<compile_context>
chip_gen: v6e
topology: v6e:2x2x1
jax: 0.10.0
libtpu: 0.0.40
codegen_flags: <defaults>
</compile_context>

<pallas_src>
import functools

import jax
import jax.numpy as jnp
import numpy as np
from jax import lax
from jax.experimental import pallas as pl
from jax.experimental.pallas import tpu as pltpu


def _round_up(x, m):
    return (x + m - 1) // m * m


# -----------------------------------------------------------------------------
# 3x3 conv kernel (stride 1, pad 1) on the padded-flat layout
# -----------------------------------------------------------------------------
def _conv3x3_kernel(xm_ref, xh_ref, w_ref, b_ref, o_ref, slab_ref, acc_ref, *,
                    P, TM, HB, relu_in, relu_out):
    # Assemble the contiguous activation slab (TM main rows + HB halo rows).
    xm = xm_ref[...]                       # (TM, Cin) bf16
    xh = xh_ref[...]                       # (HB, Cin) bf16
    if relu_in:                            # applied once per slab, not per tap
        xm = jnp.maximum(xm, 0)
        xh = jnp.maximum(xh, 0)
    slab_ref[pl.ds(0, TM), :] = xm
    slab_ref[pl.ds(TM, HB), :] = xh

    # 9 tap matmuls: each tap is a static row shift of ky*P + kx in the flat
    # layout.  bf16 x bf16 on the MXU, f32 accumulation in a VMEM scratch.
    # TODO(synk): the Cin=3 first layer could fold taps into one K=27 matmul.
    for t in range(9):
        ky, kx = divmod(t, 3)
        xt = slab_ref[pl.ds(ky * P + kx, TM), :]               # (TM, Cin)
        contrib = jnp.dot(xt, w_ref[t], preferred_element_type=jnp.float32)
        if t == 0:
            acc_ref[...] = contrib
        else:
            acc_ref[...] += contrib

    r = acc_ref[...] + b_ref[...]          # (TM, Cout) f32 + (1, Cout) f32
    if relu_out:
        r = jnp.maximum(r, 0.0)
    # Rows that do not correspond to interior pixels hold don't-care values;
    # the wrapper slices them away, so no masking is needed here.
    o_ref[...] = r.astype(o_ref.dtype)


def _conv_tiles(P, R, target_rows=1024):
    """Pick the M-tile (TM) and halo block (HB) sizes for one conv layer."""
    HB = _round_up(2 * P + 2, 8)           # covers the +(2P+2) tap reach
    L = R * P
    k = max(1, min(-(-target_rows // HB), -(-L // HB)))
    TM = k * HB                            # multiple of 8 and of HB
    nblocks = -(-L // TM)
    return TM, HB, nblocks


@functools.partial(jax.jit, static_argnames=("relu_in", "relu_out"))
def conv3x3_pallas(x_nhwc, w_hwio, b, *, relu_in, relu_out):
    """3x3 conv, stride 1, zero pad 1 (PyTorch Conv2d semantics), NHWC bf16."""
    N, H, W, Cin = x_nhwc.shape
    Cout = w_hwio.shape[-1]

    P = _round_up(W + 2, 8)                # row pitch of the padded-flat layout
    R = H + 2
    L = R * P
    TM, HB, nblocks = _conv_tiles(P, R)
    E = (nblocks + 1) * TM                 # multiple of TM and HB, >= L + halo
    EXT = P + 1                            # leading zeros: tap reads stay >= 0
    k = TM // HB

    # Padded-flat activation: (N, E, Cin) bf16, zeros everywhere except the
    # interior pixels placed at flat index EXT + (Y * P + X).
    xpf = jnp.pad(x_nhwc.astype(jnp.bfloat16),
                  ((0, 0), (1, 1), (1, P - 1 - W), (0, 0))).reshape(N, L, Cin)
    xe = jnp.pad(xpf, ((0, 0), (EXT, E - EXT - L), (0, 0)))

    w9 = w_hwio.reshape(9, Cin, Cout).astype(jnp.bfloat16)
    b2 = b.reshape(1, Cout).astype(jnp.float32)

    kernel = functools.partial(
        _conv3x3_kernel, P=P, TM=TM, HB=HB,
        relu_in=relu_in, relu_out=relu_out)

    out_flat = pl.pallas_call(
        kernel,
        out_shape=jax.ShapeDtypeStruct((N, nblocks * TM, Cout), jnp.bfloat16),
        grid_spec=pltpu.PrefetchScalarGridSpec(
            num_scalar_prefetch=0,
            grid=(N, nblocks),
            in_specs=[
                # main TM-row activation block
                pl.BlockSpec((None, TM, Cin), lambda n, m: (n, m, 0)),
                # small aligned halo block just past the main block
                pl.BlockSpec((None, HB, Cin), lambda n, m: (n, (m + 1) * k, 0)),
                # full 9-tap weights, constant index -> stays VMEM resident
                pl.BlockSpec((9, Cin, Cout), lambda n, m: (0, 0, 0)),
                pl.BlockSpec((1, Cout), lambda n, m: (0, 0)),
            ],
            out_specs=pl.BlockSpec((None, TM, Cout), lambda n, m: (n, m, 0)),
            scratch_shapes=[
                pltpu.VMEM((TM + HB, Cin), jnp.bfloat16),   # contiguous slab
                pltpu.VMEM((TM, Cout), jnp.float32),        # f32 accumulator
            ],
        ),
        compiler_params=pltpu.CompilerParams(
            dimension_semantics=("parallel", "parallel"),
            vmem_limit_bytes=48 * 1024 * 1024,
        ),
    )(xe, xe, w9, b2)

    # Back to NHWC (drop padding rows/cols + layout tail).
    y = out_flat[:, :L, :].reshape(N, R, P, Cout)[:, 1:H + 1, 1:W + 1, :]
    return y


# -----------------------------------------------------------------------------
# MaxPool2d(2, 2) kernel (batched rows per grid step)
# -----------------------------------------------------------------------------
def _maxpool_kernel(x_ref, o_ref):
    # x_ref block is (TR, 2, 2, Wo, C); each load below is a clean (TR, Wo, C)
    # slab with (rows, channels) on (sublane, lane).
    a = jnp.maximum(x_ref[:, 0, 0], x_ref[:, 0, 1])
    c = jnp.maximum(x_ref[:, 1, 0], x_ref[:, 1, 1])
    o_ref[...] = jnp.maximum(a, c)


def _largest_divisor_leq(n, cap):
    cap = max(1, min(cap, n))
    for d in range(cap, 0, -1):
        if n % d == 0:
            return d
    return 1


@jax.jit
def maxpool2x2_pallas(x_nhwc):
    """MaxPool2d(kernel=2, stride=2), NHWC."""
    N, H, W, C = x_nhwc.shape
    Ho, Wo = H // 2, W // 2
    # NOTE: the dim swap is an XLA transpose outside the kernel (kept for
    # lowering robustness); the pool kernel processes TR pooled rows per step.
    xr = (x_nhwc.reshape(N, Ho, 2, Wo, 2, C)
          .transpose(0, 1, 2, 4, 3, 5)
          .reshape(N * Ho, 2, 2, Wo, C))

    bytes_per_row = 4 * Wo * C * x_nhwc.dtype.itemsize
    cap = max(1, (2 * 1024 * 1024) // max(1, bytes_per_row))
    TR = _largest_divisor_leq(N * Ho, min(256, cap))

    out = pl.pallas_call(
        _maxpool_kernel,
        out_shape=jax.ShapeDtypeStruct((N * Ho, Wo, C), x_nhwc.dtype),
        grid_spec=pltpu.PrefetchScalarGridSpec(
            num_scalar_prefetch=0,
            grid=((N * Ho) // TR,),
            in_specs=[pl.BlockSpec((TR, 2, 2, Wo, C),
                                   lambda i: (i, 0, 0, 0, 0))],
            out_specs=pl.BlockSpec((TR, Wo, C), lambda i: (i, 0, 0)),
        ),
        compiler_params=pltpu.CompilerParams(
            dimension_semantics=("parallel",)),
    )(xr)
    return out.reshape(N, Ho, Wo, C)


# -----------------------------------------------------------------------------
# VGG16 feature extractor (matches torchvision features[0:30] slicing)
# -----------------------------------------------------------------------------
# (name, pool_before, cin, cout, relu_on_input, relu_on_output)
_BLOCKS = [
    ("relu1_1", False, 3, 64, False, True),
    ("relu1_2", False, 64, 64, False, True),
    ("relu2_1", True, 64, 128, False, True),
    ("relu2_2", False, 128, 128, False, True),
    ("relu3_1", True, 128, 256, False, True),
    ("relu3_2", False, 256, 256, False, True),
    ("relu3_3", False, 256, 256, False, True),
    ("relu4_1", True, 256, 512, False, False),   # features[16:18]: pool, conv (NO relu)
    ("relu4_2", False, 512, 512, True, True),    # features[18:21]: relu, conv, relu
    ("relu4_3", False, 512, 512, False, True),
    ("relu5_1", True, 512, 512, False, True),
    ("relu5_2", False, 512, 512, False, True),
    ("relu5_3", False, 512, 512, False, True),
]


def init_vgg16_params(key):
    params = {}
    for name, _pool, cin, cout, _ri, _ro in _BLOCKS:
        key, kw, kb = jax.random.split(key, 3)
        w = jax.random.normal(kw, (3, 3, cin, cout), jnp.float32) * np.sqrt(
            2.0 / (9.0 * cin))
        b = jax.random.normal(kb, (cout,), jnp.float32) * 0.01
        params[name] = (w, b)
    return params


def _to_nchw_f32(t):
    return jnp.transpose(t.astype(jnp.float32), (0, 3, 1, 2))


def vgg16_forward(params, x_nchw, layers=None, encode_only=False, resize=False):
    """Mirrors VGG16.forward. Input/outputs NCHW to match PyTorch."""
    del resize  # unused in the reference forward
    h = jnp.transpose(x_nchw, (0, 2, 3, 1)).astype(jnp.bfloat16)  # NCHW -> NHWC
    feats_nhwc = {}
    for name, pool_before, _cin, _cout, relu_in, relu_out in _BLOCKS:
        if pool_before:
            h = maxpool2x2_pallas(h)
        w, b = params[name]
        h = conv3x3_pallas(h, w, b, relu_in=relu_in, relu_out=relu_out)
        feats_nhwc[name] = h

    # Only convert to NCHW the features that are actually returned.
    if encode_only:
        if layers is not None and len(layers) > 0:
            feats = []
            for layer, key in enumerate(feats_nhwc):
                if layer in layers:
                    feats.append(_to_nchw_f32(feats_nhwc[key]))
            return feats
        return _to_nchw_f32(feats_nhwc["relu3_1"])
    return {k: _to_nchw_f32(v) for k, v in feats_nhwc.items()}


# -----------------------------------------------------------------------------
# Pure-JAX reference (same bf16 activation / weight quantization, f32 accum)
# -----------------------------------------------------------------------------
def _vgg16_forward_ref(params, x_nchw):
    h = jnp.transpose(x_nchw, (0, 2, 3, 1)).astype(jnp.bfloat16)
    out = {}
    for name, pool_before, _cin, _cout, relu_in, relu_out in _BLOCKS:
        if pool_before:
            N, H, W, C = h.shape
            h = jnp.max(h.reshape(N, H // 2, 2, W // 2, 2, C), axis=(2, 4))
        w, b = params[name]
        y = jnp.maximum(h, 0) if relu_in else h
        y = lax.conv_general_dilated(
            y, w.astype(jnp.bfloat16), (1, 1), "SAME",
            dimension_numbers=("NHWC", "HWIO", "NHWC"),
            preferred_element_type=jnp.float32) + b
        if relu_out:
            y = jnp.maximum(y, 0.0)
        h = y.astype(jnp.bfloat16)
        out[name] = jnp.transpose(h.astype(jnp.float32), (0, 3, 1, 2))
    return out


if __name__ == "__main__":
    key = jax.random.PRNGKey(0)
    key, kx = jax.random.split(key)
    x = jax.random.normal(kx, (2, 3, 16, 16), jnp.float32)  # small NCHW input

    params = init_vgg16_params(key)

    out = vgg16_forward(params, x)                 # default path: dict of 13 maps
    out = jax.tree_util.tree_map(jax.block_until_ready, out)

    # silent numerical sanity check against a pure-JAX reference
    ref = _vgg16_forward_ref(params, x)
    for name in ("relu1_1", "relu2_2", "relu3_1", "relu4_1", "relu5_3"):
        a, b = out[name], ref[name]
        assert a.shape == b.shape, name
        err = float(jnp.max(jnp.abs(a - b)))
        scale = float(jnp.max(jnp.abs(b)))
        assert err <= 2e-2 * scale + 2e-2, (name, err, scale)

    # encode_only paths (same semantics as the PyTorch module)
    feats = vgg16_forward(params, x, layers=[0, 4, 8], encode_only=True)
    assert len(feats) == 3
    r31 = vgg16_forward(params, x, layers=[], encode_only=True)
    jax.block_until_ready(r31)

    print("KERNEL_OK")
</pallas_src>

<mosaic_0001>
module attributes {stable_mosaic.version = 11 : i64} {
  func.func @_conv3x3_kernel(%arg0: i32, %arg1: i32, %arg2: memref<1x448x3xbf16, #tpu.memory_space<vmem>>, %arg3: memref<1x56x3xbf16, #tpu.memory_space<vmem>>, %arg4: memref<9x3x64xbf16, #tpu.memory_space<vmem>>, %arg5: memref<1x64xf32, #tpu.memory_space<vmem>>, %arg6: memref<1x448x64xbf16, #tpu.memory_space<vmem>>, %arg7: memref<504x3xbf16, #tpu.memory_space<vmem>>, %arg8: memref<448x64xf32, #tpu.memory_space<vmem>>) attributes {dimension_semantics = [#tpu.dimension_semantics<parallel>, #tpu.dimension_semantics<parallel>], iteration_bounds = array<i64: 2, 1>, scalar_prefetch = 0 : i64, scratch_operands = 2 : i64, tpu.core_type = #tpu.core_type<tc>, window_params = [{transform_indices = @transform_0, window_bounds = array<i64: 1, 448, 3>}, {transform_indices = @transform_1, window_bounds = array<i64: 1, 56, 3>}, {pipeline_mode = #tpu.pipeline_mode<synchronous>, transform_indices = @transform_2, window_bounds = array<i64: 9, 3, 64>}, {pipeline_mode = #tpu.pipeline_mode<synchronous>, transform_indices = @transform_3, window_bounds = array<i64: 1, 64>}, {transform_indices = @transform_4, window_bounds = array<i64: 1, 448, 64>}]} {
    %c0 = arith.constant 0 : index
    %c0_0 = arith.constant 0 : index
    %c0_1 = arith.constant 0 : index
    %0 = vector.load %arg2[%c0, %c0_0, %c0_1] : memref<1x448x3xbf16, #tpu.memory_space<vmem>>, vector<1x448x3xbf16>
    %1 = vector.shape_cast %0 : vector<1x448x3xbf16> to vector<448x3xbf16>
    %c0_2 = arith.constant 0 : index
    %c0_3 = arith.constant 0 : index
    %c0_4 = arith.constant 0 : index
    %2 = vector.load %arg3[%c0_2, %c0_3, %c0_4] : memref<1x56x3xbf16, #tpu.memory_space<vmem>>, vector<1x56x3xbf16>
    %3 = vector.shape_cast %2 : vector<1x56x3xbf16> to vector<56x3xbf16>
    %c0_5 = arith.constant 0 : index
    %c0_6 = arith.constant 0 : index
    %4 = vector.load %arg7[%c0_5, %c0_6] : memref<504x3xbf16, #tpu.memory_space<vmem>>, vector<448x3xbf16>
    tpu.vector_store %arg7[%c0_5, %c0_6], %1 {strides = array<i32>} : memref<504x3xbf16, #tpu.memory_space<vmem>>, vector<448x3xbf16>,
    %c448 = arith.constant 448 : index
    %c0_7 = arith.constant 0 : index
    %5 = vector.load %arg7[%c448, %c0_7] : memref<504x3xbf16, #tpu.memory_space<vmem>>, vector<56x3xbf16>
    tpu.vector_store %arg7[%c448, %c0_7], %3 {strides = array<i32>} : memref<504x3xbf16, #tpu.memory_space<vmem>>, vector<56x3xbf16>,
    %c0_8 = arith.constant 0 : index
    %c0_9 = arith.constant 0 : index
    %6 = vector.load %arg7[%c0_8, %c0_9] : memref<504x3xbf16, #tpu.memory_space<vmem>>, vector<448x3xbf16>
    %c0_10 = arith.constant 0 : index
    %c0_11 = arith.constant 0 : index
    %c0_12 = arith.constant 0 : index
    %7 = vector.load %arg4[%c0_10, %c0_11, %c0_12] : memref<9x3x64xbf16, #tpu.memory_space<vmem>>, vector<1x3x64xbf16>
    %8 = vector.shape_cast %7 : vector<1x3x64xbf16> to vector<3x64xbf16>
    %cst = arith.constant dense<0.000000e+00> : vector<448x64xf32>
    %9 = tpu.matmul %6, %8, %cst {dimension_numbers = #tpu.dot_dimension_numbers<[1], [0], [0], [1], [0, 0, 1, 1], [], []>} : vector<448x3xbf16>, vector<3x64xbf16>, vector<448x64xf32> -> vector<448x64xf32>
    %c0_13 = arith.constant 0 : index
    %c0_14 = arith.constant 0 : index
    %10 = vector.load %arg8[%c0_13, %c0_14] : memref<448x64xf32, #tpu.memory_space<vmem>>, vector<448x64xf32>
    tpu.vector_store %arg8[%c0_13, %c0_14], %9 {strides = array<i32>} : memref<448x64xf32, #tpu.memory_space<vmem>>, vector<448x64xf32>,
    %c1 = arith.constant 1 : index
    %c0_15 = arith.constant 0 : index
    %11 = vector.load %arg7[%c1, %c0_15] : memref<504x3xbf16, #tpu.memory_space<vmem>>, vector<448x3xbf16>
    %c1_16 = arith.constant 1 : index
    %c0_17 = arith.constant 0 : index
    %c0_18 = arith.constant 0 : index
    %12 = vector.load %arg4[%c1_16, %c0_17, %c0_18] : memref<9x3x64xbf16, #tpu.memory_space<vmem>>, vector<1x3x64xbf16>
    %13 = vector.shape_cast %12 : vector<1x3x64xbf16> to vector<3x64xbf16>
    %cst_19 = arith.constant dense<0.000000e+00> : vector<448x64xf32>
    %14 = tpu.matmul %11, %13, %cst_19 {dimension_numbers = #tpu.dot_dimension_numbers<[1], [0], [0], [1], [0, 0, 1, 1], [], []>} : vector<448x3xbf16>, vector<3x64xbf16>, vector<448x64xf32> -> vector<448x64xf32>
    %c0_20 = arith.constant 0 : index
    %c0_21 = arith.constant 0 : index
    %15 = vector.load %arg8[%c0_20, %c0_21] : memref<448x64xf32, #tpu.memory_space<vmem>>, vector<448x64xf32>
    %16 = arith.addf %15, %14 : vector<448x64xf32>
    %c0_22 = arith.constant 0 : index
    %c0_23 = arith.constant 0 : index
    %17 = vector.load %arg8[%c0_22, %c0_23] : memref<448x64xf32, #tpu.memory_space<vmem>>, vector<448x64xf32>
    tpu.vector_store %arg8[%c0_22, %c0_23], %16 {strides = array<i32>} : memref<448x64xf32, #tpu.memory_space<vmem>>, vector<448x64xf32>,
    %c2 = arith.constant 2 : index
    %c0_24 = arith.constant 0 : index
    %18 = vector.load %arg7[%c2, %c0_24] : memref<504x3xbf16, #tpu.memory_space<vmem>>, vector<448x3xbf16>
    %c2_25 = arith.constant 2 : index
    %c0_26 = arith.constant 0 : index
    %c0_27 = arith.constant 0 : index
    %19 = vector.load %arg4[%c2_25, %c0_26, %c0_27] : memref<9x3x64xbf16, #tpu.memory_space<vmem>>, vector<1x3x64xbf16>
    %20 = vector.shape_cast %19 : vector<1x3x64xbf16> to vector<3x64xbf16>
    %cst_28 = arith.constant dense<0.000000e+00> : vector<448x64xf32>
    %21 = tpu.matmul %18, %20, %cst_28 {dimension_numbers = #tpu.dot_dimension_numbers<[1], [0], [0], [1], [0, 0, 1, 1], [], []>} : vector<448x3xbf16>, vector<3x64xbf16>, vector<448x64xf32> -> vector<448x64xf32>
    %c0_29 = arith.constant 0 : index
    %c0_30 = arith.constant 0 : index
    %22 = vector.load %arg8[%c0_29, %c0_30] : memref<448x64xf32, #tpu.memory_space<vmem>>, vector<448x64xf32>
    %23 = arith.addf %22, %21 : vector<448x64xf32>
    %c0_31 = arith.constant 0 : index
    %c0_32 = arith.constant 0 : index
    %24 = vector.load %arg8[%c0_31, %c0_32] : memref<448x64xf32, #tpu.memory_space<vmem>>, vector<448x64xf32>
    tpu.vector_store %arg8[%c0_31, %c0_32], %23 {strides = array<i32>} : memref<448x64xf32, #tpu.memory_space<vmem>>, vector<448x64xf32>,
    %c24 = arith.constant 24 : index
    %c0_33 = arith.constant 0 : index
    %25 = vector.load %arg7[%c24, %c0_33] : memref<504x3xbf16, #tpu.memory_space<vmem>>, vector<448x3xbf16>
    %c3 = arith.constant 3 : index
    %c0_34 = arith.constant 0 : index
    %c0_35 = arith.constant 0 : index
    %26 = vector.load %arg4[%c3, %c0_34, %c0_35] : memref<9x3x64xbf16, #tpu.memory_space<vmem>>, vector<1x3x64xbf16>
    %27 = vector.shape_cast %26 : vector<1x3x64xbf16> to vector<3x64xbf16>
    %cst_36 = arith.constant dense<0.000000e+00> : vector<448x64xf32>
    %28 = tpu.matmul %25, %27, %cst_36 {dimension_numbers = #tpu.dot_dimension_numbers<[1], [0], [0], [1], [0, 0, 1, 1], [], []>} : vector<448x3xbf16>, vector<3x64xbf16>, vector<448x64xf32> -> vector<448x64xf32>
    %c0_37 = arith.constant 0 : index
    %c0_38 = arith.constant 0 : index
    %29 = vector.load %arg8[%c0_37, %c0_38] : memref<448x64xf32, #tpu.memory_space<vmem>>, vector<448x64xf32>
    %30 = arith.addf %29, %28 : vector<448x64xf32>
    %c0_39 = arith.constant 0 : index
    %c0_40 = arith.constant 0 : index
    %31 = vector.load %arg8[%c0_39, %c0_40] : memref<448x64xf32, #tpu.memory_space<vmem>>, vector<448x64xf32>
    tpu.vector_store %arg8[%c0_39, %c0_40], %30 {strides = array<i32>} : memref<448x64xf32, #tpu.memory_space<vmem>>, vector<448x64xf32>,
    %c25 = arith.constant 25 : index
    %c0_41 = arith.constant 0 : index
    %32 = vector.load %arg7[%c25, %c0_41] : memref<504x3xbf16, #tpu.memory_space<vmem>>, vector<448x3xbf16>
    %c4 = arith.constant 4 : index
    %c0_42 = arith.constant 0 : index
    %c0_43 = arith.constant 0 : index
    %33 = vector.load %arg4[%c4, %c0_42, %c0_43] : memref<9x3x64xbf16, #tpu.memory_space<vmem>>, vector<1x3x64xbf16>
    %34 = vector.shape_cast %33 : vector<1x3x64xbf16> to vector<3x64xbf16>
    %cst_44 = arith.constant dense<0.000000e+00> : vector<448x64xf32>
    %35 = tpu.matmul %32, %34, %cst_44 {dimension_numbers = #tpu.dot_dimension_numbers<[1], [0], [0], [1], [0, 0, 1, 1], [], []>} : vector<448x3xbf16>, vector<3x64xbf16>, vector<448x64xf32> -> vector<448x64xf32>
    %c0_45 = arith.constant 0 : index
    %c0_46 = arith.constant 0 : index
    %36 = vector.load %arg8[%c0_45, %c0_46] : memref<448x64xf32, #tpu.memory_space<vmem>>, vector<448x64xf32>
    %37 = arith.addf %36, %35 : vector<448x64xf32>
    %c0_47 = arith.constant 0 : index
    %c0_48 = arith.constant 0 : index
    %38 = vector.load %arg8[%c0_47, %c0_48] : memref<448x64xf32, #tpu.memory_space<vmem>>, vector<448x64xf32>
    tpu.vector_store %arg8[%c0_47, %c0_48], %37 {strides = array<i32>} : memref<448x64xf32, #tpu.memory_space<vmem>>, vector<448x64xf32>,
    %c26 = arith.constant 26 : index
    %c0_49 = arith.constant 0 : index
    %39 = vector.load %arg7[%c26, %c0_49] : memref<504x3xbf16, #tpu.memory_space<vmem>>, vector<448x3xbf16>
    %c5 = arith.constant 5 : index
    %c0_50 = arith.constant 0 : index
    %c0_51 = arith.constant 0 : index
    %40 = vector.load %arg4[%c5, %c0_50, %c0_51] : memref<9x3x64xbf16, #tpu.memory_space<vmem>>, vector<1x3x64xbf16>
    %41 = vector.shape_cast %40 : vector<1x3x64xbf16> to vector<3x64xbf16>
    %cst_52 = arith.constant dense<0.000000e+00> : vector<448x64xf32>
    %42 = tpu.matmul %39, %41, %cst_52 {dimension_numbers = #tpu.dot_dimension_numbers<[1], [0], [0], [1], [0, 0, 1, 1], [], []>} : vector<448x3xbf16>, vector<3x64xbf16>, vector<448x64xf32> -> vector<448x64xf32>
    %c0_53 = arith.constant 0 : index
    %c0_54 = arith.constant 0 : index
    %43 = vector.load %arg8[%c0_53, %c0_54] : memref<448x64xf32, #tpu.memory_space<vmem>>, vector<448x64xf32>
    %44 = arith.addf %43, %42 : vector<448x64xf32>
    %c0_55 = arith.constant 0 : index
    %c0_56 = arith.constant 0 : index
    %45 = vector.load %arg8[%c0_55, %c0_56] : memref<448x64xf32, #tpu.memory_space<vmem>>, vector<448x64xf32>
    tpu.vector_store %arg8[%c0_55, %c0_56], %44 {strides = array<i32>} : memref<448x64xf32, #tpu.memory_space<vmem>>, vector<448x64xf32>,
    %c48 = arith.constant 48 : index
    %c0_57 = arith.constant 0 : index
    %46 = vector.load %arg7[%c48, %c0_57] : memref<504x3xbf16, #tpu.memory_space<vmem>>, vector<448x3xbf16>
    %c6 = arith.constant 6 : index
    %c0_58 = arith.constant 0 : index
    %c0_59 = arith.constant 0 : index
    %47 = vector.load %arg4[%c6, %c0_58, %c0_59] : memref<9x3x64xbf16, #tpu.memory_space<vmem>>, vector<1x3x64xbf16>
    %48 = vector.shape_cast %47 : vector<1x3x64xbf16> to vector<3x64xbf16>
    %cst_60 = arith.constant dense<0.000000e+00> : vector<448x64xf32>
    %49 = tpu.matmul %46, %48, %cst_60 {dimension_numbers = #tpu.dot_dimension_numbers<[1], [0], [0], [1], [0, 0, 1, 1], [], []>} : vector<448x3xbf16>, vector<3x64xbf16>, vector<448x64xf32> -> vector<448x64xf32>
    %c0_61 = arith.constant 0 : index
    %c0_62 = arith.constant 0 : index
    %50 = vector.load %arg8[%c0_61, %c0_62] : memref<448x64xf32, #tpu.memory_space<vmem>>, vector<448x64xf32>
    %51 = arith.addf %50, %49 : vector<448x64xf32>
    %c0_63 = arith.constant 0 : index
    %c0_64 = arith.constant 0 : index
    %52 = vector.load %arg8[%c0_63, %c0_64] : memref<448x64xf32, #tpu.memory_space<vmem>>, vector<448x64xf32>
    tpu.vector_store %arg8[%c0_63, %c0_64], %51 {strides = array<i32>} : memref<448x64xf32, #tpu.memory_space<vmem>>, vector<448x64xf32>,
    %c49 = arith.constant 49 : index
    %c0_65 = arith.constant 0 : index
    %53 = vector.load %arg7[%c49, %c0_65] : memref<504x3xbf16, #tpu.memory_space<vmem>>, vector<448x3xbf16>
    %c7 = arith.constant 7 : index
    %c0_66 = arith.constant 0 : index
    %c0_67 = arith.constant 0 : index
    %54 = vector.load %arg4[%c7, %c0_66, %c0_67] : memref<9x3x64xbf16, #tpu.memory_space<vmem>>, vector<1x3x64xbf16>
    %55 = vector.shape_cast %54 : vector<1x3x64xbf16> to vector<3x64xbf16>
    %cst_68 = arith.constant dense<0.000000e+00> : vector<448x64xf32>
    %56 = tpu.matmul %53, %55, %cst_68 {dimension_numbers = #tpu.dot_dimension_numbers<[1], [0], [0], [1], [0, 0, 1, 1], [], []>} : vector<448x3xbf16>, vector<3x64xbf16>, vector<448x64xf32> -> vector<448x64xf32>
    %c0_69 = arith.constant 0 : index
    %c0_70 = arith.constant 0 : index
    %57 = vector.load %arg8[%c0_69, %c0_70] : memref<448x64xf32, #tpu.memory_space<vmem>>, vector<448x64xf32>
    %58 = arith.addf %57, %56 : vector<448x64xf32>
    %c0_71 = arith.constant 0 : index
    %c0_72 = arith.constant 0 : index
    %59 = vector.load %arg8[%c0_71, %c0_72] : memref<448x64xf32, #tpu.memory_space<vmem>>, vector<448x64xf32>
    tpu.vector_store %arg8[%c0_71, %c0_72], %58 {strides = array<i32>} : memref<448x64xf32, #tpu.memory_space<vmem>>, vector<448x64xf32>,
    %c50 = arith.constant 50 : index
    %c0_73 = arith.constant 0 : index
    %60 = vector.load %arg7[%c50, %c0_73] : memref<504x3xbf16, #tpu.memory_space<vmem>>, vector<448x3xbf16>
    %c8 = arith.constant 8 : index
    %c0_74 = arith.constant 0 : index
    %c0_75 = arith.constant 0 : index
    %61 = vector.load %arg4[%c8, %c0_74, %c0_75] : memref<9x3x64xbf16, #tpu.memory_space<vmem>>, vector<1x3x64xbf16>
    %62 = vector.shape_cast %61 : vector<1x3x64xbf16> to vector<3x64xbf16>
    %cst_76 = arith.constant dense<0.000000e+00> : vector<448x64xf32>
    %63 = tpu.matmul %60, %62, %cst_76 {dimension_numbers = #tpu.dot_dimension_numbers<[1], [0], [0], [1], [0, 0, 1, 1], [], []>} : vector<448x3xbf16>, vector<3x64xbf16>, vector<448x64xf32> -> vector<448x64xf32>
    %c0_77 = arith.constant 0 : index
    %c0_78 = arith.constant 0 : index
    %64 = vector.load %arg8[%c0_77, %c0_78] : memref<448x64xf32, #tpu.memory_space<vmem>>, vector<448x64xf32>
    %65 = arith.addf %64, %63 : vector<448x64xf32>
    %c0_79 = arith.constant 0 : index
    %c0_80 = arith.constant 0 : index
    %66 = vector.load %arg8[%c0_79, %c0_80] : memref<448x64xf32, #tpu.memory_space<vmem>>, vector<448x64xf32>
    tpu.vector_store %arg8[%c0_79, %c0_80], %65 {strides = array<i32>} : memref<448x64xf32, #tpu.memory_space<vmem>>, vector<448x64xf32>,
    %c0_81 = arith.constant 0 : index
    %c0_82 = arith.constant 0 : index
    %67 = vector.load %arg8[%c0_81, %c0_82] : memref<448x64xf32, #tpu.memory_space<vmem>>, vector<448x64xf32>
    %c0_83 = arith.constant 0 : index
    %c0_84 = arith.constant 0 : index
    %68 = vector.load %arg5[%c0_83, %c0_84] : memref<1x64xf32, #tpu.memory_space<vmem>>, vector<1x64xf32>
    %69 = vector.broadcast %68 : vector<1x64xf32> to vector<448x64xf32>
    %70 = arith.addf %67, %69 : vector<448x64xf32>
    %cst_85 = arith.constant 0.000000e+00 : f32
    %71 = vector.broadcast %cst_85 : f32 to vector<448x64xf32>
    %72 = arith.maximumf %70, %71 : vector<448x64xf32>
    %73 = arith.truncf %72 : vector<448x64xf32> to vector<448x64xbf16>
    %c0_86 = arith.constant 0 : index
    %c0_87 = arith.constant 0 : index
    %c0_88 = arith.constant 0 : index
    %74 = vector.load %arg6[%c0_86, %c0_87, %c0_88] : memref<1x448x64xbf16, #tpu.memory_space<vmem>>, vector<1x448x64xbf16>
    %75 = vector.shape_cast %74 : vector<1x448x64xbf16> to vector<448x64xbf16>
    %76 = vector.shape_cast %73 : vector<448x64xbf16> to vector<1x448x64xbf16>
    tpu.vector_store %arg6[%c0_86, %c0_87, %c0_88], %76 {strides = array<i32>} : memref<1x448x64xbf16, #tpu.memory_space<vmem>>, vector<1x448x64xbf16>,
    return
  }
  func.func @transform_0(%arg0: i32, %arg1: i32) -> (i32, i32, i32) {
    %c0_i32 = arith.constant 0 : i32
    %c0_i32_0 = arith.constant 0 : i32
    return %arg0, %arg1, %c0_i32 : i32, i32, i32
  }
  func.func @transform_1(%arg0: i32, %arg1: i32) -> (i32, i32, i32) {
    %c1_i32 = arith.constant 1 : i32
    %0 = arith.addi %arg1, %c1_i32 : i32
    %c8_i32 = arith.constant 8 : i32
    %1 = arith.muli %0, %c8_i32 : i32
    %c0_i32 = arith.constant 0 : i32
    %c0_i32_0 = arith.constant 0 : i32
    return %arg0, %1, %c0_i32 : i32, i32, i32
  }
  func.func @transform_2(%arg0: i32, %arg1: i32) -> (i32, i32, i32) {
    %c0_i32 = arith.constant 0 : i32
    %c0_i32_0 = arith.constant 0 : i32
    %c0_i32_1 = arith.constant 0 : i32
    %c0_i32_2 = arith.constant 0 : i32
    return %c0_i32, %c0_i32_0, %c0_i32_1 : i32, i32, i32
  }
  func.func @transform_3(%arg0: i32, %arg1: i32) -> (i32, i32) {
    %c0_i32 = arith.constant 0 : i32
    %c0_i32_0 = arith.constant 0 : i32
    %c0_i32_1 = arith.constant 0 : i32
    return %c0_i32, %c0_i32_0 : i32, i32
  }
  func.func @transform_4(%arg0: i32, %arg1: i32) -> (i32, i32, i32) {
    %c0_i32 = arith.constant 0 : i32
    %c0_i32_0 = arith.constant 0 : i32
    return %arg0, %arg1, %c0_i32 : i32, i32, i32
  }
}

</mosaic_0001>

<llo_original>
// kernel: conv3x3_pallas.1
$region0: #{conv3x3_pallas.1}
  #allocation0 [shape = 'u32[]', space=smem, size = 0x4, offset = 0x4, fixed_abs, tag = 'smem constant byte address 0x4 - core index']
  #allocation1 [shape = 'u32[144,128]{1,0:T(1,128)}', space=vmem, size = 0x12000, scoped, tag = 'internal scratch']
  #allocation2 [shape = 'bf16[504,3]{1,0:T(8,128)(2,1)}', space=vmem, size = 0x1f800, scoped, tag = 'scratch operand']
  #allocation3 [shape = 'f32[448,64]{1,0:T(8,128)}', space=vmem, size = 0x38000, scoped, tag = 'scratch operand']
  %s0 = inlined_call_operand.vmem [shape: bf16[2,896,3], index: 0, kind: input, shape index: {}, may-alias: {0,1}]
  %s1 = inlined_call_operand.vmem [shape: bf16[2,896,3], index: 1, kind: input, shape index: {}, may-alias: {0,1}]
  %s2 = inlined_call_operand.vmem [shape: bf16[9,3,64], index: 2, kind: input, shape index: {}]
  %s3 = inlined_call_operand.vmem [shape: f32[1,64], index: 3, kind: input, shape index: {}]
  %s4 = inlined_call_operand.vmem [shape: bf16[2,448,64], index: 4, kind: output, shape index: {}]
  %s5 = sld [smem:[#allocation0]]
  $region49: #{conv3x3_pallas.1} parent=0
    _
  %s7 = ssub.s32 1, %s5
  %s8 = scalar_select 0, %s7, %s5
  loop: start=0, step=1, limit=4
  $region2: #{conv3x3_pallas.1} parent=0 // loop_pre_header
    _
  $region3: #{conv3x3_pallas.1} parent=0 // loop_header
    %s10 = sphi 0, %s14
    %p11 = scmp.ge.s32.totalorder %s10, 4
    %s17 = sphi 0, %s29
    %s18 = sphi 0, %s25
    %s19 = sphi 0, %s17
    %s20 = sphi 0, %s18
    %s21 = sphi 0, %s19
    %s22 = sphi 0, %s20
    %s34 = sphi 0, %s36
    %s37 = sphi 0, %s34
    %s38 = sphi 0, %s37
    %s54 = sphi 0, %s38
    %s66 = sphi 0, %s68
    %s69 = sphi 0, %s66
    %s70 = sphi 0, %s69
    %s86 = sphi 0, %s70
    %s90 = sphi 0, %s90
    %s92 = sphi 0, %s90
    %s93 = sphi 0, %s92
    %s107 = sphi 0, %s93
    %s111 = sphi 0, %s111
    %s113 = sphi 0, %s111
    %s114 = sphi 0, %s113
    %s128 = sphi 0, %s114
    %s136 = sphi 0, %s138
    %s139 = sphi 0, %s136
    %s140 = sphi 0, %s139
    %s156 = sphi 0, %s140
  $region4: #{conv3x3_pallas.1} parent=0 // loop_header_branch
    %13 = sbr.rel (%p11) target = $region8
  $region5: #{conv3x3_pallas.1} parent=0 // loop_body
    %s15 = ssub.s32 %s10, 1
    %s16 = ssub.s32 %s10, 2
    %s23 = sadd.s32 1, %s18
    %p24 = scmp.ge.s32.totalorder %s23, 1
    %s25 = scalar_select %p24, 0, %s23
    %s26 = sadd.s32 1, %s17
    %s27 = scalar_select %p24, %s26, %s17
    %p28 = scmp.ge.s32.totalorder %s27, 2
    %s29 = scalar_select %p28, 0, %s27
    %s30 = ssub.s32 %s17, %s29
    %s31 = ssub.s32 %s18, %s25
    %s32 = sor.u32 %s30, %s31
    %p33 = scmp.eq.s32.totalorder %s32, 0
    %s35 = sadd.s32 %s34, 1
    %s36 = scalar_select %p33, %s34, %s35
    %p39 = pneg %p33
    %p40 = scmp.eq.s32.totalorder %s10, 1
    %p41 = por %p39, %p40
    %p42 = scmp.ne.s32.totalorder %s34, %s37
    %p43 = scmp.eq.s32.totalorder %s10, 0
    %p44 = por %p42, %p43
    %p45 = scmp.ne.s32.totalorder %s34, %s37
    %p46 = scmp.eq.s32.totalorder %s15, 1
    %p47 = por %p45, %p46
    %p48 = scmp.ne.s32.totalorder %s37, %s38
    %p49 = scmp.eq.s32.totalorder %s15, 0
    %p50 = por %p48, %p49
    %p51 = scmp.ne.s32.totalorder %s37, %s38
    %p52 = scmp.eq.s32.totalorder %s16, 1
    %p53 = por %p51, %p52
    %p55 = scmp.ne.s32.totalorder %s38, %s54
    %p56 = scmp.eq.s32.totalorder %s16, 0
    %p57 = por %p55, %p56
    %s58 = sadd.s32 %s18, 1
    %s59 = smul.u32 %s58, 8
    %s60 = sadd.s32 %s25, 1
    %s61 = smul.u32 %s60, 8
    %s62 = ssub.s32 %s17, %s29
    %s63 = ssub.s32 %s59, %s61
    %s64 = sor.u32 %s62, %s63
    %p65 = scmp.eq.s32.totalorder %s64, 0
    %s67 = sadd.s32 %s66, 1
    %s68 = scalar_select %p65, %s66, %s67
    %p71 = pneg %p65
    %p72 = scmp.eq.s32.totalorder %s10, 1
    %p73 = por %p71, %p72
    %p74 = scmp.ne.s32.totalorder %s66, %s69
    %p75 = scmp.eq.s32.totalorder %s10, 0
    %p76 = por %p74, %p75
    %p77 = scmp.ne.s32.totalorder %s66, %s69
    %p78 = scmp.eq.s32.totalorder %s15, 1
    %p79 = por %p77, %p78
    %p80 = scmp.ne.s32.totalorder %s69, %s70
    %p81 = scmp.eq.s32.totalorder %s15, 0
    %p82 = por %p80, %p81
    %p83 = scmp.ne.s32.totalorder %s69, %s70
    %p84 = scmp.eq.s32.totalorder %s16, 1
    %p85 = por %p83, %p84
    %p87 = scmp.ne.s32.totalorder %s70, %s86
    %p88 = scmp.eq.s32.totalorder %s16, 0
    %p89 = por %p87, %p88
    %s91 = sadd.s32 %s90, 1
    %p94 = scmp.eq.s32.totalorder %s10, 1
    %p95 = scmp.ne.s32.totalorder %s90, %s92
    %p96 = scmp.eq.s32.totalorder %s10, 0
    %p97 = por %p95, %p96
    %p98 = scmp.ne.s32.totalorder %s90, %s92
    %p99 = scmp.eq.s32.totalorder %s15, 1
    %p100 = por %p98, %p99
    %p101 = scmp.ne.s32.totalorder %s92, %s93
    %p102 = scmp.eq.s32.totalorder %s15, 0
    %p103 = por %p101, %p102
    %p104 = scmp.ne.s32.totalorder %s92, %s93
    %p105 = scmp.eq.s32.totalorder %s16, 1
    %p106 = por %p104, %p105
    %p108 = scmp.ne.s32.totalorder %s93, %s107
    %p109 = scmp.eq.s32.totalorder %s16, 0
    %p110 = por %p108, %p109
    %s112 = sadd.s32 %s111, 1
    %p115 = scmp.eq.s32.totalorder %s10, 1
    %p116 = scmp.ne.s32.totalorder %s111, %s113
    %p117 = scmp.eq.s32.totalorder %s10, 0
    %p118 = por %p116, %p117
    %p119 = scmp.ne.s32.totalorder %s111, %s113
    %p120 = scmp.eq.s32.totalorder %s15, 1
    %p121 = por %p119, %p120
    %p122 = scmp.ne.s32.totalorder %s113, %s114
    %p123 = scmp.eq.s32.totalorder %s15, 0
    %p124 = por %p122, %p123
    %p125 = scmp.ne.s32.totalorder %s113, %s114
    %p126 = scmp.eq.s32.totalorder %s16, 1
    %p127 = por %p125, %p126
    %p129 = scmp.ne.s32.totalorder %s114, %s128
    %p130 = scmp.eq.s32.totalorder %s16, 0
    %p131 = por %p129, %p130
    %s132 = ssub.s32 %s17, %s29
    %s133 = ssub.s32 %s18, %s25
    %s134 = sor.u32 %s132, %s133
    %p135 = scmp.eq.s32.totalorder %s134, 0
    %s137 = sadd.s32 %s136, 1
    %s138 = scalar_select %p135, %s136, %s137
    %p141 = pneg %p135
    %p142 = scmp.eq.s32.totalorder %s10, 1
    %p143 = por %p141, %p142
    %p144 = scmp.ne.s32.totalorder %s136, %s139
    %p145 = scmp.eq.s32.totalorder %s10, 0
    %p146 = por %p144, %p145
    %p147 = scmp.ne.s32.totalorder %s136, %s139
    %p148 = scmp.eq.s32.totalorder %s15, 1
    %p149 = por %p147, %p148
    %p150 = scmp.ne.s32.totalorder %s139, %s140
    %p151 = scmp.eq.s32.totalorder %s15, 0
    %p152 = por %p150, %p151
    %p153 = scmp.ne.s32.totalorder %s139, %s140
    %p154 = scmp.eq.s32.totalorder %s16, 1
    %p155 = por %p153, %p154
    %p157 = scmp.ne.s32.totalorder %s140, %s156
    %p158 = scmp.eq.s32.totalorder %s16, 0
    %p159 = por %p157, %p158
    %p160 = scmp.le.s32.totalorder 1, %s10
    %p161 = scmp.lt.s32.totalorder %s10, 3
    %p162 = pnand %p160, %p161
    %p163 = pneg %p162
    // Predicated region
    $region9: #{conv3x3_pallas.1} parent=5 // pred_check
      _
    $region10: #{conv3x3_pallas.1} parent=5 // pred_check_branch
      %165 = sbr.rel (%p162) target = $region12
    $region11: #{conv3x3_pallas.1} parent=5 // pred_region
      %s166 = ssub.s32 %s10, 1
      // Predicated region
      $region13: #{conv3x3_pallas.1} parent=11 // pred_check
        %p167 = pneg %p103
      $region14: #{conv3x3_pallas.1} parent=11 // pred_check_branch
        %169 = sbr.rel (%p167) target = $region16
      $region15: #{conv3x3_pallas.1} parent=11 // pred_region
        _
      $region16: #{conv3x3_pallas.1} parent=11 // pred_fallthru
        _
      // Predicated region
      $region17: #{conv3x3_pallas.1} parent=11 // pred_check
        %p170 = pneg %p124
      $region18: #{conv3x3_pallas.1} parent=11 // pred_check_branch
        %172 = sbr.rel (%p170) target = $region20
      $region19: #{conv3x3_pallas.1} parent=11 // pred_region
        _
      $region20: #{conv3x3_pallas.1} parent=11 // pred_fallthru
        _
    $region12: #{conv3x3_pallas.1} parent=5 // pred_fallthru
      _
    %p173 = scmp.lt.s32.totalorder %s10, 2
    // Predicated region
    $region21: #{conv3x3_pallas.1} parent=5 // pred_check
      %p174 = pneg %p173
    $region22: #{conv3x3_pallas.1} parent=5 // pred_check_branch
      %176 = sbr.rel (%p174) target = $region24
    $region23: #{conv3x3_pallas.1} parent=5 // pred_region
      // Predicated region
      $region25: #{conv3x3_pallas.1} parent=23 // pred_check
        %p177 = pneg %p44
      $region26: #{conv3x3_pallas.1} parent=23 // pred_check_branch
        %179 = sbr.rel (%p177) target = $region28
      $region27: #{conv3x3_pallas.1} parent=23 // pred_region
        %s180 = smul.u32 56, %s18
        %p181 = scmp.lt.s32.totalorder %s17, 1
        %s182 = scalar_select %p181, %s17, 1
        %p183 = scmp.lt.s32.totalorder %s180, 111
        %s184 = scalar_select %p183, %s180, 111
        %s185 = smul.addr %s182, 112
        %s186 = sadd.s32 %s184, %s185
        %s187 = smul.addr %s186, 4
        %s188 = scalar_lea.vmem %s0, %s187
        %s189 = smul.u32 56, %s18
      $region28: #{conv3x3_pallas.1} parent=23 // pred_fallthru
        _
      // Predicated region
      $region29: #{conv3x3_pallas.1} parent=23 // pred_check
        %p190 = pneg %p76
      $region30: #{conv3x3_pallas.1} parent=23 // pred_check_branch
        %192 = sbr.rel (%p190) target = $region32
      $region31: #{conv3x3_pallas.1} parent=23 // pred_region
        %s193 = sadd.s32 %s18, 1
        %s194 = smul.u32 %s193, 8
        %s195 = smul.u32 7, %s194
        %p196 = scmp.lt.s32.totalorder %s17, 1
        %s197 = scalar_select %p196, %s17, 1
        %p198 = scmp.lt.s32.totalorder %s195, 111
        %s199 = scalar_select %p198, %s195, 111
        %s200 = smul.addr %s197, 112
        %s201 = sadd.s32 %s199, %s200
        %s202 = smul.addr %s201, 4
        %s203 = scalar_lea.vmem %s1, %s202
        %s204 = sadd.s32 %s18, 1
        %s205 = smul.u32 %s204, 8
        %s206 = smul.u32 7, %s205
      $region32: #{conv3x3_pallas.1} parent=23 // pred_fallthru
        _
    $region24: #{conv3x3_pallas.1} parent=5 // pred_fallthru
      _
    %p207 = scmp.le.s32.totalorder 1, %s10
    %p208 = scmp.lt.s32.totalorder %s10, 3
    %p209 = pnand %p207, %p208
    %p210 = pneg %p209
    // Predicated region
    $region33: #{conv3x3_pallas.1} parent=5 // pred_check
      _
    $region34: #{conv3x3_pallas.1} parent=5 // pred_check_branch
      %212 = sbr.rel (%p209) target = $region36
    $region35: #{conv3x3_pallas.1} parent=5 // pred_region
      %s213 = ssub.s32 %s10, 1
      %s214 = smul.u32 56, %s20
      %p215 = scmp.lt.s32.totalorder %s19, 1
      %s216 = scalar_select %p215, %s19, 1
      %p217 = scmp.lt.s32.totalorder %s214, 111
      %s218 = scalar_select %p217, %s214, 111
      %s219 = smul.addr %s216, 112
      %s220 = sadd.s32 %s218, %s219
      %s221 = smul.addr %s220, 4
      %s222 = scalar_lea.vmem %s0, %s221
      %p223 = pneg %p50
      %p224 = pneg %p47
      %s225 = sadd.s32 %s20, 1
      %s226 = smul.u32 %s225, 8
      %s227 = smul.u32 7, %s226
      %p228 = scmp.lt.s32.totalorder %s19, 1
      %s229 = scalar_select %p228, %s19, 1
      %p230 = scmp.lt.s32.totalorder %s227, 111
      %s231 = scalar_select %p230, %s227, 111
      %s232 = smul.addr %s229, 112
      %s233 = sadd.s32 %s231, %s232
      %s234 = smul.addr %s233, 4
      %s235 = scalar_lea.vmem %s1, %s234
      %p236 = pneg %p82
      %p237 = pneg %p79
      %p238 = pneg %p103
      %p239 = pneg %p100
      %p240 = pneg %p124
      %p241 = pneg %p121
      %p242 = pneg %p152
      %p243 = pneg %p149
      %s244 = smul.u32 56, %s20
      %p245 = scmp.lt.s32.totalorder %s19, 1
      %s246 = scalar_select %p245, %s19, 1
      %p247 = scmp.lt.s32.totalorder %s244, 55
      %s248 = scalar_select %p247, %s244, 55
      %s249 = smul.addr %s246, 56
      %s250 = sadd.s32 %s248, %s249
      %s251 = smul.addr %s250, 4
      %s252 = scalar_lea.vmem %s4, %s251
      %s253 = smul.u32 56, %s20
      %p254 = scmp.lt.s32.totalorder %s19, 1
      %s255 = scalar_select %p254, %s19, 1
      %p256 = scmp.lt.s32.totalorder %s253, 111
      %s257 = scalar_select %p256, %s253, 111
      %s258 = smul.addr %s255, 112
      %s259 = sadd.s32 %s257, %s258
      %s260 = smul.addr %s259, 4
      %s261 = scalar_lea.vmem %s0, %s260
      %s262 = smul.u32 56, %s20
      %s263 = sadd.s32 %s20, 1
      %s264 = smul.u32 %s263, 8
      %s265 = smul.u32 7, %s264
      %p266 = scmp.lt.s32.totalorder %s19, 1
      %s267 = scalar_select %p266, %s19, 1
      %p268 = scmp.lt.s32.totalorder %s265, 111
      %s269 = scalar_select %p268, %s265, 111
      %s270 = smul.addr %s267, 112
      %s271 = sadd.s32 %s269, %s270
      %s272 = smul.addr %s271, 4
      %s273 = scalar_lea.vmem %s1, %s272
      %s274 = sadd.s32 %s20, 1
      %s275 = smul.u32 %s274, 8
      %s276 = smul.u32 7, %s275
      %s277 = smul.u32 56, %s20
      %p278 = scmp.lt.s32.totalorder %s19, 1
      %s279 = scalar_select %p278, %s19, 1
      %p280 = scmp.lt.s32.totalorder %s277, 55
      %s281 = scalar_select %p280, %s277, 55
      %s282 = smul.addr %s279, 56
      %s283 = sadd.s32 %s281, %s282
      %s284 = smul.addr %s283, 4
      %s285 = scalar_lea.vmem %s4, %s284
      %s286 = smul.u32 56, %s20
      %v288 = vld [vmem:[%s261] sm:$0xf]
      %v289 = vld [vmem:[%s261 + $0x4] sm:$0xf]
      %v290 = vld [vmem:[%s261 + $0x8] sm:$0xf]
      %v291 = vld [vmem:[%s261 + $0xc] sm:$0xf]
      %v292 = vld [vmem:[%s261 + $0x10] sm:$0xf]
      %v293 = vld [vmem:[%s261 + $0x14] sm:$0xf]
      %v294 = vld [vmem:[%s261 + $0x18] sm:$0xf]
      %v295 = vld [vmem:[%s261 + $0x1c] sm:$0xf]
      %v296 = vld [vmem:[%s261 + $0x20] sm:$0xf]
      %v297 = vld [vmem:[%s261 + $0x24] sm:$0xf]
      %v298 = vld [vmem:[%s261 + $0x28] sm:$0xf]
      %v299 = vld [vmem:[%s261 + $0x2c] sm:$0xf]
      %v300 = vld [vmem:[%s261 + $0x30] sm:$0xf]
      %v301 = vld [vmem:[%s261 + $0x34] sm:$0xf]
      %v302 = vld [vmem:[%s261 + $0x38] sm:$0xf]
      %v303 = vld [vmem:[%s261 + $0x3c] sm:$0xf]
      %v304 = vld [vmem:[%s261 + $0x40] sm:$0xf]
      %v305 = vld [vmem:[%s261 + $0x44] sm:$0xf]
      %v306 = vld [vmem:[%s261 + $0x48] sm:$0xf]
      %v307 = vld [vmem:[%s261 + $0x4c] sm:$0xf]
      %v308 = vld [vmem:[%s261 + $0x50] sm:$0xf]
      %v309 = vld [vmem:[%s261 + $0x54] sm:$0xf]
      %v310 = vld [vmem:[%s261 + $0x58] sm:$0xf]
      %v311 = vld [vmem:[%s261 + $0x5c] sm:$0xf]
      %v312 = vld [vmem:[%s261 + $0x60] sm:$0xf]
      %v313 = vld [vmem:[%s261 + $0x64] sm:$0xf]
      %v314 = vld [vmem:[%s261 + $0x68] sm:$0xf]
      %v315 = vld [vmem:[%s261 + $0x6c] sm:$0xf]
      %v316 = vld [vmem:[%s261 + $0x70] sm:$0xf]
      %v317 = vld [vmem:[%s261 + $0x74] sm:$0xf]
      %v318 = vld [vmem:[%s261 + $0x78] sm:$0xf]
      %v319 = vld [vmem:[%s261 + $0x7c] sm:$0xf]
      %v320 = vld [vmem:[%s261 + $0x80] sm:$0xf]
      %v321 = vld [vmem:[%s261 + $0x84] sm:$0xf]
      %v322 = vld [vmem:[%s261 + $0x88] sm:$0xf]
      %v323 = vld [vmem:[%s261 + $0x8c] sm:$0xf]
      %v324 = vld [vmem:[%s261 + $0x90] sm:$0xf]
      %v325 = vld [vmem:[%s261 + $0x94] sm:$0xf]
      %v326 = vld [vmem:[%s261 + $0x98] sm:$0xf]
      %v327 = vld [vmem:[%s261 + $0x9c] sm:$0xf]
      %v328 = vld [vmem:[%s261 + $0xa0] sm:$0xf]
      %v329 = vld [vmem:[%s261 + $0xa4] sm:$0xf]
      %v330 = vld [vmem:[%s261 + $0xa8] sm:$0xf]
      %v331 = vld [vmem:[%s261 + $0xac] sm:$0xf]
      %v332 = vld [vmem:[%s261 + $0xb0] sm:$0xf]
      %v333 = vld [vmem:[%s261 + $0xb4] sm:$0xf]
      %v334 = vld [vmem:[%s261 + $0xb8] sm:$0xf]
      %v335 = vld [vmem:[%s261 + $0xbc] sm:$0xf]
      %v336 = vld [vmem:[%s261 + $0xc0] sm:$0xf]
      %v337 = vld [vmem:[%s261 + $0xc4] sm:$0xf]
      %v338 = vld [vmem:[%s261 + $0xc8] sm:$0xf]
      %v339 = vld [vmem:[%s261 + $0xcc] sm:$0xf]
      %v340 = vld [vmem:[%s261 + $0xd0] sm:$0xf]
      %v341 = vld [vmem:[%s261 + $0xd4] sm:$0xf]
      %v342 = vld [vmem:[%s261 + $0xd8] sm:$0xf]
      %v343 = vld [vmem:[%s261 + $0xdc] sm:$0xf]
      %v344 = vld [vmem:[%s273] sm:$0xf]
      %v345 = vld [vmem:[%s273 + $0x4] sm:$0xf]
      %v346 = vld [vmem:[%s273 + $0x8] sm:$0xf]
      %v347 = vld [vmem:[%s273 + $0xc] sm:$0xf]
      %v348 = vld [vmem:[%s273 + $0x10] sm:$0xf]
      %v349 = vld [vmem:[%s273 + $0x14] sm:$0xf]
      %v350 = vld [vmem:[%s273 + $0x18] sm:$0xf]
      %vm351 = vcmask 19456
      %352 = vst.msk [vmem:[#allocation2] sm:$0xf] %vm351, %v288
      %353 = vst.msk [vmem:[#allocation2 + $0x4] sm:$0xf] %vm351, %v289
      %354 = vst.msk [vmem:[#allocation2 + $0x8] sm:$0xf] %vm351, %v290
      %355 = vst.msk [vmem:[#allocation2 + $0xc] sm:$0xf] %vm351, %v291
      %356 = vst.msk [vmem:[#allocation2 + $0x10] sm:$0xf] %vm351, %v292
      %357 = vst.msk [vmem:[#allocation2 + $0x14] sm:$0xf] %vm351, %v293
      %358 = vst.msk [vmem:[#allocation2 + $0x18] sm:$0xf] %vm351, %v294
      %359 = vst.msk [vmem:[#allocation2 + $0x1c] sm:$0xf] %vm351, %v295
      %360 = vst.msk [vmem:[#allocation2 + $0x20] sm:$0xf] %vm351, %v296
      %361 = vst.msk [vmem:[#allocation2 + $0x24] sm:$0xf] %vm351, %v297
      %362 = vst.msk [vmem:[#allocation2 + $0x28] sm:$0xf] %vm351, %v298
      %363 = vst.msk [vmem:[#allocation2 + $0x2c] sm:$0xf] %vm351, %v299
      %364 = vst.msk [vmem:[#allocation2 + $0x30] sm:$0xf] %vm351, %v300
      %365 = vst.msk [vmem:[#allocation2 + $0x34] sm:$0xf] %vm351, %v301
      %366 = vst.msk [vmem:[#allocation2 + $0x38] sm:$0xf] %vm351, %v302
      %367 = vst.msk [vmem:[#allocation2 + $0x3c] sm:$0xf] %vm351, %v303
      %368 = vst.msk [vmem:[#allocation2 + $0x40] sm:$0xf] %vm351, %v304
      %369 = vst.msk [vmem:[#allocation2 + $0x44] sm:$0xf] %vm351, %v305
      %370 = vst.msk [vmem:[#allocation2 + $0x48] sm:$0xf] %vm351, %v306
      %371 = vst.msk [vmem:[#allocation2 + $0x4c] sm:$0xf] %vm351, %v307
      %372 = vst.msk [vmem:[#allocation2 + $0x50] sm:$0xf] %vm351, %v308
      %373 = vst.msk [vmem:[#allocation2 + $0x54] sm:$0xf] %vm351, %v309
      %374 = vst.msk [vmem:[#allocation2 + $0x58] sm:$0xf] %vm351, %v310
      %375 = vst.msk [vmem:[#allocation2 + $0x5c] sm:$0xf] %vm351, %v311
      %376 = vst.msk [vmem:[#allocation2 + $0x60] sm:$0xf] %vm351, %v312
      %377 = vst.msk [vmem:[#allocation2 + $0x64] sm:$0xf] %vm351, %v313
      %378 = vst.msk [vmem:[#allocation2 + $0x68] sm:$0xf] %vm351, %v314
      %379 = vst.msk [vmem:[#allocation2 + $0x6c] sm:$0xf] %vm351, %v315
      %380 = vst.msk [vmem:[#allocation2 + $0x70] sm:$0xf] %vm351, %v316
      %381 = vst.msk [vmem:[#allocation2 + $0x74] sm:$0xf] %vm351, %v317
      %382 = vst.msk [vmem:[#allocation2 + $0x78] sm:$0xf] %vm351, %v318
      %383 = vst.msk [vmem:[#allocation2 + $0x7c] sm:$0xf] %vm351, %v319
      %384 = vst.msk [vmem:[#allocation2 + $0x80] sm:$0xf] %vm351, %v320
      %385 = vst.msk [vmem:[#allocation2 + $0x84] sm:$0xf] %vm351, %v321
      %386 = vst.msk [vmem:[#allocation2 + $0x88] sm:$0xf] %vm351, %v322
      %387 = vst.msk [vmem:[#allocation2 + $0x8c] sm:$0xf] %vm351, %v323
      %388 = vst.msk [vmem:[#allocation2 + $0x90] sm:$0xf] %vm351, %v324
      %389 = vst.msk [vmem:[#allocation2 + $0x94] sm:$0xf] %vm351, %v325
      %390 = vst.msk [vmem:[#allocation2 + $0x98] sm:$0xf] %vm351, %v326
      %391 = vst.msk [vmem:[#allocation2 + $0x9c] sm:$0xf] %vm351, %v327
      %392 = vst.msk [vmem:[#allocation2 + $0xa0] sm:$0xf] %vm351, %v328
      %393 = vst.msk [vmem:[#allocation2 + $0xa4] sm:$0xf] %vm351, %v329
      %394 = vst.msk [vmem:[#allocation2 + $0xa8] sm:$0xf] %vm351, %v330
      %395 = vst.msk [vmem:[#allocation2 + $0xac] sm:$0xf] %vm351, %v331
      %396 = vst.msk [vmem:[#allocation2 + $0xb0] sm:$0xf] %vm351, %v332
      %397 = vst.msk [vmem:[#allocation2 + $0xb4] sm:$0xf] %vm351, %v333
      %398 = vst.msk [vmem:[#allocation2 + $0xb8] sm:$0xf] %vm351, %v334
      %399 = vst.msk [vmem:[#allocation2 + $0xbc] sm:$0xf] %vm351, %v335
      %400 = vst.msk [vmem:[#allocation2 + $0xc0] sm:$0xf] %vm351, %v336
      %401 = vst.msk [vmem:[#allocation2 + $0xc4] sm:$0xf] %vm351, %v337
      %402 = vst.msk [vmem:[#allocation2 + $0xc8] sm:$0xf] %vm351, %v338
      %403 = vst.msk [vmem:[#allocation2 + $0xcc] sm:$0xf] %vm351, %v339
      %404 = vst.msk [vmem:[#allocation2 + $0xd0] sm:$0xf] %vm351, %v340
      %405 = vst.msk [vmem:[#allocation2 + $0xd4] sm:$0xf] %vm351, %v341
      %406 = vst.msk [vmem:[#allocation2 + $0xd8] sm:$0xf] %vm351, %v342
      %407 = vst.msk [vmem:[#allocation2 + $0xdc] sm:$0xf] %vm351, %v343
      %408 = vst.msk [vmem:[#allocation2 + $0xe0] sm:$0xf] %vm351, %v344
      %409 = vst.msk [vmem:[#allocation2 + $0xe4] sm:$0xf] %vm351, %v345
      %410 = vst.msk [vmem:[#allocation2 + $0xe8] sm:$0xf] %vm351, %v346
      %411 = vst.msk [vmem:[#allocation2 + $0xec] sm:$0xf] %vm351, %v347
      %412 = vst.msk [vmem:[#allocation2 + $0xf0] sm:$0xf] %vm351, %v348
      %413 = vst.msk [vmem:[#allocation2 + $0xf4] sm:$0xf] %vm351, %v349
      %414 = vst.msk [vmem:[#allocation2 + $0xf8] sm:$0xf] %vm351, %v350
      %v415 = vld [vmem:[#allocation2] sm:$0xf]
      %v416 = vld [vmem:[#allocation2 + $0x4] sm:$0xf]
      %v417 = vld [vmem:[#allocation2 + $0x8] sm:$0xf]
      %v418 = vld [vmem:[#allocation2 + $0xc] sm:$0xf]
      %v419 = vld [vmem:[#allocation2 + $0x10] sm:$0xf]
      %v420 = vld [vmem:[#allocation2 + $0x14] sm:$0xf]
      %v421 = vld [vmem:[#allocation2 + $0x18] sm:$0xf]
      %v422 = vld [vmem:[#allocation2 + $0x1c] sm:$0xf]
      %v423 = vld [vmem:[#allocation2 + $0x20] sm:$0xf]
      %v424 = vld [vmem:[#allocation2 + $0x24] sm:$0xf]
      %v425 = vld [vmem:[#allocation2 + $0x28] sm:$0xf]
      %v426 = vld [vmem:[#allocation2 + $0x2c] sm:$0xf]
      %v427 = vld [vmem:[#allocation2 + $0x30] sm:$0xf]
      %v428 = vld [vmem:[#allocation2 + $0x34] sm:$0xf]
      %v429 = vld [vmem:[#allocation2 + $0x38] sm:$0xf]
      %v430 = vld [vmem:[#allocation2 + $0x3c] sm:$0xf]
      %v431 = vld [vmem:[#allocation2 + $0x40] sm:$0xf]
      %v432 = vld [vmem:[#allocation2 + $0x44] sm:$0xf]
      %v433 = vld [vmem:[#allocation2 + $0x48] sm:$0xf]
      %v434 = vld [vmem:[#allocation2 + $0x4c] sm:$0xf]
      %v435 = vld [vmem:[#allocation2 + $0x50] sm:$0xf]
      %v436 = vld [vmem:[#allocation2 + $0x54] sm:$0xf]
      %v437 = vld [vmem:[#allocation2 + $0x58] sm:$0xf]
      %v438 = vld [vmem:[#allocation2 + $0x5c] sm:$0xf]
      %v439 = vld [vmem:[#allocation2 + $0x60] sm:$0xf]
      %v440 = vld [vmem:[#allocation2 + $0x64] sm:$0xf]
      %v441 = vld [vmem:[#allocation2 + $0x68] sm:$0xf]
      %v442 = vld [vmem:[#allocation2 + $0x6c] sm:$0xf]
      %v443 = vld [vmem:[#allocation2 + $0x70] sm:$0xf]
      %v444 = vld [vmem:[#allocation2 + $0x74] sm:$0xf]
      %v445 = vld [vmem:[#allocation2 + $0x78] sm:$0xf]
      %v446 = vld [vmem:[#allocation2 + $0x7c] sm:$0xf]
      %v447 = vld [vmem:[#allocation2 + $0x80] sm:$0xf]
      %v448 = vld [vmem:[#allocation2 + $0x84] sm:$0xf]
      %v449 = vld [vmem:[#allocation2 + $0x88] sm:$0xf]
      %v450 = vld [vmem:[#allocation2 + $0x8c] sm:$0xf]
      %v451 = vld [vmem:[#allocation2 + $0x90] sm:$0xf]
      %v452 = vld [vmem:[#allocation2 + $0x94] sm:$0xf]
      %v453 = vld [vmem:[#allocation2 + $0x98] sm:$0xf]
      %v454 = vld [vmem:[#allocation2 + $0x9c] sm:$0xf]
      %v455 = vld [vmem:[#allocation2 + $0xa0] sm:$0xf]
      %v456 = vld [vmem:[#allocation2 + $0xa4] sm:$0xf]
      %v457 = vld [vmem:[#allocation2 + $0xa8] sm:$0xf]
      %v458 = vld [vmem:[#allocation2 + $0xac] sm:$0xf]
      %v459 = vld [vmem:[#allocation2 + $0xb0] sm:$0xf]
      %v460 = vld [vmem:[#allocation2 + $0xb4] sm:$0xf]
      %v461 = vld [vmem:[#allocation2 + $0xb8] sm:$0xf]
      %v462 = vld [vmem:[#allocation2 + $0xbc] sm:$0xf]
      %v463 = vld [vmem:[#allocation2 + $0xc0] sm:$0xf]
      %v464 = vld [vmem:[#allocation2 + $0xc4] sm:$0xf]
      %v465 = vld [vmem:[#allocation2 + $0xc8] sm:$0xf]
      %v466 = vld [vmem:[#allocation2 + $0xcc] sm:$0xf]
      %v467 = vld [vmem:[#allocation2 + $0xd0] sm:$0xf]
      %v468 = vld [vmem:[#allocation2 + $0xd4] sm:$0xf]
      %v469 = vld [vmem:[#allocation2 + $0xd8] sm:$0xf]
      %v470 = vld [vmem:[#allocation2 + $0xdc] sm:$0xf]
      %v471 = vld [vmem:[%s2] sm:$0x3]
      %v528 = vunpack.c.l.b16 %v415
      %v529 = vunpack.c.l.b16 %v416
      %v530 = vunpack.c.l.b16 %v417
      %v531 = vunpack.c.l.b16 %v418
      %v532 = vunpack.c.l.b16 %v419
      %v533 = vunpack.c.l.b16 %v420
      %v534 = vunpack.c.l.b16 %v421
      %v535 = vunpack.c.l.b16 %v422
      %v536 = vunpack.c.l.b16 %v423
      %v537 = vunpack.c.l.b16 %v424
      %v538 = vunpack.c.l.b16 %v425
      %v539 = vunpack.c.l.b16 %v426
      %v540 = vunpack.c.l.b16 %v427
      %v541 = vunpack.c.l.b16 %v428
      %v542 = vunpack.c.l.b16 %v429
      %v543 = vunpack.c.l.b16 %v430
      %v544 = vunpack.c.l.b16 %v431
      %v545 = vunpack.c.l.b16 %v432
      %v546 = vunpack.c.l.b16 %v433
      %v547 = vunpack.c.l.b16 %v434
      %v548 = vunpack.c.l.b16 %v435
      %v549 = vunpack.c.l.b16 %v436
      %v550 = vunpack.c.l.b16 %v437
      %v551 = vunpack.c.l.b16 %v438
      %v552 = vunpack.c.l.b16 %v439
      %v553 = vunpack.c.l.b16 %v440
      %v554 = vunpack.c.l.b16 %v441
      %v555 = vunpack.c.l.b16 %v442
      %v556 = vunpack.c.l.b16 %v443
      %v557 = vunpack.c.l.b16 %v444
      %v558 = vunpack.c.l.b16 %v445
      %v559 = vunpack.c.l.b16 %v446
      %v560 = vunpack.c.l.b16 %v447
      %v561 = vunpack.c.l.b16 %v448
      %v562 = vunpack.c.l.b16 %v449
      %v563 = vunpack.c.l.b16 %v450
      %v564 = vunpack.c.l.b16 %v451
      %v565 = vunpack.c.l.b16 %v452
      %v566 = vunpack.c.l.b16 %v453
      %v567 = vunpack.c.l.b16 %v454
      %v568 = vunpack.c.l.b16 %v455
      %v569 = vunpack.c.l.b16 %v456
      %v570 = vunpack.c.l.b16 %v457
      %v571 = vunpack.c.l.b16 %v458
      %v572 = vunpack.c.l.b16 %v459
      %v573 = vunpack.c.l.b16 %v460
      %v574 = vunpack.c.l.b16 %v461
      %v575 = vunpack.c.l.b16 %v462
      %v576 = vunpack.c.l.b16 %v463
      %v577 = vunpack.c.l.b16 %v464
      %v578 = vunpack.c.l.b16 %v465
      %v579 = vunpack.c.l.b16 %v466
      %v580 = vunpack.c.l.b16 %v467
      %v581 = vunpack.c.l.b16 %v468
      %v582 = vunpack.c.l.b16 %v469
      %v583 = vunpack.c.l.b16 %v470
      %v584 = vpack.c.b16 %v529, %v528
      %v585 = vpack.c.b16 %v531, %v530
      %v586 = vpack.c.b16 %v533, %v532
      %v587 = vpack.c.b16 %v535, %v534
      %v588 = vpack.c.b16 %v537, %v536
      %v589 = vpack.c.b16 %v539, %v538
      %v590 = vpack.c.b16 %v541, %v540
      %v591 = vpack.c.b16 %v543, %v542
      %v592 = vpack.c.b16 %v545, %v544
      %v593 = vpack.c.b16 %v547, %v546
      %v594 = vpack.c.b16 %v549, %v548
      %v595 = vpack.c.b16 %v551, %v550
      %v596 = vpack.c.b16 %v553, %v552
      %v597 = vpack.c.b16 %v555, %v554
      %v598 = vpack.c.b16 %v557, %v556
      %v599 = vpack.c.b16 %v559, %v558
      %v600 = vpack.c.b16 %v561, %v560
      %v601 = vpack.c.b16 %v563, %v562
      %v602 = vpack.c.b16 %v565, %v564
      %v603 = vpack.c.b16 %v567, %v566
      %v604 = vpack.c.b16 %v569, %v568
      %v605 = vpack.c.b16 %v571, %v570
      %v606 = vpack.c.b16 %v573, %v572
      %v607 = vpack.c.b16 %v575, %v574
      %v608 = vpack.c.b16 %v577, %v576
      %v609 = vpack.c.b16 %v579, %v578
      %v610 = vpack.c.b16 %v581, %v580
      %v611 = vpack.c.b16 %v583, %v582
      %vm612 = vcmask 23552
      %v614 = vsel %vm612, %v584, 0
      %v617 = vsel %vm612, %v585, 0
      %v620 = vsel %vm612, %v586, 0
      %v623 = vsel %vm612, %v587, 0
      %v626 = vsel %vm612, %v588, 0
      %v629 = vsel %vm612, %v589, 0
      %v632 = vsel %vm612, %v590, 0
      %v635 = vsel %vm612, %v591, 0
      %v638 = vsel %vm612, %v592, 0
      %v641 = vsel %vm612, %v593, 0
      %v644 = vsel %vm612, %v594, 0
      %v647 = vsel %vm612, %v595, 0
      %v650 = vsel %vm612, %v596, 0
      %v653 = vsel %vm612, %v597, 0
      %v656 = vsel %vm612, %v598, 0
      %v659 = vsel %vm612, %v599, 0
      %v662 = vsel %vm612, %v600, 0
      %v665 = vsel %vm612, %v601, 0
      %v668 = vsel %vm612, %v602, 0
      %v671 = vsel %vm612, %v603, 0
      %v674 = vsel %vm612, %v604, 0
      %v677 = vsel %vm612, %v605, 0
      %v680 = vsel %vm612, %v606, 0
      %v683 = vsel %vm612, %v607, 0
      %v686 = vsel %vm612, %v608, 0
      %v689 = vsel %vm612, %v609, 0
      %v692 = vsel %vm612, %v610, 0
      %v695 = vsel %vm612, %v611, 0
      %vm697 = vcmask 1040384
      %vm698 = vcmask 1041408
      %v699 = vsel %vm697, 4294967295, 65535
      %v700 = vsel %vm698, %v699, 0
      %v702 = vand.u32 %v471, %v700
      %704 = vmatprep.subr.bf16.mxu0 0
      %705 = vmatpush1.bf16.msra.mxu0 0
      %706 = vmatprep.subr.bf16.mxu0 0
      %707 = vmatpush1.bf16.msra.mxu0 0
      %708 = vmatprep.subr.bf16.mxu0 0
      %709 = vmatpush1.bf16.msra.mxu0 0
      %710 = vmatprep.subr.bf16.mxu0 0
      %711 = vmatpush1.bf16.msra.mxu0 0
      %712 = vmatprep.subr.bf16.mxu0 0
      %713 = vmatpush1.bf16.msra.mxu0 0
      %714 = vmatprep.subr.bf16.mxu0 0
      %715 = vmatpush1.bf16.msra.mxu0 0
      %716 = vmatprep.subr.bf16.mxu0 0
      %717 = vmatpush1.bf16.msra.mxu0 0
      %718 = vmatprep.subr.bf16.mxu0 0
      %719 = vmatpush1.bf16.msra.mxu0 %v702
      %720 = vmatprep.subr.bf16.mxu0 0
      %721 = vmatpush2.bf16.msra.mxu0 0
      %722 = vmatprep.subr.bf16.mxu0 0
      %723 = vmatpush2.bf16.msra.mxu0 0
      %724 = vmatprep.subr.bf16.mxu0 0
      %725 = vmatpush2.bf16.msra.mxu0 0
      %726 = vmatprep.subr.bf16.mxu0 0
      %727 = vmatpush2.bf16.msra.mxu0 0
      %728 = vmatprep.subr.bf16.mxu0 0
      %729 = vmatpush2.bf16.msra.mxu0 0
      %730 = vmatprep.subr.bf16.mxu0 0
      %731 = vmatpush2.bf16.msra.mxu0 0
      %732 = vmatprep.subr.bf16.mxu0 0
      %733 = vmatpush2.bf16.msra.mxu0 0
      %734 = vmatprep.subr.bf16.mxu0 0
      %735 = vmatpush2.bf16.msra.mxu0 0
      %736 = vmatprep.mubr.bf16.mxu0 0
      %737 = vmatmul.mubr.bf16.gmra.mxu0 %v614
      %v738 = vpop.f32.mrf.mxu0
      %v739 = vadd.f32 0.0, %v738
      %v740 = vpop.f32.mrf.mxu0
      %v741 = vpop.f32.mrf.mxu0
      %v742 = vadd.f32 0.0, %v741
      %v743 = vpop.f32.mrf.mxu0
      %744 = vmatprep.mubr.bf16.mxu0 0
      %745 = vmatmul.mubr.bf16.gmra.mxu0 %v617
      %v746 = vpop.f32.mrf.mxu0
      %v747 = vadd.f32 0.0, %v746
      %v748 = vpop.f32.mrf.mxu0
      %v749 = vpop.f32.mrf.mxu0
      %v750 = vadd.f32 0.0, %v749
      %v751 = vpop.f32.mrf.mxu0
      %752 = vmatprep.mubr.bf16.mxu0 0
      %753 = vmatmul.mubr.bf16.gmra.mxu0 %v620
      %v754 = vpop.f32.mrf.mxu0
      %v755 = vadd.f32 0.0, %v754
      %v756 = vpop.f32.mrf.mxu0
      %v757 = vpop.f32.mrf.mxu0
      %v758 = vadd.f32 0.0, %v757
      %v759 = vpop.f32.mrf.mxu0
      %760 = vmatprep.mubr.bf16.mxu0 0
      %761 = vmatmul.mubr.bf16.gmra.mxu0 %v623
      %v762 = vpop.f32.mrf.mxu0
      %v763 = vadd.f32 0.0, %v762
      %v764 = vpop.f32.mrf.mxu0
      %v765 = vpop.f32.mrf.mxu0
      %v766 = vadd.f32 0.0, %v765
      %v767 = vpop.f32.mrf.mxu0
      %768 = vmatprep.mubr.bf16.mxu0 0
      %769 = vmatmul.mubr.bf16.gmra.mxu0 %v626
      %v770 = vpop.f32.mrf.mxu0
      %v771 = vadd.f32 0.0, %v770
      %v772 = vpop.f32.mrf.mxu0
      %v773 = vpop.f32.mrf.mxu0
      %v774 = vadd.f32 0.0, %v773
      %v775 = vpop.f32.mrf.mxu0
      %776 = vmatprep.mubr.bf16.mxu0 0
      %777 = vmatmul.mubr.bf16.gmra.mxu0 %v629
      %v778 = vpop.f32.mrf.mxu0
      %v779 = vadd.f32 0.0, %v778
      %v780 = vpop.f32.mrf.mxu0
      %v781 = vpop.f32.mrf.mxu0
      %v782 = vadd.f32 0.0, %v781
      %v783 = vpop.f32.mrf.mxu0
      %784 = vmatprep.mubr.bf16.mxu0 0
      %785 = vmatmul.mubr.bf16.gmra.mxu0 %v632
      %v786 = vpop.f32.mrf.mxu0
      %v787 = vadd.f32 0.0, %v786
      %v788 = vpop.f32.mrf.mxu0
      %v789 = vpop.f32.mrf.mxu0
      %v790 = vadd.f32 0.0, %v789
      %v791 = vpop.f32.mrf.mxu0
      %792 = vmatprep.mubr.bf16.mxu0 0
      %793 = vmatmul.mubr.bf16.gmra.mxu0 %v635
      %v794 = vpop.f32.mrf.mxu0
      %v795 = vadd.f32 0.0, %v794
      %v796 = vpop.f32.mrf.mxu0
      %v797 = vpop.f32.mrf.mxu0
      %v798 = vadd.f32 0.0, %v797
      %v799 = vpop.f32.mrf.mxu0
      %800 = vmatprep.mubr.bf16.mxu0 0
      %801 = vmatmul.mubr.bf16.gmra.mxu0 %v638
      %v802 = vpop.f32.mrf.mxu0
      %v803 = vadd.f32 0.0, %v802
      %v804 = vpop.f32.mrf.mxu0
      %v805 = vpop.f32.mrf.mxu0
      %v806 = vadd.f32 0.0, %v805
      %v807 = vpop.f32.mrf.mxu0
      %808 = vmatprep.mubr.bf16.mxu0 0
      %809 = vmatmul.mubr.bf16.gmra.mxu0 %v641
      %v810 = vpop.f32.mrf.mxu0
      %v811 = vadd.f32 0.0, %v810
      %v812 = vpop.f32.mrf.mxu0
      %v813 = vpop.f32.mrf.mxu0
      %v814 = vadd.f32 0.0, %v813
      %v815 = vpop.f32.mrf.mxu0
      %816 = vmatprep.mubr.bf16.mxu0 0
      %817 = vmatmul.mubr.bf16.gmra.mxu0 %v644
      %v818 = vpop.f32.mrf.mxu0
      %v819 = vadd.f32 0.0, %v818
      %v820 = vpop.f32.mrf.mxu0
      %v821 = vpop.f32.mrf.mxu0
      %v822 = vadd.f32 0.0, %v821
      %v823 = vpop.f32.mrf.mxu0
      %824 = vmatprep.mubr.bf16.mxu0 0
      %825 = vmatmul.mubr.bf16.gmra.mxu0 %v647
      %v826 = vpop.f32.mrf.mxu0
      %v827 = vadd.f32 0.0, %v826
      %v828 = vpop.f32.mrf.mxu0
      %v829 = vpop.f32.mrf.mxu0
      %v830 = vadd.f32 0.0, %v829
      %v831 = vpop.f32.mrf.mxu0
      %832 = vmatprep.mubr.bf16.mxu0 0
      %833 = vmatmul.mubr.bf16.gmra.mxu0 %v650
      %v834 = vpop.f32.mrf.mxu0
      %v835 = vadd.f32 0.0, %v834
      %v836 = vpop.f32.mrf.mxu0
      %v837 = vpop.f32.mrf.mxu0
      %v838 = vadd.f32 0.0, %v837
      %v839 = vpop.f32.mrf.mxu0
      %840 = vmatprep.mubr.bf16.mxu0 0
      %841 = vmatmul.mubr.bf16.gmra.mxu0 %v653
      %v842 = vpop.f32.mrf.mxu0
      %v843 = vadd.f32 0.0, %v842
      %v844 = vpop.f32.mrf.mxu0
      %v845 = vpop.f32.mrf.mxu0
      %v846 = vadd.f32 0.0, %v845
      %v847 = vpop.f32.mrf.mxu0
      %848 = vmatprep.mubr.bf16.mxu0 0
      %849 = vmatmul.mubr.bf16.gmra.mxu0 %v656
      %v850 = vpop.f32.mrf.mxu0
      %v851 = vadd.f32 0.0, %v850
      %v852 = vpop.f32.mrf.mxu0
      %v853 = vpop.f32.mrf.mxu0
      %v854 = vadd.f32 0.0, %v853
      %v855 = vpop.f32.mrf.mxu0
      %856 = vmatprep.mubr.bf16.mxu0 0
      %857 = vmatmul.mubr.bf16.gmra.mxu0 %v659
      %v858 = vpop.f32.mrf.mxu0
      %v859 = vadd.f32 0.0, %v858
      %v860 = vpop.f32.mrf.mxu0
      %v861 = vpop.f32.mrf.mxu0
      %v862 = vadd.f32 0.0, %v861
      %v863 = vpop.f32.mrf.mxu0
      %864 = vmatprep.mubr.bf16.mxu0 0
      %865 = vmatmul.mubr.bf16.gmra.mxu0 %v662
      %v866 = vpop.f32.mrf.mxu0
      %v867 = vadd.f32 0.0, %v866
      %v868 = vpop.f32.mrf.mxu0
      %v869 = vpop.f32.mrf.mxu0
      %v870 = vadd.f32 0.0, %v869
      %v871 = vpop.f32.mrf.mxu0
      %872 = vmatprep.mubr.bf16.mxu0 0
      %873 = vmatmul.mubr.bf16.gmra.mxu0 %v665
      %v874 = vpop.f32.mrf.mxu0
      %v875 = vadd.f32 0.0, %v874
      %v876 = vpop.f32.mrf.mxu0
      %v877 = vpop.f32.mrf.mxu0
      %v878 = vadd.f32 0.0, %v877
      %v879 = vpop.f32.mrf.mxu0
      %880 = vmatprep.mubr.bf16.mxu0 0
      %881 = vmatmul.mubr.bf16.gmra.mxu0 %v668
      %v882 = vpop.f32.mrf.mxu0
      %v883 = vadd.f32 0.0, %v882
      %v884 = vpop.f32.mrf.mxu0
      %v885 = vpop.f32.mrf.mxu0
      %v886 = vadd.f32 0.0, %v885
      %v887 = vpop.f32.mrf.mxu0
      %888 = vmatprep.mubr.bf16.mxu0 0
      %889 = vmatmul.mubr.bf16.gmra.mxu0 %v671
      %v890 = vpop.f32.mrf.mxu0
      %v891 = vadd.f32 0.0, %v890
      %v892 = vpop.f32.mrf.mxu0
      %v893 = vpop.f32.mrf.mxu0
      %v894 = vadd.f32 0.0, %v893
      %v895 = vpop.f32.mrf.mxu0
      %896 = vmatprep.mubr.bf16.mxu0 0
      %897 = vmatmul.mubr.bf16.gmra.mxu0 %v674
      %v898 = vpop.f32.mrf.mxu0
      %v899 = vadd.f32 0.0, %v898
      %v900 = vpop.f32.mrf.mxu0
      %v901 = vpop.f32.mrf.mxu0
      %v902 = vadd.f32 0.0, %v901
      %v903 = vpop.f32.mrf.mxu0
      %904 = vmatprep.mubr.bf16.mxu0 0
      %905 = vmatmul.mubr.bf16.gmra.mxu0 %v677
      %v906 = vpop.f32.mrf.mxu0
      %v907 = vadd.f32 0.0, %v906
      %v908 = vpop.f32.mrf.mxu0
      %v909 = vpop.f32.mrf.mxu0
      %v910 = vadd.f32 0.0, %v909
      %v911 = vpop.f32.mrf.mxu0
      %912 = vmatprep.mubr.bf16.mxu0 0
      %913 = vmatmul.mubr.bf16.gmra.mxu0 %v680
      %v914 = vpop.f32.mrf.mxu0
      %v915 = vadd.f32 0.0, %v914
      %v916 = vpop.f32.mrf.mxu0
      %v917 = vpop.f32.mrf.mxu0
      %v918 = vadd.f32 0.0, %v917
      %v919 = vpop.f32.mrf.mxu0
      %920 = vmatprep.mubr.bf16.mxu0 0
      %921 = vmatmul.mubr.bf16.gmra.mxu0 %v683
      %v922 = vpop.f32.mrf.mxu0
      %v923 = vadd.f32 0.0, %v922
      %v924 = vpop.f32.mrf.mxu0
      %v925 = vpop.f32.mrf.mxu0
      %v926 = vadd.f32 0.0, %v925
      %v927 = vpop.f32.mrf.mxu0
      %928 = vmatprep.mubr.bf16.mxu0 0
      %929 = vmatmul.mubr.bf16.gmra.mxu0 %v686
      %v930 = vpop.f32.mrf.mxu0
      %v931 = vadd.f32 0.0, %v930
      %v932 = vpop.f32.mrf.mxu0
      %v933 = vpop.f32.mrf.mxu0
      %v934 = vadd.f32 0.0, %v933
      %v935 = vpop.f32.mrf.mxu0
      %936 = vmatprep.mubr.bf16.mxu0 0
      %937 = vmatmul.mubr.bf16.gmra.mxu0 %v689
      %v938 = vpop.f32.mrf.mxu0
      %v939 = vadd.f32 0.0, %v938
      %v940 = vpop.f32.mrf.mxu0
      %v941 = vpop.f32.mrf.mxu0
      %v942 = vadd.f32 0.0, %v941
      %v943 = vpop.f32.mrf.mxu0
      %944 = vmatprep.mubr.bf16.mxu0 0
      %945 = vmatmul.mubr.bf16.gmra.mxu0 %v692
      %v946 = vpop.f32.mrf.mxu0
      %v947 = vadd.f32 0.0, %v946
      %v948 = vpop.f32.mrf.mxu0
      %v949 = vpop.f32.mrf.mxu0
      %v950 = vadd.f32 0.0, %v949
      %v951 = vpop.f32.mrf.mxu0
      %952 = vmatprep.mubr.bf16.mxu0 0
      %953 = vmatmul.mubr.bf16.gmra.mxu0 %v695
      %v954 = vpop.f32.mrf.mxu0
      %v955 = vadd.f32 0.0, %v954
      %v956 = vpop.f32.mrf.mxu0
      %v957 = vpop.f32.mrf.mxu0
      %v958 = vadd.f32 0.0, %v957
      %v959 = vpop.f32.mrf.mxu0
      %960 = vdwg.mxu0
      %vm961 = vcmask 523264
      %962 = vst.msk [vmem:[#allocation3] sm:$0xff] %vm961, %v739
      %963 = vst.msk [vmem:[#allocation3 + $0x8] sm:$0xff] %vm961, %v742
      %964 = vst.msk [vmem:[#allocation3 + $0x10] sm:$0xff] %vm961, %v747
      %965 = vst.msk [vmem:[#allocation3 + $0x18] sm:$0xff] %vm961, %v750
      %966 = vst.msk [vmem:[#allocation3 + $0x20] sm:$0xff] %vm961, %v755
      %967 = vst.msk [vmem:[#allocation3 + $0x28] sm:$0xff] %vm961, %v758
      %968 = vst.msk [vmem:[#allocation3 + $0x30] sm:$0xff] %vm961, %v763
      %969 = vst.msk [vmem:[#allocation3 + $0x38] sm:$0xff] %vm961, %v766
      %970 = vst.msk [vmem:[#allocation3 + $0x40] sm:$0xff] %vm961, %v771
      %971 = vst.msk [vmem:[#allocation3 + $0x48] sm:$0xff] %vm961, %v774
      %972 = vst.msk [vmem:[#allocation3 + $0x50] sm:$0xff] %vm961, %v779
      %973 = vst.msk [vmem:[#allocation3 + $0x58] sm:$0xff] %vm961, %v782
      %974 = vst.msk [vmem:[#allocation3 + $0x60] sm:$0xff] %vm961, %v787
      %975 = vst.msk [vmem:[#allocation3 + $0x68] sm:$0xff] %vm961, %v790
      %976 = vst.msk [vmem:[#allocation3 + $0x70] sm:$0xff] %vm961, %v795
      %977 = vst.msk [vmem:[#allocation3 + $0x78] sm:$0xff] %vm961, %v798
      %978 = vst.msk [vmem:[#allocation3 + $0x80] sm:$0xff] %vm961, %v803
      %979 = vst.msk [vmem:[#allocation3 + $0x88] sm:$0xff] %vm961, %v806
      %980 = vst.msk [vmem:[#allocation3 + $0x90] sm:$0xff] %vm961, %v811
      %981 = vst.msk [vmem:[#allocation3 + $0x98] sm:$0xff] %vm961, %v814
      %982 = vst.msk [vmem:[#allocation3 + $0xa0] sm:$0xff] %vm961, %v819
      %983 = vst.msk [vmem:[#allocation3 + $0xa8] sm:$0xff] %vm961, %v822
      %984 = vst.msk [vmem:[#allocation3 + $0xb0] sm:$0xff] %vm961, %v827
      %985 = vst.msk [vmem:[#allocation3 + $0xb8] sm:$0xff] %vm961, %v830
      %986 = vst.msk [vmem:[#allocation3 + $0xc0] sm:$0xff] %vm961, %v835
      %987 = vst.msk [vmem:[#allocation3 + $0xc8] sm:$0xff] %vm961, %v838
      %988 = vst.msk [vmem:[#allocation3 + $0xd0] sm:$0xff] %vm961, %v843
      %989 = vst.msk [vmem:[#allocation3 + $0xd8] sm:$0xff] %vm961, %v846
      %990 = vst.msk [vmem:[#allocation3 + $0xe0] sm:$0xff] %vm961, %v851
      %991 = vst.msk [vmem:[#allocation3 + $0xe8] sm:$0xff] %vm961, %v854
      %992 = vst.msk [vmem:[#allocation3 + $0xf0] sm:$0xff] %vm961, %v859
      %993 = vst.msk [vmem:[#allocation3 + $0xf8] sm:$0xff] %vm961, %v862
      %994 = vst.msk [vmem:[#allocation3 + $0x100] sm:$0xff] %vm961, %v867
      %995 = vst.msk [vmem:[#allocation3 + $0x108] sm:$0xff] %vm961, %v870
      %996 = vst.msk [vmem:[#allocation3 + $0x110] sm:$0xff] %vm961, %v875
      %997 = vst.msk [vmem:[#allocation3 + $0x118] sm:$0xff] %vm961, %v878
      %998 = vst.msk [vmem:[#allocation3 + $0x120] sm:$0xff] %vm961, %v883
      %999 = vst.msk [vmem:[#allocation3 + $0x128] sm:$0xff] %vm961, %v886
      %1000 = vst.msk [vmem:[#allocation3 + $0x130] sm:$0xff] %vm961, %v891
      %1001 = vst.msk [vmem:[#allocation3 + $0x138] sm:$0xff] %vm961, %v894
      %1002 = vst.msk [vmem:[#allocation3 + $0x140] sm:$0xff] %vm961, %v899
      %1003 = vst.msk [vmem:[#allocation3 + $0x148] sm:$0xff] %vm961, %v902
      %1004 = vst.msk [vmem:[#allocation3 + $0x150] sm:$0xff] %vm961, %v907
      %1005 = vst.msk [vmem:[#allocation3 + $0x158] sm:$0xff] %vm961, %v910
      %1006 = vst.msk [vmem:[#allocation3 + $0x160] sm:$0xff] %vm961, %v915
      %1007 = vst.msk [vmem:[#allocation3 + $0x168] sm:$0xff] %vm961, %v918
      %1008 = vst.msk [vmem:[#allocation3 + $0x170] sm:$0xff] %vm961, %v923
      %1009 = vst.msk [vmem:[#allocation3 + $0x178] sm:$0xff] %vm961, %v926
      %1010 = vst.msk [vmem:[#allocation3 + $0x180] sm:$0xff] %vm961, %v931
      %1011 = vst.msk [vmem:[#allocation3 + $0x188] sm:$0xff] %vm961, %v934
      %1012 = vst.msk [vmem:[#allocation3 + $0x190] sm:$0xff] %vm961, %v939
      %1013 = vst.msk [vmem:[#allocation3 + $0x198] sm:$0xff] %vm961, %v942
      %1014 = vst.msk [vmem:[#allocation3 + $0x1a0] sm:$0xff] %vm961, %v947
      %1015 = vst.msk [vmem:[#allocation3 + $0x1a8] sm:$0xff] %vm961, %v950
      %1016 = vst.msk [vmem:[#allocation3 + $0x1b0] sm:$0xff] %vm961, %v955
      %1017 = vst.msk [vmem:[#allocation3 + $0x1b8] sm:$0xff] %vm961, %v958
      %v1018 = vld [vmem:[#allocation2] sm:$0xf]
      %v1019 = vld [vmem:[#allocation2 + $0x4] sm:$0xf]
      %v1020 = vld [vmem:[#allocation2 + $0x8] sm:$0xf]
      %v1021 = vld [vmem:[#allocation2 + $0xc] sm:$0xf]
      %v1022 = vld [vmem:[#allocation2 + $0x10] sm:$0xf]
      %v1023 = vld [vmem:[#allocation2 + $0x14] sm:$0xf]
      %v1024 = vld [vmem:[#allocation2 + $0x18] sm:$0xf]
      %v1025 = vld [vmem:[#allocation2 + $0x1c] sm:$0xf]
      %v1026 = vld [vmem:[#allocation2 + $0x20] sm:$0xf]
      %v1027 = vld [vmem:[#allocation2 + $0x24] sm:$0xf]
      %v1028 = vld [vmem:[#allocation2 + $0x28] sm:$0xf]
      %v1029 = vld [vmem:[#allocation2 + $0x2c] sm:$0xf]
      %v1030 = vld [vmem:[#allocation2 + $0x30] sm:$0xf]
      %v1031 = vld [vmem:[#allocation2 + $0x34] sm:$0xf]
      %v1032 = vld [vmem:[#allocation2 + $0x38] sm:$0xf]
      %v1033 = vld [vmem:[#allocation2 + $0x3c] sm:$0xf]
      %v1034 = vld [vmem:[#allocation2 + $0x40] sm:$0xf]
      %v1035 = vld [vmem:[#allocation2 + $0x44] sm:$0xf]
      %v1036 = vld [vmem:[#allocation2 + $0x48] sm:$0xf]
      %v1037 = vld [vmem:[#allocation2 + $0x4c] sm:$0xf]
      %v1038 = vld [vmem:[#allocation2 + $0x50] sm:$0xf]
      %v1039 = vld [vmem:[#allocation2 + $0x54] sm:$0xf]
      %v1040 = vld [vmem:[#allocation2 + $0x58] sm:$0xf]
      %v1041 = vld [vmem:[#allocation2 + $0x5c] sm:$0xf]
      %v1042 = vld [vmem:[#allocation2 + $0x60] sm:$0xf]
      %v1043 = vld [vmem:[#allocation2 + $0x64] sm:$0xf]
      %v1044 = vld [vmem:[#allocation2 + $0x68] sm:$0xf]
      %v1045 = vld [vmem:[#allocation2 + $0x6c] sm:$0xf]
      %v1046 = vld [vmem:[#allocation2 + $0x70] sm:$0xf]
      %v1047 = vld [vmem:[#allocation2 + $0x74] sm:$0xf]
      %v1048 = vld [vmem:[#allocation2 + $0x78] sm:$0xf]
      %v1049 = vld [vmem:[#allocation2 + $0x7c] sm:$0xf]
      %v1050 = vld [vmem:[#allocation2 + $0x80] sm:$0xf]
      %v1051 = vld [vmem:[#allocation2 + $0x84] sm:$0xf]
      %v1052 = vld [vmem:[#allocation2 + $0x88] sm:$0xf]
      %v1053 = vld [vmem:[#allocation2 + $0x8c] sm:$0xf]
      %v1054 = vld [vmem:[#allocation2 + $0x90] sm:$0xf]
      %v1055 = vld [vmem:[#allocation2 + $0x94] sm:$0xf]
      %v1056 = vld [vmem:[#allocation2 + $0x98] sm:$0xf]
      %v1057 = vld [vmem:[#allocation2 + $0x9c] sm:$0xf]
      %v1058 = vld [vmem:[#allocation2 + $0xa0] sm:$0xf]
      %v1059 = vld [vmem:[#allocation2 + $0xa4] sm:$0xf]
      %v1060 = vld [vmem:[#allocation2 + $0xa8] sm:$0xf]
      %v1061 = vld [vmem:[#allocation2 + $0xac] sm:$0xf]
      %v1062 = vld [vmem:[#allocation2 + $0xb0] sm:$0xf]
      %v1063 = vld [vmem:[#allocation2 + $0xb4] sm:$0xf]
      %v1064 = vld [vmem:[#allocation2 + $0xb8] sm:$0xf]
      %v1065 = vld [vmem:[#allocation2 + $0xbc] sm:$0xf]
      %v1066 = vld [vmem:[#allocation2 + $0xc0] sm:$0xf]
      %v1067 = vld [vmem:[#allocation2 + $0xc4] sm:$0xf]
      %v1068 = vld [vmem:[#allocation2 + $0xc8] sm:$0xf]
      %v1069 = vld [vmem:[#allocation2 + $0xcc] sm:$0xf]
      %v1070 = vld [vmem:[#allocation2 + $0xd0] sm:$0xf]
      %v1071 = vld [vmem:[#allocation2 + $0xd4] sm:$0xf]
      %v1072 = vld [vmem:[#allocation2 + $0xd8] sm:$0xf]
      %v1073 = vld [vmem:[#allocation2 + $0xdc] sm:$0xf]
      %v1074 = vld [vmem:[#allocation2 + $0xe0] sm:$0x1]
      %s1075 = scalar_lea.vmem %s2, 2
      %v1076 = vld [vmem:[%s1075] sm:$0x3]
      %v1134 = vunpack.c.l.b16 %v1018
      %v1135 = vunpack.c.l.b16 %v1019
      %v1136 = vunpack.c.l.b16 %v1020
      %v1137 = vunpack.c.l.b16 %v1021
      %v1138 = vunpack.c.l.b16 %v1022
      %v1139 = vunpack.c.l.b16 %v1023
      %v1140 = vunpack.c.l.b16 %v1024
      %v1141 = vunpack.c.l.b16 %v1025
      %v1142 = vunpack.c.l.b16 %v1026
      %v1143 = vunpack.c.l.b16 %v1027
      %v1144 = vunpack.c.l.b16 %v1028
      %v1145 = vunpack.c.l.b16 %v1029
      %v1146 = vunpack.c.l.b16 %v1030
      %v1147 = vunpack.c.l.b16 %v1031
      %v1148 = vunpack.c.l.b16 %v1032
      %v1149 = vunpack.c.l.b16 %v1033
      %v1150 = vunpack.c.l.b16 %v1034
      %v1151 = vunpack.c.l.b16 %v1035
      %v1152 = vunpack.c.l.b16 %v1036
      %v1153 = vunpack.c.l.b16 %v1037
      %v1154 = vunpack.c.l.b16 %v1038
      %v1155 = vunpack.c.l.b16 %v1039
      %v1156 = vunpack.c.l.b16 %v1040
      %v1157 = vunpack.c.l.b16 %v1041
      %v1158 = vunpack.c.l.b16 %v1042
      %v1159 = vunpack.c.l.b16 %v1043
      %v1160 = vunpack.c.l.b16 %v1044
      %v1161 = vunpack.c.l.b16 %v1045
      %v1162 = vunpack.c.l.b16 %v1046
      %v1163 = vunpack.c.l.b16 %v1047
      %v1164 = vunpack.c.l.b16 %v1048
      %v1165 = vunpack.c.l.b16 %v1049
      %v1166 = vunpack.c.l.b16 %v1050
      %v1167 = vunpack.c.l.b16 %v1051
      %v1168 = vunpack.c.l.b16 %v1052
      %v1169 = vunpack.c.l.b16 %v1053
      %v1170 = vunpack.c.l.b16 %v1054
      %v1171 = vunpack.c.l.b16 %v1055
      %v1172 = vunpack.c.l.b16 %v1056
      %v1173 = vunpack.c.l.b16 %v1057
      %v1174 = vunpack.c.l.b16 %v1058
      %v1175 = vunpack.c.l.b16 %v1059
      %v1176 = vunpack.c.l.b16 %v1060
      %v1177 = vunpack.c.l.b16 %v1061
      %v1178 = vunpack.c.l.b16 %v1062
      %v1179 = vunpack.c.l.b16 %v1063
      %v1180 = vunpack.c.l.b16 %v1064
      %v1181 = vunpack.c.l.b16 %v1065
      %v1182 = vunpack.c.l.b16 %v1066
      %v1183 = vunpack.c.l.b16 %v1067
      %v1184 = vunpack.c.l.b16 %v1068
      %v1185 = vunpack.c.l.b16 %v1069
      %v1186 = vunpack.c.l.b16 %v1070
      %v1187 = vunpack.c.l.b16 %v1071
      %v1188 = vunpack.c.l.b16 %v1072
      %v1189 = vunpack.c.l.b16 %v1073
      %v1190 = vunpack.c.l.b16 %v1074
      %v1191 = vpack.c.b16 %v1135, %v1134
      %v1192 = vpack.c.b16 %v1137, %v1136
      %v1193 = vpack.c.b16 %v1139, %v1138
      %v1194 = vpack.c.b16 %v1141, %v1140
      %v1195 = vpack.c.b16 %v1143, %v1142
      %v1196 = vpack.c.b16 %v1145, %v1144
      %v1197 = vpack.c.b16 %v1147, %v1146
      %v1198 = vpack.c.b16 %v1149, %v1148
      %v1199 = vpack.c.b16 %v1151, %v1150
      %v1200 = vpack.c.b16 %v1153, %v1152
      %v1201 = vpack.c.b16 %v1155, %v1154
      %v1202 = vpack.c.b16 %v1157, %v1156
      %v1203 = vpack.c.b16 %v1159, %v1158
      %v1204 = vpack.c.b16 %v1161, %v1160
      %v1205 = vpack.c.b16 %v1163, %v1162
      %v1206 = vpack.c.b16 %v1165, %v1164
      %v1207 = vpack.c.b16 %v1167, %v1166
      %v1208 = vpack.c.b16 %v1169, %v1168
      %v1209 = vpack.c.b16 %v1171, %v1170
      %v1210 = vpack.c.b16 %v1173, %v1172
      %v1211 = vpack.c.b16 %v1175, %v1174
      %v1212 = vpack.c.b16 %v1177, %v1176
      %v1213 = vpack.c.b16 %v1179, %v1178
      %v1214 = vpack.c.b16 %v1181, %v1180
      %v1215 = vpack.c.b16 %v1183, %v1182
      %v1216 = vpack.c.b16 %v1185, %v1184
      %v1217 = vpack.c.b16 %v1187, %v1186
      %v1218 = vpack.c.b16 %v1189, %v1188
      %v1219 = vpack.c.b16 %v1190, %v1190
      %vm1220 = vsmask.f32 7424
      %v1222 = vshrl.u32 %v1191, 16
      %v1224 = vshll.u32 %v1191, 16
      %v1226 = vrot.slane %v1224, 1
      %v1227 = vor.u32 %v1222, %v1226
      %v1229 = vshll.u32 %v1192, 16
      %v1231 = vrot.slane %v1229, 1
      %v1232 = vsel %vm1220, %v1227, %v1231
      %v1233 = vshrl.u32 %v1192, 16
      %v1235 = vor.u32 %v1233, %v1231
      %v1237 = vshll.u32 %v1193, 16
      %v1239 = vrot.slane %v1237, 1
      %v1240 = vsel %vm1220, %v1235, %v1239
      %v1241 = vshrl.u32 %v1193, 16
      %v1243 = vor.u32 %v1241, %v1239
      %v1245 = vshll.u32 %v1194, 16
      %v1247 = vrot.slane %v1245, 1
      %v1248 = vsel %vm1220, %v1243, %v1247
      %v1249 = vshrl.u32 %v1194, 16
      %v1251 = vor.u32 %v1249, %v1247
      %v1253 = vshll.u32 %v1195, 16
      %v1255 = vrot.slane %v1253, 1
      %v1256 = vsel %vm1220, %v1251, %v1255
      %v1257 = vshrl.u32 %v1195, 16
      %v1259 = vor.u32 %v1257, %v1255
      %v1261 = vshll.u32 %v1196, 16
      %v1263 = vrot.slane %v1261, 1
      %v1264 = vsel %vm1220, %v1259, %v1263
      %v1265 = vshrl.u32 %v1196, 16
      %v1267 = vor.u32 %v1265, %v1263
      %v1269 = vshll.u32 %v1197, 16
      %v1271 = vrot.slane %v1269, 1
      %v1272 = vsel %vm1220, %v1267, %v1271
      %v1273 = vshrl.u32 %v1197, 16
      %v1275 = vor.u32 %v1273, %v1271
      %v1277 = vshll.u32 %v1198, 16
      %v1279 = vrot.slane %v1277, 1
      %v1280 = vsel %vm1220, %v1275, %v1279
      %v1281 = vshrl.u32 %v1198, 16
      %v1283 = vor.u32 %v1281, %v1279
      %v1285 = vshll.u32 %v1199, 16
      %v1287 = vrot.slane %v1285, 1
      %v1288 = vsel %vm1220, %v1283, %v1287
      %v1289 = vshrl.u32 %v1199, 16
      %v1291 = vor.u32 %v1289, %v1287
      %v1293 = vshll.u32 %v1200, 16
      %v1295 = vrot.slane %v1293, 1
      %v1296 = vsel %vm1220, %v1291, %v1295
      %v1297 = vshrl.u32 %v1200, 16
      %v1299 = vor.u32 %v1297, %v1295
      %v1301 = vshll.u32 %v1201, 16
      %v1303 = vrot.slane %v1301, 1
      %v1304 = vsel %vm1220, %v1299, %v1303
      %v1305 = vshrl.u32 %v1201, 16
      %v1307 = vor.u32 %v1305, %v1303
      %v1309 = vshll.u32 %v1202, 16
      %v1311 = vrot.slane %v1309, 1
      %v1312 = vsel %vm1220, %v1307, %v1311
      %v1313 = vshrl.u32 %v1202, 16
      %v1315 = vor.u32 %v1313, %v1311
      %v1317 = vshll.u32 %v1203, 16
      %v1319 = vrot.slane %v1317, 1
      %v1320 = vsel %vm1220, %v1315, %v1319
      %v1321 = vshrl.u32 %v1203, 16
      %v1323 = vor.u32 %v1321, %v1319
      %v1325 = vshll.u32 %v1204, 16
      %v1327 = vrot.slane %v1325, 1
      %v1328 = vsel %vm1220, %v1323, %v1327
      %v1329 = vshrl.u32 %v1204, 16
      %v1331 = vor.u32 %v1329, %v1327
      %v1333 = vshll.u32 %v1205, 16
      %v1335 = vrot.slane %v1333, 1
      %v1336 = vsel %vm1220, %v1331, %v1335
      %v1337 = vshrl.u32 %v1205, 16
      %v1339 = vor.u32 %v1337, %v1335
      %v1341 = vshll.u32 %v1206, 16
      %v1343 = vrot.slane %v1341, 1
      %v1344 = vsel %vm1220, %v1339, %v1343
      %v1345 = vshrl.u32 %v1206, 16
      %v1347 = vor.u32 %v1345, %v1343
      %v1349 = vshll.u32 %v1207, 16
      %v1351 = vrot.slane %v1349, 1
      %v1352 = vsel %vm1220, %v1347, %v1351
      %v1353 = vshrl.u32 %v1207, 16
      %v1355 = vor.u32 %v1353, %v1351
      %v1357 = vshll.u32 %v1208, 16
      %v1359 = vrot.slane %v1357, 1
      %v1360 = vsel %vm1220, %v1355, %v1359
      %v1361 = vshrl.u32 %v1208, 16
      %v1363 = vor.u32 %v1361, %v1359
      %v1365 = vshll.u32 %v1209, 16
      %v1367 = vrot.slane %v1365, 1
      %v1368 = vsel %vm1220, %v1363, %v1367
      %v1369 = vshrl.u32 %v1209, 16
      %v1371 = vor.u32 %v1369, %v1367
      %v1373 = vshll.u32 %v1210, 16
      %v1375 = vrot.slane %v1373, 1
      %v1376 = vsel %vm1220, %v1371, %v1375
      %v1377 = vshrl.u32 %v1210, 16
      %v1379 = vor.u32 %v1377, %v1375
      %v1381 = vshll.u32 %v1211, 16
      %v1383 = vrot.slane %v1381, 1
      %v1384 = vsel %vm1220, %v1379, %v1383
      %v1385 = vshrl.u32 %v1211, 16
      %v1387 = vor.u32 %v1385, %v1383
      %v1389 = vshll.u32 %v1212, 16
      %v1391 = vrot.slane %v1389, 1
      %v1392 = vsel %vm1220, %v1387, %v1391
      %v1393 = vshrl.u32 %v1212, 16
      %v1395 = vor.u32 %v1393, %v1391
      %v1397 = vshll.u32 %v1213, 16
      %v1399 = vrot.slane %v1397, 1
      %v1400 = vsel %vm1220, %v1395, %v1399
      %v1401 = vshrl.u32 %v1213, 16
      %v1403 = vor.u32 %v1401, %v1399
      %v1405 = vshll.u32 %v1214, 16
      %v1407 = vrot.slane %v1405, 1
      %v1408 = vsel %vm1220, %v1403, %v1407
      %v1409 = vshrl.u32 %v1214, 16
      %v1411 = vor.u32 %v1409, %v1407
      %v1413 = vshll.u32 %v1215, 16
      %v1415 = vrot.slane %v1413, 1
      %v1416 = vsel %vm1220, %v1411, %v1415
      %v1417 = vshrl.u32 %v1215, 16
      %v1419 = vor.u32 %v1417, %v1415
      %v1421 = vshll.u32 %v1216, 16
      %v1423 = vrot.slane %v1421, 1
      %v1424 = vsel %vm1220, %v1419, %v1423
      %v1425 = vshrl.u32 %v1216, 16
      %v1427 = vor.u32 %v1425, %v1423
      %v1429 = vshll.u32 %v1217, 16
      %v1431 = vrot.slane %v1429, 1
      %v1432 = vsel %vm1220, %v1427, %v1431
      %v1433 = vshrl.u32 %v1217, 16
      %v1435 = vor.u32 %v1433, %v1431
      %v1437 = vshll.u32 %v1218, 16
      %v1439 = vrot.slane %v1437, 1
      %v1440 = vsel %vm1220, %v1435, %v1439
      %v1441 = vshrl.u32 %v1218, 16
      %v1443 = vor.u32 %v1441, %v1439
      %v1445 = vshll.u32 %v1219, 16
      %v1447 = vrot.slane %v1445, 1
      %v1448 = vsel %vm1220, %v1443, %v1447
      %v1450 = vsel %vm612, %v1232, 0
      %v1453 = vsel %vm612, %v1240, 0
      %v1456 = vsel %vm612, %v1248, 0
      %v1459 = vsel %vm612, %v1256, 0
      %v1462 = vsel %vm612, %v1264, 0
      %v1465 = vsel %vm612, %v1272, 0
      %v1468 = vsel %vm612, %v1280, 0
      %v1471 = vsel %vm612, %v1288, 0
      %v1474 = vsel %vm612, %v1296, 0
      %v1477 = vsel %vm612, %v1304, 0
      %v1480 = vsel %vm612, %v1312, 0
      %v1483 = vsel %vm612, %v1320, 0
      %v1486 = vsel %vm612, %v1328, 0
      %v1489 = vsel %vm612, %v1336, 0
      %v1492 = vsel %vm612, %v1344, 0
      %v1495 = vsel %vm612, %v1352, 0
      %v1498 = vsel %vm612, %v1360, 0
      %v1501 = vsel %vm612, %v1368, 0
      %v1504 = vsel %vm612, %v1376, 0
      %v1507 = vsel %vm612, %v1384, 0
      %v1510 = vsel %vm612, %v1392, 0
      %v1513 = vsel %vm612, %v1400, 0
      %v1516 = vsel %vm612, %v1408, 0
      %v1519 = vsel %vm612, %v1416, 0
      %v1522 = vsel %vm612, %v1424, 0
      %v1525 = vsel %vm612, %v1432, 0
      %v1528 = vsel %vm612, %v1440, 0
      %v1531 = vsel %vm612, %v1448, 0
      %v1534 = vand.u32 %v1076, %v700
      %1536 = vmatprep.subr.bf16.mxu0 0
      %1537 = vmatpush1.bf16.msra.mxu0 0
      %1538 = vmatprep.subr.bf16.mxu0 0
      %1539 = vmatpush1.bf16.msra.mxu0 0
      %1540 = vmatprep.subr.bf16.mxu0 0
      %1541 = vmatpush1.bf16.msra.mxu0 0
      %1542 = vmatprep.subr.bf16.mxu0 0
      %1543 = vmatpush1.bf16.msra.mxu0 0
      %1544 = vmatprep.subr.bf16.mxu0 0
      %1545 = vmatpush1.bf16.msra.mxu0 0
      %1546 = vmatprep.subr.bf16.mxu0 0
      %1547 = vmatpush1.bf16.msra.mxu0 0
      %1548 = vmatprep.subr.bf16.mxu0 0
      %1549 = vmatpush1.bf16.msra.mxu0 0
      %1550 = vmatprep.subr.bf16.mxu0 0
      %1551 = vmatpush1.bf16.msra.mxu0 %v1534
      %1552 = vmatprep.subr.bf16.mxu0 0
      %1553 = vmatpush2.bf16.msra.mxu0 0
      %1554 = vmatprep.subr.bf16.mxu0 0
      %1555 = vmatpush2.bf16.msra.mxu0 0
      %1556 = vmatprep.subr.bf16.mxu0 0
      %1557 = vmatpush2.bf16.msra.mxu0 0
      %1558 = vmatprep.subr.bf16.mxu0 0
      %1559 = vmatpush2.bf16.msra.mxu0 0
      %1560 = vmatprep.subr.bf16.mxu0 0
      %1561 = vmatpush2.bf16.msra.mxu0 0
      %1562 = vmatprep.subr.bf16.mxu0 0
      %1563 = vmatpush2.bf16.msra.mxu0 0
      %1564 = vmatprep.subr.bf16.mxu0 0
      %1565 = vmatpush2.bf16.msra.mxu0 0
      %1566 = vmatprep.subr.bf16.mxu0 0
      %1567 = vmatpush2.bf16.msra.mxu0 0
      %1568 = vmatprep.mubr.bf16.mxu0 0
      %1569 = vmatmul.mubr.bf16.gmra.mxu0 %v1450
      %v1570 = vpop.f32.mrf.mxu0
      %v1571 = vadd.f32 0.0, %v1570
      %v1572 = vpop.f32.mrf.mxu0
      %v1573 = vpop.f32.mrf.mxu0
      %v1574 = vadd.f32 0.0, %v1573
      %v1575 = vpop.f32.mrf.mxu0
      %1576 = vmatprep.mubr.bf16.mxu0 0
      %1577 = vmatmul.mubr.bf16.gmra.mxu0 %v1453
      %v1578 = vpop.f32.mrf.mxu0
      %v1579 = vadd.f32 0.0, %v1578
      %v1580 = vpop.f32.mrf.mxu0
      %v1581 = vpop.f32.mrf.mxu0
      %v1582 = vadd.f32 0.0, %v1581
      %v1583 = vpop.f32.mrf.mxu0
      %1584 = vmatprep.mubr.bf16.mxu0 0
      %1585 = vmatmul.mubr.bf16.gmra.mxu0 %v1456
      %v1586 = vpop.f32.mrf.mxu0
      %v1587 = vadd.f32 0.0, %v1586
      %v1588 = vpop.f32.mrf.mxu0
      %v1589 = vpop.f32.mrf.mxu0
      %v1590 = vadd.f32 0.0, %v1589
      %v1591 = vpop.f32.mrf.mxu0
      %1592 = vmatprep.mubr.bf16.mxu0 0
      %1593 = vmatmul.mubr.bf16.gmra.mxu0 %v1459
      %v1594 = vpop.f32.mrf.mxu0
      %v1595 = vadd.f32 0.0, %v1594
      %v1596 = vpop.f32.mrf.mxu0
      %v1597 = vpop.f32.mrf.mxu0
      %v1598 = vadd.f32 0.0, %v1597
      %v1599 = vpop.f32.mrf.mxu0
      %1600 = vmatprep.mubr.bf16.mxu0 0
      %1601 = vmatmul.mubr.bf16.gmra.mxu0 %v1462
      %v1602 = vpop.f32.mrf.mxu0
      %v1603 = vadd.f32 0.0, %v1602
      %v1604 = vpop.f32.mrf.mxu0
      %v1605 = vpop.f32.mrf.mxu0
      %v1606 = vadd.f32 0.0, %v1605
      %v1607 = vpop.f32.mrf.mxu0
      %1608 = vmatprep.mubr.bf16.mxu0 0
      %1609 = vmatmul.mubr.bf16.gmra.mxu0 %v1465
      %v1610 = vpop.f32.mrf.mxu0
      %v1611 = vadd.f32 0.0, %v1610
      %v1612 = vpop.f32.mrf.mxu0
      %v1613 = vpop.f32.mrf.mxu0
      %v1614 = vadd.f32 0.0, %v1613
      %v1615 = vpop.f32.mrf.mxu0
      %1616 = vmatprep.mubr.bf16.mxu0 0
      %1617 = vmatmul.mubr.bf16.gmra.mxu0 %v1468
      %v1618 = vpop.f32.mrf.mxu0
      %v1619 = vadd.f32 0.0, %v1618
      %v1620 = vpop.f32.mrf.mxu0
      %v1621 = vpop.f32.mrf.mxu0
      %v1622 = vadd.f32 0.0, %v1621
      %v1623 = vpop.f32.mrf.mxu0
      %1624 = vmatprep.mubr.bf16.mxu0 0
      %1625 = vmatmul.mubr.bf16.gmra.mxu0 %v1471
      %v1626 = vpop.f32.mrf.mxu0
      %v1627 = vadd.f32 0.0, %v1626
      %v1628 = vpop.f32.mrf.mxu0
      %v1629 = vpop.f32.mrf.mxu0
      %v1630 = vadd.f32 0.0, %v1629
      %v1631 = vpop.f32.mrf.mxu0
      %1632 = vmatprep.mubr.bf16.mxu0 0
      %1633 = vmatmul.mubr.bf16.gmra.mxu0 %v1474
      %v1634 = vpop.f32.mrf.mxu0
      %v1635 = vadd.f32 0.0, %v1634
      %v1636 = vpop.f32.mrf.mxu0
      %v1637 = vpop.f32.mrf.mxu0
      %v1638 = vadd.f32 0.0, %v1637
      %v1639 = vpop.f32.mrf.mxu0
      %1640 = vmatprep.mubr.bf16.mxu0 0
      %1641 = vmatmul.mubr.bf16.gmra.mxu0 %v1477
      %v1642 = vpop.f32.mrf.mxu0
      %v1643 = vadd.f32 0.0, %v1642
      %v1644 = vpop.f32.mrf.mxu0
      %v1645 = vpop.f32.mrf.mxu0
      %v1646 = vadd.f32 0.0, %v1645
      %v1647 = vpop.f32.mrf.mxu0
      %1648 = vmatprep.mubr.bf16.mxu0 0
      %1649 = vmatmul.mubr.bf16.gmra.mxu0 %v1480
      %v1650 = vpop.f32.mrf.mxu0
      %v1651 = vadd.f32 0.0, %v1650
      %v1652 = vpop.f32.mrf.mxu0
      %v1653 = vpop.f32.mrf.mxu0
      %v1654 = vadd.f32 0.0, %v1653
      %v1655 = vpop.f32.mrf.mxu0
      %1656 = vmatprep.mubr.bf16.mxu0 0
      %1657 = vmatmul.mubr.bf16.gmra.mxu0 %v1483
      %v1658 = vpop.f32.mrf.mxu0
      %v1659 = vadd.f32 0.0, %v1658
      %v1660 = vpop.f32.mrf.mxu0
      %v1661 = vpop.f32.mrf.mxu0
      %v1662 = vadd.f32 0.0, %v1661
      %v1663 = vpop.f32.mrf.mxu0
      %1664 = vmatprep.mubr.bf16.mxu0 0
      %1665 = vmatmul.mubr.bf16.gmra.mxu0 %v1486
      %v1666 = vpop.f32.mrf.mxu0
      %v1667 = vadd.f32 0.0, %v1666
      %v1668 = vpop.f32.mrf.mxu0
      %v1669 = vpop.f32.mrf.mxu0
      %v1670 = vadd.f32 0.0, %v1669
      %v1671 = vpop.f32.mrf.mxu0
      %1672 = vmatprep.mubr.bf16.mxu0 0
      %1673 = vmatmul.mubr.bf16.gmra.mxu0 %v1489
      %v1674 = vpop.f32.mrf.mxu0
      %v1675 = vadd.f32 0.0, %v1674
      %v1676 = vpop.f32.mrf.mxu0
      %v1677 = vpop.f32.mrf.mxu0
      %v1678 = vadd.f32 0.0, %v1677
      %v1679 = vpop.f32.mrf.mxu0
      %1680 = vmatprep.mubr.bf16.mxu0 0
      %1681 = vmatmul.mubr.bf16.gmra.mxu0 %v1492
      %v1682 = vpop.f32.mrf.mxu0
      %v1683 = vadd.f32 0.0, %v1682
      %v1684 = vpop.f32.mrf.mxu0
      %v1685 = vpop.f32.mrf.mxu0
      %v1686 = vadd.f32 0.0, %v1685
      %v1687 = vpop.f32.mrf.mxu0
      %1688 = vmatprep.mubr.bf16.mxu0 0
      %1689 = vmatmul.mubr.bf16.gmra.mxu0 %v1495
      %v1690 = vpop.f32.mrf.mxu0
      %v1691 = vadd.f32 0.0, %v1690
      %v1692 = vpop.f32.mrf.mxu0
      %v1693 = vpop.f32.mrf.mxu0
      %v1694 = vadd.f32 0.0, %v1693
      %v1695 = vpop.f32.mrf.mxu0
      %1696 = vmatprep.mubr.bf16.mxu0 0
      %1697 = vmatmul.mubr.bf16.gmra.mxu0 %v1498
      %v1698 = vpop.f32.mrf.mxu0
      %v1699 = vadd.f32 0.0, %v1698
      %v1700 = vpop.f32.mrf.mxu0
      %v1701 = vpop.f32.mrf.mxu0
      %v1702 = vadd.f32 0.0, %v1701
      %v1703 = vpop.f32.mrf.mxu0
      %1704 = vmatprep.mubr.bf16.mxu0 0
      %1705 = vmatmul.mubr.bf16.gmra.mxu0 %v1501
      %v1706 = vpop.f32.mrf.mxu0
      %v1707 = vadd.f32 0.0, %v1706
      %v1708 = vpop.f32.mrf.mxu0
      %v1709 = vpop.f32.mrf.mxu0
      %v1710 = vadd.f32 0.0, %v1709
      %v1711 = vpop.f32.mrf.mxu0
      %1712 = vmatprep.mubr.bf16.mxu0 0
      %1713 = vmatmul.mubr.bf16.gmra.mxu0 %v1504
      %v1714 = vpop.f32.mrf.mxu0
      %v1715 = vadd.f32 0.0, %v1714
      %v1716 = vpop.f32.mrf.mxu0
      %v1717 = vpop.f32.mrf.mxu0
      %v1718 = vadd.f32 0.0, %v1717
      %v1719 = vpop.f32.mrf.mxu0
      %1720 = vmatprep.mubr.bf16.mxu0 0
      %1721 = vmatmul.mubr.bf16.gmra.mxu0 %v1507
      %v1722 = vpop.f32.mrf.mxu0
      %v1723 = vadd.f32 0.0, %v1722
      %v1724 = vpop.f32.mrf.mxu0
      %v1725 = vpop.f32.mrf.mxu0
      %v1726 = vadd.f32 0.0, %v1725
      %v1727 = vpop.f32.mrf.mxu0
      %1728 = vmatprep.mubr.bf16.mxu0 0
      %1729 = vmatmul.mubr.bf16.gmra.mxu0 %v1510
      %v1730 = vpop.f32.mrf.mxu0
      %v1731 = vadd.f32 0.0, %v1730
      %v1732 = vpop.f32.mrf.mxu0
      %v1733 = vpop.f32.mrf.mxu0
      %v1734 = vadd.f32 0.0, %v1733
      %v1735 = vpop.f32.mrf.mxu0
      %1736 = vmatprep.mubr.bf16.mxu0 0
      %1737 = vmatmul.mubr.bf16.gmra.mxu0 %v1513
      %v1738 = vpop.f32.mrf.mxu0
      %v1739 = vadd.f32 0.0, %v1738
      %v1740 = vpop.f32.mrf.mxu0
      %v1741 = vpop.f32.mrf.mxu0
      %v1742 = vadd.f32 0.0, %v1741
      %v1743 = vpop.f32.mrf.mxu0
      %1744 = vmatprep.mubr.bf16.mxu0 0
      %1745 = vmatmul.mubr.bf16.gmra.mxu0 %v1516
      %v1746 = vpop.f32.mrf.mxu0
      %v1747 = vadd.f32 0.0, %v1746
      %v1748 = vpop.f32.mrf.mxu0
      %v1749 = vpop.f32.mrf.mxu0
      %v1750 = vadd.f32 0.0, %v1749
      %v1751 = vpop.f32.mrf.mxu0
      %1752 = vmatprep.mubr.bf16.mxu0 0
      %1753 = vmatmul.mubr.bf16.gmra.mxu0 %v1519
      %v1754 = vpop.f32.mrf.mxu0
      %v1755 = vadd.f32 0.0, %v1754
      %v1756 = vpop.f32.mrf.mxu0
      %v1757 = vpop.f32.mrf.mxu0
      %v1758 = vadd.f32 0.0, %v1757
      %v1759 = vpop.f32.mrf.mxu0
      %1760 = vmatprep.mubr.bf16.mxu0 0
      %1761 = vmatmul.mubr.bf16.gmra.mxu0 %v1522
      %v1762 = vpop.f32.mrf.mxu0
      %v1763 = vadd.f32 0.0, %v1762
      %v1764 = vpop.f32.mrf.mxu0
      %v1765 = vpop.f32.mrf.mxu0
      %v1766 = vadd.f32 0.0, %v1765
      %v1767 = vpop.f32.mrf.mxu0
      %1768 = vmatprep.mubr.bf16.mxu0 0
      %1769 = vmatmul.mubr.bf16.gmra.mxu0 %v1525
      %v1770 = vpop.f32.mrf.mxu0
      %v1771 = vadd.f32 0.0, %v1770
      %v1772 = vpop.f32.mrf.mxu0
      %v1773 = vpop.f32.mrf.mxu0
      %v1774 = vadd.f32 0.0, %v1773
      %v1775 = vpop.f32.mrf.mxu0
      %1776 = vmatprep.mubr.bf16.mxu0 0
      %1777 = vmatmul.mubr.bf16.gmra.mxu0 %v1528
      %v1778 = vpop.f32.mrf.mxu0
      %v1779 = vadd.f32 0.0, %v1778
      %v1780 = vpop.f32.mrf.mxu0
      %v1781 = vpop.f32.mrf.mxu0
      %v1782 = vadd.f32 0.0, %v1781
      %v1783 = vpop.f32.mrf.mxu0
      %1784 = vmatprep.mubr.bf16.mxu0 0
      %1785 = vmatmul.mubr.bf16.gmra.mxu0 %v1531
      %v1786 = vpop.f32.mrf.mxu0
      %v1787 = vadd.f32 0.0, %v1786
      %v1788 = vpop.f32.mrf.mxu0
      %v1789 = vpop.f32.mrf.mxu0
      %v1790 = vadd.f32 0.0, %v1789
      %v1791 = vpop.f32.mrf.mxu0
      %1792 = vdwg.mxu0
      %v1793 = vld [vmem:[#allocation3] sm:$0xff]
      %v1794 = vld [vmem:[#allocation3 + $0x8] sm:$0xff]
      %v1795 = vld [vmem:[#allocation3 + $0x10] sm:$0xff]
      %v1796 = vld [vmem:[#allocation3 + $0x18] sm:$0xff]
      %v1797 = vld [vmem:[#allocation3 + $0x20] sm:$0xff]
      %v1798 = vld [vmem:[#allocation3 + $0x28] sm:$0xff]
      %v1799 = vld [vmem:[#allocation3 + $0x30] sm:$0xff]
      %v1800 = vld [vmem:[#allocation3 + $0x38] sm:$0xff]
      %v1801 = vld [vmem:[#allocation3 + $0x40] sm:$0xff]
      %v1802 = vld [vmem:[#allocation3 + $0x48] sm:$0xff]
      %v1803 = vld [vmem:[#allocation3 + $0x50] sm:$0xff]
      %v1804 = vld [vmem:[#allocation3 + $0x58] sm:$0xff]
      %v1805 = vld [vmem:[#allocation3 + $0x60] sm:$0xff]
      %v1806 = vld [vmem:[#allocation3 + $0x68] sm:$0xff]
      %v1807 = vld [vmem:[#allocation3 + $0x70] sm:$0xff]
      %v1808 = vld [vmem:[#allocation3 + $0x78] sm:$0xff]
      %v1809 = vld [vmem:[#allocation3 + $0x80] sm:$0xff]
      %v1810 = vld [vmem:[#allocation3 + $0x88] sm:$0xff]
      %v1811 = vld [vmem:[#allocation3 + $0x90] sm:$0xff]
      %v1812 = vld [vmem:[#allocation3 + $0x98] sm:$0xff]
      %v1813 = vld [vmem:[#allocation3 + $0xa0] sm:$0xff]
      %v1814 = vld [vmem:[#allocation3 + $0xa8] sm:$0xff]
      %v1815 = vld [vmem:[#allocation3 + $0xb0] sm:$0xff]
      %v1816 = vld [vmem:[#allocation3 + $0xb8] sm:$0xff]
      %v1817 = vld [vmem:[#allocation3 + $0xc0] sm:$0xff]
      %v1818 = vld [vmem:[#allocation3 + $0xc8] sm:$0xff]
      %v1819 = vld [vmem:[#allocation3 + $0xd0] sm:$0xff]
      %v1820 = vld [vmem:[#allocation3 + $0xd8] sm:$0xff]
      %v1821 = vld [vmem:[#allocation3 + $0xe0] sm:$0xff]
      %v1822 = vld [vmem:[#allocation3 + $0xe8] sm:$0xff]
      %v1823 = vld [vmem:[#allocation3 + $0xf0] sm:$0xff]
      %v1824 = vld [vmem:[#allocation3 + $0xf8] sm:$0xff]
      %v1825 = vld [vmem:[#allocation3 + $0x100] sm:$0xff]
      %v1826 = vld [vmem:[#allocation3 + $0x108] sm:$0xff]
      %v1827 = vld [vmem:[#allocation3 + $0x110] sm:$0xff]
      %v1828 = vld [vmem:[#allocation3 + $0x118] sm:$0xff]
      %v1829 = vld [vmem:[#allocation3 + $0x120] sm:$0xff]
      %v1830 = vld [vmem:[#allocation3 + $0x128] sm:$0xff]
      %v1831 = vld [vmem:[#allocation3 + $0x130] sm:$0xff]
      %v1832 = vld [vmem:[#allocation3 + $0x138] sm:$0xff]
      %v1833 = vld [vmem:[#allocation3 + $0x140] sm:$0xff]
      %v1834 = vld [vmem:[#allocation3 + $0x148] sm:$0xff]
      %v1835 = vld [vmem:[#allocation3 + $0x150] sm:$0xff]
      %v1836 = vld [vmem:[#allocation3 + $0x158] sm:$0xff]
      %v1837 = vld [vmem:[#allocation3 + $0x160] sm:$0xff]
      %v1838 = vld [vmem:[#allocation3 + $0x168] sm:$0xff]
      %v1839 = vld [vmem:[#allocation3 + $0x170] sm:$0xff]
      %v1840 = vld [vmem:[#allocation3 + $0x178] sm:$0xff]
      %v1841 = vld [vmem:[#allocation3 + $0x180] sm:$0xff]
      %v1842 = vld [vmem:[#allocation3 + $0x188] sm:$0xff]
      %v1843 = vld [vmem:[#allocation3 + $0x190] sm:$0xff]
      %v1844 = vld [vmem:[#allocation3 + $0x198] sm:$0xff]
      %v1845 = vld [vmem:[#allocation3 + $0x1a0] sm:$0xff]
      %v1846 = vld [vmem:[#allocation3 + $0x1a8] sm:$0xff]
      %v1847 = vld [vmem:[#allocation3 + $0x1b0] sm:$0xff]
      %v1848 = vld [vmem:[#allocation3 + $0x1b8] sm:$0xff]
      %v1849 = vadd.f32 %v1793, %v1571
      %v1850 = vadd.f32 %v1794, %v1574
      %v1851 = vadd.f32 %v1795, %v1579
      %v1852 = vadd.f32 %v1796, %v1582
      %v1853 = vadd.f32 %v1797, %v1587
      %v1854 = vadd.f32 %v1798, %v1590
      %v1855 = vadd.f32 %v1799, %v1595
      %v1856 = vadd.f32 %v1800, %v1598
      %v1857 = vadd.f32 %v1801, %v1603
      %v1858 = vadd.f32 %v1802, %v1606
      %v1859 = vadd.f32 %v1803, %v1611
      %v1860 = vadd.f32 %v1804, %v1614
      %v1861 = vadd.f32 %v1805, %v1619
      %v1862 = vadd.f32 %v1806, %v1622
      %v1863 = vadd.f32 %v1807, %v1627
      %v1864 = vadd.f32 %v1808, %v1630
      %v1865 = vadd.f32 %v1809, %v1635
      %v1866 = vadd.f32 %v1810, %v1638
      %v1867 = vadd.f32 %v1811, %v1643
      %v1868 = vadd.f32 %v1812, %v1646
      %v1869 = vadd.f32 %v1813, %v1651
      %v1870 = vadd.f32 %v1814, %v1654
      %v1871 = vadd.f32 %v1815, %v1659
      %v1872 = vadd.f32 %v1816, %v1662
      %v1873 = vadd.f32 %v1817, %v1667
      %v1874 = vadd.f32 %v1818, %v1670
      %v1875 = vadd.f32 %v1819, %v1675
      %v1876 = vadd.f32 %v1820, %v1678
      %v1877 = vadd.f32 %v1821, %v1683
      %v1878 = vadd.f32 %v1822, %v1686
      %v1879 = vadd.f32 %v1823, %v1691
      %v1880 = vadd.f32 %v1824, %v1694
      %v1881 = vadd.f32 %v1825, %v1699
      %v1882 = vadd.f32 %v1826, %v1702
      %v1883 = vadd.f32 %v1827, %v1707
      %v1884 = vadd.f32 %v1828, %v1710
      %v1885 = vadd.f32 %v1829, %v1715
      %v1886 = vadd.f32 %v1830, %v1718
      %v1887 = vadd.f32 %v1831, %v1723
      %v1888 = vadd.f32 %v1832, %v1726
      %v1889 = vadd.f32 %v1833, %v1731
      %v1890 = vadd.f32 %v1834, %v1734
      %v1891 = vadd.f32 %v1835, %v1739
      %v1892 = vadd.f32 %v1836, %v1742
      %v1893 = vadd.f32 %v1837, %v1747
      %v1894 = vadd.f32 %v1838, %v1750
      %v1895 = vadd.f32 %v1839, %v1755
      %v1896 = vadd.f32 %v1840, %v1758
      %v1897 = vadd.f32 %v1841, %v1763
      %v1898 = vadd.f32 %v1842, %v1766
      %v1899 = vadd.f32 %v1843, %v1771
      %v1900 = vadd.f32 %v1844, %v1774
      %v1901 = vadd.f32 %v1845, %v1779
      %v1902 = vadd.f32 %v1846, %v1782
      %v1903 = vadd.f32 %v1847, %v1787
      %v1904 = vadd.f32 %v1848, %v1790
      %1905 = vst.msk [vmem:[#allocation3] sm:$0xff] %vm961, %v1849
      %1906 = vst.msk [vmem:[#allocation3 + $0x8] sm:$0xff] %vm961, %v1850
      %1907 = vst.msk [vmem:[#allocation3 + $0x10] sm:$0xff] %vm961, %v1851
      %1908 = vst.msk [vmem:[#allocation3 + $0x18] sm:$0xff] %vm961, %v1852
      %1909 = vst.msk [vmem:[#allocation3 + $0x20] sm:$0xff] %vm961, %v1853
      %1910 = vst.msk [vmem:[#allocation3 + $0x28] sm:$0xff] %vm961, %v1854
      %1911 = vst.msk [vmem:[#allocation3 + $0x30] sm:$0xff] %vm961, %v1855
      %1912 = vst.msk [vmem:[#allocation3 + $0x38] sm:$0xff] %vm961, %v1856
      %1913 = vst.msk [vmem:[#allocation3 + $0x40] sm:$0xff] %vm961, %v1857
      %1914 = vst.msk [vmem:[#allocation3 + $0x48] sm:$0xff] %vm961, %v1858
      %1915 = vst.msk [vmem:[#allocation3 + $0x50] sm:$0xff] %vm961, %v1859
      %1916 = vst.msk [vmem:[#allocation3 + $0x58] sm:$0xff] %vm961, %v1860
      %1917 = vst.msk [vmem:[#allocation3 + $0x60] sm:$0xff] %vm961, %v1861
      %1918 = vst.msk [vmem:[#allocation3 + $0x68] sm:$0xff] %vm961, %v1862
      %1919 = vst.msk [vmem:[#allocation3 + $0x70] sm:$0xff] %vm961, %v1863
      %1920 = vst.msk [vmem:[#allocation3 + $0x78] sm:$0xff] %vm961, %v1864
      %1921 = vst.msk [vmem:[#allocation3 + $0x80] sm:$0xff] %vm961, %v1865
      %1922 = vst.msk [vmem:[#allocation3 + $0x88] sm:$0xff] %vm961, %v1866
      %1923 = vst.msk [vmem:[#allocation3 + $0x90] sm:$0xff] %vm961, %v1867
      %1924 = vst.msk [vmem:[#allocation3 + $0x98] sm:$0xff] %vm961, %v1868
      %1925 = vst.msk [vmem:[#allocation3 + $0xa0] sm:$0xff] %vm961, %v1869
      %1926 = vst.msk [vmem:[#allocation3 + $0xa8] sm:$0xff] %vm961, %v1870
      %1927 = vst.msk [vmem:[#allocation3 + $0xb0] sm:$0xff] %vm961, %v1871
      %1928 = vst.msk [vmem:[#allocation3 + $0xb8] sm:$0xff] %vm961, %v1872
      %1929 = vst.msk [vmem:[#allocation3 + $0xc0] sm:$0xff] %vm961, %v1873
      %1930 = vst.msk [vmem:[#allocation3 + $0xc8] sm:$0xff] %vm961, %v1874
      %1931 = vst.msk [vmem:[#allocation3 + $0xd0] sm:$0xff] %vm961, %v1875
      %1932 = vst.msk [vmem:[#allocation3 + $0xd8] sm:$0xff] %vm961, %v1876
      %1933 = vst.msk [vmem:[#allocation3 + $0xe0] sm:$0xff] %vm961, %v1877
      %1934 = vst.msk [vmem:[#allocation3 + $0xe8] sm:$0xff] %vm961, %v1878
      %1935 = vst.msk [vmem:[#allocation3 + $0xf0] sm:$0xff] %vm961, %v1879
      %1936 = vst.msk [vmem:[#allocation3 + $0xf8] sm:$0xff] %vm961, %v1880
      %1937 = vst.msk [vmem:[#allocation3 + $0x100] sm:$0xff] %vm961, %v1881
      %1938 = vst.msk [vmem:[#allocation3 + $0x108] sm:$0xff] %vm961, %v1882
      %1939 = vst.msk [vmem:[#allocation3 + $0x110] sm:$0xff] %vm961, %v1883
      %1940 = vst.msk [vmem:[#allocation3 + $0x118] sm:$0xff] %vm961, %v1884
      %1941 = vst.msk [vmem:[#allocation3 + $0x120] sm:$0xff] %vm961, %v1885
      %1942 = vst.msk [vmem:[#allocation3 + $0x128] sm:$0xff] %vm961, %v1886
      %1943 = vst.msk [vmem:[#allocation3 + $0x130] sm:$0xff] %vm961, %v1887
      %1944 = vst.msk [vmem:[#allocation3 + $0x138] sm:$0xff] %vm961, %v1888
      %1945 = vst.msk [vmem:[#allocation3 + $0x140] sm:$0xff] %vm961, %v1889
      %1946 = vst.msk [vmem:[#allocation3 + $0x148] sm:$0xff] %vm961, %v1890
      %1947 = vst.msk [vmem:[#allocation3 + $0x150] sm:$0xff] %vm961, %v1891
      %1948 = vst.msk [vmem:[#allocation3 + $0x158] sm:$0xff] %vm961, %v1892
      %1949 = vst.msk [vmem:[#allocation3 + $0x160] sm:$0xff] %vm961, %v1893
      %1950 = vst.msk [vmem:[#allocation3 + $0x168] sm:$0xff] %vm961, %v1894
      %1951 = vst.msk [vmem:[#allocation3 + $0x170] sm:$0xff] %vm961, %v1895
      %1952 = vst.msk [vmem:[#allocation3 + $0x178] sm:$0xff] %vm961, %v1896
      %1953 = vst.msk [vmem:[#allocation3 + $0x180] sm:$0xff] %vm961, %v1897
      %1954 = vst.msk [vmem:[#allocation3 + $0x188] sm:$0xff] %vm961, %v1898
      %1955 = vst.msk [vmem:[#allocation3 + $0x190] sm:$0xff] %vm961, %v1899
      %1956 = vst.msk [vmem:[#allocation3 + $0x198] sm:$0xff] %vm961, %v1900
      %1957 = vst.msk [vmem:[#allocation3 + $0x1a0] sm:$0xff] %vm961, %v1901
      %1958 = vst.msk [vmem:[#allocation3 + $0x1a8] sm:$0xff] %vm961, %v1902
      %1959 = vst.msk [vmem:[#allocation3 + $0x1b0] sm:$0xff] %vm961, %v1903
      %1960 = vst.msk [vmem:[#allocation3 + $0x1b8] sm:$0xff] %vm961, %v1904
      %v1961 = vld [vmem:[#allocation2] sm:$0xe]
      %v1962 = vld [vmem:[#allocation2 + $0x4] sm:$0xf]
      %v1963 = vld [vmem:[#allocation2 + $0x8] sm:$0xf]
      %v1964 = vld [vmem:[#allocation2 + $0xc] sm:$0xf]
      %v1965 = vld [vmem:[#allocation2 + $0x10] sm:$0xf]
      %v1966 = vld [vmem:[#allocation2 + $0x14] sm:$0xf]
      %v1967 = vld [vmem:[#allocation2 + $0x18] sm:$0xf]
      %v1968 = vld [vmem:[#allocation2 + $0x1c] sm:$0xf]
      %v1969 = vld [vmem:[#allocation2 + $0x20] sm:$0xf]
      %v1970 = vld [vmem:[#allocation2 + $0x24] sm:$0xf]
      %v1971 = vld [vmem:[#allocation2 + $0x28] sm:$0xf]
      %v1972 = vld [vmem:[#allocation2 + $0x2c] sm:$0xf]
      %v1973 = vld [vmem:[#allocation2 + $0x30] sm:$0xf]
      %v1974 = vld [vmem:[#allocation2 + $0x34] sm:$0xf]
      %v1975 = vld [vmem:[#allocation2 + $0x38] sm:$0xf]
      %v1976 = vld [vmem:[#allocation2 + $0x3c] sm:$0xf]
      %v1977 = vld [vmem:[#allocation2 + $0x40] sm:$0xf]
      %v1978 = vld [vmem:[#allocation2 + $0x44] sm:$0xf]
      %v1979 = vld [vmem:[#allocation2 + $0x48] sm:$0xf]
      %v1980 = vld [vmem:[#allocation2 + $0x4c] sm:$0xf]
      %v1981 = vld [vmem:[#allocation2 + $0x50] sm:$0xf]
      %v1982 = vld [vmem:[#allocation2 + $0x54] sm:$0xf]
      %v1983 = vld [vmem:[#allocation2 + $0x58] sm:$0xf]
      %v1984 = vld [vmem:[#allocation2 + $0x5c] sm:$0xf]
      %v1985 = vld [vmem:[#allocation2 + $0x60] sm:$0xf]
      %v1986 = vld [vmem:[#allocation2 + $0x64] sm:$0xf]
      %v1987 = vld [vmem:[#allocation2 + $0x68] sm:$0xf]
      %v1988 = vld [vmem:[#allocation2 + $0x6c] sm:$0xf]
      %v1989 = vld [vmem:[#allocation2 + $0x70] sm:$0xf]
      %v1990 = vld [vmem:[#allocation2 + $0x74] sm:$0xf]
      %v1991 = vld [vmem:[#allocation2 + $0x78] sm:$0xf]
      %v1992 = vld [vmem:[#allocation2 + $0x7c] sm:$0xf]
      %v1993 = vld [vmem:[#allocation2 + $0x80] sm:$0xf]
      %v1994 = vld [vmem:[#allocation2 + $0x84] sm:$0xf]
      %v1995 = vld [vmem:[#allocation2 + $0x88] sm:$0xf]
      %v1996 = vld [vmem:[#allocation2 + $0x8c] sm:$0xf]
      %v1997 = vld [vmem:[#allocation2 + $0x90] sm:$0xf]
      %v1998 = vld [vmem:[#allocation2 + $0x94] sm:$0xf]
      %v1999 = vld [vmem:[#allocation2 + $0x98] sm:$0xf]
      %v2000 = vld [vmem:[#allocation2 + $0x9c] sm:$0xf]
      %v2001 = vld [vmem:[#allocation2 + $0xa0] sm:$0xf]
      %v2002 = vld [vmem:[#allocation2 + $0xa4] sm:$0xf]
      %v2003 = vld [vmem:[#allocation2 + $0xa8] sm:$0xf]
      %v2004 = vld [vmem:[#allocation2 + $0xac] sm:$0xf]
      %v2005 = vld [vmem:[#allocation2 + $0xb0] sm:$0xf]
      %v2006 = vld [vmem:[#allocation2 + $0xb4] sm:$0xf]
      %v2007 = vld [vmem:[#allocation2 + $0xb8] sm:$0xf]
      %v2008 = vld [vmem:[#allocation2 + $0xbc] sm:$0xf]
      %v2009 = vld [vmem:[#allocation2 + $0xc0] sm:$0xf]
      %v2010 = vld [vmem:[#allocation2 + $0xc4] sm:$0xf]
      %v2011 = vld [vmem:[#allocation2 + $0xc8] sm:$0xf]
      %v2012 = vld [vmem:[#allocation2 + $0xcc] sm:$0xf]
      %v2013 = vld [vmem:[#allocation2 + $0xd0] sm:$0xf]
      %v2014 = vld [vmem:[#allocation2 + $0xd4] sm:$0xf]
      %v2015 = vld [vmem:[#allocation2 + $0xd8] sm:$0xf]
      %v2016 = vld [vmem:[#allocation2 + $0xdc] sm:$0xf]
      %v2017 = vld [vmem:[#allocation2 + $0xe0] sm:$0x1]
      %s2018 = scalar_lea.vmem %s2, 4
      %v2019 = vld [vmem:[%s2018] sm:$0x3]
      %v2077 = vunpack.c.l.b16 %v1961
      %v2078 = vunpack.c.l.b16 %v1962
      %v2079 = vunpack.c.l.b16 %v1963
      %v2080 = vunpack.c.l.b16 %v1964
      %v2081 = vunpack.c.l.b16 %v1965
      %v2082 = vunpack.c.l.b16 %v1966
      %v2083 = vunpack.c.l.b16 %v1967
      %v2084 = vunpack.c.l.b16 %v1968
      %v2085 = vunpack.c.l.b16 %v1969
      %v2086 = vunpack.c.l.b16 %v1970
      %v2087 = vunpack.c.l.b16 %v1971
      %v2088 = vunpack.c.l.b16 %v1972
      %v2089 = vunpack.c.l.b16 %v1973
      %v2090 = vunpack.c.l.b16 %v1974
      %v2091 = vunpack.c.l.b16 %v1975
      %v2092 = vunpack.c.l.b16 %v1976
      %v2093 = vunpack.c.l.b16 %v1977
      %v2094 = vunpack.c.l.b16 %v1978
      %v2095 = vunpack.c.l.b16 %v1979
      %v2096 = vunpack.c.l.b16 %v1980
      %v2097 = vunpack.c.l.b16 %v1981
      %v2098 = vunpack.c.l.b16 %v1982
      %v2099 = vunpack.c.l.b16 %v1983
      %v2100 = vunpack.c.l.b16 %v1984
      %v2101 = vunpack.c.l.b16 %v1985
      %v2102 = vunpack.c.l.b16 %v1986
      %v2103 = vunpack.c.l.b16 %v1987
      %v2104 = vunpack.c.l.b16 %v1988
      %v2105 = vunpack.c.l.b16 %v1989
      %v2106 = vunpack.c.l.b16 %v1990
      %v2107 = vunpack.c.l.b16 %v1991
      %v2108 = vunpack.c.l.b16 %v1992
      %v2109 = vunpack.c.l.b16 %v1993
      %v2110 = vunpack.c.l.b16 %v1994
      %v2111 = vunpack.c.l.b16 %v1995
      %v2112 = vunpack.c.l.b16 %v1996
      %v2113 = vunpack.c.l.b16 %v1997
      %v2114 = vunpack.c.l.b16 %v1998
      %v2115 = vunpack.c.l.b16 %v1999
      %v2116 = vunpack.c.l.b16 %v2000
      %v2117 = vunpack.c.l.b16 %v2001
      %v2118 = vunpack.c.l.b16 %v2002
      %v2119 = vunpack.c.l.b16 %v2003
      %v2120 = vunpack.c.l.b16 %v2004
      %v2121 = vunpack.c.l.b16 %v2005
      %v2122 = vunpack.c.l.b16 %v2006
      %v2123 = vunpack.c.l.b16 %v2007
      %v2124 = vunpack.c.l.b16 %v2008
      %v2125 = vunpack.c.l.b16 %v2009
      %v2126 = vunpack.c.l.b16 %v2010
      %v2127 = vunpack.c.l.b16 %v2011
      %v2128 = vunpack.c.l.b16 %v2012
      %v2129 = vunpack.c.l.b16 %v2013
      %v2130 = vunpack.c.l.b16 %v2014
      %v2131 = vunpack.c.l.b16 %v2015
      %v2132 = vunpack.c.l.b16 %v2016
      %v2133 = vunpack.c.l.b16 %v2017
      %v2134 = vpack.c.b16 %v2078, %v2077
      %v2135 = vpack.c.b16 %v2080, %v2079
      %v2136 = vpack.c.b16 %v2082, %v2081
      %v2137 = vpack.c.b16 %v2084, %v2083
      %v2138 = vpack.c.b16 %v2086, %v2085
      %v2139 = vpack.c.b16 %v2088, %v2087
      %v2140 = vpack.c.b16 %v2090, %v2089
      %v2141 = vpack.c.b16 %v2092, %v2091
      %v2142 = vpack.c.b16 %v2094, %v2093
      %v2143 = vpack.c.b16 %v2096, %v2095
      %v2144 = vpack.c.b16 %v2098, %v2097
      %v2145 = vpack.c.b16 %v2100, %v2099
      %v2146 = vpack.c.b16 %v2102, %v2101
      %v2147 = vpack.c.b16 %v2104, %v2103
      %v2148 = vpack.c.b16 %v2106, %v2105
      %v2149 = vpack.c.b16 %v2108, %v2107
      %v2150 = vpack.c.b16 %v2110, %v2109
      %v2151 = vpack.c.b16 %v2112, %v2111
      %v2152 = vpack.c.b16 %v2114, %v2113
      %v2153 = vpack.c.b16 %v2116, %v2115
      %v2154 = vpack.c.b16 %v2118, %v2117
      %v2155 = vpack.c.b16 %v2120, %v2119
      %v2156 = vpack.c.b16 %v2122, %v2121
      %v2157 = vpack.c.b16 %v2124, %v2123
      %v2158 = vpack.c.b16 %v2126, %v2125
      %v2159 = vpack.c.b16 %v2128, %v2127
      %v2160 = vpack.c.b16 %v2130, %v2129
      %v2161 = vpack.c.b16 %v2132, %v2131
      %v2162 = vpack.c.b16 %v2133, %v2133
      %vm2163 = vcmask 1046528
      %v2164 = vrot.slane %v2134, 1
      %v2165 = vrot.slane %v2135, 1
      %v2166 = vsel %vm2163, %v2164, %v2165
      %v2167 = vrot.slane %v2136, 1
      %v2168 = vsel %vm2163, %v2165, %v2167
      %v2169 = vrot.slane %v2137, 1
      %v2170 = vsel %vm2163, %v2167, %v2169
      %v2171 = vrot.slane %v2138, 1
      %v2172 = vsel %vm2163, %v2169, %v2171
      %v2173 = vrot.slane %v2139, 1
      %v2174 = vsel %vm2163, %v2171, %v2173
      %v2175 = vrot.slane %v2140, 1
      %v2176 = vsel %vm2163, %v2173, %v2175
      %v2177 = vrot.slane %v2141, 1
      %v2178 = vsel %vm2163, %v2175, %v2177
      %v2179 = vrot.slane %v2142, 1
      %v2180 = vsel %vm2163, %v2177, %v2179
      %v2181 = vrot.slane %v2143, 1
      %v2182 = vsel %vm2163, %v2179, %v2181
      %v2183 = vrot.slane %v2144, 1
      %v2184 = vsel %vm2163, %v2181, %v2183
      %v2185 = vrot.slane %v2145, 1
      %v2186 = vsel %vm2163, %v2183, %v2185
      %v2187 = vrot.slane %v2146, 1
      %v2188 = vsel %vm2163, %v2185, %v2187
      %v2189 = vrot.slane %v2147, 1
      %v2190 = vsel %vm2163, %v2187, %v2189
      %v2191 = vrot.slane %v2148, 1
      %v2192 = vsel %vm2163, %v2189, %v2191
      %v2193 = vrot.slane %v2149, 1
      %v2194 = vsel %vm2163, %v2191, %v2193
      %v2195 = vrot.slane %v2150, 1
      %v2196 = vsel %vm2163, %v2193, %v2195
      %v2197 = vrot.slane %v2151, 1
      %v2198 = vsel %vm2163, %v2195, %v2197
      %v2199 = vrot.slane %v2152, 1
      %v2200 = vsel %vm2163, %v2197, %v2199
      %v2201 = vrot.slane %v2153, 1
      %v2202 = vsel %vm2163, %v2199, %v2201
      %v2203 = vrot.slane %v2154, 1
      %v2204 = vsel %vm2163, %v2201, %v2203
      %v2205 = vrot.slane %v2155, 1
      %v2206 = vsel %vm2163, %v2203, %v2205
      %v2207 = vrot.slane %v2156, 1
      %v2208 = vsel %vm2163, %v2205, %v2207
      %v2209 = vrot.slane %v2157, 1
      %v2210 = vsel %vm2163, %v2207, %v2209
      %v2211 = vrot.slane %v2158, 1
      %v2212 = vsel %vm2163, %v2209, %v2211
      %v2213 = vrot.slane %v2159, 1
      %v2214 = vsel %vm2163, %v2211, %v2213
      %v2215 = vrot.slane %v2160, 1
      %v2216 = vsel %vm2163, %v2213, %v2215
      %v2217 = vrot.slane %v2161, 1
      %v2218 = vsel %vm2163, %v2215, %v2217
      %v2219 = vrot.slane %v2162, 1
      %v2220 = vsel %vm2163, %v2217, %v2219
      %v2222 = vsel %vm612, %v2166, 0
      %v2225 = vsel %vm612, %v2168, 0
      %v2228 = vsel %vm612, %v2170, 0
      %v2231 = vsel %vm612, %v2172, 0
      %v2234 = vsel %vm612, %v2174, 0
      %v2237 = vsel %vm612, %v2176, 0
      %v2240 = vsel %vm612, %v2178, 0
      %v2243 = vsel %vm612, %v2180, 0
      %v2246 = vsel %vm612, %v2182, 0
      %v2249 = vsel %vm612, %v2184, 0
      %v2252 = vsel %vm612, %v2186, 0
      %v2255 = vsel %vm612, %v2188, 0
      %v2258 = vsel %vm612, %v2190, 0
      %v2261 = vsel %vm612, %v2192, 0
      %v2264 = vsel %vm612, %v2194, 0
      %v2267 = vsel %vm612, %v2196, 0
      %v2270 = vsel %vm612, %v2198, 0
      %v2273 = vsel %vm612, %v2200, 0
      %v2276 = vsel %vm612, %v2202, 0
      %v2279 = vsel %vm612, %v2204, 0
      %v2282 = vsel %vm612, %v2206, 0
      %v2285 = vsel %vm612, %v2208, 0
      %v2288 = vsel %vm612, %v2210, 0
      %v2291 = vsel %vm612, %v2212, 0
      %v2294 = vsel %vm612, %v2214, 0
      %v2297 = vsel %vm612, %v2216, 0
      %v2300 = vsel %vm612, %v2218, 0
      %v2303 = vsel %vm612, %v2220, 0
      %v2306 = vand.u32 %v2019, %v700
      %2308 = vmatprep.subr.bf16.mxu0 0
      %2309 = vmatpush1.bf16.msra.mxu0 0
      %2310 = vmatprep.subr.bf16.mxu0 0
      %2311 = vmatpush1.bf16.msra.mxu0 0
      %2312 = vmatprep.subr.bf16.mxu0 0
      %2313 = vmatpush1.bf16.msra.mxu0 0
      %2314 = vmatprep.subr.bf16.mxu0 0
      %2315 = vmatpush1.bf16.msra.mxu0 0
      %2316 = vmatprep.subr.bf16.mxu0 0
      %2317 = vmatpush1.bf16.msra.mxu0 0
      %2318 = vmatprep.subr.bf16.mxu0 0
      %2319 = vmatpush1.bf16.msra.mxu0 0
      %2320 = vmatprep.subr.bf16.mxu0 0
      %2321 = vmatpush1.bf16.msra.mxu0 0
      %2322 = vmatprep.subr.bf16.mxu0 0
      %2323 = vmatpush1.bf16.msra.mxu0 %v2306
      %2324 = vmatprep.subr.bf16.mxu0 0
      %2325 = vmatpush2.bf16.msra.mxu0 0
      %2326 = vmatprep.subr.bf16.mxu0 0
      %2327 = vmatpush2.bf16.msra.mxu0 0
      %2328 = vmatprep.subr.bf16.mxu0 0
      %2329 = vmatpush2.bf16.msra.mxu0 0
      %2330 = vmatprep.subr.bf16.mxu0 0
      %2331 = vmatpush2.bf16.msra.mxu0 0
      %2332 = vmatprep.subr.bf16.mxu0 0
      %2333 = vmatpush2.bf16.msra.mxu0 0
      %2334 = vmatprep.subr.bf16.mxu0 0
      %2335 = vmatpush2.bf16.msra.mxu0 0
      %2336 = vmatprep.subr.bf16.mxu0 0
      %2337 = vmatpush2.bf16.msra.mxu0 0
      %2338 = vmatprep.subr.bf16.mxu0 0
      %2339 = vmatpush2.bf16.msra.mxu0 0
      %2340 = vmatprep.mubr.bf16.mxu0 0
      %2341 = vmatmul.mubr.bf16.gmra.mxu0 %v2222
      %v2342 = vpop.f32.mrf.mxu0
      %v2343 = vadd.f32 0.0, %v2342
      %v2344 = vpop.f32.mrf.mxu0
      %v2345 = vpop.f32.mrf.mxu0
      %v2346 = vadd.f32 0.0, %v2345
      %v2347 = vpop.f32.mrf.mxu0
      %2348 = vmatprep.mubr.bf16.mxu0 0
      %2349 = vmatmul.mubr.bf16.gmra.mxu0 %v2225
      %v2350 = vpop.f32.mrf.mxu0
      %v2351 = vadd.f32 0.0, %v2350
      %v2352 = vpop.f32.mrf.mxu0
      %v2353 = vpop.f32.mrf.mxu0
      %v2354 = vadd.f32 0.0, %v2353
      %v2355 = vpop.f32.mrf.mxu0
      %2356 = vmatprep.mubr.bf16.mxu0 0
      %2357 = vmatmul.mubr.bf16.gmra.mxu0 %v2228
      %v2358 = vpop.f32.mrf.mxu0
      %v2359 = vadd.f32 0.0, %v2358
      %v2360 = vpop.f32.mrf.mxu0
      %v2361 = vpop.f32.mrf.mxu0
      %v2362 = vadd.f32 0.0, %v2361
      %v2363 = vpop.f32.mrf.mxu0
      %2364 = vmatprep.mubr.bf16.mxu0 0
      %2365 = vmatmul.mubr.bf16.gmra.mxu0 %v2231
      %v2366 = vpop.f32.mrf.mxu0
      %v2367 = vadd.f32 0.0, %v2366
      %v2368 = vpop.f32.mrf.mxu0
      %v2369 = vpop.f32.mrf.mxu0
      %v2370 = vadd.f32 0.0, %v2369
      %v2371 = vpop.f32.mrf.mxu0
      %2372 = vmatprep.mubr.bf16.mxu0 0
      %2373 = vmatmul.mubr.bf16.gmra.mxu0 %v2234
      %v2374 = vpop.f32.mrf.mxu0
      %v2375 = vadd.f32 0.0, %v2374
      %v2376 = vpop.f32.mrf.mxu0
      %v2377 = vpop.f32.mrf.mxu0
      %v2378 = vadd.f32 0.0, %v2377
      %v2379 = vpop.f32.mrf.mxu0
      %2380 = vmatprep.mubr.bf16.mxu0 0
      %2381 = vmatmul.mubr.bf16.gmra.mxu0 %v2237
      %v2382 = vpop.f32.mrf.mxu0
      %v2383 = vadd.f32 0.0, %v2382
      %v2384 = vpop.f32.mrf.mxu0
      %v2385 = vpop.f32.mrf.mxu0
      %v2386 = vadd.f32 0.0, %v2385
      %v2387 = vpop.f32.mrf.mxu0
      %2388 = vmatprep.mubr.bf16.mxu0 0
      %2389 = vmatmul.mubr.bf16.gmra.mxu0 %v2240
      %v2390 = vpop.f32.mrf.mxu0
      %v2391 = vadd.f32 0.0, %v2390
      %v2392 = vpop.f32.mrf.mxu0
      %v2393 = vpop.f32.mrf.mxu0
      %v2394 = vadd.f32 0.0, %v2393
      %v2395 = vpop.f32.mrf.mxu0
      %2396 = vmatprep.mubr.bf16.mxu0 0
      %2397 = vmatmul.mubr.bf16.gmra.mxu0 %v2243
      %v2398 = vpop.f32.mrf.mxu0
      %v2399 = vadd.f32 0.0, %v2398
      %v2400 = vpop.f32.mrf.mxu0
      %v2401 = vpop.f32.mrf.mxu0
      %v2402 = vadd.f32 0.0, %v2401
      %v2403 = vpop.f32.mrf.mxu0
      %2404 = vmatprep.mubr.bf16.mxu0 0
      %2405 = vmatmul.mubr.bf16.gmra.mxu0 %v2246
      %v2406 = vpop.f32.mrf.mxu0
      %v2407 = vadd.f32 0.0, %v2406
      %v2408 = vpop.f32.mrf.mxu0
      %v2409 = vpop.f32.mrf.mxu0
      %v2410 = vadd.f32 0.0, %v2409
      %v2411 = vpop.f32.mrf.mxu0
      %2412 = vmatprep.mubr.bf16.mxu0 0
      %2413 = vmatmul.mubr.bf16.gmra.mxu0 %v2249
      %v2414 = vpop.f32.mrf.mxu0
      %v2415 = vadd.f32 0.0, %v2414
      %v2416 = vpop.f32.mrf.mxu0
      %v2417 = vpop.f32.mrf.mxu0
      %v2418 = vadd.f32 0.0, %v2417
      %v2419 = vpop.f32.mrf.mxu0
      %2420 = vmatprep.mubr.bf16.mxu0 0
      %2421 = vmatmul.mubr.bf16.gmra.mxu0 %v2252
      %v2422 = vpop.f32.mrf.mxu0
      %v2423 = vadd.f32 0.0, %v2422
      %v2424 = vpop.f32.mrf.mxu0
      %v2425 = vpop.f32.mrf.mxu0
      %v2426 = vadd.f32 0.0, %v2425
      %v2427 = vpop.f32.mrf.mxu0
      %2428 = vmatprep.mubr.bf16.mxu0 0
      %2429 = vmatmul.mubr.bf16.gmra.mxu0 %v2255
      %v2430 = vpop.f32.mrf.mxu0
      %v2431 = vadd.f32 0.0, %v2430
      %v2432 = vpop.f32.mrf.mxu0
      %v2433 = vpop.f32.mrf.mxu0
      %v2434 = vadd.f32 0.0, %v2433
      %v2435 = vpop.f32.mrf.mxu0
      %2436 = vmatprep.mubr.bf16.mxu0 0
      %2437 = vmatmul.mubr.bf16.gmra.mxu0 %v2258
      %v2438 = vpop.f32.mrf.mxu0
      %v2439 = vadd.f32 0.0, %v2438
      %v2440 = vpop.f32.mrf.mxu0
      %v2441 = vpop.f32.mrf.mxu0
      %v2442 = vadd.f32 0.0, %v2441
      %v2443 = vpop.f32.mrf.mxu0
      %2444 = vmatprep.mubr.bf16.mxu0 0
      %2445 = vmatmul.mubr.bf16.gmra.mxu0 %v2261
      %v2446 = vpop.f32.mrf.mxu0
      %v2447 = vadd.f32 0.0, %v2446
      %v2448 = vpop.f32.mrf.mxu0
      %v2449 = vpop.f32.mrf.mxu0
      %v2450 = vadd.f32 0.0, %v2449
      %v2451 = vpop.f32.mrf.mxu0
      %2452 = vmatprep.mubr.bf16.mxu0 0
      %2453 = vmatmul.mubr.bf16.gmra.mxu0 %v2264
      %v2454 = vpop.f32.mrf.mxu0
      %v2455 = vadd.f32 0.0, %v2454
      %v2456 = vpop.f32.mrf.mxu0
      %v2457 = vpop.f32.mrf.mxu0
      %v2458 = vadd.f32 0.0, %v2457
      %v2459 = vpop.f32.mrf.mxu0
      %2460 = vmatprep.mubr.bf16.mxu0 0
      %2461 = vmatmul.mubr.bf16.gmra.mxu0 %v2267
      %v2462 = vpop.f32.mrf.mxu0
      %v2463 = vadd.f32 0.0, %v2462
      %v2464 = vpop.f32.mrf.mxu0
      %v2465 = vpop.f32.mrf.mxu0
      %v2466 = vadd.f32 0.0, %v2465
      %v2467 = vpop.f32.mrf.mxu0
      %2468 = vmatprep.mubr.bf16.mxu0 0
      %2469 = vmatmul.mubr.bf16.gmra.mxu0 %v2270
      %v2470 = vpop.f32.mrf.mxu0
      %v2471 = vadd.f32 0.0, %v2470
      %v2472 = vpop.f32.mrf.mxu0
      %v2473 = vpop.f32.mrf.mxu0
      %v2474 = vadd.f32 0.0, %v2473
      %v2475 = vpop.f32.mrf.mxu0
      %2476 = vmatprep.mubr.bf16.mxu0 0
      %2477 = vmatmul.mubr.bf16.gmra.mxu0 %v2273
      %v2478 = vpop.f32.mrf.mxu0
      %v2479 = vadd.f32 0.0, %v2478
      %v2480 = vpop.f32.mrf.mxu0
      %v2481 = vpop.f32.mrf.mxu0
      %v2482 = vadd.f32 0.0, %v2481
      %v2483 = vpop.f32.mrf.mxu0
      %2484 = vmatprep.mubr.bf16.mxu0 0
      %2485 = vmatmul.mubr.bf16.gmra.mxu0 %v2276
      %v2486 = vpop.f32.mrf.mxu0
      %v2487 = vadd.f32 0.0, %v2486
      %v2488 = vpop.f32.mrf.mxu0
      %v2489 = vpop.f32.mrf.mxu0
      %v2490 = vadd.f32 0.0, %v2489
      %v2491 = vpop.f32.mrf.mxu0
      %2492 = vmatprep.mubr.bf16.mxu0 0
      %2493 = vmatmul.mubr.bf16.gmra.mxu0 %v2279
      %v2494 = vpop.f32.mrf.mxu0
      %v2495 = vadd.f32 0.0, %v2494
      %v2496 = vpop.f32.mrf.mxu0
      %v2497 = vpop.f32.mrf.mxu0
      %v2498 = vadd.f32 0.0, %v2497
      %v2499 = vpop.f32.mrf.mxu0
      %2500 = vmatprep.mubr.bf16.mxu0 0
      %2501 = vmatmul.mubr.bf16.gmra.mxu0 %v2282
      %v2502 = vpop.f32.mrf.mxu0
      %v2503 = vadd.f32 0.0, %v2502
      %v2504 = vpop.f32.mrf.mxu0
      %v2505 = vpop.f32.mrf.mxu0
      %v2506 = vadd.f32 0.0, %v2505
      %v2507 = vpop.f32.mrf.mxu0
      %2508 = vmatprep.mubr.bf16.mxu0 0
      %2509 = vmatmul.mubr.bf16.gmra.mxu0 %v2285
      %v2510 = vpop.f32.mrf.mxu0
      %v2511 = vadd.f32 0.0, %v2510
      %v2512 = vpop.f32.mrf.mxu0
      %v2513 = vpop.f32.mrf.mxu0
      %v2514 = vadd.f32 0.0, %v2513
      %v2515 = vpop.f32.mrf.mxu0
      %2516 = vmatprep.mubr.bf16.mxu0 0
      %2517 = vmatmul.mubr.bf16.gmra.mxu0 %v2288
      %v2518 = vpop.f32.mrf.mxu0
      %v2519 = vadd.f32 0.0, %v2518
      %v2520 = vpop.f32.mrf.mxu0
      %v2521 = vpop.f32.mrf.mxu0
      %v2522 = vadd.f32 0.0, %v2521
      %v2523 = vpop.f32.mrf.mxu0
      %2524 = vmatprep.mubr.bf16.mxu0 0
      %2525 = vmatmul.mubr.bf16.gmra.mxu0 %v2291
      %v2526 = vpop.f32.mrf.mxu0
      %v2527 = vadd.f32 0.0, %v2526
      %v2528 = vpop.f32.mrf.mxu0
      %v2529 = vpop.f32.mrf.mxu0
      %v2530 = vadd.f32 0.0, %v2529
      %v2531 = vpop.f32.mrf.mxu0
      %2532 = vmatprep.mubr.bf16.mxu0 0
      %2533 = vmatmul.mubr.bf16.gmra.mxu0 %v2294
      %v2534 = vpop.f32.mrf.mxu0
      %v2535 = vadd.f32 0.0, %v2534
      %v2536 = vpop.f32.mrf.mxu0
      %v2537 = vpop.f32.mrf.mxu0
      %v2538 = vadd.f32 0.0, %v2537
      %v2539 = vpop.f32.mrf.mxu0
      %2540 = vmatprep.mubr.bf16.mxu0 0
      %2541 = vmatmul.mubr.bf16.gmra.mxu0 %v2297
      %v2542 = vpop.f32.mrf.mxu0
      %v2543 = vadd.f32 0.0, %v2542
      %v2544 = vpop.f32.mrf.mxu0
      %v2545 = vpop.f32.mrf.mxu0
      %v2546 = vadd.f32 0.0, %v2545
      %v2547 = vpop.f32.mrf.mxu0
      %2548 = vmatprep.mubr.bf16.mxu0 0
      %2549 = vmatmul.mubr.bf16.gmra.mxu0 %v2300
      %v2550 = vpop.f32.mrf.mxu0
      %v2551 = vadd.f32 0.0, %v2550
      %v2552 = vpop.f32.mrf.mxu0
      %v2553 = vpop.f32.mrf.mxu0
      %v2554 = vadd.f32 0.0, %v2553
      %v2555 = vpop.f32.mrf.mxu0
      %2556 = vmatprep.mubr.bf16.mxu0 0
      %2557 = vmatmul.mubr.bf16.gmra.mxu0 %v2303
      %v2558 = vpop.f32.mrf.mxu0
      %v2559 = vadd.f32 0.0, %v2558
      %v2560 = vpop.f32.mrf.mxu0
      %v2561 = vpop.f32.mrf.mxu0
      %v2562 = vadd.f32 0.0, %v2561
      %v2563 = vpop.f32.mrf.mxu0
      %2564 = vdwg.mxu0
      %v2565 = vld [vmem:[#allocation3] sm:$0xff]
      %v2566 = vld [vmem:[#allocation3 + $0x8] sm:$0xff]
      %v2567 = vld [vmem:[#allocation3 + $0x10] sm:$0xff]
      %v2568 = vld [vmem:[#allocation3 + $0x18] sm:$0xff]
      %v2569 = vld [vmem:[#allocation3 + $0x20] sm:$0xff]
      %v2570 = vld [vmem:[#allocation3 + $0x28] sm:$0xff]
      %v2571 = vld [vmem:[#allocation3 + $0x30] sm:$0xff]
      %v2572 = vld [vmem:[#allocation3 + $0x38] sm:$0xff]
      %v2573 = vld [vmem:[#allocation3 + $0x40] sm:$0xff]
      %v2574 = vld [vmem:[#allocation3 + $0x48] sm:$0xff]
      %v2575 = vld [vmem:[#allocation3 + $0x50] sm:$0xff]
      %v2576 = vld [vmem:[#allocation3 + $0x58] sm:$0xff]
      %v2577 = vld [vmem:[#allocation3 + $0x60] sm:$0xff]
      %v2578 = vld [vmem:[#allocation3 + $0x68] sm:$0xff]
      %v2579 = vld [vmem:[#allocation3 + $0x70] sm:$0xff]
      %v2580 = vld [vmem:[#allocation3 + $0x78] sm:$0xff]
      %v2581 = vld [vmem:[#allocation3 + $0x80] sm:$0xff]
      %v2582 = vld [vmem:[#allocation3 + $0x88] sm:$0xff]
      %v2583 = vld [vmem:[#allocation3 + $0x90] sm:$0xff]
      %v2584 = vld [vmem:[#allocation3 + $0x98] sm:$0xff]
      %v2585 = vld [vmem:[#allocation3 + $0xa0] sm:$0xff]
      %v2586 = vld [vmem:[#allocation3 + $0xa8] sm:$0xff]
      %v2587 = vld [vmem:[#allocation3 + $0xb0] sm:$0xff]
      %v2588 = vld [vmem:[#allocation3 + $0xb8] sm:$0xff]
      %v2589 = vld [vmem:[#allocation3 + $0xc0] sm:$0xff]
      %v2590 = vld [vmem:[#allocation3 + $0xc8] sm:$0xff]
      %v2591 = vld [vmem:[#allocation3 + $0xd0] sm:$0xff]
      %v2592 = vld [vmem:[#allocation3 + $0xd8] sm:$0xff]
      %v2593 = vld [vmem:[#allocation3 + $0xe0] sm:$0xff]
      %v2594 = vld [vmem:[#allocation3 + $0xe8] sm:$0xff]
      %v2595 = vld [vmem:[#allocation3 + $0xf0] sm:$0xff]
      %v2596 = vld [vmem:[#allocation3 + $0xf8] sm:$0xff]
      %v2597 = vld [vmem:[#allocation3 + $0x100] sm:$0xff]
      %v2598 = vld [vmem:[#allocation3 + $0x108] sm:$0xff]
      %v2599 = vld [vmem:[#allocation3 + $0x110] sm:$0xff]
      %v2600 = vld [vmem:[#allocation3 + $0x118] sm:$0xff]
      %v2601 = vld [vmem:[#allocation3 + $0x120] sm:$0xff]
      %v2602 = vld [vmem:[#allocation3 + $0x128] sm:$0xff]
      %v2603 = vld [vmem:[#allocation3 + $0x130] sm:$0xff]
      %v2604 = vld [vmem:[#allocation3 + $0x138] sm:$0xff]
      %v2605 = vld [vmem:[#allocation3 + $0x140] sm:$0xff]
      %v2606 = vld [vmem:[#allocation3 + $0x148] sm:$0xff]
      %v2607 = vld [vmem:[#allocation3 + $0x150] sm:$0xff]
      %v2608 = vld [vmem:[#allocation3 + $0x158] sm:$0xff]
      %v2609 = vld [vmem:[#allocation3 + $0x160] sm:$0xff]
      %v2610 = vld [vmem:[#allocation3 + $0x168] sm:$0xff]
      %v2611 = vld [vmem:[#allocation3 + $0x170] sm:$0xff]
      %v2612 = vld [vmem:[#allocation3 + $0x178] sm:$0xff]
      %v2613 = vld [vmem:[#allocation3 + $0x180] sm:$0xff]
      %v2614 = vld [vmem:[#allocation3 + $0x188] sm:$0xff]
      %v2615 = vld [vmem:[#allocation3 + $0x190] sm:$0xff]
      %v2616 = vld [vmem:[#allocation3 + $0x198] sm:$0xff]
      %v2617 = vld [vmem:[#allocation3 + $0x1a0] sm:$0xff]
      %v2618 = vld [vmem:[#allocation3 + $0x1a8] sm:$0xff]
      %v2619 = vld [vmem:[#allocation3 + $0x1b0] sm:$0xff]
      %v2620 = vld [vmem:[#allocation3 + $0x1b8] sm:$0xff]
      %v2621 = vadd.f32 %v2565, %v2343
      %v2622 = vadd.f32 %v2566, %v2346
      %v2623 = vadd.f32 %v2567, %v2351
      %v2624 = vadd.f32 %v2568, %v2354
      %v2625 = vadd.f32 %v2569, %v2359
      %v2626 = vadd.f32 %v2570, %v2362
      %v2627 = vadd.f32 %v2571, %v2367
      %v2628 = vadd.f32 %v2572, %v2370
      %v2629 = vadd.f32 %v2573, %v2375
      %v2630 = vadd.f32 %v2574, %v2378
      %v2631 = vadd.f32 %v2575, %v2383
      %v2632 = vadd.f32 %v2576, %v2386
      %v2633 = vadd.f32 %v2577, %v2391
      %v2634 = vadd.f32 %v2578, %v2394
      %v2635 = vadd.f32 %v2579, %v2399
      %v2636 = vadd.f32 %v2580, %v2402
      %v2637 = vadd.f32 %v2581, %v2407
      %v2638 = vadd.f32 %v2582, %v2410
      %v2639 = vadd.f32 %v2583, %v2415
      %v2640 = vadd.f32 %v2584, %v2418
      %v2641 = vadd.f32 %v2585, %v2423
      %v2642 = vadd.f32 %v2586, %v2426
      %v2643 = vadd.f32 %v2587, %v2431
      %v2644 = vadd.f32 %v2588, %v2434
      %v2645 = vadd.f32 %v2589, %v2439
      %v2646 = vadd.f32 %v2590, %v2442
      %v2647 = vadd.f32 %v2591, %v2447
      %v2648 = vadd.f32 %v2592, %v2450
      %v2649 = vadd.f32 %v2593, %v2455
      %v2650 = vadd.f32 %v2594, %v2458
      %v2651 = vadd.f32 %v2595, %v2463
      %v2652 = vadd.f32 %v2596, %v2466
      %v2653 = vadd.f32 %v2597, %v2471
      %v2654 = vadd.f32 %v2598, %v2474
      %v2655 = vadd.f32 %v2599, %v2479
      %v2656 = vadd.f32 %v2600, %v2482
      %v2657 = vadd.f32 %v2601, %v2487
      %v2658 = vadd.f32 %v2602, %v2490
      %v2659 = vadd.f32 %v2603, %v2495
      %v2660 = vadd.f32 %v2604, %v2498
      %v2661 = vadd.f32 %v2605, %v2503
      %v2662 = vadd.f32 %v2606, %v2506
      %v2663 = vadd.f32 %v2607, %v2511
      %v2664 = vadd.f32 %v2608, %v2514
      %v2665 = vadd.f32 %v2609, %v2519
      %v2666 = vadd.f32 %v2610, %v2522
      %v2667 = vadd.f32 %v2611, %v2527
      %v2668 = vadd.f32 %v2612, %v2530
      %v2669 = vadd.f32 %v2613, %v2535
      %v2670 = vadd.f32 %v2614, %v2538
      %v2671 = vadd.f32 %v2615, %v2543
      %v2672 = vadd.f32 %v2616, %v2546
      %v2673 = vadd.f32 %v2617, %v2551
      %v2674 = vadd.f32 %v2618, %v2554
      %v2675 = vadd.f32 %v2619, %v2559
      %v2676 = vadd.f32 %v2620, %v2562
      %2677 = vst.msk [vmem:[#allocation3] sm:$0xff] %vm961, %v2621
      %2678 = vst.msk [vmem:[#allocation3 + $0x8] sm:$0xff] %vm961, %v2622
      %2679 = vst.msk [vmem:[#allocation3 + $0x10] sm:$0xff] %vm961, %v2623
      %2680 = vst.msk [vmem:[#allocation3 + $0x18] sm:$0xff] %vm961, %v2624
      %2681 = vst.msk [vmem:[#allocation3 + $0x20] sm:$0xff] %vm961, %v2625
      %2682 = vst.msk [vmem:[#allocation3 + $0x28] sm:$0xff] %vm961, %v2626
      %2683 = vst.msk [vmem:[#allocation3 + $0x30] sm:$0xff] %vm961, %v2627
      %2684 = vst.msk [vmem:[#allocation3 + $0x38] sm:$0xff] %vm961, %v2628
      %2685 = vst.msk [vmem:[#allocation3 + $0x40] sm:$0xff] %vm961, %v2629
      %2686 = vst.msk [vmem:[#allocation3 + $0x48] sm:$0xff] %vm961, %v2630
      %2687 = vst.msk [vmem:[#allocation3 + $0x50] sm:$0xff] %vm961, %v2631
      %2688 = vst.msk [vmem:[#allocation3 + $0x58] sm:$0xff] %vm961, %v2632
      %2689 = vst.msk [vmem:[#allocation3 + $0x60] sm:$0xff] %vm961, %v2633
      %2690 = vst.msk [vmem:[#allocation3 + $0x68] sm:$0xff] %vm961, %v2634
      %2691 = vst.msk [vmem:[#allocation3 + $0x70] sm:$0xff] %vm961, %v2635
      %2692 = vst.msk [vmem:[#allocation3 + $0x78] sm:$0xff] %vm961, %v2636
      %2693 = vst.msk [vmem:[#allocation3 + $0x80] sm:$0xff] %vm961, %v2637
      %2694 = vst.msk [vmem:[#allocation3 + $0x88] sm:$0xff] %vm961, %v2638
      %2695 = vst.msk [vmem:[#allocation3 + $0x90] sm:$0xff] %vm961, %v2639
      %2696 = vst.msk [vmem:[#allocation3 + $0x98] sm:$0xff] %vm961, %v2640
      %2697 = vst.msk [vmem:[#allocation3 + $0xa0] sm:$0xff] %vm961, %v2641
      %2698 = vst.msk [vmem:[#allocation3 + $0xa8] sm:$0xff] %vm961, %v2642
      %2699 = vst.msk [vmem:[#allocation3 + $0xb0] sm:$0xff] %vm961, %v2643
      %2700 = vst.msk [vmem:[#allocation3 + $0xb8] sm:$0xff] %vm961, %v2644
      %2701 = vst.msk [vmem:[#allocation3 + $0xc0] sm:$0xff] %vm961, %v2645
      %2702 = vst.msk [vmem:[#allocation3 + $0xc8] sm:$0xff] %vm961, %v2646
      %2703 = vst.msk [vmem:[#allocation3 + $0xd0] sm:$0xff] %vm961, %v2647
      %2704 = vst.msk [vmem:[#allocation3 + $0xd8] sm:$0xff] %vm961, %v2648
      %2705 = vst.msk [vmem:[#allocation3 + $0xe0] sm:$0xff] %vm961, %v2649
      %2706 = vst.msk [vmem:[#allocation3 + $0xe8] sm:$0xff] %vm961, %v2650
      %2707 = vst.msk [vmem:[#allocation3 + $0xf0] sm:$0xff] %vm961, %v2651
      %2708 = vst.msk [vmem:[#allocation3 + $0xf8] sm:$0xff] %vm961, %v2652
      %2709 = vst.msk [vmem:[#allocation3 + $0x100] sm:$0xff] %vm961, %v2653
      %2710 = vst.msk [vmem:[#allocation3 + $0x108] sm:$0xff] %vm961, %v2654
      %2711 = vst.msk [vmem:[#allocation3 + $0x110] sm:$0xff] %vm961, %v2655
      %2712 = vst.msk [vmem:[#allocation3 + $0x118] sm:$0xff] %vm961, %v2656
      %2713 = vst.msk [vmem:[#allocation3 + $0x120] sm:$0xff] %vm961, %v2657
      %2714 = vst.msk [vmem:[#allocation3 + $0x128] sm:$0xff] %vm961, %v2658
      %2715 = vst.msk [vmem:[#allocation3 + $0x130] sm:$0xff] %vm961, %v2659
      %2716 = vst.msk [vmem:[#allocation3 + $0x138] sm:$0xff] %vm961, %v2660
      %2717 = vst.msk [vmem:[#allocation3 + $0x140] sm:$0xff] %vm961, %v2661
      %2718 = vst.msk [vmem:[#allocation3 + $0x148] sm:$0xff] %vm961, %v2662
      %2719 = vst.msk [vmem:[#allocation3 + $0x150] sm:$0xff] %vm961, %v2663
      %2720 = vst.msk [vmem:[#allocation3 + $0x158] sm:$0xff] %vm961, %v2664
      %2721 = vst.msk [vmem:[#allocation3 + $0x160] sm:$0xff] %vm961, %v2665
      %2722 = vst.msk [vmem:[#allocation3 + $0x168] sm:$0xff] %vm961, %v2666
      %2723 = vst.msk [vmem:[#allocation3 + $0x170] sm:$0xff] %vm961, %v2667
      %2724 = vst.msk [vmem:[#allocation3 + $0x178] sm:$0xff] %vm961, %v2668
      %2725 = vst.msk [vmem:[#allocation3 + $0x180] sm:$0xff] %vm961, %v2669
      %2726 = vst.msk [vmem:[#allocation3 + $0x188] sm:$0xff] %vm961, %v2670
      %2727 = vst.msk [vmem:[#allocation3 + $0x190] sm:$0xff] %vm961, %v2671
      %2728 = vst.msk [vmem:[#allocation3 + $0x198] sm:$0xff] %vm961, %v2672
      %2729 = vst.msk [vmem:[#allocation3 + $0x1a0] sm:$0xff] %vm961, %v2673
      %2730 = vst.msk [vmem:[#allocation3 + $0x1a8] sm:$0xff] %vm961, %v2674
      %2731 = vst.msk [vmem:[#allocation3 + $0x1b0] sm:$0xff] %vm961, %v2675
      %2732 = vst.msk [vmem:[#allocation3 + $0x1b8] sm:$0xff] %vm961, %v2676
      %v2733 = vld [vmem:[#allocation2 + $0xc] sm:$0xf]
      %v2734 = vld [vmem:[#allocation2 + $0x10] sm:$0xf]
      %v2735 = vld [vmem:[#allocation2 + $0x14] sm:$0xf]
      %v2736 = vld [vmem:[#allocation2 + $0x18] sm:$0xf]
      %v2737 = vld [vmem:[#allocation2 + $0x1c] sm:$0xf]
      %v2738 = vld [vmem:[#allocation2 + $0x20] sm:$0xf]
      %v2739 = vld [vmem:[#allocation2 + $0x24] sm:$0xf]
      %v2740 = vld [vmem:[#allocation2 + $0x28] sm:$0xf]
      %v2741 = vld [vmem:[#allocation2 + $0x2c] sm:$0xf]
      %v2742 = vld [vmem:[#allocation2 + $0x30] sm:$0xf]
      %v2743 = vld [vmem:[#allocation2 + $0x34] sm:$0xf]
      %v2744 = vld [vmem:[#allocation2 + $0x38] sm:$0xf]
      %v2745 = vld [vmem:[#allocation2 + $0x3c] sm:$0xf]
      %v2746 = vld [vmem:[#allocation2 + $0x40] sm:$0xf]
      %v2747 = vld [vmem:[#allocation2 + $0x44] sm:$0xf]
      %v2748 = vld [vmem:[#allocation2 + $0x48] sm:$0xf]
      %v2749 = vld [vmem:[#allocation2 + $0x4c] sm:$0xf]
      %v2750 = vld [vmem:[#allocation2 + $0x50] sm:$0xf]
      %v2751 = vld [vmem:[#allocation2 + $0x54] sm:$0xf]
      %v2752 = vld [vmem:[#allocation2 + $0x58] sm:$0xf]
      %v2753 = vld [vmem:[#allocation2 + $0x5c] sm:$0xf]
      %v2754 = vld [vmem:[#allocation2 + $0x60] sm:$0xf]
      %v2755 = vld [vmem:[#allocation2 + $0x64] sm:$0xf]
      %v2756 = vld [vmem:[#allocation2 + $0x68] sm:$0xf]
      %v2757 = vld [vmem:[#allocation2 + $0x6c] sm:$0xf]
      %v2758 = vld [vmem:[#allocation2 + $0x70] sm:$0xf]
      %v2759 = vld [vmem:[#allocation2 + $0x74] sm:$0xf]
      %v2760 = vld [vmem:[#allocation2 + $0x78] sm:$0xf]
      %v2761 = vld [vmem:[#allocation2 + $0x7c] sm:$0xf]
      %v2762 = vld [vmem:[#allocation2 + $0x80] sm:$0xf]
      %v2763 = vld [vmem:[#allocation2 + $0x84] sm:$0xf]
      %v2764 = vld [vmem:[#allocation2 + $0x88] sm:$0xf]
      %v2765 = vld [vmem:[#allocation2 + $0x8c] sm:$0xf]
      %v2766 = vld [vmem:[#allocation2 + $0x90] sm:$0xf]
      %v2767 = vld [vmem:[#allocation2 + $0x94] sm:$0xf]
      %v2768 = vld [vmem:[#allocation2 + $0x98] sm:$0xf]
      %v2769 = vld [vmem:[#allocation2 + $0x9c] sm:$0xf]
      %v2770 = vld [vmem:[#allocation2 + $0xa0] sm:$0xf]
      %v2771 = vld [vmem:[#allocation2 + $0xa4] sm:$0xf]
      %v2772 = vld [vmem:[#allocation2 + $0xa8] sm:$0xf]
      %v2773 = vld [vmem:[#allocation2 + $0xac] sm:$0xf]
      %v2774 = vld [vmem:[#allocation2 + $0xb0] sm:$0xf]
      %v2775 = vld [vmem:[#allocation2 + $0xb4] sm:$0xf]
      %v2776 = vld [vmem:[#allocation2 + $0xb8] sm:$0xf]
      %v2777 = vld [vmem:[#allocation2 + $0xbc] sm:$0xf]
      %v2778 = vld [vmem:[#allocation2 + $0xc0] sm:$0xf]
      %v2779 = vld [vmem:[#allocation2 + $0xc4] sm:$0xf]
      %v2780 = vld [vmem:[#allocation2 + $0xc8] sm:$0xf]
      %v2781 = vld [vmem:[#allocation2 + $0xcc] sm:$0xf]
      %v2782 = vld [vmem:[#allocation2 + $0xd0] sm:$0xf]
      %v2783 = vld [vmem:[#allocation2 + $0xd4] sm:$0xf]
      %v2784 = vld [vmem:[#allocation2 + $0xd8] sm:$0xf]
      %v2785 = vld [vmem:[#allocation2 + $0xdc] sm:$0xf]
      %v2786 = vld [vmem:[#allocation2 + $0xe0] sm:$0xf]
      %v2787 = vld [vmem:[#allocation2 + $0xe4] sm:$0xf]
      %v2788 = vld [vmem:[#allocation2 + $0xe8] sm:$0xf]
      %s2789 = scalar_lea.vmem %s2, 6
      %v2790 = vld [vmem:[%s2789] sm:$0x3]
      %v2847 = vunpack.c.l.b16 %v2733
      %v2848 = vunpack.c.l.b16 %v2734
      %v2849 = vunpack.c.l.b16 %v2735
      %v2850 = vunpack.c.l.b16 %v2736
      %v2851 = vunpack.c.l.b16 %v2737
      %v2852 = vunpack.c.l.b16 %v2738
      %v2853 = vunpack.c.l.b16 %v2739
      %v2854 = vunpack.c.l.b16 %v2740
      %v2855 = vunpack.c.l.b16 %v2741
      %v2856 = vunpack.c.l.b16 %v2742
      %v2857 = vunpack.c.l.b16 %v2743
      %v2858 = vunpack.c.l.b16 %v2744
      %v2859 = vunpack.c.l.b16 %v2745
      %v2860 = vunpack.c.l.b16 %v2746
      %v2861 = vunpack.c.l.b16 %v2747
      %v2862 = vunpack.c.l.b16 %v2748
      %v2863 = vunpack.c.l.b16 %v2749
      %v2864 = vunpack.c.l.b16 %v2750
      %v2865 = vunpack.c.l.b16 %v2751
      %v2866 = vunpack.c.l.b16 %v2752
      %v2867 = vunpack.c.l.b16 %v2753
      %v2868 = vunpack.c.l.b16 %v2754
      %v2869 = vunpack.c.l.b16 %v2755
      %v2870 = vunpack.c.l.b16 %v2756
      %v2871 = vunpack.c.l.b16 %v2757
      %v2872 = vunpack.c.l.b16 %v2758
      %v2873 = vunpack.c.l.b16 %v2759
      %v2874 = vunpack.c.l.b16 %v2760
      %v2875 = vunpack.c.l.b16 %v2761
      %v2876 = vunpack.c.l.b16 %v2762
      %v2877 = vunpack.c.l.b16 %v2763
      %v2878 = vunpack.c.l.b16 %v2764
      %v2879 = vunpack.c.l.b16 %v2765
      %v2880 = vunpack.c.l.b16 %v2766
      %v2881 = vunpack.c.l.b16 %v2767
      %v2882 = vunpack.c.l.b16 %v2768
      %v2883 = vunpack.c.l.b16 %v2769
      %v2884 = vunpack.c.l.b16 %v2770
      %v2885 = vunpack.c.l.b16 %v2771
      %v2886 = vunpack.c.l.b16 %v2772
      %v2887 = vunpack.c.l.b16 %v2773
      %v2888 = vunpack.c.l.b16 %v2774
      %v2889 = vunpack.c.l.b16 %v2775
      %v2890 = vunpack.c.l.b16 %v2776
      %v2891 = vunpack.c.l.b16 %v2777
      %v2892 = vunpack.c.l.b16 %v2778
      %v2893 = vunpack.c.l.b16 %v2779
      %v2894 = vunpack.c.l.b16 %v2780
      %v2895 = vunpack.c.l.b16 %v2781
      %v2896 = vunpack.c.l.b16 %v2782
      %v2897 = vunpack.c.l.b16 %v2783
      %v2898 = vunpack.c.l.b16 %v2784
      %v2899 = vunpack.c.l.b16 %v2785
      %v2900 = vunpack.c.l.b16 %v2786
      %v2901 = vunpack.c.l.b16 %v2787
      %v2902 = vunpack.c.l.b16 %v2788
      %v2903 = vpack.c.b16 %v2848, %v2847
      %v2904 = vpack.c.b16 %v2850, %v2849
      %v2905 = vpack.c.b16 %v2852, %v2851
      %v2906 = vpack.c.b16 %v2854, %v2853
      %v2907 = vpack.c.b16 %v2856, %v2855
      %v2908 = vpack.c.b16 %v2858, %v2857
      %v2909 = vpack.c.b16 %v2860, %v2859
      %v2910 = vpack.c.b16 %v2862, %v2861
      %v2911 = vpack.c.b16 %v2864, %v2863
      %v2912 = vpack.c.b16 %v2866, %v2865
      %v2913 = vpack.c.b16 %v2868, %v2867
      %v2914 = vpack.c.b16 %v2870, %v2869
      %v2915 = vpack.c.b16 %v2872, %v2871
      %v2916 = vpack.c.b16 %v2874, %v2873
      %v2917 = vpack.c.b16 %v2876, %v2875
      %v2918 = vpack.c.b16 %v2878, %v2877
      %v2919 = vpack.c.b16 %v2880, %v2879
      %v2920 = vpack.c.b16 %v2882, %v2881
      %v2921 = vpack.c.b16 %v2884, %v2883
      %v2922 = vpack.c.b16 %v2886, %v2885
      %v2923 = vpack.c.b16 %v2888, %v2887
      %v2924 = vpack.c.b16 %v2890, %v2889
      %v2925 = vpack.c.b16 %v2892, %v2891
      %v2926 = vpack.c.b16 %v2894, %v2893
      %v2927 = vpack.c.b16 %v2896, %v2895
      %v2928 = vpack.c.b16 %v2898, %v2897
      %v2929 = vpack.c.b16 %v2900, %v2899
      %v2930 = vpack.c.b16 %v2902, %v2901
      %v2932 = vsel %vm612, %v2903, 0
      %v2935 = vsel %vm612, %v2904, 0
      %v2938 = vsel %vm612, %v2905, 0
      %v2941 = vsel %vm612, %v2906, 0
      %v2944 = vsel %vm612, %v2907, 0
      %v2947 = vsel %vm612, %v2908, 0
      %v2950 = vsel %vm612, %v2909, 0
      %v2953 = vsel %vm612, %v2910, 0
      %v2956 = vsel %vm612, %v2911, 0
      %v2959 = vsel %vm612, %v2912, 0
      %v2962 = vsel %vm612, %v2913, 0
      %v2965 = vsel %vm612, %v2914, 0
      %v2968 = vsel %vm612, %v2915, 0
      %v2971 = vsel %vm612, %v2916, 0
      %v2974 = vsel %vm612, %v2917, 0
      %v2977 = vsel %vm612, %v2918, 0
      %v2980 = vsel %vm612, %v2919, 0
      %v2983 = vsel %vm612, %v2920, 0
      %v2986 = vsel %vm612, %v2921, 0
      %v2989 = vsel %vm612, %v2922, 0
      %v2992 = vsel %vm612, %v2923, 0
      %v2995 = vsel %vm612, %v2924, 0
      %v2998 = vsel %vm612, %v2925, 0
      %v3001 = vsel %vm612, %v2926, 0
      %v3004 = vsel %vm612, %v2927, 0
      %v3007 = vsel %vm612, %v2928, 0
      %v3010 = vsel %vm612, %v2929, 0
      %v3013 = vsel %vm612, %v2930, 0
      %v3016 = vand.u32 %v2790, %v700
      %3018 = vmatprep.subr.bf16.mxu0 0
      %3019 = vmatpush1.bf16.msra.mxu0 0
      %3020 = vmatprep.subr.bf16.mxu0 0
      %3021 = vmatpush1.bf16.msra.mxu0 0
      %3022 = vmatprep.subr.bf16.mxu0 0
      %3023 = vmatpush1.bf16.msra.mxu0 0
      %3024 = vmatprep.subr.bf16.mxu0 0
      %3025 = vmatpush1.bf16.msra.mxu0 0
      %3026 = vmatprep.subr.bf16.mxu0 0
      %3027 = vmatpush1.bf16.msra.mxu0 0
      %3028 = vmatprep.subr.bf16.mxu0 0
      %3029 = vmatpush1.bf16.msra.mxu0 0
      %3030 = vmatprep.subr.bf16.mxu0 0
      %3031 = vmatpush1.bf16.msra.mxu0 0
      %3032 = vmatprep.subr.bf16.mxu0 0
      %3033 = vmatpush1.bf16.msra.mxu0 %v3016
      %3034 = vmatprep.subr.bf16.mxu0 0
      %3035 = vmatpush2.bf16.msra.mxu0 0
      %3036 = vmatprep.subr.bf16.mxu0 0
      %3037 = vmatpush2.bf16.msra.mxu0 0
      %3038 = vmatprep.subr.bf16.mxu0 0
      %3039 = vmatpush2.bf16.msra.mxu0 0
      %3040 = vmatprep.subr.bf16.mxu0 0
      %3041 = vmatpush2.bf16.msra.mxu0 0
      %3042 = vmatprep.subr.bf16.mxu0 0
      %3043 = vmatpush2.bf16.msra.mxu0 0
      %3044 = vmatprep.subr.bf16.mxu0 0
      %3045 = vmatpush2.bf16.msra.mxu0 0
      %3046 = vmatprep.subr.bf16.mxu0 0
      %3047 = vmatpush2.bf16.msra.mxu0 0
      %3048 = vmatprep.subr.bf16.mxu0 0
      %3049 = vmatpush2.bf16.msra.mxu0 0
      %3050 = vmatprep.mubr.bf16.mxu0 0
      %3051 = vmatmul.mubr.bf16.gmra.mxu0 %v2932
      %v3052 = vpop.f32.mrf.mxu0
      %v3053 = vadd.f32 0.0, %v3052
      %v3054 = vpop.f32.mrf.mxu0
      %v3055 = vpop.f32.mrf.mxu0
      %v3056 = vadd.f32 0.0, %v3055
      %v3057 = vpop.f32.mrf.mxu0
      %3058 = vmatprep.mubr.bf16.mxu0 0
      %3059 = vmatmul.mubr.bf16.gmra.mxu0 %v2935
      %v3060 = vpop.f32.mrf.mxu0
      %v3061 = vadd.f32 0.0, %v3060
      %v3062 = vpop.f32.mrf.mxu0
      %v3063 = vpop.f32.mrf.mxu0
      %v3064 = vadd.f32 0.0, %v3063
      %v3065 = vpop.f32.mrf.mxu0
      %3066 = vmatprep.mubr.bf16.mxu0 0
      %3067 = vmatmul.mubr.bf16.gmra.mxu0 %v2938
      %v3068 = vpop.f32.mrf.mxu0
      %v3069 = vadd.f32 0.0, %v3068
      %v3070 = vpop.f32.mrf.mxu0
      %v3071 = vpop.f32.mrf.mxu0
      %v3072 = vadd.f32 0.0, %v3071
      %v3073 = vpop.f32.mrf.mxu0
      %3074 = vmatprep.mubr.bf16.mxu0 0
      %3075 = vmatmul.mubr.bf16.gmra.mxu0 %v2941
      %v3076 = vpop.f32.mrf.mxu0
      %v3077 = vadd.f32 0.0, %v3076
      %v3078 = vpop.f32.mrf.mxu0
      %v3079 = vpop.f32.mrf.mxu0
      %v3080 = vadd.f32 0.0, %v3079
      %v3081 = vpop.f32.mrf.mxu0
      %3082 = vmatprep.mubr.bf16.mxu0 0
      %3083 = vmatmul.mubr.bf16.gmra.mxu0 %v2944
      %v3084 = vpop.f32.mrf.mxu0
      %v3085 = vadd.f32 0.0, %v3084
      %v3086 = vpop.f32.mrf.mxu0
      %v3087 = vpop.f32.mrf.mxu0
      %v3088 = vadd.f32 0.0, %v3087
      %v3089 = vpop.f32.mrf.mxu0
      %3090 = vmatprep.mubr.bf16.mxu0 0
      %3091 = vmatmul.mubr.bf16.gmra.mxu0 %v2947
      %v3092 = vpop.f32.mrf.mxu0
      %v3093 = vadd.f32 0.0, %v3092
      %v3094 = vpop.f32.mrf.mxu0
      %v3095 = vpop.f32.mrf.mxu0
      %v3096 = vadd.f32 0.0, %v3095
      %v3097 = vpop.f32.mrf.mxu0
      %3098 = vmatprep.mubr.bf16.mxu0 0
      %3099 = vmatmul.mubr.bf16.gmra.mxu0 %v2950
      %v3100 = vpop.f32.mrf.mxu0
      %v3101 = vadd.f32 0.0, %v3100
      %v3102 = vpop.f32.mrf.mxu0
      %v3103 = vpop.f32.mrf.mxu0
      %v3104 = vadd.f32 0.0, %v3103
      %v3105 = vpop.f32.mrf.mxu0
      %3106 = vmatprep.mubr.bf16.mxu0 0
      %3107 = vmatmul.mubr.bf16.gmra.mxu0 %v2953
      %v3108 = vpop.f32.mrf.mxu0
      %v3109 = vadd.f32 0.0, %v3108
      %v3110 = vpop.f32.mrf.mxu0
      %v3111 = vpop.f32.mrf.mxu0
      %v3112 = vadd.f32 0.0, %v3111
      %v3113 = vpop.f32.mrf.mxu0
      %3114 = vmatprep.mubr.bf16.mxu0 0
      %3115 = vmatmul.mubr.bf16.gmra.mxu0 %v2956
      %v3116 = vpop.f32.mrf.mxu0
      %v3117 = vadd.f32 0.0, %v3116
      %v3118 = vpop.f32.mrf.mxu0
      %v3119 = vpop.f32.mrf.mxu0
      %v3120 = vadd.f32 0.0, %v3119
      %v3121 = vpop.f32.mrf.mxu0
      %3122 = vmatprep.mubr.bf16.mxu0 0
      %3123 = vmatmul.mubr.bf16.gmra.mxu0 %v2959
      %v3124 = vpop.f32.mrf.mxu0
      %v3125 = vadd.f32 0.0, %v3124
      %v3126 = vpop.f32.mrf.mxu0
      %v3127 = vpop.f32.mrf.mxu0
      %v3128 = vadd.f32 0.0, %v3127
      %v3129 = vpop.f32.mrf.mxu0
      %3130 = vmatprep.mubr.bf16.mxu0 0
      %3131 = vmatmul.mubr.bf16.gmra.mxu0 %v2962
      %v3132 = vpop.f32.mrf.mxu0
      %v3133 = vadd.f32 0.0, %v3132
      %v3134 = vpop.f32.mrf.mxu0
      %v3135 = vpop.f32.mrf.mxu0
      %v3136 = vadd.f32 0.0, %v3135
      %v3137 = vpop.f32.mrf.mxu0
      %3138 = vmatprep.mubr.bf16.mxu0 0
      %3139 = vmatmul.mubr.bf16.gmra.mxu0 %v2965
      %v3140 = vpop.f32.mrf.mxu0
      %v3141 = vadd.f32 0.0, %v3140
      %v3142 = vpop.f32.mrf.mxu0
      %v3143 = vpop.f32.mrf.mxu0
      %v3144 = vadd.f32 0.0, %v3143
      %v3145 = vpop.f32.mrf.mxu0
      %3146 = vmatprep.mubr.bf16.mxu0 0
      %3147 = vmatmul.mubr.bf16.gmra.mxu0 %v2968
      %v3148 = vpop.f32.mrf.mxu0
      %v3149 = vadd.f32 0.0, %v3148
      %v3150 = vpop.f32.mrf.mxu0
      %v3151 = vpop.f32.mrf.mxu0
      %v3152 = vadd.f32 0.0, %v3151
      %v3153 = vpop.f32.mrf.mxu0
      %3154 = vmatprep.mubr.bf16.mxu0 0
      %3155 = vmatmul.mubr.bf16.gmra.mxu0 %v2971
      %v3156 = vpop.f32.mrf.mxu0
      %v3157 = vadd.f32 0.0, %v3156
      %v3158 = vpop.f32.mrf.mxu0
      %v3159 = vpop.f32.mrf.mxu0
      %v3160 = vadd.f32 0.0, %v3159
      %v3161 = vpop.f32.mrf.mxu0
      %3162 = vmatprep.mubr.bf16.mxu0 0
      %3163 = vmatmul.mubr.bf16.gmra.mxu0 %v2974
      %v3164 = vpop.f32.mrf.mxu0
      %v3165 = vadd.f32 0.0, %v3164
      %v3166 = vpop.f32.mrf.mxu0
      %v3167 = vpop.f32.mrf.mxu0
      %v3168 = vadd.f32 0.0, %v3167
      %v3169 = vpop.f32.mrf.mxu0
      %3170 = vmatprep.mubr.bf16.mxu0 0
      %3171 = vmatmul.mubr.bf16.gmra.mxu0 %v2977
      %v3172 = vpop.f32.mrf.mxu0
      %v3173 = vadd.f32 0.0, %v3172
      %v3174 = vpop.f32.mrf.mxu0
      %v3175 = vpop.f32.mrf.mxu0
      %v3176 = vadd.f32 0.0, %v3175
      %v3177 = vpop.f32.mrf.mxu0
      %3178 = vmatprep.mubr.bf16.mxu0 0
      %3179 = vmatmul.mubr.bf16.gmra.mxu0 %v2980
      %v3180 = vpop.f32.mrf.mxu0
      %v3181 = vadd.f32 0.0, %v3180
      %v3182 = vpop.f32.mrf.mxu0
      %v3183 = vpop.f32.mrf.mxu0
      %v3184 = vadd.f32 0.0, %v3183
      %v3185 = vpop.f32.mrf.mxu0
      %3186 = vmatprep.mubr.bf16.mxu0 0
      %3187 = vmatmul.mubr.bf16.gmra.mxu0 %v2983
      %v3188 = vpop.f32.mrf.mxu0
      %v3189 = vadd.f32 0.0, %v3188
      %v3190 = vpop.f32.mrf.mxu0
      %v3191 = vpop.f32.mrf.mxu0
      %v3192 = vadd.f32 0.0, %v3191
      %v3193 = vpop.f32.mrf.mxu0
      %3194 = vmatprep.mubr.bf16.mxu0 0
      %3195 = vmatmul.mubr.bf16.gmra.mxu0 %v2986
      %v3196 = vpop.f32.mrf.mxu0
      %v3197 = vadd.f32 0.0, %v3196
      %v3198 = vpop.f32.mrf.mxu0
      %v3199 = vpop.f32.mrf.mxu0
      %v3200 = vadd.f32 0.0, %v3199
      %v3201 = vpop.f32.mrf.mxu0
      %3202 = vmatprep.mubr.bf16.mxu0 0
      %3203 = vmatmul.mubr.bf16.gmra.mxu0 %v2989
      %v3204 = vpop.f32.mrf.mxu0
      %v3205 = vadd.f32 0.0, %v3204
      %v3206 = vpop.f32.mrf.mxu0
      %v3207 = vpop.f32.mrf.mxu0
      %v3208 = vadd.f32 0.0, %v3207
      %v3209 = vpop.f32.mrf.mxu0
      %3210 = vmatprep.mubr.bf16.mxu0 0
      %3211 = vmatmul.mubr.bf16.gmra.mxu0 %v2992
      %v3212 = vpop.f32.mrf.mxu0
      %v3213 = vadd.f32 0.0, %v3212
      %v3214 = vpop.f32.mrf.mxu0
      %v3215 = vpop.f32.mrf.mxu0
      %v3216 = vadd.f32 0.0, %v3215
      %v3217 = vpop.f32.mrf.mxu0
      %3218 = vmatprep.mubr.bf16.mxu0 0
      %3219 = vmatmul.mubr.bf16.gmra.mxu0 %v2995
      %v3220 = vpop.f32.mrf.mxu0
      %v3221 = vadd.f32 0.0, %v3220
      %v3222 = vpop.f32.mrf.mxu0
      %v3223 = vpop.f32.mrf.mxu0
      %v3224 = vadd.f32 0.0, %v3223
      %v3225 = vpop.f32.mrf.mxu0
      %3226 = vmatprep.mubr.bf16.mxu0 0
      %3227 = vmatmul.mubr.bf16.gmra.mxu0 %v2998
      %v3228 = vpop.f32.mrf.mxu0
      %v3229 = vadd.f32 0.0, %v3228
      %v3230 = vpop.f32.mrf.mxu0
      %v3231 = vpop.f32.mrf.mxu0
      %v3232 = vadd.f32 0.0, %v3231
      %v3233 = vpop.f32.mrf.mxu0
      %3234 = vmatprep.mubr.bf16.mxu0 0
      %3235 = vmatmul.mubr.bf16.gmra.mxu0 %v3001
      %v3236 = vpop.f32.mrf.mxu0
      %v3237 = vadd.f32 0.0, %v3236
      %v3238 = vpop.f32.mrf.mxu0
      %v3239 = vpop.f32.mrf.mxu0
      %v3240 = vadd.f32 0.0, %v3239
      %v3241 = vpop.f32.mrf.mxu0
      %3242 = vmatprep.mubr.bf16.mxu0 0
      %3243 = vmatmul.mubr.bf16.gmra.mxu0 %v3004
      %v3244 = vpop.f32.mrf.mxu0
      %v3245 = vadd.f32 0.0, %v3244
      %v3246 = vpop.f32.mrf.mxu0
      %v3247 = vpop.f32.mrf.mxu0
      %v3248 = vadd.f32 0.0, %v3247
      %v3249 = vpop.f32.mrf.mxu0
      %3250 = vmatprep.mubr.bf16.mxu0 0
      %3251 = vmatmul.mubr.bf16.gmra.mxu0 %v3007
      %v3252 = vpop.f32.mrf.mxu0
      %v3253 = vadd.f32 0.0, %v3252
      %v3254 = vpop.f32.mrf.mxu0
      %v3255 = vpop.f32.mrf.mxu0
      %v3256 = vadd.f32 0.0, %v3255
      %v3257 = vpop.f32.mrf.mxu0
      %3258 = vmatprep.mubr.bf16.mxu0 0
      %3259 = vmatmul.mubr.bf16.gmra.mxu0 %v3010
      %v3260 = vpop.f32.mrf.mxu0
      %v3261 = vadd.f32 0.0, %v3260
      %v3262 = vpop.f32.mrf.mxu0
      %v3263 = vpop.f32.mrf.mxu0
      %v3264 = vadd.f32 0.0, %v3263
      %v3265 = vpop.f32.mrf.mxu0
      %3266 = vmatprep.mubr.bf16.mxu0 0
      %3267 = vmatmul.mubr.bf16.gmra.mxu0 %v3013
      %v3268 = vpop.f32.mrf.mxu0
      %v3269 = vadd.f32 0.0, %v3268
      %v3270 = vpop.f32.mrf.mxu0
      %v3271 = vpop.f32.mrf.mxu0
      %v3272 = vadd.f32 0.0, %v3271
      %v3273 = vpop.f32.mrf.mxu0
      %3274 = vdwg.mxu0
      %v3275 = vld [vmem:[#allocation3] sm:$0xff]
      %v3276 = vld [vmem:[#allocation3 + $0x8] sm:$0xff]
      %v3277 = vld [vmem:[#allocation3 + $0x10] sm:$0xff]
      %v3278 = vld [vmem:[#allocation3 + $0x18] sm:$0xff]
      %v3279 = vld [vmem:[#allocation3 + $0x20] sm:$0xff]
      %v3280 = vld [vmem:[#allocation3 + $0x28] sm:$0xff]
      %v3281 = vld [vmem:[#allocation3 + $0x30] sm:$0xff]
      %v3282 = vld [vmem:[#allocation3 + $0x38] sm:$0xff]
      %v3283 = vld [vmem:[#allocation3 + $0x40] sm:$0xff]
      %v3284 = vld [vmem:[#allocation3 + $0x48] sm:$0xff]
      %v3285 = vld [vmem:[#allocation3 + $0x50] sm:$0xff]
      %v3286 = vld [vmem:[#allocation3 + $0x58] sm:$0xff]
      %v3287 = vld [vmem:[#allocation3 + $0x60] sm:$0xff]
      %v3288 = vld [vmem:[#allocation3 + $0x68] sm:$0xff]
      %v3289 = vld [vmem:[#allocation3 + $0x70] sm:$0xff]
      %v3290 = vld [vmem:[#allocation3 + $0x78] sm:$0xff]
      %v3291 = vld [vmem:[#allocation3 + $0x80] sm:$0xff]
      %v3292 = vld [vmem:[#allocation3 + $0x88] sm:$0xff]
      %v3293 = vld [vmem:[#allocation3 + $0x90] sm:$0xff]
      %v3294 = vld [vmem:[#allocation3 + $0x98] sm:$0xff]
      %v3295 = vld [vmem:[#allocation3 + $0xa0] sm:$0xff]
      %v3296 = vld [vmem:[#allocation3 + $0xa8] sm:$0xff]
      %v3297 = vld [vmem:[#allocation3 + $0xb0] sm:$0xff]
      %v3298 = vld [vmem:[#allocation3 + $0xb8] sm:$0xff]
      %v3299 = vld [vmem:[#allocation3 + $0xc0] sm:$0xff]
      %v3300 = vld [vmem:[#allocation3 + $0xc8] sm:$0xff]
      %v3301 = vld [vmem:[#allocation3 + $0xd0] sm:$0xff]
      %v3302 = vld [vmem:[#allocation3 + $0xd8] sm:$0xff]
      %v3303 = vld [vmem:[#allocation3 + $0xe0] sm:$0xff]
      %v3304 = vld [vmem:[#allocation3 + $0xe8] sm:$0xff]
      %v3305 = vld [vmem:[#allocation3 + $0xf0] sm:$0xff]
      %v3306 = vld [vmem:[#allocation3 + $0xf8] sm:$0xff]
      %v3307 = vld [vmem:[#allocation3 + $0x100] sm:$0xff]
      %v3308 = vld [vmem:[#allocation3 + $0x108] sm:$0xff]
      %v3309 = vld [vmem:[#allocation3 + $0x110] sm:$0xff]
      %v3310 = vld [vmem:[#allocation3 + $0x118] sm:$0xff]
      %v3311 = vld [vmem:[#allocation3 + $0x120] sm:$0xff]
      %v3312 = vld [vmem:[#allocation3 + $0x128] sm:$0xff]
      %v3313 = vld [vmem:[#allocation3 + $0x130] sm:$0xff]
      %v3314 = vld [vmem:[#allocation3 + $0x138] sm:$0xff]
      %v3315 = vld [vmem:[#allocation3 + $0x140] sm:$0xff]
      %v3316 = vld [vmem:[#allocation3 + $0x148] sm:$0xff]
      %v3317 = vld [vmem:[#allocation3 + $0x150] sm:$0xff]
      %v3318 = vld [vmem:[#allocation3 + $0x158] sm:$0xff]
      %v3319 = vld [vmem:[#allocation3 + $0x160] sm:$0xff]
      %v3320 = vld [vmem:[#allocation3 + $0x168] sm:$0xff]
      %v3321 = vld [vmem:[#allocation3 + $0x170] sm:$0xff]
      %v3322 = vld [vmem:[#allocation3 + $0x178] sm:$0xff]
      %v3323 = vld [vmem:[#allocation3 + $0x180] sm:$0xff]
      %v3324 = vld [vmem:[#allocation3 + $0x188] sm:$0xff]
      %v3325 = vld [vmem:[#allocation3 + $0x190] sm:$0xff]
      %v3326 = vld [vmem:[#allocation3 + $0x198] sm:$0xff]
      %v3327 = vld [vmem:[#allocation3 + $0x1a0] sm:$0xff]
      %v3328 = vld [vmem:[#allocation3 + $0x1a8] sm:$0xff]
      %v3329 = vld [vmem:[#allocation3 + $0x1b0] sm:$0xff]
      %v3330 = vld [vmem:[#allocation3 + $0x1b8] sm:$0xff]
      %v3331 = vadd.f32 %v3275, %v3053
      %v3332 = vadd.f32 %v3276, %v3056
      %v3333 = vadd.f32 %v3277, %v3061
      %v3334 = vadd.f32 %v3278, %v3064
      %v3335 = vadd.f32 %v3279, %v3069
      %v3336 = vadd.f32 %v3280, %v3072
      %v3337 = vadd.f32 %v3281, %v3077
      %v3338 = vadd.f32 %v3282, %v3080
      %v3339 = vadd.f32 %v3283, %v3085
      %v3340 = vadd.f32 %v3284, %v3088
      %v3341 = vadd.f32 %v3285, %v3093
      %v3342 = vadd.f32 %v3286, %v3096
      %v3343 = vadd.f32 %v3287, %v3101
      %v3344 = vadd.f32 %v3288, %v3104
      %v3345 = vadd.f32 %v3289, %v3109
      %v3346 = vadd.f32 %v3290, %v3112
      %v3347 = vadd.f32 %v3291, %v3117
      %v3348 = vadd.f32 %v3292, %v3120
      %v3349 = vadd.f32 %v3293, %v3125
      %v3350 = vadd.f32 %v3294, %v3128
      %v3351 = vadd.f32 %v3295, %v3133
      %v3352 = vadd.f32 %v3296, %v3136
      %v3353 = vadd.f32 %v3297, %v3141
      %v3354 = vadd.f32 %v3298, %v3144
      %v3355 = vadd.f32 %v3299, %v3149
      %v3356 = vadd.f32 %v3300, %v3152
      %v3357 = vadd.f32 %v3301, %v3157
      %v3358 = vadd.f32 %v3302, %v3160
      %v3359 = vadd.f32 %v3303, %v3165
      %v3360 = vadd.f32 %v3304, %v3168
      %v3361 = vadd.f32 %v3305, %v3173
      %v3362 = vadd.f32 %v3306, %v3176
      %v3363 = vadd.f32 %v3307, %v3181
      %v3364 = vadd.f32 %v3308, %v3184
      %v3365 = vadd.f32 %v3309, %v3189
      %v3366 = vadd.f32 %v3310, %v3192
      %v3367 = vadd.f32 %v3311, %v3197
      %v3368 = vadd.f32 %v3312, %v3200
      %v3369 = vadd.f32 %v3313, %v3205
      %v3370 = vadd.f32 %v3314, %v3208
      %v3371 = vadd.f32 %v3315, %v3213
      %v3372 = vadd.f32 %v3316, %v3216
      %v3373 = vadd.f32 %v3317, %v3221
      %v3374 = vadd.f32 %v3318, %v3224
      %v3375 = vadd.f32 %v3319, %v3229
      %v3376 = vadd.f32 %v3320, %v3232
      %v3377 = vadd.f32 %v3321, %v3237
      %v3378 = vadd.f32 %v3322, %v3240
      %v3379 = vadd.f32 %v3323, %v3245
      %v3380 = vadd.f32 %v3324, %v3248
      %v3381 = vadd.f32 %v3325, %v3253
      %v3382 = vadd.f32 %v3326, %v3256
      %v3383 = vadd.f32 %v3327, %v3261
      %v3384 = vadd.f32 %v3328, %v3264
      %v3385 = vadd.f32 %v3329, %v3269
      %v3386 = vadd.f32 %v3330, %v3272
      %3387 = vst.msk [vmem:[#allocation3] sm:$0xff] %vm961, %v3331
      %3388 = vst.msk [vmem:[#allocation3 + $0x8] sm:$0xff] %vm961, %v3332
      %3389 = vst.msk [vmem:[#allocation3 + $0x10] sm:$0xff] %vm961, %v3333
      %3390 = vst.msk [vmem:[#allocation3 + $0x18] sm:$0xff] %vm961, %v3334
      %3391 = vst.msk [vmem:[#allocation3 + $0x20] sm:$0xff] %vm961, %v3335
      %3392 = vst.msk [vmem:[#allocation3 + $0x28] sm:$0xff] %vm961, %v3336
      %3393 = vst.msk [vmem:[#allocation3 + $0x30] sm:$0xff] %vm961, %v3337
      %3394 = vst.msk [vmem:[#allocation3 + $0x38] sm:$0xff] %vm961, %v3338
      %3395 = vst.msk [vmem:[#allocation3 + $0x40] sm:$0xff] %vm961, %v3339
      %3396 = vst.msk [vmem:[#allocation3 + $0x48] sm:$0xff] %vm961, %v3340
      %3397 = vst.msk [vmem:[#allocation3 + $0x50] sm:$0xff] %vm961, %v3341
      %3398 = vst.msk [vmem:[#allocation3 + $0x58] sm:$0xff] %vm961, %v3342
      %3399 = vst.msk [vmem:[#allocation3 + $0x60] sm:$0xff] %vm961, %v3343
      %3400 = vst.msk [vmem:[#allocation3 + $0x68] sm:$0xff] %vm961, %v3344
      %3401 = vst.msk [vmem:[#allocation3 + $0x70] sm:$0xff] %vm961, %v3345
      %3402 = vst.msk [vmem:[#allocation3 + $0x78] sm:$0xff] %vm961, %v3346
      %3403 = vst.msk [vmem:[#allocation3 + $0x80] sm:$0xff] %vm961, %v3347
      %3404 = vst.msk [vmem:[#allocation3 + $0x88] sm:$0xff] %vm961, %v3348
      %3405 = vst.msk [vmem:[#allocation3 + $0x90] sm:$0xff] %vm961, %v3349
      %3406 = vst.msk [vmem:[#allocation3 + $0x98] sm:$0xff] %vm961, %v3350
      %3407 = vst.msk [vmem:[#allocation3 + $0xa0] sm:$0xff] %vm961, %v3351
      %3408 = vst.msk [vmem:[#allocation3 + $0xa8] sm:$0xff] %vm961, %v3352
      %3409 = vst.msk [vmem:[#allocation3 + $0xb0] sm:$0xff] %vm961, %v3353
      %3410 = vst.msk [vmem:[#allocation3 + $0xb8] sm:$0xff] %vm961, %v3354
      %3411 = vst.msk [vmem:[#allocation3 + $0xc0] sm:$0xff] %vm961, %v3355
      %3412 = vst.msk [vmem:[#allocation3 + $0xc8] sm:$0xff] %vm961, %v3356
      %3413 = vst.msk [vmem:[#allocation3 + $0xd0] sm:$0xff] %vm961, %v3357
      %3414 = vst.msk [vmem:[#allocation3 + $0xd8] sm:$0xff] %vm961, %v3358
      %3415 = vst.msk [vmem:[#allocation3 + $0xe0] sm:$0xff] %vm961, %v3359
      %3416 = vst.msk [vmem:[#allocation3 + $0xe8] sm:$0xff] %vm961, %v3360
      %3417 = vst.msk [vmem:[#allocation3 + $0xf0] sm:$0xff] %vm961, %v3361
      %3418 = vst.msk [vmem:[#allocation3 + $0xf8] sm:$0xff] %vm961, %v3362
      %3419 = vst.msk [vmem:[#allocation3 + $0x100] sm:$0xff] %vm961, %v3363
      %3420 = vst.msk [vmem:[#allocation3 + $0x108] sm:$0xff] %vm961, %v3364
      %3421 = vst.msk [vmem:[#allocation3 + $0x110] sm:$0xff] %vm961, %v3365
      %3422 = vst.msk [vmem:[#allocation3 + $0x118] sm:$0xff] %vm961, %v3366
      %3423 = vst.msk [vmem:[#allocation3 + $0x120] sm:$0xff] %vm961, %v3367
      %3424 = vst.msk [vmem:[#allocation3 + $0x128] sm:$0xff] %vm961, %v3368
      %3425 = vst.msk [vmem:[#allocation3 + $0x130] sm:$0xff] %vm961, %v3369
      %3426 = vst.msk [vmem:[#allocation3 + $0x138] sm:$0xff] %vm961, %v3370
      %3427 = vst.msk [vmem:[#allocation3 + $0x140] sm:$0xff] %vm961, %v3371
      %3428 = vst.msk [vmem:[#allocation3 + $0x148] sm:$0xff] %vm961, %v3372
      %3429 = vst.msk [vmem:[#allocation3 + $0x150] sm:$0xff] %vm961, %v3373
      %3430 = vst.msk [vmem:[#allocation3 + $0x158] sm:$0xff] %vm961, %v3374
      %3431 = vst.msk [vmem:[#allocation3 + $0x160] sm:$0xff] %vm961, %v3375
      %3432 = vst.msk [vmem:[#allocation3 + $0x168] sm:$0xff] %vm961, %v3376
      %3433 = vst.msk [vmem:[#allocation3 + $0x170] sm:$0xff] %vm961, %v3377
      %3434 = vst.msk [vmem:[#allocation3 + $0x178] sm:$0xff] %vm961, %v3378
      %3435 = vst.msk [vmem:[#allocation3 + $0x180] sm:$0xff] %vm961, %v3379
      %3436 = vst.msk [vmem:[#allocation3 + $0x188] sm:$0xff] %vm961, %v3380
      %3437 = vst.msk [vmem:[#allocation3 + $0x190] sm:$0xff] %vm961, %v3381
      %3438 = vst.msk [vmem:[#allocation3 + $0x198] sm:$0xff] %vm961, %v3382
      %3439 = vst.msk [vmem:[#allocation3 + $0x1a0] sm:$0xff] %vm961, %v3383
      %3440 = vst.msk [vmem:[#allocation3 + $0x1a8] sm:$0xff] %vm961, %v3384
      %3441 = vst.msk [vmem:[#allocation3 + $0x1b0] sm:$0xff] %vm961, %v3385
      %3442 = vst.msk [vmem:[#allocation3 + $0x1b8] sm:$0xff] %vm961, %v3386
      %v3443 = vld [vmem:[#allocation2 + $0xc] sm:$0xf]
      %v3444 = vld [vmem:[#allocation2 + $0x10] sm:$0xf]
      %v3445 = vld [vmem:[#allocation2 + $0x14] sm:$0xf]
      %v3446 = vld [vmem:[#allocation2 + $0x18] sm:$0xf]
      %v3447 = vld [vmem:[#allocation2 + $0x1c] sm:$0xf]
      %v3448 = vld [vmem:[#allocation2 + $0x20] sm:$0xf]
      %v3449 = vld [vmem:[#allocation2 + $0x24] sm:$0xf]
      %v3450 = vld [vmem:[#allocation2 + $0x28] sm:$0xf]
      %v3451 = vld [vmem:[#allocation2 + $0x2c] sm:$0xf]
      %v3452 = vld [vmem:[#allocation2 + $0x30] sm:$0xf]
      %v3453 = vld [vmem:[#allocation2 + $0x34] sm:$0xf]
      %v3454 = vld [vmem:[#allocation2 + $0x38] sm:$0xf]
      %v3455 = vld [vmem:[#allocation2 + $0x3c] sm:$0xf]
      %v3456 = vld [vmem:[#allocation2 + $0x40] sm:$0xf]
      %v3457 = vld [vmem:[#allocation2 + $0x44] sm:$0xf]
      %v3458 = vld [vmem:[#allocation2 + $0x48] sm:$0xf]
      %v3459 = vld [vmem:[#allocation2 + $0x4c] sm:$0xf]
      %v3460 = vld [vmem:[#allocation2 + $0x50] sm:$0xf]
      %v3461 = vld [vmem:[#allocation2 + $0x54] sm:$0xf]
      %v3462 = vld [vmem:[#allocation2 + $0x58] sm:$0xf]
      %v3463 = vld [vmem:[#allocation2 + $0x5c] sm:$0xf]
      %v3464 = vld [vmem:[#allocation2 + $0x60] sm:$0xf]
      %v3465 = vld [vmem:[#allocation2 + $0x64] sm:$0xf]
      %v3466 = vld [vmem:[#allocation2 + $0x68] sm:$0xf]
      %v3467 = vld [vmem:[#allocation2 + $0x6c] sm:$0xf]
      %v3468 = vld [vmem:[#allocation2 + $0x70] sm:$0xf]
      %v3469 = vld [vmem:[#allocation2 + $0x74] sm:$0xf]
      %v3470 = vld [vmem:[#allocation2 + $0x78] sm:$0xf]
      %v3471 = vld [vmem:[#allocation2 + $0x7c] sm:$0xf]
      %v3472 = vld [vmem:[#allocation2 + $0x80] sm:$0xf]
      %v3473 = vld [vmem:[#allocation2 + $0x84] sm:$0xf]
      %v3474 = vld [vmem:[#allocation2 + $0x88] sm:$0xf]
      %v3475 = vld [vmem:[#allocation2 + $0x8c] sm:$0xf]
      %v3476 = vld [vmem:[#allocation2 + $0x90] sm:$0xf]
      %v3477 = vld [vmem:[#allocation2 + $0x94] sm:$0xf]
      %v3478 = vld [vmem:[#allocation2 + $0x98] sm:$0xf]
      %v3479 = vld [vmem:[#allocation2 + $0x9c] sm:$0xf]
      %v3480 = vld [vmem:[#allocation2 + $0xa0] sm:$0xf]
      %v3481 = vld [vmem:[#allocation2 + $0xa4] sm:$0xf]
      %v3482 = vld [vmem:[#allocation2 + $0xa8] sm:$0xf]
      %v3483 = vld [vmem:[#allocation2 + $0xac] sm:$0xf]
      %v3484 = vld [vmem:[#allocation2 + $0xb0] sm:$0xf]
      %v3485 = vld [vmem:[#allocation2 + $0xb4] sm:$0xf]
      %v3486 = vld [vmem:[#allocation2 + $0xb8] sm:$0xf]
      %v3487 = vld [vmem:[#allocation2 + $0xbc] sm:$0xf]
      %v3488 = vld [vmem:[#allocation2 + $0xc0] sm:$0xf]
      %v3489 = vld [vmem:[#allocation2 + $0xc4] sm:$0xf]
      %v3490 = vld [vmem:[#allocation2 + $0xc8] sm:$0xf]
      %v3491 = vld [vmem:[#allocation2 + $0xcc] sm:$0xf]
      %v3492 = vld [vmem:[#allocation2 + $0xd0] sm:$0xf]
      %v3493 = vld [vmem:[#allocation2 + $0xd4] sm:$0xf]
      %v3494 = vld [vmem:[#allocation2 + $0xd8] sm:$0xf]
      %v3495 = vld [vmem:[#allocation2 + $0xdc] sm:$0xf]
      %v3496 = vld [vmem:[#allocation2 + $0xe0] sm:$0xf]
      %v3497 = vld [vmem:[#allocation2 + $0xe4] sm:$0xf]
      %v3498 = vld [vmem:[#allocation2 + $0xe8] sm:$0xf]
      %v3499 = vld [vmem:[#allocation2 + $0xec] sm:$0x1]
      %s3500 = scalar_lea.vmem %s2, 8
      %v3501 = vld [vmem:[%s3500] sm:$0x3]
      %v3559 = vunpack.c.l.b16 %v3443
      %v3560 = vunpack.c.l.b16 %v3444
      %v3561 = vunpack.c.l.b16 %v3445
      %v3562 = vunpack.c.l.b16 %v3446
      %v3563 = vunpack.c.l.b16 %v3447
      %v3564 = vunpack.c.l.b16 %v3448
      %v3565 = vunpack.c.l.b16 %v3449
      %v3566 = vunpack.c.l.b16 %v3450
      %v3567 = vunpack.c.l.b16 %v3451
      %v3568 = vunpack.c.l.b16 %v3452
      %v3569 = vunpack.c.l.b16 %v3453
      %v3570 = vunpack.c.l.b16 %v3454
      %v3571 = vunpack.c.l.b16 %v3455
      %v3572 = vunpack.c.l.b16 %v3456
      %v3573 = vunpack.c.l.b16 %v3457
      %v3574 = vunpack.c.l.b16 %v3458
      %v3575 = vunpack.c.l.b16 %v3459
      %v3576 = vunpack.c.l.b16 %v3460
      %v3577 = vunpack.c.l.b16 %v3461
      %v3578 = vunpack.c.l.b16 %v3462
      %v3579 = vunpack.c.l.b16 %v3463
      %v3580 = vunpack.c.l.b16 %v3464
      %v3581 = vunpack.c.l.b16 %v3465
      %v3582 = vunpack.c.l.b16 %v3466
      %v3583 = vunpack.c.l.b16 %v3467
      %v3584 = vunpack.c.l.b16 %v3468
      %v3585 = vunpack.c.l.b16 %v3469
      %v3586 = vunpack.c.l.b16 %v3470
      %v3587 = vunpack.c.l.b16 %v3471
      %v3588 = vunpack.c.l.b16 %v3472
      %v3589 = vunpack.c.l.b16 %v3473
      %v3590 = vunpack.c.l.b16 %v3474
      %v3591 = vunpack.c.l.b16 %v3475
      %v3592 = vunpack.c.l.b16 %v3476
      %v3593 = vunpack.c.l.b16 %v3477
      %v3594 = vunpack.c.l.b16 %v3478
      %v3595 = vunpack.c.l.b16 %v3479
      %v3596 = vunpack.c.l.b16 %v3480
      %v3597 = vunpack.c.l.b16 %v3481
      %v3598 = vunpack.c.l.b16 %v3482
      %v3599 = vunpack.c.l.b16 %v3483
      %v3600 = vunpack.c.l.b16 %v3484
      %v3601 = vunpack.c.l.b16 %v3485
      %v3602 = vunpack.c.l.b16 %v3486
      %v3603 = vunpack.c.l.b16 %v3487
      %v3604 = vunpack.c.l.b16 %v3488
      %v3605 = vunpack.c.l.b16 %v3489
      %v3606 = vunpack.c.l.b16 %v3490
      %v3607 = vunpack.c.l.b16 %v3491
      %v3608 = vunpack.c.l.b16 %v3492
      %v3609 = vunpack.c.l.b16 %v3493
      %v3610 = vunpack.c.l.b16 %v3494
      %v3611 = vunpack.c.l.b16 %v3495
      %v3612 = vunpack.c.l.b16 %v3496
      %v3613 = vunpack.c.l.b16 %v3497
      %v3614 = vunpack.c.l.b16 %v3498
      %v3615 = vunpack.c.l.b16 %v3499
      %v3616 = vpack.c.b16 %v3560, %v3559
      %v3617 = vpack.c.b16 %v3562, %v3561
      %v3618 = vpack.c.b16 %v3564, %v3563
      %v3619 = vpack.c.b16 %v3566, %v3565
      %v3620 = vpack.c.b16 %v3568, %v3567
      %v3621 = vpack.c.b16 %v3570, %v3569
      %v3622 = vpack.c.b16 %v3572, %v3571
      %v3623 = vpack.c.b16 %v3574, %v3573
      %v3624 = vpack.c.b16 %v3576, %v3575
      %v3625 = vpack.c.b16 %v3578, %v3577
      %v3626 = vpack.c.b16 %v3580, %v3579
      %v3627 = vpack.c.b16 %v3582, %v3581
      %v3628 = vpack.c.b16 %v3584, %v3583
      %v3629 = vpack.c.b16 %v3586, %v3585
      %v3630 = vpack.c.b16 %v3588, %v3587
      %v3631 = vpack.c.b16 %v3590, %v3589
      %v3632 = vpack.c.b16 %v3592, %v3591
      %v3633 = vpack.c.b16 %v3594, %v3593
      %v3634 = vpack.c.b16 %v3596, %v3595
      %v3635 = vpack.c.b16 %v3598, %v3597
      %v3636 = vpack.c.b16 %v3600, %v3599
      %v3637 = vpack.c.b16 %v3602, %v3601
      %v3638 = vpack.c.b16 %v3604, %v3603
      %v3639 = vpack.c.b16 %v3606, %v3605
      %v3640 = vpack.c.b16 %v3608, %v3607
      %v3641 = vpack.c.b16 %v3610, %v3609
      %v3642 = vpack.c.b16 %v3612, %v3611
      %v3643 = vpack.c.b16 %v3614, %v3613
      %v3644 = vpack.c.b16 %v3615, %v3615
      %v3646 = vshrl.u32 %v3616, 16
      %v3648 = vshll.u32 %v3616, 16
      %v3650 = vrot.slane %v3648, 1
      %v3651 = vor.u32 %v3646, %v3650
      %v3653 = vshll.u32 %v3617, 16
      %v3655 = vrot.slane %v3653, 1
      %v3656 = vsel %vm1220, %v3651, %v3655
      %v3657 = vshrl.u32 %v3617, 16
      %v3659 = vor.u32 %v3657, %v3655
      %v3661 = vshll.u32 %v3618, 16
      %v3663 = vrot.slane %v3661, 1
      %v3664 = vsel %vm1220, %v3659, %v3663
      %v3665 = vshrl.u32 %v3618, 16
      %v3667 = vor.u32 %v3665, %v3663
      %v3669 = vshll.u32 %v3619, 16
      %v3671 = vrot.slane %v3669, 1
      %v3672 = vsel %vm1220, %v3667, %v3671
      %v3673 = vshrl.u32 %v3619, 16
      %v3675 = vor.u32 %v3673, %v3671
      %v3677 = vshll.u32 %v3620, 16
      %v3679 = vrot.slane %v3677, 1
      %v3680 = vsel %vm1220, %v3675, %v3679
      %v3681 = vshrl.u32 %v3620, 16
      %v3683 = vor.u32 %v3681, %v3679
      %v3685 = vshll.u32 %v3621, 16
      %v3687 = vrot.slane %v3685, 1
      %v3688 = vsel %vm1220, %v3683, %v3687
      %v3689 = vshrl.u32 %v3621, 16
      %v3691 = vor.u32 %v3689, %v3687
      %v3693 = vshll.u32 %v3622, 16
      %v3695 = vrot.slane %v3693, 1
      %v3696 = vsel %vm1220, %v3691, %v3695
      %v3697 = vshrl.u32 %v3622, 16
      %v3699 = vor.u32 %v3697, %v3695
      %v3701 = vshll.u32 %v3623, 16
      %v3703 = vrot.slane %v3701, 1
      %v3704 = vsel %vm1220, %v3699, %v3703
      %v3705 = vshrl.u32 %v3623, 16
      %v3707 = vor.u32 %v3705, %v3703
      %v3709 = vshll.u32 %v3624, 16
      %v3711 = vrot.slane %v3709, 1
      %v3712 = vsel %vm1220, %v3707, %v3711
      %v3713 = vshrl.u32 %v3624, 16
      %v3715 = vor.u32 %v3713, %v3711
      %v3717 = vshll.u32 %v3625, 16
      %v3719 = vrot.slane %v3717, 1
      %v3720 = vsel %vm1220, %v3715, %v3719
      %v3721 = vshrl.u32 %v3625, 16
      %v3723 = vor.u32 %v3721, %v3719
      %v3725 = vshll.u32 %v3626, 16
      %v3727 = vrot.slane %v3725, 1
      %v3728 = vsel %vm1220, %v3723, %v3727
      %v3729 = vshrl.u32 %v3626, 16
      %v3731 = vor.u32 %v3729, %v3727
      %v3733 = vshll.u32 %v3627, 16
      %v3735 = vrot.slane %v3733, 1
      %v3736 = vsel %vm1220, %v3731, %v3735
      %v3737 = vshrl.u32 %v3627, 16
      %v3739 = vor.u32 %v3737, %v3735
      %v3741 = vshll.u32 %v3628, 16
      %v3743 = vrot.slane %v3741, 1
      %v3744 = vsel %vm1220, %v3739, %v3743
      %v3745 = vshrl.u32 %v3628, 16
      %v3747 = vor.u32 %v3745, %v3743
      %v3749 = vshll.u32 %v3629, 16
      %v3751 = vrot.slane %v3749, 1
      %v3752 = vsel %vm1220, %v3747, %v3751
      %v3753 = vshrl.u32 %v3629, 16
      %v3755 = vor.u32 %v3753, %v3751
      %v3757 = vshll.u32 %v3630, 16
      %v3759 = vrot.slane %v3757, 1
      %v3760 = vsel %vm1220, %v3755, %v3759
      %v3761 = vshrl.u32 %v3630, 16
      %v3763 = vor.u32 %v3761, %v3759
      %v3765 = vshll.u32 %v3631, 16
      %v3767 = vrot.slane %v3765, 1
      %v3768 = vsel %vm1220, %v3763, %v3767
      %v3769 = vshrl.u32 %v3631, 16
      %v3771 = vor.u32 %v3769, %v3767
      %v3773 = vshll.u32 %v3632, 16
      %v3775 = vrot.slane %v3773, 1
      %v3776 = vsel %vm1220, %v3771, %v3775
      %v3777 = vshrl.u32 %v3632, 16
      %v3779 = vor.u32 %v3777, %v3775
      %v3781 = vshll.u32 %v3633, 16
      %v3783 = vrot.slane %v3781, 1
      %v3784 = vsel %vm1220, %v3779, %v3783
      %v3785 = vshrl.u32 %v3633, 16
      %v3787 = vor.u32 %v3785, %v3783
      %v3789 = vshll.u32 %v3634, 16
      %v3791 = vrot.slane %v3789, 1
      %v3792 = vsel %vm1220, %v3787, %v3791
      %v3793 = vshrl.u32 %v3634, 16
      %v3795 = vor.u32 %v3793, %v3791
      %v3797 = vshll.u32 %v3635, 16
      %v3799 = vrot.slane %v3797, 1
      %v3800 = vsel %vm1220, %v3795, %v3799
      %v3801 = vshrl.u32 %v3635, 16
      %v3803 = vor.u32 %v3801, %v3799
      %v3805 = vshll.u32 %v3636, 16
      %v3807 = vrot.slane %v3805, 1
      %v3808 = vsel %vm1220, %v3803, %v3807
      %v3809 = vshrl.u32 %v3636, 16
      %v3811 = vor.u32 %v3809, %v3807
      %v3813 = vshll.u32 %v3637, 16
      %v3815 = vrot.slane %v3813, 1
      %v3816 = vsel %vm1220, %v3811, %v3815
      %v3817 = vshrl.u32 %v3637, 16
      %v3819 = vor.u32 %v3817, %v3815
      %v3821 = vshll.u32 %v3638, 16
      %v3823 = vrot.slane %v3821, 1
      %v3824 = vsel %vm1220, %v3819, %v3823
      %v3825 = vshrl.u32 %v3638, 16
      %v3827 = vor.u32 %v3825, %v3823
      %v3829 = vshll.u32 %v3639, 16
      %v3831 = vrot.slane %v3829, 1
      %v3832 = vsel %vm1220, %v3827, %v3831
      %v3833 = vshrl.u32 %v3639, 16
      %v3835 = vor.u32 %v3833, %v3831
      %v3837 = vshll.u32 %v3640, 16
      %v3839 = vrot.slane %v3837, 1
      %v3840 = vsel %vm1220, %v3835, %v3839
      %v3841 = vshrl.u32 %v3640, 16
      %v3843 = vor.u32 %v3841, %v3839
      %v3845 = vshll.u32 %v3641, 16
      %v3847 = vrot.slane %v3845, 1
      %v3848 = vsel %vm1220, %v3843, %v3847
      %v3849 = vshrl.u32 %v3641, 16
      %v3851 = vor.u32 %v3849, %v3847
      %v3853 = vshll.u32 %v3642, 16
      %v3855 = vrot.slane %v3853, 1
      %v3856 = vsel %vm1220, %v3851, %v3855
      %v3857 = vshrl.u32 %v3642, 16
      %v3859 = vor.u32 %v3857, %v3855
      %v3861 = vshll.u32 %v3643, 16
      %v3863 = vrot.slane %v3861, 1
      %v3864 = vsel %vm1220, %v3859, %v3863
      %v3865 = vshrl.u32 %v3643, 16
      %v3867 = vor.u32 %v3865, %v3863
      %v3869 = vshll.u32 %v3644, 16
      %v3871 = vrot.slane %v3869, 1
      %v3872 = vsel %vm1220, %v3867, %v3871
      %v3874 = vsel %vm612, %v3656, 0
      %v3877 = vsel %vm612, %v3664, 0
      %v3880 = vsel %vm612, %v3672, 0
      %v3883 = vsel %vm612, %v3680, 0
      %v3886 = vsel %vm612, %v3688, 0
      %v3889 = vsel %vm612, %v3696, 0
      %v3892 = vsel %vm612, %v3704, 0
      %v3895 = vsel %vm612, %v3712, 0
      %v3898 = vsel %vm612, %v3720, 0
      %v3901 = vsel %vm612, %v3728, 0
      %v3904 = vsel %vm612, %v3736, 0
      %v3907 = vsel %vm612, %v3744, 0
      %v3910 = vsel %vm612, %v3752, 0
      %v3913 = vsel %vm612, %v3760, 0
      %v3916 = vsel %vm612, %v3768, 0
      %v3919 = vsel %vm612, %v3776, 0
      %v3922 = vsel %vm612, %v3784, 0
      %v3925 = vsel %vm612, %v3792, 0
      %v3928 = vsel %vm612, %v3800, 0
      %v3931 = vsel %vm612, %v3808, 0
      %v3934 = vsel %vm612, %v3816, 0
      %v3937 = vsel %vm612, %v3824, 0
      %v3940 = vsel %vm612, %v3832, 0
      %v3943 = vsel %vm612, %v3840, 0
      %v3946 = vsel %vm612, %v3848, 0
      %v3949 = vsel %vm612, %v3856, 0
      %v3952 = vsel %vm612, %v3864, 0
      %v3955 = vsel %vm612, %v3872, 0
      %v3958 = vand.u32 %v3501, %v700
      %3960 = vmatprep.subr.bf16.mxu0 0
      %3961 = vmatpush1.bf16.msra.mxu0 0
      %3962 = vmatprep.subr.bf16.mxu0 0
      %3963 = vmatpush1.bf16.msra.mxu0 0
      %3964 = vmatprep.subr.bf16.mxu0 0
      %3965 = vmatpush1.bf16.msra.mxu0 0
      %3966 = vmatprep.subr.bf16.mxu0 0
      %3967 = vmatpush1.bf16.msra.mxu0 0
      %3968 = vmatprep.subr.bf16.mxu0 0
      %3969 = vmatpush1.bf16.msra.mxu0 0
      %3970 = vmatprep.subr.bf16.mxu0 0
      %3971 = vmatpush1.bf16.msra.mxu0 0
      %3972 = vmatprep.subr.bf16.mxu0 0
      %3973 = vmatpush1.bf16.msra.mxu0 0
      %3974 = vmatprep.subr.bf16.mxu0 0
      %3975 = vmatpush1.bf16.msra.mxu0 %v3958
      %3976 = vmatprep.subr.bf16.mxu0 0
      %3977 = vmatpush2.bf16.msra.mxu0 0
      %3978 = vmatprep.subr.bf16.mxu0 0
      %3979 = vmatpush2.bf16.msra.mxu0 0
      %3980 = vmatprep.subr.bf16.mxu0 0
      %3981 = vmatpush2.bf16.msra.mxu0 0
      %3982 = vmatprep.subr.bf16.mxu0 0
      %3983 = vmatpush2.bf16.msra.mxu0 0
      %3984 = vmatprep.subr.bf16.mxu0 0
      %3985 = vmatpush2.bf16.msra.mxu0 0
      %3986 = vmatprep.subr.bf16.mxu0 0
      %3987 = vmatpush2.bf16.msra.mxu0 0
      %3988 = vmatprep.subr.bf16.mxu0 0
      %3989 = vmatpush2.bf16.msra.mxu0 0
      %3990 = vmatprep.subr.bf16.mxu0 0
      %3991 = vmatpush2.bf16.msra.mxu0 0
      %3992 = vmatprep.mubr.bf16.mxu0 0
      %3993 = vmatmul.mubr.bf16.gmra.mxu0 %v3874
      %v3994 = vpop.f32.mrf.mxu0
      %v3995 = vadd.f32 0.0, %v3994
      %v3996 = vpop.f32.mrf.mxu0
      %v3997 = vpop.f32.mrf.mxu0
      %v3998 = vadd.f32 0.0, %v3997
      %v3999 = vpop.f32.mrf.mxu0
      %4000 = vmatprep.mubr.bf16.mxu0 0
      %4001 = vmatmul.mubr.bf16.gmra.mxu0 %v3877
      %v4002 = vpop.f32.mrf.mxu0
      %v4003 = vadd.f32 0.0, %v4002
      %v4004 = vpop.f32.mrf.mxu0
      %v4005 = vpop.f32.mrf.mxu0
      %v4006 = vadd.f32 0.0, %v4005
      %v4007 = vpop.f32.mrf.mxu0
      %4008 = vmatprep.mubr.bf16.mxu0 0
      %4009 = vmatmul.mubr.bf16.gmra.mxu0 %v3880
      %v4010 = vpop.f32.mrf.mxu0
      %v4011 = vadd.f32 0.0, %v4010
      %v4012 = vpop.f32.mrf.mxu0
      %v4013 = vpop.f32.mrf.mxu0
      %v4014 = vadd.f32 0.0, %v4013
      %v4015 = vpop.f32.mrf.mxu0
      %4016 = vmatprep.mubr.bf16.mxu0 0
      %4017 = vmatmul.mubr.bf16.gmra.mxu0 %v3883
      %v4018 = vpop.f32.mrf.mxu0
      %v4019 = vadd.f32 0.0, %v4018
      %v4020 = vpop.f32.mrf.mxu0
      %v4021 = vpop.f32.mrf.mxu0
      %v4022 = vadd.f32 0.0, %v4021
      %v4023 = vpop.f32.mrf.mxu0
      %4024 = vmatprep.mubr.bf16.mxu0 0
      %4025 = vmatmul.mubr.bf16.gmra.mxu0 %v3886
      %v4026 = vpop.f32.mrf.mxu0
      %v4027 = vadd.f32 0.0, %v4026
      %v4028 = vpop.f32.mrf.mxu0
      %v4029 = vpop.f32.mrf.mxu0
      %v4030 = vadd.f32 0.0, %v4029
      %v4031 = vpop.f32.mrf.mxu0
      %4032 = vmatprep.mubr.bf16.mxu0 0
      %4033 = vmatmul.mubr.bf16.gmra.mxu0 %v3889
      %v4034 = vpop.f32.mrf.mxu0
      %v4035 = vadd.f32 0.0, %v4034
      %v4036 = vpop.f32.mrf.mxu0
      %v4037 = vpop.f32.mrf.mxu0
      %v4038 = vadd.f32 0.0, %v4037
      %v4039 = vpop.f32.mrf.mxu0
      %4040 = vmatprep.mubr.bf16.mxu0 0
      %4041 = vmatmul.mubr.bf16.gmra.mxu0 %v3892
      %v4042 = vpop.f32.mrf.mxu0
      %v4043 = vadd.f32 0.0, %v4042
      %v4044 = vpop.f32.mrf.mxu0
      %v4045 = vpop.f32.mrf.mxu0
      %v4046 = vadd.f32 0.0, %v4045
      %v4047 = vpop.f32.mrf.mxu0
      %4048 = vmatprep.mubr.bf16.mxu0 0
      %4049 = vmatmul.mubr.bf16.gmra.mxu0 %v3895
      %v4050 = vpop.f32.mrf.mxu0
      %v4051 = vadd.f32 0.0, %v4050
      %v4052 = vpop.f32.mrf.mxu0
      %v4053 = vpop.f32.mrf.mxu0
      %v4054 = vadd.f32 0.0, %v4053
      %v4055 = vpop.f32.mrf.mxu0
      %4056 = vmatprep.mubr.bf16.mxu0 0
      %4057 = vmatmul.mubr.bf16.gmra.mxu0 %v3898
      %v4058 = vpop.f32.mrf.mxu0
      %v4059 = vadd.f32 0.0, %v4058
      %v4060 = vpop.f32.mrf.mxu0
      %v4061 = vpop.f32.mrf.mxu0
      %v4062 = vadd.f32 0.0, %v4061
      %v4063 = vpop.f32.mrf.mxu0
      %4064 = vmatprep.mubr.bf16.mxu0 0
      %4065 = vmatmul.mubr.bf16.gmra.mxu0 %v3901
      %v4066 = vpop.f32.mrf.mxu0
      %v4067 = vadd.f32 0.0, %v4066
      %v4068 = vpop.f32.mrf.mxu0
      %v4069 = vpop.f32.mrf.mxu0
      %v4070 = vadd.f32 0.0, %v4069
      %v4071 = vpop.f32.mrf.mxu0
      %4072 = vmatprep.mubr.bf16.mxu0 0
      %4073 = vmatmul.mubr.bf16.gmra.mxu0 %v3904
      %v4074 = vpop.f32.mrf.mxu0
      %v4075 = vadd.f32 0.0, %v4074
      %v4076 = vpop.f32.mrf.mxu0
      %v4077 = vpop.f32.mrf.mxu0
      %v4078 = vadd.f32 0.0, %v4077
      %v4079 = vpop.f32.mrf.mxu0
      %4080 = vmatprep.mubr.bf16.mxu0 0
      %4081 = vmatmul.mubr.bf16.gmra.mxu0 %v3907
      %v4082 = vpop.f32.mrf.mxu0
      %v4083 = vadd.f32 0.0, %v4082
      %v4084 = vpop.f32.mrf.mxu0
      %v4085 = vpop.f32.mrf.mxu0
      %v4086 = vadd.f32 0.0, %v4085
      %v4087 = vpop.f32.mrf.mxu0
      %4088 = vmatprep.mubr.bf16.mxu0 0
      %4089 = vmatmul.mubr.bf16.gmra.mxu0 %v3910
      %v4090 = vpop.f32.mrf.mxu0
      %v4091 = vadd.f32 0.0, %v4090
      %v4092 = vpop.f32.mrf.mxu0
      %v4093 = vpop.f32.mrf.mxu0
      %v4094 = vadd.f32 0.0, %v4093
      %v4095 = vpop.f32.mrf.mxu0
      %4096 = vmatprep.mubr.bf16.mxu0 0
      %4097 = vmatmul.mubr.bf16.gmra.mxu0 %v3913
      %v4098 = vpop.f32.mrf.mxu0
      %v4099 = vadd.f32 0.0, %v4098
      %v4100 = vpop.f32.mrf.mxu0
      %v4101 = vpop.f32.mrf.mxu0
      %v4102 = vadd.f32 0.0, %v4101
      %v4103 = vpop.f32.mrf.mxu0
      %4104 = vmatprep.mubr.bf16.mxu0 0
      %4105 = vmatmul.mubr.bf16.gmra.mxu0 %v3916
      %v4106 = vpop.f32.mrf.mxu0
      %v4107 = vadd.f32 0.0, %v4106
      %v4108 = vpop.f32.mrf.mxu0
      %v4109 = vpop.f32.mrf.mxu0
      %v4110 = vadd.f32 0.0, %v4109
      %v4111 = vpop.f32.mrf.mxu0
      %4112 = vmatprep.mubr.bf16.mxu0 0
      %4113 = vmatmul.mubr.bf16.gmra.mxu0 %v3919
      %v4114 = vpop.f32.mrf.mxu0
      %v4115 = vadd.f32 0.0, %v4114
      %v4116 = vpop.f32.mrf.mxu0
      %v4117 = vpop.f32.mrf.mxu0
      %v4118 = vadd.f32 0.0, %v4117
      %v4119 = vpop.f32.mrf.mxu0
      %4120 = vmatprep.mubr.bf16.mxu0 0
      %4121 = vmatmul.mubr.bf16.gmra.mxu0 %v3922
      %v4122 = vpop.f32.mrf.mxu0
      %v4123 = vadd.f32 0.0, %v4122
      %v4124 = vpop.f32.mrf.mxu0
      %v4125 = vpop.f32.mrf.mxu0
      %v4126 = vadd.f32 0.0, %v4125
      %v4127 = vpop.f32.mrf.mxu0
      %4128 = vmatprep.mubr.bf16.mxu0 0
      %4129 = vmatmul.mubr.bf16.gmra.mxu0 %v3925
      %v4130 = vpop.f32.mrf.mxu0
      %v4131 = vadd.f32 0.0, %v4130
      %v4132 = vpop.f32.mrf.mxu0
      %v4133 = vpop.f32.mrf.mxu0
      %v4134 = vadd.f32 0.0, %v4133
      %v4135 = vpop.f32.mrf.mxu0
      %4136 = vmatprep.mubr.bf16.mxu0 0
      %4137 = vmatmul.mubr.bf16.gmra.mxu0 %v3928
      %v4138 = vpop.f32.mrf.mxu0
      %v4139 = vadd.f32 0.0, %v4138
      %v4140 = vpop.f32.mrf.mxu0
      %v4141 = vpop.f32.mrf.mxu0
      %v4142 = vadd.f32 0.0, %v4141
      %v4143 = vpop.f32.mrf.mxu0
      %4144 = vmatprep.mubr.bf16.mxu0 0
      %4145 = vmatmul.mubr.bf16.gmra.mxu0 %v3931
      %v4146 = vpop.f32.mrf.mxu0
      %v4147 = vadd.f32 0.0, %v4146
      %v4148 = vpop.f32.mrf.mxu0
      %v4149 = vpop.f32.mrf.mxu0
      %v4150 = vadd.f32 0.0, %v4149
      %v4151 = vpop.f32.mrf.mxu0
      %4152 = vmatprep.mubr.bf16.mxu0 0
      %4153 = vmatmul.mubr.bf16.gmra.mxu0 %v3934
      %v4154 = vpop.f32.mrf.mxu0
      %v4155 = vadd.f32 0.0, %v4154
      %v4156 = vpop.f32.mrf.mxu0
      %v4157 = vpop.f32.mrf.mxu0
      %v4158 = vadd.f32 0.0, %v4157
      %v4159 = vpop.f32.mrf.mxu0
      %4160 = vmatprep.mubr.bf16.mxu0 0
      %4161 = vmatmul.mubr.bf16.gmra.mxu0 %v3937
      %v4162 = vpop.f32.mrf.mxu0
      %v4163 = vadd.f32 0.0, %v4162
      %v4164 = vpop.f32.mrf.mxu0
      %v4165 = vpop.f32.mrf.mxu0
      %v4166 = vadd.f32 0.0, %v4165
      %v4167 = vpop.f32.mrf.mxu0
      %4168 = vmatprep.mubr.bf16.mxu0 0
      %4169 = vmatmul.mubr.bf16.gmra.mxu0 %v3940
      %v4170 = vpop.f32.mrf.mxu0
      %v4171 = vadd.f32 0.0, %v4170
      %v4172 = vpop.f32.mrf.mxu0
      %v4173 = vpop.f32.mrf.mxu0
      %v4174 = vadd.f32 0.0, %v4173
      %v4175 = vpop.f32.mrf.mxu0
      %4176 = vmatprep.mubr.bf16.mxu0 0
      %4177 = vmatmul.mubr.bf16.gmra.mxu0 %v3943
      %v4178 = vpop.f32.mrf.mxu0
      %v4179 = vadd.f32 0.0, %v4178
      %v4180 = vpop.f32.mrf.mxu0
      %v4181 = vpop.f32.mrf.mxu0
      %v4182 = vadd.f32 0.0, %v4181
      %v4183 = vpop.f32.mrf.mxu0
      %4184 = vmatprep.mubr.bf16.mxu0 0
      %4185 = vmatmul.mubr.bf16.gmra.mxu0 %v3946
      %v4186 = vpop.f32.mrf.mxu0
      %v4187 = vadd.f32 0.0, %v4186
      %v4188 = vpop.f32.mrf.mxu0
      %v4189 = vpop.f32.mrf.mxu0
      %v4190 = vadd.f32 0.0, %v4189
      %v4191 = vpop.f32.mrf.mxu0
      %4192 = vmatprep.mubr.bf16.mxu0 0
      %4193 = vmatmul.mubr.bf16.gmra.mxu0 %v3949
      %v4194 = vpop.f32.mrf.mxu0
      %v4195 = vadd.f32 0.0, %v4194
      %v4196 = vpop.f32.mrf.mxu0
      %v4197 = vpop.f32.mrf.mxu0
      %v4198 = vadd.f32 0.0, %v4197
      %v4199 = vpop.f32.mrf.mxu0
      %4200 = vmatprep.mubr.bf16.mxu0 0
      %4201 = vmatmul.mubr.bf16.gmra.mxu0 %v3952
      %v4202 = vpop.f32.mrf.mxu0
      %v4203 = vadd.f32 0.0, %v4202
      %v4204 = vpop.f32.mrf.mxu0
      %v4205 = vpop.f32.mrf.mxu0
      %v4206 = vadd.f32 0.0, %v4205
      %v4207 = vpop.f32.mrf.mxu0
      %4208 = vmatprep.mubr.bf16.mxu0 0
      %4209 = vmatmul.mubr.bf16.gmra.mxu0 %v3955
      %v4210 = vpop.f32.mrf.mxu0
      %v4211 = vadd.f32 0.0, %v4210
      %v4212 = vpop.f32.mrf.mxu0
      %v4213 = vpop.f32.mrf.mxu0
      %v4214 = vadd.f32 0.0, %v4213
      %v4215 = vpop.f32.mrf.mxu0
      %4216 = vdwg.mxu0
      %v4217 = vld [vmem:[#allocation3] sm:$0xff]
      %v4218 = vld [vmem:[#allocation3 + $0x8] sm:$0xff]
      %v4219 = vld [vmem:[#allocation3 + $0x10] sm:$0xff]
      %v4220 = vld [vmem:[#allocation3 + $0x18] sm:$0xff]
      %v4221 = vld [vmem:[#allocation3 + $0x20] sm:$0xff]
      %v4222 = vld [vmem:[#allocation3 + $0x28] sm:$0xff]
      %v4223 = vld [vmem:[#allocation3 + $0x30] sm:$0xff]
      %v4224 = vld [vmem:[#allocation3 + $0x38] sm:$0xff]
      %v4225 = vld [vmem:[#allocation3 + $0x40] sm:$0xff]
      %v4226 = vld [vmem:[#allocation3 + $0x48] sm:$0xff]
      %v4227 = vld [vmem:[#allocation3 + $0x50] sm:$0xff]
      %v4228 = vld [vmem:[#allocation3 + $0x58] sm:$0xff]
      %v4229 = vld [vmem:[#allocation3 + $0x60] sm:$0xff]
      %v4230 = vld [vmem:[#allocation3 + $0x68] sm:$0xff]
      %v4231 = vld [vmem:[#allocation3 + $0x70] sm:$0xff]
      %v4232 = vld [vmem:[#allocation3 + $0x78] sm:$0xff]
      %v4233 = vld [vmem:[#allocation3 + $0x80] sm:$0xff]
      %v4234 = vld [vmem:[#allocation3 + $0x88] sm:$0xff]
      %v4235 = vld [vmem:[#allocation3 + $0x90] sm:$0xff]
      %v4236 = vld [vmem:[#allocation3 + $0x98] sm:$0xff]
      %v4237 = vld [vmem:[#allocation3 + $0xa0] sm:$0xff]
      %v4238 = vld [vmem:[#allocation3 + $0xa8] sm:$0xff]
      %v4239 = vld [vmem:[#allocation3 + $0xb0] sm:$0xff]
      %v4240 = vld [vmem:[#allocation3 + $0xb8] sm:$0xff]
      %v4241 = vld [vmem:[#allocation3 + $0xc0] sm:$0xff]
      %v4242 = vld [vmem:[#allocation3 + $0xc8] sm:$0xff]
      %v4243 = vld [vmem:[#allocation3 + $0xd0] sm:$0xff]
      %v4244 = vld [vmem:[#allocation3 + $0xd8] sm:$0xff]
      %v4245 = vld [vmem:[#allocation3 + $0xe0] sm:$0xff]
      %v4246 = vld [vmem:[#allocation3 + $0xe8] sm:$0xff]
      %v4247 = vld [vmem:[#allocation3 + $0xf0] sm:$0xff]
      %v4248 = vld [vmem:[#allocation3 + $0xf8] sm:$0xff]
      %v4249 = vld [vmem:[#allocation3 + $0x100] sm:$0xff]
      %v4250 = vld [vmem:[#allocation3 + $0x108] sm:$0xff]
      %v4251 = vld [vmem:[#allocation3 + $0x110] sm:$0xff]
      %v4252 = vld [vmem:[#allocation3 + $0x118] sm:$0xff]
      %v4253 = vld [vmem:[#allocation3 + $0x120] sm:$0xff]
      %v4254 = vld [vmem:[#allocation3 + $0x128] sm:$0xff]
      %v4255 = vld [vmem:[#allocation3 + $0x130] sm:$0xff]
      %v4256 = vld [vmem:[#allocation3 + $0x138] sm:$0xff]
      %v4257 = vld [vmem:[#allocation3 + $0x140] sm:$0xff]
      %v4258 = vld [vmem:[#allocation3 + $0x148] sm:$0xff]
      %v4259 = vld [vmem:[#allocation3 + $0x150] sm:$0xff]
      %v4260 = vld [vmem:[#allocation3 + $0x158] sm:$0xff]
      %v4261 = vld [vmem:[#allocation3 + $0x160] sm:$0xff]
      %v4262 = vld [vmem:[#allocation3 + $0x168] sm:$0xff]
      %v4263 = vld [vmem:[#allocation3 + $0x170] sm:$0xff]
      %v4264 = vld [vmem:[#allocation3 + $0x178] sm:$0xff]
      %v4265 = vld [vmem:[#allocation3 + $0x180] sm:$0xff]
      %v4266 = vld [vmem:[#allocation3 + $0x188] sm:$0xff]
      %v4267 = vld [vmem:[#allocation3 + $0x190] sm:$0xff]
      %v4268 = vld [vmem:[#allocation3 + $0x198] sm:$0xff]
      %v4269 = vld [vmem:[#allocation3 + $0x1a0] sm:$0xff]
      %v4270 = vld [vmem:[#allocation3 + $0x1a8] sm:$0xff]
      %v4271 = vld [vmem:[#allocation3 + $0x1b0] sm:$0xff]
      %v4272 = vld [vmem:[#allocation3 + $0x1b8] sm:$0xff]
      %v4273 = vadd.f32 %v4217, %v3995
      %v4274 = vadd.f32 %v4218, %v3998
      %v4275 = vadd.f32 %v4219, %v4003
      %v4276 = vadd.f32 %v4220, %v4006
      %v4277 = vadd.f32 %v4221, %v4011
      %v4278 = vadd.f32 %v4222, %v4014
      %v4279 = vadd.f32 %v4223, %v4019
      %v4280 = vadd.f32 %v4224, %v4022
      %v4281 = vadd.f32 %v4225, %v4027
      %v4282 = vadd.f32 %v4226, %v4030
      %v4283 = vadd.f32 %v4227, %v4035
      %v4284 = vadd.f32 %v4228, %v4038
      %v4285 = vadd.f32 %v4229, %v4043
      %v4286 = vadd.f32 %v4230, %v4046
      %v4287 = vadd.f32 %v4231, %v4051
      %v4288 = vadd.f32 %v4232, %v4054
      %v4289 = vadd.f32 %v4233, %v4059
      %v4290 = vadd.f32 %v4234, %v4062
      %v4291 = vadd.f32 %v4235, %v4067
      %v4292 = vadd.f32 %v4236, %v4070
      %v4293 = vadd.f32 %v4237, %v4075
      %v4294 = vadd.f32 %v4238, %v4078
      %v4295 = vadd.f32 %v4239, %v4083
      %v4296 = vadd.f32 %v4240, %v4086
      %v4297 = vadd.f32 %v4241, %v4091
      %v4298 = vadd.f32 %v4242, %v4094
      %v4299 = vadd.f32 %v4243, %v4099
      %v4300 = vadd.f32 %v4244, %v4102
      %v4301 = vadd.f32 %v4245, %v4107
      %v4302 = vadd.f32 %v4246, %v4110
      %v4303 = vadd.f32 %v4247, %v4115
      %v4304 = vadd.f32 %v4248, %v4118
      %v4305 = vadd.f32 %v4249, %v4123
      %v4306 = vadd.f32 %v4250, %v4126
      %v4307 = vadd.f32 %v4251, %v4131
      %v4308 = vadd.f32 %v4252, %v4134
      %v4309 = vadd.f32 %v4253, %v4139
      %v4310 = vadd.f32 %v4254, %v4142
      %v4311 = vadd.f32 %v4255, %v4147
      %v4312 = vadd.f32 %v4256, %v4150
      %v4313 = vadd.f32 %v4257, %v4155
      %v4314 = vadd.f32 %v4258, %v4158
      %v4315 = vadd.f32 %v4259, %v4163
      %v4316 = vadd.f32 %v4260, %v4166
      %v4317 = vadd.f32 %v4261, %v4171
      %v4318 = vadd.f32 %v4262, %v4174
      %v4319 = vadd.f32 %v4263, %v4179
      %v4320 = vadd.f32 %v4264, %v4182
      %v4321 = vadd.f32 %v4265, %v4187
      %v4322 = vadd.f32 %v4266, %v4190
      %v4323 = vadd.f32 %v4267, %v4195
      %v4324 = vadd.f32 %v4268, %v4198
      %v4325 = vadd.f32 %v4269, %v4203
      %v4326 = vadd.f32 %v4270, %v4206
      %v4327 = vadd.f32 %v4271, %v4211
      %v4328 = vadd.f32 %v4272, %v4214
      %4329 = vst.msk [vmem:[#allocation3] sm:$0xff] %vm961, %v4273
      %4330 = vst.msk [vmem:[#allocation3 + $0x8] sm:$0xff] %vm961, %v4274
      %4331 = vst.msk [vmem:[#allocation3 + $0x10] sm:$0xff] %vm961, %v4275
      %4332 = vst.msk [vmem:[#allocation3 + $0x18] sm:$0xff] %vm961, %v4276
      %4333 = vst.msk [vmem:[#allocation3 + $0x20] sm:$0xff] %vm961, %v4277
      %4334 = vst.msk [vmem:[#allocation3 + $0x28] sm:$0xff] %vm961, %v4278
      %4335 = vst.msk [vmem:[#allocation3 + $0x30] sm:$0xff] %vm961, %v4279
      %4336 = vst.msk [vmem:[#allocation3 + $0x38] sm:$0xff] %vm961, %v4280
      %4337 = vst.msk [vmem:[#allocation3 + $0x40] sm:$0xff] %vm961, %v4281
      %4338 = vst.msk [vmem:[#allocation3 + $0x48] sm:$0xff] %vm961, %v4282
      %4339 = vst.msk [vmem:[#allocation3 + $0x50] sm:$0xff] %vm961, %v4283
      %4340 = vst.msk [vmem:[#allocation3 + $0x58] sm:$0xff] %vm961, %v4284
      %4341 = vst.msk [vmem:[#allocation3 + $0x60] sm:$0xff] %vm961, %v4285
      %4342 = vst.msk [vmem:[#allocation3 + $0x68] sm:$0xff] %vm961, %v4286
      %4343 = vst.msk [vmem:[#allocation3 + $0x70] sm:$0xff] %vm961, %v4287
      %4344 = vst.msk [vmem:[#allocation3 + $0x78] sm:$0xff] %vm961, %v4288
      %4345 = vst.msk [vmem:[#allocation3 + $0x80] sm:$0xff] %vm961, %v4289
      %4346 = vst.msk [vmem:[#allocation3 + $0x88] sm:$0xff] %vm961, %v4290
      %4347 = vst.msk [vmem:[#allocation3 + $0x90] sm:$0xff] %vm961, %v4291
      %4348 = vst.msk [vmem:[#allocation3 + $0x98] sm:$0xff] %vm961, %v4292
      %4349 = vst.msk [vmem:[#allocation3 + $0xa0] sm:$0xff] %vm961, %v4293
      %4350 = vst.msk [vmem:[#allocation3 + $0xa8] sm:$0xff] %vm961, %v4294
      %4351 = vst.msk [vmem:[#allocation3 + $0xb0] sm:$0xff] %vm961, %v4295
      %4352 = vst.msk [vmem:[#allocation3 + $0xb8] sm:$0xff] %vm961, %v4296
      %4353 = vst.msk [vmem:[#allocation3 + $0xc0] sm:$0xff] %vm961, %v4297
      %4354 = vst.msk [vmem:[#allocation3 + $0xc8] sm:$0xff] %vm961, %v4298
      %4355 = vst.msk [vmem:[#allocation3 + $0xd0] sm:$0xff] %vm961, %v4299
      %4356 = vst.msk [vmem:[#allocation3 + $0xd8] sm:$0xff] %vm961, %v4300
      %4357 = vst.msk [vmem:[#allocation3 + $0xe0] sm:$0xff] %vm961, %v4301
      %4358 = vst.msk [vmem:[#allocation3 + $0xe8] sm:$0xff] %vm961, %v4302
      %4359 = vst.msk [vmem:[#allocation3 + $0xf0] sm:$0xff] %vm961, %v4303
      %4360 = vst.msk [vmem:[#allocation3 + $0xf8] sm:$0xff] %vm961, %v4304
      %4361 = vst.msk [vmem:[#allocation3 + $0x100] sm:$0xff] %vm961, %v4305
      %4362 = vst.msk [vmem:[#allocation3 + $0x108] sm:$0xff] %vm961, %v4306
      %4363 = vst.msk [vmem:[#allocation3 + $0x110] sm:$0xff] %vm961, %v4307
      %4364 = vst.msk [vmem:[#allocation3 + $0x118] sm:$0xff] %vm961, %v4308
      %4365 = vst.msk [vmem:[#allocation3 + $0x120] sm:$0xff] %vm961, %v4309
      %4366 = vst.msk [vmem:[#allocation3 + $0x128] sm:$0xff] %vm961, %v4310
      %4367 = vst.msk [vmem:[#allocation3 + $0x130] sm:$0xff] %vm961, %v4311
      %4368 = vst.msk [vmem:[#allocation3 + $0x138] sm:$0xff] %vm961, %v4312
      %4369 = vst.msk [vmem:[#allocation3 + $0x140] sm:$0xff] %vm961, %v4313
      %4370 = vst.msk [vmem:[#allocation3 + $0x148] sm:$0xff] %vm961, %v4314
      %4371 = vst.msk [vmem:[#allocation3 + $0x150] sm:$0xff] %vm961, %v4315
      %4372 = vst.msk [vmem:[#allocation3 + $0x158] sm:$0xff] %vm961, %v4316
      %4373 = vst.msk [vmem:[#allocation3 + $0x160] sm:$0xff] %vm961, %v4317
      %4374 = vst.msk [vmem:[#allocation3 + $0x168] sm:$0xff] %vm961, %v4318
      %4375 = vst.msk [vmem:[#allocation3 + $0x170] sm:$0xff] %vm961, %v4319
      %4376 = vst.msk [vmem:[#allocation3 + $0x178] sm:$0xff] %vm961, %v4320
      %4377 = vst.msk [vmem:[#allocation3 + $0x180] sm:$0xff] %vm961, %v4321
      %4378 = vst.msk [vmem:[#allocation3 + $0x188] sm:$0xff] %vm961, %v4322
      %4379 = vst.msk [vmem:[#allocation3 + $0x190] sm:$0xff] %vm961, %v4323
      %4380 = vst.msk [vmem:[#allocation3 + $0x198] sm:$0xff] %vm961, %v4324
      %4381 = vst.msk [vmem:[#allocation3 + $0x1a0] sm:$0xff] %vm961, %v4325
      %4382 = vst.msk [vmem:[#allocation3 + $0x1a8] sm:$0xff] %vm961, %v4326
      %4383 = vst.msk [vmem:[#allocation3 + $0x1b0] sm:$0xff] %vm961, %v4327
      %4384 = vst.msk [vmem:[#allocation3 + $0x1b8] sm:$0xff] %vm961, %v4328
      %v4385 = vld [vmem:[#allocation2 + $0xc] sm:$0xe]
      %v4386 = vld [vmem:[#allocation2 + $0x10] sm:$0xf]
      %v4387 = vld [vmem:[#allocation2 + $0x14] sm:$0xf]
      %v4388 = vld [vmem:[#allocation2 + $0x18] sm:$0xf]
      %v4389 = vld [vmem:[#allocation2 + $0x1c] sm:$0xf]
      %v4390 = vld [vmem:[#allocation2 + $0x20] sm:$0xf]
      %v4391 = vld [vmem:[#allocation2 + $0x24] sm:$0xf]
      %v4392 = vld [vmem:[#allocation2 + $0x28] sm:$0xf]
      %v4393 = vld [vmem:[#allocation2 + $0x2c] sm:$0xf]
      %v4394 = vld [vmem:[#allocation2 + $0x30] sm:$0xf]
      %v4395 = vld [vmem:[#allocation2 + $0x34] sm:$0xf]
      %v4396 = vld [vmem:[#allocation2 + $0x38] sm:$0xf]
      %v4397 = vld [vmem:[#allocation2 + $0x3c] sm:$0xf]
      %v4398 = vld [vmem:[#allocation2 + $0x40] sm:$0xf]
      %v4399 = vld [vmem:[#allocation2 + $0x44] sm:$0xf]
      %v4400 = vld [vmem:[#allocation2 + $0x48] sm:$0xf]
      %v4401 = vld [vmem:[#allocation2 + $0x4c] sm:$0xf]
      %v4402 = vld [vmem:[#allocation2 + $0x50] sm:$0xf]
      %v4403 = vld [vmem:[#allocation2 + $0x54] sm:$0xf]
      %v4404 = vld [vmem:[#allocation2 + $0x58] sm:$0xf]
      %v4405 = vld [vmem:[#allocation2 + $0x5c] sm:$0xf]
      %v4406 = vld [vmem:[#allocation2 + $0x60] sm:$0xf]
      %v4407 = vld [vmem:[#allocation2 + $0x64] sm:$0xf]
      %v4408 = vld [vmem:[#allocation2 + $0x68] sm:$0xf]
      %v4409 = vld [vmem:[#allocation2 + $0x6c] sm:$0xf]
      %v4410 = vld [vmem:[#allocation2 + $0x70] sm:$0xf]
      %v4411 = vld [vmem:[#allocation2 + $0x74] sm:$0xf]
      %v4412 = vld [vmem:[#allocation2 + $0x78] sm:$0xf]
      %v4413 = vld [vmem:[#allocation2 + $0x7c] sm:$0xf]
      %v4414 = vld [vmem:[#allocation2 + $0x80] sm:$0xf]
      %v4415 = vld [vmem:[#allocation2 + $0x84] sm:$0xf]
      %v4416 = vld [vmem:[#allocation2 + $0x88] sm:$0xf]
      %v4417 = vld [vmem:[#allocation2 + $0x8c] sm:$0xf]
      %v4418 = vld [vmem:[#allocation2 + $0x90] sm:$0xf]
      %v4419 = vld [vmem:[#allocation2 + $0x94] sm:$0xf]
      %v4420 = vld [vmem:[#allocation2 + $0x98] sm:$0xf]
      %v4421 = vld [vmem:[#allocation2 + $0x9c] sm:$0xf]
      %v4422 = vld [vmem:[#allocation2 + $0xa0] sm:$0xf]
      %v4423 = vld [vmem:[#allocation2 + $0xa4] sm:$0xf]
      %v4424 = vld [vmem:[#allocation2 + $0xa8] sm:$0xf]
      %v4425 = vld [vmem:[#allocation2 + $0xac] sm:$0xf]
      %v4426 = vld [vmem:[#allocation2 + $0xb0] sm:$0xf]
      %v4427 = vld [vmem:[#allocation2 + $0xb4] sm:$0xf]
      %v4428 = vld [vmem:[#allocation2 + $0xb8] sm:$0xf]
      %v4429 = vld [vmem:[#allocation2 + $0xbc] sm:$0xf]
      %v4430 = vld [vmem:[#allocation2 + $0xc0] sm:$0xf]
      %v4431 = vld [vmem:[#allocation2 + $0xc4] sm:$0xf]
      %v4432 = vld [vmem:[#allocation2 + $0xc8] sm:$0xf]
      %v4433 = vld [vmem:[#allocation2 + $0xcc] sm:$0xf]
      %v4434 = vld [vmem:[#allocation2 + $0xd0] sm:$0xf]
      %v4435 = vld [vmem:[#allocation2 + $0xd4] sm:$0xf]
      %v4436 = vld [vmem:[#allocation2 + $0xd8] sm:$0xf]
      %v4437 = vld [vmem:[#allocation2 + $0xdc] sm:$0xf]
      %v4438 = vld [vmem:[#allocation2 + $0xe0] sm:$0xf]
      %v4439 = vld [vmem:[#allocation2 + $0xe4] sm:$0xf]
      %v4440 = vld [vmem:[#allocation2 + $0xe8] sm:$0xf]
      %v4441 = vld [vmem:[#allocation2 + $0xec] sm:$0x1]
      %s4442 = scalar_lea.vmem %s2, 10
      %v4443 = vld [vmem:[%s4442] sm:$0x3]
      %v4501 = vunpack.c.l.b16 %v4385
      %v4502 = vunpack.c.l.b16 %v4386
      %v4503 = vunpack.c.l.b16 %v4387
      %v4504 = vunpack.c.l.b16 %v4388
      %v4505 = vunpack.c.l.b16 %v4389
      %v4506 = vunpack.c.l.b16 %v4390
      %v4507 = vunpack.c.l.b16 %v4391
      %v4508 = vunpack.c.l.b16 %v4392
      %v4509 = vunpack.c.l.b16 %v4393
      %v4510 = vunpack.c.l.b16 %v4394
      %v4511 = vunpack.c.l.b16 %v4395
      %v4512 = vunpack.c.l.b16 %v4396
      %v4513 = vunpack.c.l.b16 %v4397
      %v4514 = vunpack.c.l.b16 %v4398
      %v4515 = vunpack.c.l.b16 %v4399
      %v4516 = vunpack.c.l.b16 %v4400
      %v4517 = vunpack.c.l.b16 %v4401
      %v4518 = vunpack.c.l.b16 %v4402
      %v4519 = vunpack.c.l.b16 %v4403
      %v4520 = vunpack.c.l.b16 %v4404
      %v4521 = vunpack.c.l.b16 %v4405
      %v4522 = vunpack.c.l.b16 %v4406
      %v4523 = vunpack.c.l.b16 %v4407
      %v4524 = vunpack.c.l.b16 %v4408
      %v4525 = vunpack.c.l.b16 %v4409
      %v4526 = vunpack.c.l.b16 %v4410
      %v4527 = vunpack.c.l.b16 %v4411
      %v4528 = vunpack.c.l.b16 %v4412
      %v4529 = vunpack.c.l.b16 %v4413
      %v4530 = vunpack.c.l.b16 %v4414
      %v4531 = vunpack.c.l.b16 %v4415
      %v4532 = vunpack.c.l.b16 %v4416
      %v4533 = vunpack.c.l.b16 %v4417
      %v4534 = vunpack.c.l.b16 %v4418
      %v4535 = vunpack.c.l.b16 %v4419
      %v4536 = vunpack.c.l.b16 %v4420
      %v4537 = vunpack.c.l.b16 %v4421
      %v4538 = vunpack.c.l.b16 %v4422
      %v4539 = vunpack.c.l.b16 %v4423
      %v4540 = vunpack.c.l.b16 %v4424
      %v4541 = vunpack.c.l.b16 %v4425
      %v4542 = vunpack.c.l.b16 %v4426
      %v4543 = vunpack.c.l.b16 %v4427
      %v4544 = vunpack.c.l.b16 %v4428
      %v4545 = vunpack.c.l.b16 %v4429
      %v4546 = vunpack.c.l.b16 %v4430
      %v4547 = vunpack.c.l.b16 %v4431
      %v4548 = vunpack.c.l.b16 %v4432
      %v4549 = vunpack.c.l.b16 %v4433
      %v4550 = vunpack.c.l.b16 %v4434
      %v4551 = vunpack.c.l.b16 %v4435
      %v4552 = vunpack.c.l.b16 %v4436
      %v4553 = vunpack.c.l.b16 %v4437
      %v4554 = vunpack.c.l.b16 %v4438
      %v4555 = vunpack.c.l.b16 %v4439
      %v4556 = vunpack.c.l.b16 %v4440
      %v4557 = vunpack.c.l.b16 %v4441
      %v4558 = vpack.c.b16 %v4502, %v4501
      %v4559 = vpack.c.b16 %v4504, %v4503
      %v4560 = vpack.c.b16 %v4506, %v4505
      %v4561 = vpack.c.b16 %v4508, %v4507
      %v4562 = vpack.c.b16 %v4510, %v4509
      %v4563 = vpack.c.b16 %v4512, %v4511
      %v4564 = vpack.c.b16 %v4514, %v4513
      %v4565 = vpack.c.b16 %v4516, %v4515
      %v4566 = vpack.c.b16 %v4518, %v4517
      %v4567 = vpack.c.b16 %v4520, %v4519
      %v4568 = vpack.c.b16 %v4522, %v4521
      %v4569 = vpack.c.b16 %v4524, %v4523
      %v4570 = vpack.c.b16 %v4526, %v4525
      %v4571 = vpack.c.b16 %v4528, %v4527
      %v4572 = vpack.c.b16 %v4530, %v4529
      %v4573 = vpack.c.b16 %v4532, %v4531
      %v4574 = vpack.c.b16 %v4534, %v4533
      %v4575 = vpack.c.b16 %v4536, %v4535
      %v4576 = vpack.c.b16 %v4538, %v4537
      %v4577 = vpack.c.b16 %v4540, %v4539
      %v4578 = vpack.c.b16 %v4542, %v4541
      %v4579 = vpack.c.b16 %v4544, %v4543
      %v4580 = vpack.c.b16 %v4546, %v4545
      %v4581 = vpack.c.b16 %v4548, %v4547
      %v4582 = vpack.c.b16 %v4550, %v4549
      %v4583 = vpack.c.b16 %v4552, %v4551
      %v4584 = vpack.c.b16 %v4554, %v4553
      %v4585 = vpack.c.b16 %v4556, %v4555
      %v4586 = vpack.c.b16 %v4557, %v4557
      %v4587 = vrot.slane %v4558, 1
      %v4588 = vrot.slane %v4559, 1
      %v4589 = vsel %vm2163, %v4587, %v4588
      %v4590 = vrot.slane %v4560, 1
      %v4591 = vsel %vm2163, %v4588, %v4590
      %v4592 = vrot.slane %v4561, 1
      %v4593 = vsel %vm2163, %v4590, %v4592
      %v4594 = vrot.slane %v4562, 1
      %v4595 = vsel %vm2163, %v4592, %v4594
      %v4596 = vrot.slane %v4563, 1
      %v4597 = vsel %vm2163, %v4594, %v4596
      %v4598 = vrot.slane %v4564, 1
      %v4599 = vsel %vm2163, %v4596, %v4598
      %v4600 = vrot.slane %v4565, 1
      %v4601 = vsel %vm2163, %v4598, %v4600
      %v4602 = vrot.slane %v4566, 1
      %v4603 = vsel %vm2163, %v4600, %v4602
      %v4604 = vrot.slane %v4567, 1
      %v4605 = vsel %vm2163, %v4602, %v4604
      %v4606 = vrot.slane %v4568, 1
      %v4607 = vsel %vm2163, %v4604, %v4606
      %v4608 = vrot.slane %v4569, 1
      %v4609 = vsel %vm2163, %v4606, %v4608
      %v4610 = vrot.slane %v4570, 1
      %v4611 = vsel %vm2163, %v4608, %v4610
      %v4612 = vrot.slane %v4571, 1
      %v4613 = vsel %vm2163, %v4610, %v4612
      %v4614 = vrot.slane %v4572, 1
      %v4615 = vsel %vm2163, %v4612, %v4614
      %v4616 = vrot.slane %v4573, 1
      %v4617 = vsel %vm2163, %v4614, %v4616
      %v4618 = vrot.slane %v4574, 1
      %v4619 = vsel %vm2163, %v4616, %v4618
      %v4620 = vrot.slane %v4575, 1
      %v4621 = vsel %vm2163, %v4618, %v4620
      %v4622 = vrot.slane %v4576, 1
      %v4623 = vsel %vm2163, %v4620, %v4622
      %v4624 = vrot.slane %v4577, 1
      %v4625 = vsel %vm2163, %v4622, %v4624
      %v4626 = vrot.slane %v4578, 1
      %v4627 = vsel %vm2163, %v4624, %v4626
      %v4628 = vrot.slane %v4579, 1
      %v4629 = vsel %vm2163, %v4626, %v4628
      %v4630 = vrot.slane %v4580, 1
      %v4631 = vsel %vm2163, %v4628, %v4630
      %v4632 = vrot.slane %v4581, 1
      %v4633 = vsel %vm2163, %v4630, %v4632
      %v4634 = vrot.slane %v4582, 1
      %v4635 = vsel %vm2163, %v4632, %v4634
      %v4636 = vrot.slane %v4583, 1
      %v4637 = vsel %vm2163, %v4634, %v4636
      %v4638 = vrot.slane %v4584, 1
      %v4639 = vsel %vm2163, %v4636, %v4638
      %v4640 = vrot.slane %v4585, 1
      %v4641 = vsel %vm2163, %v4638, %v4640
      %v4642 = vrot.slane %v4586, 1
      %v4643 = vsel %vm2163, %v4640, %v4642
      %v4645 = vsel %vm612, %v4589, 0
      %v4648 = vsel %vm612, %v4591, 0
      %v4651 = vsel %vm612, %v4593, 0
      %v4654 = vsel %vm612, %v4595, 0
      %v4657 = vsel %vm612, %v4597, 0
      %v4660 = vsel %vm612, %v4599, 0
      %v4663 = vsel %vm612, %v4601, 0
      %v4666 = vsel %vm612, %v4603, 0
      %v4669 = vsel %vm612, %v4605, 0
      %v4672 = vsel %vm612, %v4607, 0
      %v4675 = vsel %vm612, %v4609, 0
      %v4678 = vsel %vm612, %v4611, 0
      %v4681 = vsel %vm612, %v4613, 0
      %v4684 = vsel %vm612, %v4615, 0
      %v4687 = vsel %vm612, %v4617, 0
      %v4690 = vsel %vm612, %v4619, 0
      %v4693 = vsel %vm612, %v4621, 0
      %v4696 = vsel %vm612, %v4623, 0
      %v4699 = vsel %vm612, %v4625, 0
      %v4702 = vsel %vm612, %v4627, 0
      %v4705 = vsel %vm612, %v4629, 0
      %v4708 = vsel %vm612, %v4631, 0
      %v4711 = vsel %vm612, %v4633, 0
      %v4714 = vsel %vm612, %v4635, 0
      %v4717 = vsel %vm612, %v4637, 0
      %v4720 = vsel %vm612, %v4639, 0
      %v4723 = vsel %vm612, %v4641, 0
      %v4726 = vsel %vm612, %v4643, 0
      %v4729 = vand.u32 %v4443, %v700
      %4731 = vmatprep.subr.bf16.mxu0 0
      %4732 = vmatpush1.bf16.msra.mxu0 0
      %4733 = vmatprep.subr.bf16.mxu0 0
      %4734 = vmatpush1.bf16.msra.mxu0 0
      %4735 = vmatprep.subr.bf16.mxu0 0
      %4736 = vmatpush1.bf16.msra.mxu0 0
      %4737 = vmatprep.subr.bf16.mxu0 0
      %4738 = vmatpush1.bf16.msra.mxu0 0
      %4739 = vmatprep.subr.bf16.mxu0 0
      %4740 = vmatpush1.bf16.msra.mxu0 0
      %4741 = vmatprep.subr.bf16.mxu0 0
      %4742 = vmatpush1.bf16.msra.mxu0 0
      %4743 = vmatprep.subr.bf16.mxu0 0
      %4744 = vmatpush1.bf16.msra.mxu0 0
      %4745 = vmatprep.subr.bf16.mxu0 0
      %4746 = vmatpush1.bf16.msra.mxu0 %v4729
      %4747 = vmatprep.subr.bf16.mxu0 0
      %4748 = vmatpush2.bf16.msra.mxu0 0
      %4749 = vmatprep.subr.bf16.mxu0 0
      %4750 = vmatpush2.bf16.msra.mxu0 0
      %4751 = vmatprep.subr.bf16.mxu0 0
      %4752 = vmatpush2.bf16.msra.mxu0 0
      %4753 = vmatprep.subr.bf16.mxu0 0
      %4754 = vmatpush2.bf16.msra.mxu0 0
      %4755 = vmatprep.subr.bf16.mxu0 0
      %4756 = vmatpush2.bf16.msra.mxu0 0
      %4757 = vmatprep.subr.bf16.mxu0 0
      %4758 = vmatpush2.bf16.msra.mxu0 0
      %4759 = vmatprep.subr.bf16.mxu0 0
      %4760 = vmatpush2.bf16.msra.mxu0 0
      %4761 = vmatprep.subr.bf16.mxu0 0
      %4762 = vmatpush2.bf16.msra.mxu0 0
      %4763 = vmatprep.mubr.bf16.mxu0 0
      %4764 = vmatmul.mubr.bf16.gmra.mxu0 %v4645
      %v4765 = vpop.f32.mrf.mxu0
      %v4766 = vadd.f32 0.0, %v4765
      %v4767 = vpop.f32.mrf.mxu0
      %v4768 = vpop.f32.mrf.mxu0
      %v4769 = vadd.f32 0.0, %v4768
      %v4770 = vpop.f32.mrf.mxu0
      %4771 = vmatprep.mubr.bf16.mxu0 0
      %4772 = vmatmul.mubr.bf16.gmra.mxu0 %v4648
      %v4773 = vpop.f32.mrf.mxu0
      %v4774 = vadd.f32 0.0, %v4773
      %v4775 = vpop.f32.mrf.mxu0
      %v4776 = vpop.f32.mrf.mxu0
      %v4777 = vadd.f32 0.0, %v4776
      %v4778 = vpop.f32.mrf.mxu0
      %4779 = vmatprep.mubr.bf16.mxu0 0
      %4780 = vmatmul.mubr.bf16.gmra.mxu0 %v4651
      %v4781 = vpop.f32.mrf.mxu0
      %v4782 = vadd.f32 0.0, %v4781
      %v4783 = vpop.f32.mrf.mxu0
      %v4784 = vpop.f32.mrf.mxu0
      %v4785 = vadd.f32 0.0, %v4784
      %v4786 = vpop.f32.mrf.mxu0
      %4787 = vmatprep.mubr.bf16.mxu0 0
      %4788 = vmatmul.mubr.bf16.gmra.mxu0 %v4654
      %v4789 = vpop.f32.mrf.mxu0
      %v4790 = vadd.f32 0.0, %v4789
      %v4791 = vpop.f32.mrf.mxu0
      %v4792 = vpop.f32.mrf.mxu0
      %v4793 = vadd.f32 0.0, %v4792
      %v4794 = vpop.f32.mrf.mxu0
      %4795 = vmatprep.mubr.bf16.mxu0 0
      %4796 = vmatmul.mubr.bf16.gmra.mxu0 %v4657
      %v4797 = vpop.f32.mrf.mxu0
      %v4798 = vadd.f32 0.0, %v4797
      %v4799 = vpop.f32.mrf.mxu0
      %v4800 = vpop.f32.mrf.mxu0
      %v4801 = vadd.f32 0.0, %v4800
      %v4802 = vpop.f32.mrf.mxu0
      %4803 = vmatprep.mubr.bf16.mxu0 0
      %4804 = vmatmul.mubr.bf16.gmra.mxu0 %v4660
      %v4805 = vpop.f32.mrf.mxu0
      %v4806 = vadd.f32 0.0, %v4805
      %v4807 = vpop.f32.mrf.mxu0
      %v4808 = vpop.f32.mrf.mxu0
      %v4809 = vadd.f32 0.0, %v4808
      %v4810 = vpop.f32.mrf.mxu0
      %4811 = vmatprep.mubr.bf16.mxu0 0
      %4812 = vmatmul.mubr.bf16.gmra.mxu0 %v4663
      %v4813 = vpop.f32.mrf.mxu0
      %v4814 = vadd.f32 0.0, %v4813
      %v4815 = vpop.f32.mrf.mxu0
      %v4816 = vpop.f32.mrf.mxu0
      %v4817 = vadd.f32 0.0, %v4816
      %v4818 = vpop.f32.mrf.mxu0
      %4819 = vmatprep.mubr.bf16.mxu0 0
      %4820 = vmatmul.mubr.bf16.gmra.mxu0 %v4666
      %v4821 = vpop.f32.mrf.mxu0
      %v4822 = vadd.f32 0.0, %v4821
      %v4823 = vpop.f32.mrf.mxu0
      %v4824 = vpop.f32.mrf.mxu0
      %v4825 = vadd.f32 0.0, %v4824
      %v4826 = vpop.f32.mrf.mxu0
      %4827 = vmatprep.mubr.bf16.mxu0 0
      %4828 = vmatmul.mubr.bf16.gmra.mxu0 %v4669
      %v4829 = vpop.f32.mrf.mxu0
      %v4830 = vadd.f32 0.0, %v4829
      %v4831 = vpop.f32.mrf.mxu0
      %v4832 = vpop.f32.mrf.mxu0
      %v4833 = vadd.f32 0.0, %v4832
      %v4834 = vpop.f32.mrf.mxu0
      %4835 = vmatprep.mubr.bf16.mxu0 0
      %4836 = vmatmul.mubr.bf16.gmra.mxu0 %v4672
      %v4837 = vpop.f32.mrf.mxu0
      %v4838 = vadd.f32 0.0, %v4837
      %v4839 = vpop.f32.mrf.mxu0
      %v4840 = vpop.f32.mrf.mxu0
      %v4841 = vadd.f32 0.0, %v4840
      %v4842 = vpop.f32.mrf.mxu0
      %4843 = vmatprep.mubr.bf16.mxu0 0
      %4844 = vmatmul.mubr.bf16.gmra.mxu0 %v4675
      %v4845 = vpop.f32.mrf.mxu0
      %v4846 = vadd.f32 0.0, %v4845
      %v4847 = vpop.f32.mrf.mxu0
      %v4848 = vpop.f32.mrf.mxu0
      %v4849 = vadd.f32 0.0, %v4848
      %v4850 = vpop.f32.mrf.mxu0
      %4851 = vmatprep.mubr.bf16.mxu0 0
      %4852 = vmatmul.mubr.bf16.gmra.mxu0 %v4678
      %v4853 = vpop.f32.mrf.mxu0
      %v4854 = vadd.f32 0.0, %v4853
      %v4855 = vpop.f32.mrf.mxu0
      %v4856 = vpop.f32.mrf.mxu0
      %v4857 = vadd.f32 0.0, %v4856
      %v4858 = vpop.f32.mrf.mxu0
      %4859 = vmatprep.mubr.bf16.mxu0 0
      %4860 = vmatmul.mubr.bf16.gmra.mxu0 %v4681
      %v4861 = vpop.f32.mrf.mxu0
      %v4862 = vadd.f32 0.0, %v4861
      %v4863 = vpop.f32.mrf.mxu0
      %v4864 = vpop.f32.mrf.mxu0
      %v4865 = vadd.f32 0.0, %v4864
      %v4866 = vpop.f32.mrf.mxu0
      %4867 = vmatprep.mubr.bf16.mxu0 0
      %4868 = vmatmul.mubr.bf16.gmra.mxu0 %v4684
      %v4869 = vpop.f32.mrf.mxu0
      %v4870 = vadd.f32 0.0, %v4869
      %v4871 = vpop.f32.mrf.mxu0
      %v4872 = vpop.f32.mrf.mxu0
      %v4873 = vadd.f32 0.0, %v4872
      %v4874 = vpop.f32.mrf.mxu0
      %4875 = vmatprep.mubr.bf16.mxu0 0
      %4876 = vmatmul.mubr.bf16.gmra.mxu0 %v4687
      %v4877 = vpop.f32.mrf.mxu0
      %v4878 = vadd.f32 0.0, %v4877
      %v4879 = vpop.f32.mrf.mxu0
      %v4880 = vpop.f32.mrf.mxu0
      %v4881 = vadd.f32 0.0, %v4880
      %v4882 = vpop.f32.mrf.mxu0
      %4883 = vmatprep.mubr.bf16.mxu0 0
      %4884 = vmatmul.mubr.bf16.gmra.mxu0 %v4690
      %v4885 = vpop.f32.mrf.mxu0
      %v4886 = vadd.f32 0.0, %v4885
      %v4887 = vpop.f32.mrf.mxu0
      %v4888 = vpop.f32.mrf.mxu0
      %v4889 = vadd.f32 0.0, %v4888
      %v4890 = vpop.f32.mrf.mxu0
      %4891 = vmatprep.mubr.bf16.mxu0 0
      %4892 = vmatmul.mubr.bf16.gmra.mxu0 %v4693
      %v4893 = vpop.f32.mrf.mxu0
      %v4894 = vadd.f32 0.0, %v4893
      %v4895 = vpop.f32.mrf.mxu0
      %v4896 = vpop.f32.mrf.mxu0
      %v4897 = vadd.f32 0.0, %v4896
      %v4898 = vpop.f32.mrf.mxu0
      %4899 = vmatprep.mubr.bf16.mxu0 0
      %4900 = vmatmul.mubr.bf16.gmra.mxu0 %v4696
      %v4901 = vpop.f32.mrf.mxu0
      %v4902 = vadd.f32 0.0, %v4901
      %v4903 = vpop.f32.mrf.mxu0
      %v4904 = vpop.f32.mrf.mxu0
      %v4905 = vadd.f32 0.0, %v4904
      %v4906 = vpop.f32.mrf.mxu0
      %4907 = vmatprep.mubr.bf16.mxu0 0
      %4908 = vmatmul.mubr.bf16.gmra.mxu0 %v4699
      %v4909 = vpop.f32.mrf.mxu0
      %v4910 = vadd.f32 0.0, %v4909
      %v4911 = vpop.f32.mrf.mxu0
      %v4912 = vpop.f32.mrf.mxu0
      %v4913 = vadd.f32 0.0, %v4912
      %v4914 = vpop.f32.mrf.mxu0
      %4915 = vmatprep.mubr.bf16.mxu0 0
      %4916 = vmatmul.mubr.bf16.gmra.mxu0 %v4702
      %v4917 = vpop.f32.mrf.mxu0
      %v4918 = vadd.f32 0.0, %v4917
      %v4919 = vpop.f32.mrf.mxu0
      %v4920 = vpop.f32.mrf.mxu0
      %v4921 = vadd.f32 0.0, %v4920
      %v4922 = vpop.f32.mrf.mxu0
      %4923 = vmatprep.mubr.bf16.mxu0 0
      %4924 = vmatmul.mubr.bf16.gmra.mxu0 %v4705
      %v4925 = vpop.f32.mrf.mxu0
      %v4926 = vadd.f32 0.0, %v4925
      %v4927 = vpop.f32.mrf.mxu0
      %v4928 = vpop.f32.mrf.mxu0
      %v4929 = vadd.f32 0.0, %v4928
      %v4930 = vpop.f32.mrf.mxu0
      %4931 = vmatprep.mubr.bf16.mxu0 0
      %4932 = vmatmul.mubr.bf16.gmra.mxu0 %v4708
      %v4933 = vpop.f32.mrf.mxu0
      %v4934 = vadd.f32 0.0, %v4933
      %v4935 = vpop.f32.mrf.mxu0
      %v4936 = vpop.f32.mrf.mxu0
      %v4937 = vadd.f32 0.0, %v4936
      %v4938 = vpop.f32.mrf.mxu0
      %4939 = vmatprep.mubr.bf16.mxu0 0
      %4940 = vmatmul.mubr.bf16.gmra.mxu0 %v4711
      %v4941 = vpop.f32.mrf.mxu0
      %v4942 = vadd.f32 0.0, %v4941
      %v4943 = vpop.f32.mrf.mxu0
      %v4944 = vpop.f32.mrf.mxu0
      %v4945 = vadd.f32 0.0, %v4944
      %v4946 = vpop.f32.mrf.mxu0
      %4947 = vmatprep.mubr.bf16.mxu0 0
      %4948 = vmatmul.mubr.bf16.gmra.mxu0 %v4714
      %v4949 = vpop.f32.mrf.mxu0
      %v4950 = vadd.f32 0.0, %v4949
      %v4951 = vpop.f32.mrf.mxu0
      %v4952 = vpop.f32.mrf.mxu0
      %v4953 = vadd.f32 0.0, %v4952
      %v4954 = vpop.f32.mrf.mxu0
      %4955 = vmatprep.mubr.bf16.mxu0 0
      %4956 = vmatmul.mubr.bf16.gmra.mxu0 %v4717
      %v4957 = vpop.f32.mrf.mxu0
      %v4958 = vadd.f32 0.0, %v4957
      %v4959 = vpop.f32.mrf.mxu0
      %v4960 = vpop.f32.mrf.mxu0
      %v4961 = vadd.f32 0.0, %v4960
      %v4962 = vpop.f32.mrf.mxu0
      %4963 = vmatprep.mubr.bf16.mxu0 0
      %4964 = vmatmul.mubr.bf16.gmra.mxu0 %v4720
      %v4965 = vpop.f32.mrf.mxu0
      %v4966 = vadd.f32 0.0, %v4965
      %v4967 = vpop.f32.mrf.mxu0
      %v4968 = vpop.f32.mrf.mxu0
      %v4969 = vadd.f32 0.0, %v4968
      %v4970 = vpop.f32.mrf.mxu0
      %4971 = vmatprep.mubr.bf16.mxu0 0
      %4972 = vmatmul.mubr.bf16.gmra.mxu0 %v4723
      %v4973 = vpop.f32.mrf.mxu0
      %v4974 = vadd.f32 0.0, %v4973
      %v4975 = vpop.f32.mrf.mxu0
      %v4976 = vpop.f32.mrf.mxu0
      %v4977 = vadd.f32 0.0, %v4976
      %v4978 = vpop.f32.mrf.mxu0
      %4979 = vmatprep.mubr.bf16.mxu0 0
      %4980 = vmatmul.mubr.bf16.gmra.mxu0 %v4726
      %v4981 = vpop.f32.mrf.mxu0
      %v4982 = vadd.f32 0.0, %v4981
      %v4983 = vpop.f32.mrf.mxu0
      %v4984 = vpop.f32.mrf.mxu0
      %v4985 = vadd.f32 0.0, %v4984
      %v4986 = vpop.f32.mrf.mxu0
      %4987 = vdwg.mxu0
      %v4988 = vld [vmem:[#allocation3] sm:$0xff]
      %v4989 = vld [vmem:[#allocation3 + $0x8] sm:$0xff]
      %v4990 = vld [vmem:[#allocation3 + $0x10] sm:$0xff]
      %v4991 = vld [vmem:[#allocation3 + $0x18] sm:$0xff]
      %v4992 = vld [vmem:[#allocation3 + $0x20] sm:$0xff]
      %v4993 = vld [vmem:[#allocation3 + $0x28] sm:$0xff]
      %v4994 = vld [vmem:[#allocation3 + $0x30] sm:$0xff]
      %v4995 = vld [vmem:[#allocation3 + $0x38] sm:$0xff]
      %v4996 = vld [vmem:[#allocation3 + $0x40] sm:$0xff]
      %v4997 = vld [vmem:[#allocation3 + $0x48] sm:$0xff]
      %v4998 = vld [vmem:[#allocation3 + $0x50] sm:$0xff]
      %v4999 = vld [vmem:[#allocation3 + $0x58] sm:$0xff]
      %v5000 = vld [vmem:[#allocation3 + $0x60] sm:$0xff]
      %v5001 = vld [vmem:[#allocation3 + $0x68] sm:$0xff]
      %v5002 = vld [vmem:[#allocation3 + $0x70] sm:$0xff]
      %v5003 = vld [vmem:[#allocation3 + $0x78] sm:$0xff]
      %v5004 = vld [vmem:[#allocation3 + $0x80] sm:$0xff]
      %v5005 = vld [vmem:[#allocation3 + $0x88] sm:$0xff]
      %v5006 = vld [vmem:[#allocation3 + $0x90] sm:$0xff]
      %v5007 = vld [vmem:[#allocation3 + $0x98] sm:$0xff]
      %v5008 = vld [vmem:[#allocation3 + $0xa0] sm:$0xff]
      %v5009 = vld [vmem:[#allocation3 + $0xa8] sm:$0xff]
      %v5010 = vld [vmem:[#allocation3 + $0xb0] sm:$0xff]
      %v5011 = vld [vmem:[#allocation3 + $0xb8] sm:$0xff]
      %v5012 = vld [vmem:[#allocation3 + $0xc0] sm:$0xff]
      %v5013 = vld [vmem:[#allocation3 + $0xc8] sm:$0xff]
      %v5014 = vld [vmem:[#allocation3 + $0xd0] sm:$0xff]
      %v5015 = vld [vmem:[#allocation3 + $0xd8] sm:$0xff]
      %v5016 = vld [vmem:[#allocation3 + $0xe0] sm:$0xff]
      %v5017 = vld [vmem:[#allocation3 + $0xe8] sm:$0xff]
      %v5018 = vld [vmem:[#allocation3 + $0xf0] sm:$0xff]
      %v5019 = vld [vmem:[#allocation3 + $0xf8] sm:$0xff]
      %v5020 = vld [vmem:[#allocation3 + $0x100] sm:$0xff]
      %v5021 = vld [vmem:[#allocation3 + $0x108] sm:$0xff]
      %v5022 = vld [vmem:[#allocation3 + $0x110] sm:$0xff]
      %v5023 = vld [vmem:[#allocation3 + $0x118] sm:$0xff]
      %v5024 = vld [vmem:[#allocation3 + $0x120] sm:$0xff]
      %v5025 = vld [vmem:[#allocation3 + $0x128] sm:$0xff]
      %v5026 = vld [vmem:[#allocation3 + $0x130] sm:$0xff]
      %v5027 = vld [vmem:[#allocation3 + $0x138] sm:$0xff]
      %v5028 = vld [vmem:[#allocation3 + $0x140] sm:$0xff]
      %v5029 = vld [vmem:[#allocation3 + $0x148] sm:$0xff]
      %v5030 = vld [vmem:[#allocation3 + $0x150] sm:$0xff]
      %v5031 = vld [vmem:[#allocation3 + $0x158] sm:$0xff]
      %v5032 = vld [vmem:[#allocation3 + $0x160] sm:$0xff]
      %v5033 = vld [vmem:[#allocation3 + $0x168] sm:$0xff]
      %v5034 = vld [vmem:[#allocation3 + $0x170] sm:$0xff]
      %v5035 = vld [vmem:[#allocation3 + $0x178] sm:$0xff]
      %v5036 = vld [vmem:[#allocation3 + $0x180] sm:$0xff]
      %v5037 = vld [vmem:[#allocation3 + $0x188] sm:$0xff]
      %v5038 = vld [vmem:[#allocation3 + $0x190] sm:$0xff]
      %v5039 = vld [vmem:[#allocation3 + $0x198] sm:$0xff]
      %v5040 = vld [vmem:[#allocation3 + $0x1a0] sm:$0xff]
      %v5041 = vld [vmem:[#allocation3 + $0x1a8] sm:$0xff]
      %v5042 = vld [vmem:[#allocation3 + $0x1b0] sm:$0xff]
      %v5043 = vld [vmem:[#allocation3 + $0x1b8] sm:$0xff]
      %v5044 = vadd.f32 %v4988, %v4766
      %v5045 = vadd.f32 %v4989, %v4769
      %v5046 = vadd.f32 %v4990, %v4774
      %v5047 = vadd.f32 %v4991, %v4777
      %v5048 = vadd.f32 %v4992, %v4782
      %v5049 = vadd.f32 %v4993, %v4785
      %v5050 = vadd.f32 %v4994, %v4790
      %v5051 = vadd.f32 %v4995, %v4793
      %v5052 = vadd.f32 %v4996, %v4798
      %v5053 = vadd.f32 %v4997, %v4801
      %v5054 = vadd.f32 %v4998, %v4806
      %v5055 = vadd.f32 %v4999, %v4809
      %v5056 = vadd.f32 %v5000, %v4814
      %v5057 = vadd.f32 %v5001, %v4817
      %v5058 = vadd.f32 %v5002, %v4822
      %v5059 = vadd.f32 %v5003, %v4825
      %v5060 = vadd.f32 %v5004, %v4830
      %v5061 = vadd.f32 %v5005, %v4833
      %v5062 = vadd.f32 %v5006, %v4838
      %v5063 = vadd.f32 %v5007, %v4841
      %v5064 = vadd.f32 %v5008, %v4846
      %v5065 = vadd.f32 %v5009, %v4849
      %v5066 = vadd.f32 %v5010, %v4854
      %v5067 = vadd.f32 %v5011, %v4857
      %v5068 = vadd.f32 %v5012, %v4862
      %v5069 = vadd.f32 %v5013, %v4865
      %v5070 = vadd.f32 %v5014, %v4870
      %v5071 = vadd.f32 %v5015, %v4873
      %v5072 = vadd.f32 %v5016, %v4878
      %v5073 = vadd.f32 %v5017, %v4881
      %v5074 = vadd.f32 %v5018, %v4886
      %v5075 = vadd.f32 %v5019, %v4889
      %v5076 = vadd.f32 %v5020, %v4894
      %v5077 = vadd.f32 %v5021, %v4897
      %v5078 = vadd.f32 %v5022, %v4902
      %v5079 = vadd.f32 %v5023, %v4905
      %v5080 = vadd.f32 %v5024, %v4910
      %v5081 = vadd.f32 %v5025, %v4913
      %v5082 = vadd.f32 %v5026, %v4918
      %v5083 = vadd.f32 %v5027, %v4921
      %v5084 = vadd.f32 %v5028, %v4926
      %v5085 = vadd.f32 %v5029, %v4929
      %v5086 = vadd.f32 %v5030, %v4934
      %v5087 = vadd.f32 %v5031, %v4937
      %v5088 = vadd.f32 %v5032, %v4942
      %v5089 = vadd.f32 %v5033, %v4945
      %v5090 = vadd.f32 %v5034, %v4950
      %v5091 = vadd.f32 %v5035, %v4953
      %v5092 = vadd.f32 %v5036, %v4958
      %v5093 = vadd.f32 %v5037, %v4961
      %v5094 = vadd.f32 %v5038, %v4966
      %v5095 = vadd.f32 %v5039, %v4969
      %v5096 = vadd.f32 %v5040, %v4974
      %v5097 = vadd.f32 %v5041, %v4977
      %v5098 = vadd.f32 %v5042, %v4982
      %v5099 = vadd.f32 %v5043, %v4985
      %5100 = vst.msk [vmem:[#allocation3] sm:$0xff] %vm961, %v5044
      %5101 = vst.msk [vmem:[#allocation3 + $0x8] sm:$0xff] %vm961, %v5045
      %5102 = vst.msk [vmem:[#allocation3 + $0x10] sm:$0xff] %vm961, %v5046
      %5103 = vst.msk [vmem:[#allocation3 + $0x18] sm:$0xff] %vm961, %v5047
      %5104 = vst.msk [vmem:[#allocation3 + $0x20] sm:$0xff] %vm961, %v5048
      %5105 = vst.msk [vmem:[#allocation3 + $0x28] sm:$0xff] %vm961, %v5049
      %5106 = vst.msk [vmem:[#allocation3 + $0x30] sm:$0xff] %vm961, %v5050
      %5107 = vst.msk [vmem:[#allocation3 + $0x38] sm:$0xff] %vm961, %v5051
      %5108 = vst.msk [vmem:[#allocation3 + $0x40] sm:$0xff] %vm961, %v5052
      %5109 = vst.msk [vmem:[#allocation3 + $0x48] sm:$0xff] %vm961, %v5053
      %5110 = vst.msk [vmem:[#allocation3 + $0x50] sm:$0xff] %vm961, %v5054
      %5111 = vst.msk [vmem:[#allocation3 + $0x58] sm:$0xff] %vm961, %v5055
      %5112 = vst.msk [vmem:[#allocation3 + $0x60] sm:$0xff] %vm961, %v5056
      %5113 = vst.msk [vmem:[#allocation3 + $0x68] sm:$0xff] %vm961, %v5057
      %5114 = vst.msk [vmem:[#allocation3 + $0x70] sm:$0xff] %vm961, %v5058
      %5115 = vst.msk [vmem:[#allocation3 + $0x78] sm:$0xff] %vm961, %v5059
      %5116 = vst.msk [vmem:[#allocation3 + $0x80] sm:$0xff] %vm961, %v5060
      %5117 = vst.msk [vmem:[#allocation3 + $0x88] sm:$0xff] %vm961, %v5061
      %5118 = vst.msk [vmem:[#allocation3 + $0x90] sm:$0xff] %vm961, %v5062
      %5119 = vst.msk [vmem:[#allocation3 + $0x98] sm:$0xff] %vm961, %v5063
      %5120 = vst.msk [vmem:[#allocation3 + $0xa0] sm:$0xff] %vm961, %v5064
      %5121 = vst.msk [vmem:[#allocation3 + $0xa8] sm:$0xff] %vm961, %v5065
      %5122 = vst.msk [vmem:[#allocation3 + $0xb0] sm:$0xff] %vm961, %v5066
      %5123 = vst.msk [vmem:[#allocation3 + $0xb8] sm:$0xff] %vm961, %v5067
      %5124 = vst.msk [vmem:[#allocation3 + $0xc0] sm:$0xff] %vm961, %v5068
      %5125 = vst.msk [vmem:[#allocation3 + $0xc8] sm:$0xff] %vm961, %v5069
      %5126 = vst.msk [vmem:[#allocation3 + $0xd0] sm:$0xff] %vm961, %v5070
      %5127 = vst.msk [vmem:[#allocation3 + $0xd8] sm:$0xff] %vm961, %v5071
      %5128 = vst.msk [vmem:[#allocation3 + $0xe0] sm:$0xff] %vm961, %v5072
      %5129 = vst.msk [vmem:[#allocation3 + $0xe8] sm:$0xff] %vm961, %v5073
      %5130 = vst.msk [vmem:[#allocation3 + $0xf0] sm:$0xff] %vm961, %v5074
      %5131 = vst.msk [vmem:[#allocation3 + $0xf8] sm:$0xff] %vm961, %v5075
      %5132 = vst.msk [vmem:[#allocation3 + $0x100] sm:$0xff] %vm961, %v5076
      %5133 = vst.msk [vmem:[#allocation3 + $0x108] sm:$0xff] %vm961, %v5077
      %5134 = vst.msk [vmem:[#allocation3 + $0x110] sm:$0xff] %vm961, %v5078
      %5135 = vst.msk [vmem:[#allocation3 + $0x118] sm:$0xff] %vm961, %v5079
      %5136 = vst.msk [vmem:[#allocation3 + $0x120] sm:$0xff] %vm961, %v5080
      %5137 = vst.msk [vmem:[#allocation3 + $0x128] sm:$0xff] %vm961, %v5081
      %5138 = vst.msk [vmem:[#allocation3 + $0x130] sm:$0xff] %vm961, %v5082
      %5139 = vst.msk [vmem:[#allocation3 + $0x138] sm:$0xff] %vm961, %v5083
      %5140 = vst.msk [vmem:[#allocation3 + $0x140] sm:$0xff] %vm961, %v5084
      %5141 = vst.msk [vmem:[#allocation3 + $0x148] sm:$0xff] %vm961, %v5085
      %5142 = vst.msk [vmem:[#allocation3 + $0x150] sm:$0xff] %vm961, %v5086
      %5143 = vst.msk [vmem:[#allocation3 + $0x158] sm:$0xff] %vm961, %v5087
      %5144 = vst.msk [vmem:[#allocation3 + $0x160] sm:$0xff] %vm961, %v5088
      %5145 = vst.msk [vmem:[#allocation3 + $0x168] sm:$0xff] %vm961, %v5089
      %5146 = vst.msk [vmem:[#allocation3 + $0x170] sm:$0xff] %vm961, %v5090
      %5147 = vst.msk [vmem:[#allocation3 + $0x178] sm:$0xff] %vm961, %v5091
      %5148 = vst.msk [vmem:[#allocation3 + $0x180] sm:$0xff] %vm961, %v5092
      %5149 = vst.msk [vmem:[#allocation3 + $0x188] sm:$0xff] %vm961, %v5093
      %5150 = vst.msk [vmem:[#allocation3 + $0x190] sm:$0xff] %vm961, %v5094
      %5151 = vst.msk [vmem:[#allocation3 + $0x198] sm:$0xff] %vm961, %v5095
      %5152 = vst.msk [vmem:[#allocation3 + $0x1a0] sm:$0xff] %vm961, %v5096
      %5153 = vst.msk [vmem:[#allocation3 + $0x1a8] sm:$0xff] %vm961, %v5097
      %5154 = vst.msk [vmem:[#allocation3 + $0x1b0] sm:$0xff] %vm961, %v5098
      %5155 = vst.msk [vmem:[#allocation3 + $0x1b8] sm:$0xff] %vm961, %v5099
      %v5156 = vld [vmem:[#allocation2 + $0x18] sm:$0xf]
      %v5157 = vld [vmem:[#allocation2 + $0x1c] sm:$0xf]
      %v5158 = vld [vmem:[#allocation2 + $0x20] sm:$0xf]
      %v5159 = vld [vmem:[#allocation2 + $0x24] sm:$0xf]
      %v5160 = vld [vmem:[#allocation2 + $0x28] sm:$0xf]
      %v5161 = vld [vmem:[#allocation2 + $0x2c] sm:$0xf]
      %v5162 = vld [vmem:[#allocation2 + $0x30] sm:$0xf]
      %v5163 = vld [vmem:[#allocation2 + $0x34] sm:$0xf]
      %v5164 = vld [vmem:[#allocation2 + $0x38] sm:$0xf]
      %v5165 = vld [vmem:[#allocation2 + $0x3c] sm:$0xf]
      %v5166 = vld [vmem:[#allocation2 + $0x40] sm:$0xf]
      %v5167 = vld [vmem:[#allocation2 + $0x44] sm:$0xf]
      %v5168 = vld [vmem:[#allocation2 + $0x48] sm:$0xf]
      %v5169 = vld [vmem:[#allocation2 + $0x4c] sm:$0xf]
      %v5170 = vld [vmem:[#allocation2 + $0x50] sm:$0xf]
      %v5171 = vld [vmem:[#allocation2 + $0x54] sm:$0xf]
      %v5172 = vld [vmem:[#allocation2 + $0x58] sm:$0xf]
      %v5173 = vld [vmem:[#allocation2 + $0x5c] sm:$0xf]
      %v5174 = vld [vmem:[#allocation2 + $0x60] sm:$0xf]
      %v5175 = vld [vmem:[#allocation2 + $0x64] sm:$0xf]
      %v5176 = vld [vmem:[#allocation2 + $0x68] sm:$0xf]
      %v5177 = vld [vmem:[#allocation2 + $0x6c] sm:$0xf]
      %v5178 = vld [vmem:[#allocation2 + $0x70] sm:$0xf]
      %v5179 = vld [vmem:[#allocation2 + $0x74] sm:$0xf]
      %v5180 = vld [vmem:[#allocation2 + $0x78] sm:$0xf]
      %v5181 = vld [vmem:[#allocation2 + $0x7c] sm:$0xf]
      %v5182 = vld [vmem:[#allocation2 + $0x80] sm:$0xf]
      %v5183 = vld [vmem:[#allocation2 + $0x84] sm:$0xf]
      %v5184 = vld [vmem:[#allocation2 + $0x88] sm:$0xf]
      %v5185 = vld [vmem:[#allocation2 + $0x8c] sm:$0xf]
      %v5186 = vld [vmem:[#allocation2 + $0x90] sm:$0xf]
      %v5187 = vld [vmem:[#allocation2 + $0x94] sm:$0xf]
      %v5188 = vld [vmem:[#allocation2 + $0x98] sm:$0xf]
      %v5189 = vld [vmem:[#allocation2 + $0x9c] sm:$0xf]
      %v5190 = vld [vmem:[#allocation2 + $0xa0] sm:$0xf]
      %v5191 = vld [vmem:[#allocation2 + $0xa4] sm:$0xf]
      %v5192 = vld [vmem:[#allocation2 + $0xa8] sm:$0xf]
      %v5193 = vld [vmem:[#allocation2 + $0xac] sm:$0xf]
      %v5194 = vld [vmem:[#allocation2 + $0xb0] sm:$0xf]
      %v5195 = vld [vmem:[#allocation2 + $0xb4] sm:$0xf]
      %v5196 = vld [vmem:[#allocation2 + $0xb8] sm:$0xf]
      %v5197 = vld [vmem:[#allocation2 + $0xbc] sm:$0xf]
      %v5198 = vld [vmem:[#allocation2 + $0xc0] sm:$0xf]
      %v5199 = vld [vmem:[#allocation2 + $0xc4] sm:$0xf]
      %v5200 = vld [vmem:[#allocation2 + $0xc8] sm:$0xf]
      %v5201 = vld [vmem:[#allocation2 + $0xcc] sm:$0xf]
      %v5202 = vld [vmem:[#allocation2 + $0xd0] sm:$0xf]
      %v5203 = vld [vmem:[#allocation2 + $0xd4] sm:$0xf]
      %v5204 = vld [vmem:[#allocation2 + $0xd8] sm:$0xf]
      %v5205 = vld [vmem:[#allocation2 + $0xdc] sm:$0xf]
      %v5206 = vld [vmem:[#allocation2 + $0xe0] sm:$0xf]
      %v5207 = vld [vmem:[#allocation2 + $0xe4] sm:$0xf]
      %v5208 = vld [vmem:[#allocation2 + $0xe8] sm:$0xf]
      %v5209 = vld [vmem:[#allocation2 + $0xec] sm:$0xf]
      %v5210 = vld [vmem:[#allocation2 + $0xf0] sm:$0xf]
      %v5211 = vld [vmem:[#allocation2 + $0xf4] sm:$0xf]
      %s5212 = scalar_lea.vmem %s2, 12
      %v5213 = vld [vmem:[%s5212] sm:$0x3]
      %v5270 = vunpack.c.l.b16 %v5156
      %v5271 = vunpack.c.l.b16 %v5157
      %v5272 = vunpack.c.l.b16 %v5158
      %v5273 = vunpack.c.l.b16 %v5159
      %v5274 = vunpack.c.l.b16 %v5160
      %v5275 = vunpack.c.l.b16 %v5161
      %v5276 = vunpack.c.l.b16 %v5162
      %v5277 = vunpack.c.l.b16 %v5163
      %v5278 = vunpack.c.l.b16 %v5164
      %v5279 = vunpack.c.l.b16 %v5165
      %v5280 = vunpack.c.l.b16 %v5166
      %v5281 = vunpack.c.l.b16 %v5167
      %v5282 = vunpack.c.l.b16 %v5168
      %v5283 = vunpack.c.l.b16 %v5169
      %v5284 = vunpack.c.l.b16 %v5170
      %v5285 = vunpack.c.l.b16 %v5171
      %v5286 = vunpack.c.l.b16 %v5172
      %v5287 = vunpack.c.l.b16 %v5173
      %v5288 = vunpack.c.l.b16 %v5174
      %v5289 = vunpack.c.l.b16 %v5175
      %v5290 = vunpack.c.l.b16 %v5176
      %v5291 = vunpack.c.l.b16 %v5177
      %v5292 = vunpack.c.l.b16 %v5178
      %v5293 = vunpack.c.l.b16 %v5179
      %v5294 = vunpack.c.l.b16 %v5180
      %v5295 = vunpack.c.l.b16 %v5181
      %v5296 = vunpack.c.l.b16 %v5182
      %v5297 = vunpack.c.l.b16 %v5183
      %v5298 = vunpack.c.l.b16 %v5184
      %v5299 = vunpack.c.l.b16 %v5185
      %v5300 = vunpack.c.l.b16 %v5186
      %v5301 = vunpack.c.l.b16 %v5187
      %v5302 = vunpack.c.l.b16 %v5188
      %v5303 = vunpack.c.l.b16 %v5189
      %v5304 = vunpack.c.l.b16 %v5190
      %v5305 = vunpack.c.l.b16 %v5191
      %v5306 = vunpack.c.l.b16 %v5192
      %v5307 = vunpack.c.l.b16 %v5193
      %v5308 = vunpack.c.l.b16 %v5194
      %v5309 = vunpack.c.l.b16 %v5195
      %v5310 = vunpack.c.l.b16 %v5196
      %v5311 = vunpack.c.l.b16 %v5197
      %v5312 = vunpack.c.l.b16 %v5198
      %v5313 = vunpack.c.l.b16 %v5199
      %v5314 = vunpack.c.l.b16 %v5200
      %v5315 = vunpack.c.l.b16 %v5201
      %v5316 = vunpack.c.l.b16 %v5202
      %v5317 = vunpack.c.l.b16 %v5203
      %v5318 = vunpack.c.l.b16 %v5204
      %v5319 = vunpack.c.l.b16 %v5205
      %v5320 = vunpack.c.l.b16 %v5206
      %v5321 = vunpack.c.l.b16 %v5207
      %v5322 = vunpack.c.l.b16 %v5208
      %v5323 = vunpack.c.l.b16 %v5209
      %v5324 = vunpack.c.l.b16 %v5210
      %v5325 = vunpack.c.l.b16 %v5211
      %v5326 = vpack.c.b16 %v5271, %v5270
      %v5327 = vpack.c.b16 %v5273, %v5272
      %v5328 = vpack.c.b16 %v5275, %v5274
      %v5329 = vpack.c.b16 %v5277, %v5276
      %v5330 = vpack.c.b16 %v5279, %v5278
      %v5331 = vpack.c.b16 %v5281, %v5280
      %v5332 = vpack.c.b16 %v5283, %v5282
      %v5333 = vpack.c.b16 %v5285, %v5284
      %v5334 = vpack.c.b16 %v5287, %v5286
      %v5335 = vpack.c.b16 %v5289, %v5288
      %v5336 = vpack.c.b16 %v5291, %v5290
      %v5337 = vpack.c.b16 %v5293, %v5292
      %v5338 = vpack.c.b16 %v5295, %v5294
      %v5339 = vpack.c.b16 %v5297, %v5296
      %v5340 = vpack.c.b16 %v5299, %v5298
      %v5341 = vpack.c.b16 %v5301, %v5300
      %v5342 = vpack.c.b16 %v5303, %v5302
      %v5343 = vpack.c.b16 %v5305, %v5304
      %v5344 = vpack.c.b16 %v5307, %v5306
      %v5345 = vpack.c.b16 %v5309, %v5308
      %v5346 = vpack.c.b16 %v5311, %v5310
      %v5347 = vpack.c.b16 %v5313, %v5312
      %v5348 = vpack.c.b16 %v5315, %v5314
      %v5349 = vpack.c.b16 %v5317, %v5316
      %v5350 = vpack.c.b16 %v5319, %v5318
      %v5351 = vpack.c.b16 %v5321, %v5320
      %v5352 = vpack.c.b16 %v5323, %v5322
      %v5353 = vpack.c.b16 %v5325, %v5324
      %v5355 = vsel %vm612, %v5326, 0
      %v5358 = vsel %vm612, %v5327, 0
      %v5361 = vsel %vm612, %v5328, 0
      %v5364 = vsel %vm612, %v5329, 0
      %v5367 = vsel %vm612, %v5330, 0
      %v5370 = vsel %vm612, %v5331, 0
      %v5373 = vsel %vm612, %v5332, 0
      %v5376 = vsel %vm612, %v5333, 0
      %v5379 = vsel %vm612, %v5334, 0
      %v5382 = vsel %vm612, %v5335, 0
      %v5385 = vsel %vm612, %v5336, 0
      %v5388 = vsel %vm612, %v5337, 0
      %v5391 = vsel %vm612, %v5338, 0
      %v5394 = vsel %vm612, %v5339, 0
      %v5397 = vsel %vm612, %v5340, 0
      %v5400 = vsel %vm612, %v5341, 0
      %v5403 = vsel %vm612, %v5342, 0
      %v5406 = vsel %vm612, %v5343, 0
      %v5409 = vsel %vm612, %v5344, 0
      %v5412 = vsel %vm612, %v5345, 0
      %v5415 = vsel %vm612, %v5346, 0
      %v5418 = vsel %vm612, %v5347, 0
      %v5421 = vsel %vm612, %v5348, 0
      %v5424 = vsel %vm612, %v5349, 0
      %v5427 = vsel %vm612, %v5350, 0
      %v5430 = vsel %vm612, %v5351, 0
      %v5433 = vsel %vm612, %v5352, 0
      %v5436 = vsel %vm612, %v5353, 0
      %v5439 = vand.u32 %v5213, %v700
      %5441 = vmatprep.subr.bf16.mxu0 0
      %5442 = vmatpush1.bf16.msra.mxu0 0
      %5443 = vmatprep.subr.bf16.mxu0 0
      %5444 = vmatpush1.bf16.msra.mxu0 0
      %5445 = vmatprep.subr.bf16.mxu0 0
      %5446 = vmatpush1.bf16.msra.mxu0 0
      %5447 = vmatprep.subr.bf16.mxu0 0
      %5448 = vmatpush1.bf16.msra.mxu0 0
      %5449 = vmatprep.subr.bf16.mxu0 0
      %5450 = vmatpush1.bf16.msra.mxu0 0
      %5451 = vmatprep.subr.bf16.mxu0 0
      %5452 = vmatpush1.bf16.msra.mxu0 0
      %5453 = vmatprep.subr.bf16.mxu0 0
      %5454 = vmatpush1.bf16.msra.mxu0 0
      %5455 = vmatprep.subr.bf16.mxu0 0
      %5456 = vmatpush1.bf16.msra.mxu0 %v5439
      %5457 = vmatprep.subr.bf16.mxu0 0
      %5458 = vmatpush2.bf16.msra.mxu0 0
      %5459 = vmatprep.subr.bf16.mxu0 0
      %5460 = vmatpush2.bf16.msra.mxu0 0
      %5461 = vmatprep.subr.bf16.mxu0 0
      %5462 = vmatpush2.bf16.msra.mxu0 0
      %5463 = vmatprep.subr.bf16.mxu0 0
      %5464 = vmatpush2.bf16.msra.mxu0 0
      %5465 = vmatprep.subr.bf16.mxu0 0
      %5466 = vmatpush2.bf16.msra.mxu0 0
      %5467 = vmatprep.subr.bf16.mxu0 0
      %5468 = vmatpush2.bf16.msra.mxu0 0
      %5469 = vmatprep.subr.bf16.mxu0 0
      %5470 = vmatpush2.bf16.msra.mxu0 0
      %5471 = vmatprep.subr.bf16.mxu0 0
      %5472 = vmatpush2.bf16.msra.mxu0 0
      %5473 = vmatprep.mubr.bf16.mxu0 0
      %5474 = vmatmul.mubr.bf16.gmra.mxu0 %v5355
      %v5475 = vpop.f32.mrf.mxu0
      %v5476 = vadd.f32 0.0, %v5475
      %v5477 = vpop.f32.mrf.mxu0
      %v5478 = vpop.f32.mrf.mxu0
      %v5479 = vadd.f32 0.0, %v5478
      %v5480 = vpop.f32.mrf.mxu0
      %5481 = vmatprep.mubr.bf16.mxu0 0
      %5482 = vmatmul.mubr.bf16.gmra.mxu0 %v5358
      %v5483 = vpop.f32.mrf.mxu0
      %v5484 = vadd.f32 0.0, %v5483
      %v5485 = vpop.f32.mrf.mxu0
      %v5486 = vpop.f32.mrf.mxu0
      %v5487 = vadd.f32 0.0, %v5486
      %v5488 = vpop.f32.mrf.mxu0
      %5489 = vmatprep.mubr.bf16.mxu0 0
      %5490 = vmatmul.mubr.bf16.gmra.mxu0 %v5361
      %v5491 = vpop.f32.mrf.mxu0
      %v5492 = vadd.f32 0.0, %v5491
      %v5493 = vpop.f32.mrf.mxu0
      %v5494 = vpop.f32.mrf.mxu0
      %v5495 = vadd.f32 0.0, %v5494
      %v5496 = vpop.f32.mrf.mxu0
      %5497 = vmatprep.mubr.bf16.mxu0 0
      %5498 = vmatmul.mubr.bf16.gmra.mxu0 %v5364
      %v5499 = vpop.f32.mrf.mxu0
      %v5500 = vadd.f32 0.0, %v5499
      %v5501 = vpop.f32.mrf.mxu0
      %v5502 = vpop.f32.mrf.mxu0
      %v5503 = vadd.f32 0.0, %v5502
      %v5504 = vpop.f32.mrf.mxu0
      %5505 = vmatprep.mubr.bf16.mxu0 0
      %5506 = vmatmul.mubr.bf16.gmra.mxu0 %v5367
      %v5507 = vpop.f32.mrf.mxu0
      %v5508 = vadd.f32 0.0, %v5507
      %v5509 = vpop.f32.mrf.mxu0
      %v5510 = vpop.f32.mrf.mxu0
      %v5511 = vadd.f32 0.0, %v5510
      %v5512 = vpop.f32.mrf.mxu0
      %5513 = vmatprep.mubr.bf16.mxu0 0
      %5514 = vmatmul.mubr.bf16.gmra.mxu0 %v5370
      %v5515 = vpop.f32.mrf.mxu0
      %v5516 = vadd.f32 0.0, %v5515
      %v5517 = vpop.f32.mrf.mxu0
      %v5518 = vpop.f32.mrf.mxu0
      %v5519 = vadd.f32 0.0, %v5518
      %v5520 = vpop.f32.mrf.mxu0
      %5521 = vmatprep.mubr.bf16.mxu0 0
      %5522 = vmatmul.mubr.bf16.gmra.mxu0 %v5373
      %v5523 = vpop.f32.mrf.mxu0
      %v5524 = vadd.f32 0.0, %v5523
      %v5525 = vpop.f32.mrf.mxu0
      %v5526 = vpop.f32.mrf.mxu0
      %v5527 = vadd.f32 0.0, %v5526
      %v5528 = vpop.f32.mrf.mxu0
      %5529 = vmatprep.mubr.bf16.mxu0 0
      %5530 = vmatmul.mubr.bf16.gmra.mxu0 %v5376
      %v5531 = vpop.f32.mrf.mxu0
      %v5532 = vadd.f32 0.0, %v5531
      %v5533 = vpop.f32.mrf.mxu0
      %v5534 = vpop.f32.mrf.mxu0
      %v5535 = vadd.f32 0.0, %v5534
      %v5536 = vpop.f32.mrf.mxu0
      %5537 = vmatprep.mubr.bf16.mxu0 0
      %5538 = vmatmul.mubr.bf16.gmra.mxu0 %v5379
      %v5539 = vpop.f32.mrf.mxu0
      %v5540 = vadd.f32 0.0, %v5539
      %v5541 = vpop.f32.mrf.mxu0
      %v5542 = vpop.f32.mrf.mxu0
      %v5543 = vadd.f32 0.0, %v5542
      %v5544 = vpop.f32.mrf.mxu0
      %5545 = vmatprep.mubr.bf16.mxu0 0
      %5546 = vmatmul.mubr.bf16.gmra.mxu0 %v5382
      %v5547 = vpop.f32.mrf.mxu0
      %v5548 = vadd.f32 0.0, %v5547
      %v5549 = vpop.f32.mrf.mxu0
      %v5550 = vpop.f32.mrf.mxu0
      %v5551 = vadd.f32 0.0, %v5550
      %v5552 = vpop.f32.mrf.mxu0
      %5553 = vmatprep.mubr.bf16.mxu0 0
      %5554 = vmatmul.mubr.bf16.gmra.mxu0 %v5385
      %v5555 = vpop.f32.mrf.mxu0
      %v5556 = vadd.f32 0.0, %v5555
      %v5557 = vpop.f32.mrf.mxu0
      %v5558 = vpop.f32.mrf.mxu0
      %v5559 = vadd.f32 0.0, %v5558
      %v5560 = vpop.f32.mrf.mxu0
      %5561 = vmatprep.mubr.bf16.mxu0 0
      %5562 = vmatmul.mubr.bf16.gmra.mxu0 %v5388
      %v5563 = vpop.f32.mrf.mxu0
      %v5564 = vadd.f32 0.0, %v5563
      %v5565 = vpop.f32.mrf.mxu0
      %v5566 = vpop.f32.mrf.mxu0
      %v5567 = vadd.f32 0.0, %v5566
      %v5568 = vpop.f32.mrf.mxu0
      %5569 = vmatprep.mubr.bf16.mxu0 0
      %5570 = vmatmul.mubr.bf16.gmra.mxu0 %v5391
      %v5571 = vpop.f32.mrf.mxu0
      %v5572 = vadd.f32 0.0, %v5571
      %v5573 = vpop.f32.mrf.mxu0
      %v5574 = vpop.f32.mrf.mxu0
      %v5575 = vadd.f32 0.0, %v5574
      %v5576 = vpop.f32.mrf.mxu0
      %5577 = vmatprep.mubr.bf16.mxu0 0
      %5578 = vmatmul.mubr.bf16.gmra.mxu0 %v5394
      %v5579 = vpop.f32.mrf.mxu0
      %v5580 = vadd.f32 0.0, %v5579
      %v5581 = vpop.f32.mrf.mxu0
      %v5582 = vpop.f32.mrf.mxu0
      %v5583 = vadd.f32 0.0, %v5582
      %v5584 = vpop.f32.mrf.mxu0
      %5585 = vmatprep.mubr.bf16.mxu0 0
      %5586 = vmatmul.mubr.bf16.gmra.mxu0 %v5397
      %v5587 = vpop.f32.mrf.mxu0
      %v5588 = vadd.f32 0.0, %v5587
      %v5589 = vpop.f32.mrf.mxu0
      %v5590 = vpop.f32.mrf.mxu0
      %v5591 = vadd.f32 0.0, %v5590
      %v5592 = vpop.f32.mrf.mxu0
      %5593 = vmatprep.mubr.bf16.mxu0 0
      %5594 = vmatmul.mubr.bf16.gmra.mxu0 %v5400
      %v5595 = vpop.f32.mrf.mxu0
      %v5596 = vadd.f32 0.0, %v5595
      %v5597 = vpop.f32.mrf.mxu0
      %v5598 = vpop.f32.mrf.mxu0
      %v5599 = vadd.f32 0.0, %v5598
      %v5600 = vpop.f32.mrf.mxu0
      %5601 = vmatprep.mubr.bf16.mxu0 0
      %5602 = vmatmul.mubr.bf16.gmra.mxu0 %v5403
      %v5603 = vpop.f32.mrf.mxu0
      %v5604 = vadd.f32 0.0, %v5603
      %v5605 = vpop.f32.mrf.mxu0
      %v5606 = vpop.f32.mrf.mxu0
      %v5607 = vadd.f32 0.0, %v5606
      %v5608 = vpop.f32.mrf.mxu0
      %5609 = vmatprep.mubr.bf16.mxu0 0
      %5610 = vmatmul.mubr.bf16.gmra.mxu0 %v5406
      %v5611 = vpop.f32.mrf.mxu0
      %v5612 = vadd.f32 0.0, %v5611
      %v5613 = vpop.f32.mrf.mxu0
      %v5614 = vpop.f32.mrf.mxu0
      %v5615 = vadd.f32 0.0, %v5614
      %v5616 = vpop.f32.mrf.mxu0
      %5617 = vmatprep.mubr.bf16.mxu0 0
      %5618 = vmatmul.mubr.bf16.gmra.mxu0 %v5409
      %v5619 = vpop.f32.mrf.mxu0
      %v5620 = vadd.f32 0.0, %v5619
      %v5621 = vpop.f32.mrf.mxu0
      %v5622 = vpop.f32.mrf.mxu0
      %v5623 = vadd.f32 0.0, %v5622
      %v5624 = vpop.f32.mrf.mxu0
      %5625 = vmatprep.mubr.bf16.mxu0 0
      %5626 = vmatmul.mubr.bf16.gmra.mxu0 %v5412
      %v5627 = vpop.f32.mrf.mxu0
      %v5628 = vadd.f32 0.0, %v5627
      %v5629 = vpop.f32.mrf.mxu0
      %v5630 = vpop.f32.mrf.mxu0
      %v5631 = vadd.f32 0.0, %v5630
      %v5632 = vpop.f32.mrf.mxu0
      %5633 = vmatprep.mubr.bf16.mxu0 0
      %5634 = vmatmul.mubr.bf16.gmra.mxu0 %v5415
      %v5635 = vpop.f32.mrf.mxu0
      %v5636 = vadd.f32 0.0, %v5635
      %v5637 = vpop.f32.mrf.mxu0
      %v5638 = vpop.f32.mrf.mxu0
      %v5639 = vadd.f32 0.0, %v5638
      %v5640 = vpop.f32.mrf.mxu0
      %5641 = vmatprep.mubr.bf16.mxu0 0
      %5642 = vmatmul.mubr.bf16.gmra.mxu0 %v5418
      %v5643 = vpop.f32.mrf.mxu0
      %v5644 = vadd.f32 0.0, %v5643
      %v5645 = vpop.f32.mrf.mxu0
      %v5646 = vpop.f32.mrf.mxu0
      %v5647 = vadd.f32 0.0, %v5646
      %v5648 = vpop.f32.mrf.mxu0
      %5649 = vmatprep.mubr.bf16.mxu0 0
      %5650 = vmatmul.mubr.bf16.gmra.mxu0 %v5421
      %v5651 = vpop.f32.mrf.mxu0
      %v5652 = vadd.f32 0.0, %v5651
      %v5653 = vpop.f32.mrf.mxu0
      %v5654 = vpop.f32.mrf.mxu0
      %v5655 = vadd.f32 0.0, %v5654
      %v5656 = vpop.f32.mrf.mxu0
      %5657 = vmatprep.mubr.bf16.mxu0 0
      %5658 = vmatmul.mubr.bf16.gmra.mxu0 %v5424
      %v5659 = vpop.f32.mrf.mxu0
      %v5660 = vadd.f32 0.0, %v5659
      %v5661 = vpop.f32.mrf.mxu0
      %v5662 = vpop.f32.mrf.mxu0
      %v5663 = vadd.f32 0.0, %v5662
      %v5664 = vpop.f32.mrf.mxu0
      %5665 = vmatprep.mubr.bf16.mxu0 0
      %5666 = vmatmul.mubr.bf16.gmra.mxu0 %v5427
      %v5667 = vpop.f32.mrf.mxu0
      %v5668 = vadd.f32 0.0, %v5667
      %v5669 = vpop.f32.mrf.mxu0
      %v5670 = vpop.f32.mrf.mxu0
      %v5671 = vadd.f32 0.0, %v5670
      %v5672 = vpop.f32.mrf.mxu0
      %5673 = vmatprep.mubr.bf16.mxu0 0
      %5674 = vmatmul.mubr.bf16.gmra.mxu0 %v5430
      %v5675 = vpop.f32.mrf.mxu0
      %v5676 = vadd.f32 0.0, %v5675
      %v5677 = vpop.f32.mrf.mxu0
      %v5678 = vpop.f32.mrf.mxu0
      %v5679 = vadd.f32 0.0, %v5678
      %v5680 = vpop.f32.mrf.mxu0
      %5681 = vmatprep.mubr.bf16.mxu0 0
      %5682 = vmatmul.mubr.bf16.gmra.mxu0 %v5433
      %v5683 = vpop.f32.mrf.mxu0
      %v5684 = vadd.f32 0.0, %v5683
      %v5685 = vpop.f32.mrf.mxu0
      %v5686 = vpop.f32.mrf.mxu0
      %v5687 = vadd.f32 0.0, %v5686
      %v5688 = vpop.f32.mrf.mxu0
      %5689 = vmatprep.mubr.bf16.mxu0 0
      %5690 = vmatmul.mubr.bf16.gmra.mxu0 %v5436
      %v5691 = vpop.f32.mrf.mxu0
      %v5692 = vadd.f32 0.0, %v5691
      %v5693 = vpop.f32.mrf.mxu0
      %v5694 = vpop.f32.mrf.mxu0
      %v5695 = vadd.f32 0.0, %v5694
      %v5696 = vpop.f32.mrf.mxu0
      %5697 = vdwg.mxu0
      %v5698 = vld [vmem:[#allocation3] sm:$0xff]
      %v5699 = vld [vmem:[#allocation3 + $0x8] sm:$0xff]
      %v5700 = vld [vmem:[#allocation3 + $0x10] sm:$0xff]
      %v5701 = vld [vmem:[#allocation3 + $0x18] sm:$0xff]
      %v5702 = vld [vmem:[#allocation3 + $0x20] sm:$0xff]
      %v5703 = vld [vmem:[#allocation3 + $0x28] sm:$0xff]
      %v5704 = vld [vmem:[#allocation3 + $0x30] sm:$0xff]
      %v5705 = vld [vmem:[#allocation3 + $0x38] sm:$0xff]
      %v5706 = vld [vmem:[#allocation3 + $0x40] sm:$0xff]
      %v5707 = vld [vmem:[#allocation3 + $0x48] sm:$0xff]
      %v5708 = vld [vmem:[#allocation3 + $0x50] sm:$0xff]
      %v5709 = vld [vmem:[#allocation3 + $0x58] sm:$0xff]
      %v5710 = vld [vmem:[#allocation3 + $0x60] sm:$0xff]
      %v5711 = vld [vmem:[#allocation3 + $0x68] sm:$0xff]
      %v5712 = vld [vmem:[#allocation3 + $0x70] sm:$0xff]
      %v5713 = vld [vmem:[#allocation3 + $0x78] sm:$0xff]
      %v5714 = vld [vmem:[#allocation3 + $0x80] sm:$0xff]
      %v5715 = vld [vmem:[#allocation3 + $0x88] sm:$0xff]
      %v5716 = vld [vmem:[#allocation3 + $0x90] sm:$0xff]
      %v5717 = vld [vmem:[#allocation3 + $0x98] sm:$0xff]
      %v5718 = vld [vmem:[#allocation3 + $0xa0] sm:$0xff]
      %v5719 = vld [vmem:[#allocation3 + $0xa8] sm:$0xff]
      %v5720 = vld [vmem:[#allocation3 + $0xb0] sm:$0xff]
      %v5721 = vld [vmem:[#allocation3 + $0xb8] sm:$0xff]
      %v5722 = vld [vmem:[#allocation3 + $0xc0] sm:$0xff]
      %v5723 = vld [vmem:[#allocation3 + $0xc8] sm:$0xff]
      %v5724 = vld [vmem:[#allocation3 + $0xd0] sm:$0xff]
      %v5725 = vld [vmem:[#allocation3 + $0xd8] sm:$0xff]
      %v5726 = vld [vmem:[#allocation3 + $0xe0] sm:$0xff]
      %v5727 = vld [vmem:[#allocation3 + $0xe8] sm:$0xff]
      %v5728 = vld [vmem:[#allocation3 + $0xf0] sm:$0xff]
      %v5729 = vld [vmem:[#allocation3 + $0xf8] sm:$0xff]
      %v5730 = vld [vmem:[#allocation3 + $0x100] sm:$0xff]
      %v5731 = vld [vmem:[#allocation3 + $0x108] sm:$0xff]
      %v5732 = vld [vmem:[#allocation3 + $0x110] sm:$0xff]
      %v5733 = vld [vmem:[#allocation3 + $0x118] sm:$0xff]
      %v5734 = vld [vmem:[#allocation3 + $0x120] sm:$0xff]
      %v5735 = vld [vmem:[#allocation3 + $0x128] sm:$0xff]
      %v5736 = vld [vmem:[#allocation3 + $0x130] sm:$0xff]
      %v5737 = vld [vmem:[#allocation3 + $0x138] sm:$0xff]
      %v5738 = vld [vmem:[#allocation3 + $0x140] sm:$0xff]
      %v5739 = vld [vmem:[#allocation3 + $0x148] sm:$0xff]
      %v5740 = vld [vmem:[#allocation3 + $0x150] sm:$0xff]
      %v5741 = vld [vmem:[#allocation3 + $0x158] sm:$0xff]
      %v5742 = vld [vmem:[#allocation3 + $0x160] sm:$0xff]
      %v5743 = vld [vmem:[#allocation3 + $0x168] sm:$0xff]
      %v5744 = vld [vmem:[#allocation3 + $0x170] sm:$0xff]
      %v5745 = vld [vmem:[#allocation3 + $0x178] sm:$0xff]
      %v5746 = vld [vmem:[#allocation3 + $0x180] sm:$0xff]
      %v5747 = vld [vmem:[#allocation3 + $0x188] sm:$0xff]
      %v5748 = vld [vmem:[#allocation3 + $0x190] sm:$0xff]
      %v5749 = vld [vmem:[#allocation3 + $0x198] sm:$0xff]
      %v5750 = vld [vmem:[#allocation3 + $0x1a0] sm:$0xff]
      %v5751 = vld [vmem:[#allocation3 + $0x1a8] sm:$0xff]
      %v5752 = vld [vmem:[#allocation3 + $0x1b0] sm:$0xff]
      %v5753 = vld [vmem:[#allocation3 + $0x1b8] sm:$0xff]
      %v5754 = vadd.f32 %v5698, %v5476
      %v5755 = vadd.f32 %v5699, %v5479
      %v5756 = vadd.f32 %v5700, %v5484
      %v5757 = vadd.f32 %v5701, %v5487
      %v5758 = vadd.f32 %v5702, %v5492
      %v5759 = vadd.f32 %v5703, %v5495
      %v5760 = vadd.f32 %v5704, %v5500
      %v5761 = vadd.f32 %v5705, %v5503
      %v5762 = vadd.f32 %v5706, %v5508
      %v5763 = vadd.f32 %v5707, %v5511
      %v5764 = vadd.f32 %v5708, %v5516
      %v5765 = vadd.f32 %v5709, %v5519
      %v5766 = vadd.f32 %v5710, %v5524
      %v5767 = vadd.f32 %v5711, %v5527
      %v5768 = vadd.f32 %v5712, %v5532
      %v5769 = vadd.f32 %v5713, %v5535
      %v5770 = vadd.f32 %v5714, %v5540
      %v5771 = vadd.f32 %v5715, %v5543
      %v5772 = vadd.f32 %v5716, %v5548
      %v5773 = vadd.f32 %v5717, %v5551
      %v5774 = vadd.f32 %v5718, %v5556
      %v5775 = vadd.f32 %v5719, %v5559
      %v5776 = vadd.f32 %v5720, %v5564
      %v5777 = vadd.f32 %v5721, %v5567
      %v5778 = vadd.f32 %v5722, %v5572
      %v5779 = vadd.f32 %v5723, %v5575
      %v5780 = vadd.f32 %v5724, %v5580
      %v5781 = vadd.f32 %v5725, %v5583
      %v5782 = vadd.f32 %v5726, %v5588
      %v5783 = vadd.f32 %v5727, %v5591
      %v5784 = vadd.f32 %v5728, %v5596
      %v5785 = vadd.f32 %v5729, %v5599
      %v5786 = vadd.f32 %v5730, %v5604
      %v5787 = vadd.f32 %v5731, %v5607
      %v5788 = vadd.f32 %v5732, %v5612
      %v5789 = vadd.f32 %v5733, %v5615
      %v5790 = vadd.f32 %v5734, %v5620
      %v5791 = vadd.f32 %v5735, %v5623
      %v5792 = vadd.f32 %v5736, %v5628
      %v5793 = vadd.f32 %v5737, %v5631
      %v5794 = vadd.f32 %v5738, %v5636
      %v5795 = vadd.f32 %v5739, %v5639
      %v5796 = vadd.f32 %v5740, %v5644
      %v5797 = vadd.f32 %v5741, %v5647
      %v5798 = vadd.f32 %v5742, %v5652
      %v5799 = vadd.f32 %v5743, %v5655
      %v5800 = vadd.f32 %v5744, %v5660
      %v5801 = vadd.f32 %v5745, %v5663
      %v5802 = vadd.f32 %v5746, %v5668
      %v5803 = vadd.f32 %v5747, %v5671
      %v5804 = vadd.f32 %v5748, %v5676
      %v5805 = vadd.f32 %v5749, %v5679
      %v5806 = vadd.f32 %v5750, %v5684
      %v5807 = vadd.f32 %v5751, %v5687
      %v5808 = vadd.f32 %v5752, %v5692
      %v5809 = vadd.f32 %v5753, %v5695
      %5810 = vst.msk [vmem:[#allocation3] sm:$0xff] %vm961, %v5754
      %5811 = vst.msk [vmem:[#allocation3 + $0x8] sm:$0xff] %vm961, %v5755
      %5812 = vst.msk [vmem:[#allocation3 + $0x10] sm:$0xff] %vm961, %v5756
      %5813 = vst.msk [vmem:[#allocation3 + $0x18] sm:$0xff] %vm961, %v5757
      %5814 = vst.msk [vmem:[#allocation3 + $0x20] sm:$0xff] %vm961, %v5758
      %5815 = vst.msk [vmem:[#allocation3 + $0x28] sm:$0xff] %vm961, %v5759
      %5816 = vst.msk [vmem:[#allocation3 + $0x30] sm:$0xff] %vm961, %v5760
      %5817 = vst.msk [vmem:[#allocation3 + $0x38] sm:$0xff] %vm961, %v5761
      %5818 = vst.msk [vmem:[#allocation3 + $0x40] sm:$0xff] %vm961, %v5762
      %5819 = vst.msk [vmem:[#allocation3 + $0x48] sm:$0xff] %vm961, %v5763
      %5820 = vst.msk [vmem:[#allocation3 + $0x50] sm:$0xff] %vm961, %v5764
      %5821 = vst.msk [vmem:[#allocation3 + $0x58] sm:$0xff] %vm961, %v5765
      %5822 = vst.msk [vmem:[#allocation3 + $0x60] sm:$0xff] %vm961, %v5766
      %5823 = vst.msk [vmem:[#allocation3 + $0x68] sm:$0xff] %vm961, %v5767
      %5824 = vst.msk [vmem:[#allocation3 + $0x70] sm:$0xff] %vm961, %v5768
      %5825 = vst.msk [vmem:[#allocation3 + $0x78] sm:$0xff] %vm961, %v5769
      %5826 = vst.msk [vmem:[#allocation3 + $0x80] sm:$0xff] %vm961, %v5770
      %5827 = vst.msk [vmem:[#allocation3 + $0x88] sm:$0xff] %vm961, %v5771
      %5828 = vst.msk [vmem:[#allocation3 + $0x90] sm:$0xff] %vm961, %v5772
      %5829 = vst.msk [vmem:[#allocation3 + $0x98] sm:$0xff] %vm961, %v5773
      %5830 = vst.msk [vmem:[#allocation3 + $0xa0] sm:$0xff] %vm961, %v5774
      %5831 = vst.msk [vmem:[#allocation3 + $0xa8] sm:$0xff] %vm961, %v5775
      %5832 = vst.msk [vmem:[#allocation3 + $0xb0] sm:$0xff] %vm961, %v5776
      %5833 = vst.msk [vmem:[#allocation3 + $0xb8] sm:$0xff] %vm961, %v5777
      %5834 = vst.msk [vmem:[#allocation3 + $0xc0] sm:$0xff] %vm961, %v5778
      %5835 = vst.msk [vmem:[#allocation3 + $0xc8] sm:$0xff] %vm961, %v5779
      %5836 = vst.msk [vmem:[#allocation3 + $0xd0] sm:$0xff] %vm961, %v5780
      %5837 = vst.msk [vmem:[#allocation3 + $0xd8] sm:$0xff] %vm961, %v5781
      %5838 = vst.msk [vmem:[#allocation3 + $0xe0] sm:$0xff] %vm961, %v5782
      %5839 = vst.msk [vmem:[#allocation3 + $0xe8] sm:$0xff] %vm961, %v5783
      %5840 = vst.msk [vmem:[#allocation3 + $0xf0] sm:$0xff] %vm961, %v5784
      %5841 = vst.msk [vmem:[#allocation3 + $0xf8] sm:$0xff] %vm961, %v5785
      %5842 = vst.msk [vmem:[#allocation3 + $0x100] sm:$0xff] %vm961, %v5786
      %5843 = vst.msk [vmem:[#allocation3 + $0x108] sm:$0xff] %vm961, %v5787
      %5844 = vst.msk [vmem:[#allocation3 + $0x110] sm:$0xff] %vm961, %v5788
      %5845 = vst.msk [vmem:[#allocation3 + $0x118] sm:$0xff] %vm961, %v5789
      %5846 = vst.msk [vmem:[#allocation3 + $0x120] sm:$0xff] %vm961, %v5790
      %5847 = vst.msk [vmem:[#allocation3 + $0x128] sm:$0xff] %vm961, %v5791
      %5848 = vst.msk [vmem:[#allocation3 + $0x130] sm:$0xff] %vm961, %v5792
      %5849 = vst.msk [vmem:[#allocation3 + $0x138] sm:$0xff] %vm961, %v5793
      %5850 = vst.msk [vmem:[#allocation3 + $0x140] sm:$0xff] %vm961, %v5794
      %5851 = vst.msk [vmem:[#allocation3 + $0x148] sm:$0xff] %vm961, %v5795
      %5852 = vst.msk [vmem:[#allocation3 + $0x150] sm:$0xff] %vm961, %v5796
      %5853 = vst.msk [vmem:[#allocation3 + $0x158] sm:$0xff] %vm961, %v5797
      %5854 = vst.msk [vmem:[#allocation3 + $0x160] sm:$0xff] %vm961, %v5798
      %5855 = vst.msk [vmem:[#allocation3 + $0x168] sm:$0xff] %vm961, %v5799
      %5856 = vst.msk [vmem:[#allocation3 + $0x170] sm:$0xff] %vm961, %v5800
      %5857 = vst.msk [vmem:[#allocation3 + $0x178] sm:$0xff] %vm961, %v5801
      %5858 = vst.msk [vmem:[#allocation3 + $0x180] sm:$0xff] %vm961, %v5802
      %5859 = vst.msk [vmem:[#allocation3 + $0x188] sm:$0xff] %vm961, %v5803
      %5860 = vst.msk [vmem:[#allocation3 + $0x190] sm:$0xff] %vm961, %v5804
      %5861 = vst.msk [vmem:[#allocation3 + $0x198] sm:$0xff] %vm961, %v5805
      %5862 = vst.msk [vmem:[#allocation3 + $0x1a0] sm:$0xff] %vm961, %v5806
      %5863 = vst.msk [vmem:[#allocation3 + $0x1a8] sm:$0xff] %vm961, %v5807
      %5864 = vst.msk [vmem:[#allocation3 + $0x1b0] sm:$0xff] %vm961, %v5808
      %5865 = vst.msk [vmem:[#allocation3 + $0x1b8] sm:$0xff] %vm961, %v5809
      %v5866 = vld [vmem:[#allocation2 + $0x18] sm:$0xf]
      %v5867 = vld [vmem:[#allocation2 + $0x1c] sm:$0xf]
      %v5868 = vld [vmem:[#allocation2 + $0x20] sm:$0xf]
      %v5869 = vld [vmem:[#allocation2 + $0x24] sm:$0xf]
      %v5870 = vld [vmem:[#allocation2 + $0x28] sm:$0xf]
      %v5871 = vld [vmem:[#allocation2 + $0x2c] sm:$0xf]
      %v5872 = vld [vmem:[#allocation2 + $0x30] sm:$0xf]
      %v5873 = vld [vmem:[#allocation2 + $0x34] sm:$0xf]
      %v5874 = vld [vmem:[#allocation2 + $0x38] sm:$0xf]
      %v5875 = vld [vmem:[#allocation2 + $0x3c] sm:$0xf]
      %v5876 = vld [vmem:[#allocation2 + $0x40] sm:$0xf]
      %v5877 = vld [vmem:[#allocation2 + $0x44] sm:$0xf]
      %v5878 = vld [vmem:[#allocation2 + $0x48] sm:$0xf]
      %v5879 = vld [vmem:[#allocation2 + $0x4c] sm:$0xf]
      %v5880 = vld [vmem:[#allocation2 + $0x50] sm:$0xf]
      %v5881 = vld [vmem:[#allocation2 + $0x54] sm:$0xf]
      %v5882 = vld [vmem:[#allocation2 + $0x58] sm:$0xf]
      %v5883 = vld [vmem:[#allocation2 + $0x5c] sm:$0xf]
      %v5884 = vld [vmem:[#allocation2 + $0x60] sm:$0xf]
      %v5885 = vld [vmem:[#allocation2 + $0x64] sm:$0xf]
      %v5886 = vld [vmem:[#allocation2 + $0x68] sm:$0xf]
      %v5887 = vld [vmem:[#allocation2 + $0x6c] sm:$0xf]
      %v5888 = vld [vmem:[#allocation2 + $0x70] sm:$0xf]
      %v5889 = vld [vmem:[#allocation2 + $0x74] sm:$0xf]
      %v5890 = vld [vmem:[#allocation2 + $0x78] sm:$0xf]
      %v5891 = vld [vmem:[#allocation2 + $0x7c] sm:$0xf]
      %v5892 = vld [vmem:[#allocation2 + $0x80] sm:$0xf]
      %v5893 = vld [vmem:[#allocation2 + $0x84] sm:$0xf]
      %v5894 = vld [vmem:[#allocation2 + $0x88] sm:$0xf]
      %v5895 = vld [vmem:[#allocation2 + $0x8c] sm:$0xf]
      %v5896 = vld [vmem:[#allocation2 + $0x90] sm:$0xf]
      %v5897 = vld [vmem:[#allocation2 + $0x94] sm:$0xf]
      %v5898 = vld [vmem:[#allocation2 + $0x98] sm:$0xf]
      %v5899 = vld [vmem:[#allocation2 + $0x9c] sm:$0xf]
      %v5900 = vld [vmem:[#allocation2 + $0xa0] sm:$0xf]
      %v5901 = vld [vmem:[#allocation2 + $0xa4] sm:$0xf]
      %v5902 = vld [vmem:[#allocation2 + $0xa8] sm:$0xf]
      %v5903 = vld [vmem:[#allocation2 + $0xac] sm:$0xf]
      %v5904 = vld [vmem:[#allocation2 + $0xb0] sm:$0xf]
      %v5905 = vld [vmem:[#allocation2 + $0xb4] sm:$0xf]
      %v5906 = vld [vmem:[#allocation2 + $0xb8] sm:$0xf]
      %v5907 = vld [vmem:[#allocation2 + $0xbc] sm:$0xf]
      %v5908 = vld [vmem:[#allocation2 + $0xc0] sm:$0xf]
      %v5909 = vld [vmem:[#allocation2 + $0xc4] sm:$0xf]
      %v5910 = vld [vmem:[#allocation2 + $0xc8] sm:$0xf]
      %v5911 = vld [vmem:[#allocation2 + $0xcc] sm:$0xf]
      %v5912 = vld [vmem:[#allocation2 + $0xd0] sm:$0xf]
      %v5913 = vld [vmem:[#allocation2 + $0xd4] sm:$0xf]
      %v5914 = vld [vmem:[#allocation2 + $0xd8] sm:$0xf]
      %v5915 = vld [vmem:[#allocation2 + $0xdc] sm:$0xf]
      %v5916 = vld [vmem:[#allocation2 + $0xe0] sm:$0xf]
      %v5917 = vld [vmem:[#allocation2 + $0xe4] sm:$0xf]
      %v5918 = vld [vmem:[#allocation2 + $0xe8] sm:$0xf]
      %v5919 = vld [vmem:[#allocation2 + $0xec] sm:$0xf]
      %v5920 = vld [vmem:[#allocation2 + $0xf0] sm:$0xf]
      %v5921 = vld [vmem:[#allocation2 + $0xf4] sm:$0xf]
      %v5922 = vld [vmem:[#allocation2 + $0xf8] sm:$0x1]
      %s5923 = scalar_lea.vmem %s2, 14
      %v5924 = vld [vmem:[%s5923] sm:$0x3]
      %v5982 = vunpack.c.l.b16 %v5866
      %v5983 = vunpack.c.l.b16 %v5867
      %v5984 = vunpack.c.l.b16 %v5868
      %v5985 = vunpack.c.l.b16 %v5869
      %v5986 = vunpack.c.l.b16 %v5870
      %v5987 = vunpack.c.l.b16 %v5871
      %v5988 = vunpack.c.l.b16 %v5872
      %v5989 = vunpack.c.l.b16 %v5873
      %v5990 = vunpack.c.l.b16 %v5874
      %v5991 = vunpack.c.l.b16 %v5875
      %v5992 = vunpack.c.l.b16 %v5876
      %v5993 = vunpack.c.l.b16 %v5877
      %v5994 = vunpack.c.l.b16 %v5878
      %v5995 = vunpack.c.l.b16 %v5879
      %v5996 = vunpack.c.l.b16 %v5880
      %v5997 = vunpack.c.l.b16 %v5881
      %v5998 = vunpack.c.l.b16 %v5882
      %v5999 = vunpack.c.l.b16 %v5883
      %v6000 = vunpack.c.l.b16 %v5884
      %v6001 = vunpack.c.l.b16 %v5885
      %v6002 = vunpack.c.l.b16 %v5886
      %v6003 = vunpack.c.l.b16 %v5887
      %v6004 = vunpack.c.l.b16 %v5888
      %v6005 = vunpack.c.l.b16 %v5889
      %v6006 = vunpack.c.l.b16 %v5890
      %v6007 = vunpack.c.l.b16 %v5891
      %v6008 = vunpack.c.l.b16 %v5892
      %v6009 = vunpack.c.l.b16 %v5893
      %v6010 = vunpack.c.l.b16 %v5894
      %v6011 = vunpack.c.l.b16 %v5895
      %v6012 = vunpack.c.l.b16 %v5896
      %v6013 = vunpack.c.l.b16 %v5897
      %v6014 = vunpack.c.l.b16 %v5898
      %v6015 = vunpack.c.l.b16 %v5899
      %v6016 = vunpack.c.l.b16 %v5900
      %v6017 = vunpack.c.l.b16 %v5901
      %v6018 = vunpack.c.l.b16 %v5902
      %v6019 = vunpack.c.l.b16 %v5903
      %v6020 = vunpack.c.l.b16 %v5904
      %v6021 = vunpack.c.l.b16 %v5905
      %v6022 = vunpack.c.l.b16 %v5906
      %v6023 = vunpack.c.l.b16 %v5907
      %v6024 = vunpack.c.l.b16 %v5908
      %v6025 = vunpack.c.l.b16 %v5909
      %v6026 = vunpack.c.l.b16 %v5910
      %v6027 = vunpack.c.l.b16 %v5911
      %v6028 = vunpack.c.l.b16 %v5912
      %v6029 = vunpack.c.l.b16 %v5913
      %v6030 = vunpack.c.l.b16 %v5914
      %v6031 = vunpack.c.l.b16 %v5915
      %v6032 = vunpack.c.l.b16 %v5916
      %v6033 = vunpack.c.l.b16 %v5917
      %v6034 = vunpack.c.l.b16 %v5918
      %v6035 = vunpack.c.l.b16 %v5919
      %v6036 = vunpack.c.l.b16 %v5920
      %v6037 = vunpack.c.l.b16 %v5921
      %v6038 = vunpack.c.l.b16 %v5922
      %v6039 = vpack.c.b16 %v5983, %v5982
      %v6040 = vpack.c.b16 %v5985, %v5984
      %v6041 = vpack.c.b16 %v5987, %v5986
      %v6042 = vpack.c.b16 %v5989, %v5988
      %v6043 = vpack.c.b16 %v5991, %v5990
      %v6044 = vpack.c.b16 %v5993, %v5992
      %v6045 = vpack.c.b16 %v5995, %v5994
      %v6046 = vpack.c.b16 %v5997, %v5996
      %v6047 = vpack.c.b16 %v5999, %v5998
      %v6048 = vpack.c.b16 %v6001, %v6000
      %v6049 = vpack.c.b16 %v6003, %v6002
      %v6050 = vpack.c.b16 %v6005, %v6004
      %v6051 = vpack.c.b16 %v6007, %v6006
      %v6052 = vpack.c.b16 %v6009, %v6008
      %v6053 = vpack.c.b16 %v6011, %v6010
      %v6054 = vpack.c.b16 %v6013, %v6012
      %v6055 = vpack.c.b16 %v6015, %v6014
      %v6056 = vpack.c.b16 %v6017, %v6016
      %v6057 = vpack.c.b16 %v6019, %v6018
      %v6058 = vpack.c.b16 %v6021, %v6020
      %v6059 = vpack.c.b16 %v6023, %v6022
      %v6060 = vpack.c.b16 %v6025, %v6024
      %v6061 = vpack.c.b16 %v6027, %v6026
      %v6062 = vpack.c.b16 %v6029, %v6028
      %v6063 = vpack.c.b16 %v6031, %v6030
      %v6064 = vpack.c.b16 %v6033, %v6032
      %v6065 = vpack.c.b16 %v6035, %v6034
      %v6066 = vpack.c.b16 %v6037, %v6036
      %v6067 = vpack.c.b16 %v6038, %v6038
      %v6069 = vshrl.u32 %v6039, 16
      %v6071 = vshll.u32 %v6039, 16
      %v6073 = vrot.slane %v6071, 1
      %v6074 = vor.u32 %v6069, %v6073
      %v6076 = vshll.u32 %v6040, 16
      %v6078 = vrot.slane %v6076, 1
      %v6079 = vsel %vm1220, %v6074, %v6078
      %v6080 = vshrl.u32 %v6040, 16
      %v6082 = vor.u32 %v6080, %v6078
      %v6084 = vshll.u32 %v6041, 16
      %v6086 = vrot.slane %v6084, 1
      %v6087 = vsel %vm1220, %v6082, %v6086
      %v6088 = vshrl.u32 %v6041, 16
      %v6090 = vor.u32 %v6088, %v6086
      %v6092 = vshll.u32 %v6042, 16
      %v6094 = vrot.slane %v6092, 1
      %v6095 = vsel %vm1220, %v6090, %v6094
      %v6096 = vshrl.u32 %v6042, 16
      %v6098 = vor.u32 %v6096, %v6094
      %v6100 = vshll.u32 %v6043, 16
      %v6102 = vrot.slane %v6100, 1
      %v6103 = vsel %vm1220, %v6098, %v6102
      %v6104 = vshrl.u32 %v6043, 16
      %v6106 = vor.u32 %v6104, %v6102
      %v6108 = vshll.u32 %v6044, 16
      %v6110 = vrot.slane %v6108, 1
      %v6111 = vsel %vm1220, %v6106, %v6110
      %v6112 = vshrl.u32 %v6044, 16
      %v6114 = vor.u32 %v6112, %v6110
      %v6116 = vshll.u32 %v6045, 16
      %v6118 = vrot.slane %v6116, 1
      %v6119 = vsel %vm1220, %v6114, %v6118
      %v6120 = vshrl.u32 %v6045, 16
      %v6122 = vor.u32 %v6120, %v6118
      %v6124 = vshll.u32 %v6046, 16
      %v6126 = vrot.slane %v6124, 1
      %v6127 = vsel %vm1220, %v6122, %v6126
      %v6128 = vshrl.u32 %v6046, 16
      %v6130 = vor.u32 %v6128, %v6126
      %v6132 = vshll.u32 %v6047, 16
      %v6134 = vrot.slane %v6132, 1
      %v6135 = vsel %vm1220, %v6130, %v6134
      %v6136 = vshrl.u32 %v6047, 16
      %v6138 = vor.u32 %v6136, %v6134
      %v6140 = vshll.u32 %v6048, 16
      %v6142 = vrot.slane %v6140, 1
      %v6143 = vsel %vm1220, %v6138, %v6142
      %v6144 = vshrl.u32 %v6048, 16
      %v6146 = vor.u32 %v6144, %v6142
      %v6148 = vshll.u32 %v6049, 16
      %v6150 = vrot.slane %v6148, 1
      %v6151 = vsel %vm1220, %v6146, %v6150
      %v6152 = vshrl.u32 %v6049, 16
      %v6154 = vor.u32 %v6152, %v6150
      %v6156 = vshll.u32 %v6050, 16
      %v6158 = vrot.slane %v6156, 1
      %v6159 = vsel %vm1220, %v6154, %v6158
      %v6160 = vshrl.u32 %v6050, 16
      %v6162 = vor.u32 %v6160, %v6158
      %v6164 = vshll.u32 %v6051, 16
      %v6166 = vrot.slane %v6164, 1
      %v6167 = vsel %vm1220, %v6162, %v6166
      %v6168 = vshrl.u32 %v6051, 16
      %v6170 = vor.u32 %v6168, %v6166
      %v6172 = vshll.u32 %v6052, 16
      %v6174 = vrot.slane %v6172, 1
      %v6175 = vsel %vm1220, %v6170, %v6174
      %v6176 = vshrl.u32 %v6052, 16
      %v6178 = vor.u32 %v6176, %v6174
      %v6180 = vshll.u32 %v6053, 16
      %v6182 = vrot.slane %v6180, 1
      %v6183 = vsel %vm1220, %v6178, %v6182
      %v6184 = vshrl.u32 %v6053, 16
      %v6186 = vor.u32 %v6184, %v6182
      %v6188 = vshll.u32 %v6054, 16
      %v6190 = vrot.slane %v6188, 1
      %v6191 = vsel %vm1220, %v6186, %v6190
      %v6192 = vshrl.u32 %v6054, 16
      %v6194 = vor.u32 %v6192, %v6190
      %v6196 = vshll.u32 %v6055, 16
      %v6198 = vrot.slane %v6196, 1
      %v6199 = vsel %vm1220, %v6194, %v6198
      %v6200 = vshrl.u32 %v6055, 16
      %v6202 = vor.u32 %v6200, %v6198
      %v6204 = vshll.u32 %v6056, 16
      %v6206 = vrot.slane %v6204, 1
      %v6207 = vsel %vm1220, %v6202, %v6206
      %v6208 = vshrl.u32 %v6056, 16
      %v6210 = vor.u32 %v6208, %v6206
      %v6212 = vshll.u32 %v6057, 16
      %v6214 = vrot.slane %v6212, 1
      %v6215 = vsel %vm1220, %v6210, %v6214
      %v6216 = vshrl.u32 %v6057, 16
      %v6218 = vor.u32 %v6216, %v6214
      %v6220 = vshll.u32 %v6058, 16
      %v6222 = vrot.slane %v6220, 1
      %v6223 = vsel %vm1220, %v6218, %v6222
      %v6224 = vshrl.u32 %v6058, 16
      %v6226 = vor.u32 %v6224, %v6222
      %v6228 = vshll.u32 %v6059, 16
      %v6230 = vrot.slane %v6228, 1
      %v6231 = vsel %vm1220, %v6226, %v6230
      %v6232 = vshrl.u32 %v6059, 16
      %v6234 = vor.u32 %v6232, %v6230
      %v6236 = vshll.u32 %v6060, 16
      %v6238 = vrot.slane %v6236, 1
      %v6239 = vsel %vm1220, %v6234, %v6238
      %v6240 = vshrl.u32 %v6060, 16
      %v6242 = vor.u32 %v6240, %v6238
      %v6244 = vshll.u32 %v6061, 16
      %v6246 = vrot.slane %v6244, 1
      %v6247 = vsel %vm1220, %v6242, %v6246
      %v6248 = vshrl.u32 %v6061, 16
      %v6250 = vor.u32 %v6248, %v6246
      %v6252 = vshll.u32 %v6062, 16
      %v6254 = vrot.slane %v6252, 1
      %v6255 = vsel %vm1220, %v6250, %v6254
      %v6256 = vshrl.u32 %v6062, 16
      %v6258 = vor.u32 %v6256, %v6254
      %v6260 = vshll.u32 %v6063, 16
      %v6262 = vrot.slane %v6260, 1
      %v6263 = vsel %vm1220, %v6258, %v6262
      %v6264 = vshrl.u32 %v6063, 16
      %v6266 = vor.u32 %v6264, %v6262
      %v6268 = vshll.u32 %v6064, 16
      %v6270 = vrot.slane %v6268, 1
      %v6271 = vsel %vm1220, %v6266, %v6270
      %v6272 = vshrl.u32 %v6064, 16
      %v6274 = vor.u32 %v6272, %v6270
      %v6276 = vshll.u32 %v6065, 16
      %v6278 = vrot.slane %v6276, 1
      %v6279 = vsel %vm1220, %v6274, %v6278
      %v6280 = vshrl.u32 %v6065, 16
      %v6282 = vor.u32 %v6280, %v6278
      %v6284 = vshll.u32 %v6066, 16
      %v6286 = vrot.slane %v6284, 1
      %v6287 = vsel %vm1220, %v6282, %v6286
      %v6288 = vshrl.u32 %v6066, 16
      %v6290 = vor.u32 %v6288, %v6286
      %v6292 = vshll.u32 %v6067, 16
      %v6294 = vrot.slane %v6292, 1
      %v6295 = vsel %vm1220, %v6290, %v6294
      %v6297 = vsel %vm612, %v6079, 0
      %v6300 = vsel %vm612, %v6087, 0
      %v6303 = vsel %vm612, %v6095, 0
      %v6306 = vsel %vm612, %v6103, 0
      %v6309 = vsel %vm612, %v6111, 0
      %v6312 = vsel %vm612, %v6119, 0
      %v6315 = vsel %vm612, %v6127, 0
      %v6318 = vsel %vm612, %v6135, 0
      %v6321 = vsel %vm612, %v6143, 0
      %v6324 = vsel %vm612, %v6151, 0
      %v6327 = vsel %vm612, %v6159, 0
      %v6330 = vsel %vm612, %v6167, 0
      %v6333 = vsel %vm612, %v6175, 0
      %v6336 = vsel %vm612, %v6183, 0
      %v6339 = vsel %vm612, %v6191, 0
      %v6342 = vsel %vm612, %v6199, 0
      %v6345 = vsel %vm612, %v6207, 0
      %v6348 = vsel %vm612, %v6215, 0
      %v6351 = vsel %vm612, %v6223, 0
      %v6354 = vsel %vm612, %v6231, 0
      %v6357 = vsel %vm612, %v6239, 0
      %v6360 = vsel %vm612, %v6247, 0
      %v6363 = vsel %vm612, %v6255, 0
      %v6366 = vsel %vm612, %v6263, 0
      %v6369 = vsel %vm612, %v6271, 0
      %v6372 = vsel %vm612, %v6279, 0
      %v6375 = vsel %vm612, %v6287, 0
      %v6378 = vsel %vm612, %v6295, 0
      %v6381 = vand.u32 %v5924, %v700
      %6383 = vmatprep.subr.bf16.mxu0 0
      %6384 = vmatpush1.bf16.msra.mxu0 0
      %6385 = vmatprep.subr.bf16.mxu0 0
      %6386 = vmatpush1.bf16.msra.mxu0 0
      %6387 = vmatprep.subr.bf16.mxu0 0
      %6388 = vmatpush1.bf16.msra.mxu0 0
      %6389 = vmatprep.subr.bf16.mxu0 0
      %6390 = vmatpush1.bf16.msra.mxu0 0
      %6391 = vmatprep.subr.bf16.mxu0 0
      %6392 = vmatpush1.bf16.msra.mxu0 0
      %6393 = vmatprep.subr.bf16.mxu0 0
      %6394 = vmatpush1.bf16.msra.mxu0 0
      %6395 = vmatprep.subr.bf16.mxu0 0
      %6396 = vmatpush1.bf16.msra.mxu0 0
      %6397 = vmatprep.subr.bf16.mxu0 0
      %6398 = vmatpush1.bf16.msra.mxu0 %v6381
      %6399 = vmatprep.subr.bf16.mxu0 0
      %6400 = vmatpush2.bf16.msra.mxu0 0
      %6401 = vmatprep.subr.bf16.mxu0 0
      %6402 = vmatpush2.bf16.msra.mxu0 0
      %6403 = vmatprep.subr.bf16.mxu0 0
      %6404 = vmatpush2.bf16.msra.mxu0 0
      %6405 = vmatprep.subr.bf16.mxu0 0
      %6406 = vmatpush2.bf16.msra.mxu0 0
      %6407 = vmatprep.subr.bf16.mxu0 0
      %6408 = vmatpush2.bf16.msra.mxu0 0
      %6409 = vmatprep.subr.bf16.mxu0 0
      %6410 = vmatpush2.bf16.msra.mxu0 0
      %6411 = vmatprep.subr.bf16.mxu0 0
      %6412 = vmatpush2.bf16.msra.mxu0 0
      %6413 = vmatprep.subr.bf16.mxu0 0
      %6414 = vmatpush2.bf16.msra.mxu0 0
      %6415 = vmatprep.mubr.bf16.mxu0 0
      %6416 = vmatmul.mubr.bf16.gmra.mxu0 %v6297
      %v6417 = vpop.f32.mrf.mxu0
      %v6418 = vadd.f32 0.0, %v6417
      %v6419 = vpop.f32.mrf.mxu0
      %v6420 = vpop.f32.mrf.mxu0
      %v6421 = vadd.f32 0.0, %v6420
      %v6422 = vpop.f32.mrf.mxu0
      %6423 = vmatprep.mubr.bf16.mxu0 0
      %6424 = vmatmul.mubr.bf16.gmra.mxu0 %v6300
      %v6425 = vpop.f32.mrf.mxu0
      %v6426 = vadd.f32 0.0, %v6425
      %v6427 = vpop.f32.mrf.mxu0
      %v6428 = vpop.f32.mrf.mxu0
      %v6429 = vadd.f32 0.0, %v6428
      %v6430 = vpop.f32.mrf.mxu0
      %6431 = vmatprep.mubr.bf16.mxu0 0
      %6432 = vmatmul.mubr.bf16.gmra.mxu0 %v6303
      %v6433 = vpop.f32.mrf.mxu0
      %v6434 = vadd.f32 0.0, %v6433
      %v6435 = vpop.f32.mrf.mxu0
      %v6436 = vpop.f32.mrf.mxu0
      %v6437 = vadd.f32 0.0, %v6436
      %v6438 = vpop.f32.mrf.mxu0
      %6439 = vmatprep.mubr.bf16.mxu0 0
      %6440 = vmatmul.mubr.bf16.gmra.mxu0 %v6306
      %v6441 = vpop.f32.mrf.mxu0
      %v6442 = vadd.f32 0.0, %v6441
      %v6443 = vpop.f32.mrf.mxu0
      %v6444 = vpop.f32.mrf.mxu0
      %v6445 = vadd.f32 0.0, %v6444
      %v6446 = vpop.f32.mrf.mxu0
      %6447 = vmatprep.mubr.bf16.mxu0 0
      %6448 = vmatmul.mubr.bf16.gmra.mxu0 %v6309
      %v6449 = vpop.f32.mrf.mxu0
      %v6450 = vadd.f32 0.0, %v6449
      %v6451 = vpop.f32.mrf.mxu0
      %v6452 = vpop.f32.mrf.mxu0
      %v6453 = vadd.f32 0.0, %v6452
      %v6454 = vpop.f32.mrf.mxu0
      %6455 = vmatprep.mubr.bf16.mxu0 0
      %6456 = vmatmul.mubr.bf16.gmra.mxu0 %v6312
      %v6457 = vpop.f32.mrf.mxu0
      %v6458 = vadd.f32 0.0, %v6457
      %v6459 = vpop.f32.mrf.mxu0
      %v6460 = vpop.f32.mrf.mxu0
      %v6461 = vadd.f32 0.0, %v6460
      %v6462 = vpop.f32.mrf.mxu0
      %6463 = vmatprep.mubr.bf16.mxu0 0
      %6464 = vmatmul.mubr.bf16.gmra.mxu0 %v6315
      %v6465 = vpop.f32.mrf.mxu0
      %v6466 = vadd.f32 0.0, %v6465
      %v6467 = vpop.f32.mrf.mxu0
      %v6468 = vpop.f32.mrf.mxu0
      %v6469 = vadd.f32 0.0, %v6468
      %v6470 = vpop.f32.mrf.mxu0
      %6471 = vmatprep.mubr.bf16.mxu0 0
      %6472 = vmatmul.mubr.bf16.gmra.mxu0 %v6318
      %v6473 = vpop.f32.mrf.mxu0
      %v6474 = vadd.f32 0.0, %v6473
      %v6475 = vpop.f32.mrf.mxu0
      %v6476 = vpop.f32.mrf.mxu0
      %v6477 = vadd.f32 0.0, %v6476
      %v6478 = vpop.f32.mrf.mxu0
      %6479 = vmatprep.mubr.bf16.mxu0 0
      %6480 = vmatmul.mubr.bf16.gmra.mxu0 %v6321
      %v6481 = vpop.f32.mrf.mxu0
      %v6482 = vadd.f32 0.0, %v6481
      %v6483 = vpop.f32.mrf.mxu0
      %v6484 = vpop.f32.mrf.mxu0
      %v6485 = vadd.f32 0.0, %v6484
      %v6486 = vpop.f32.mrf.mxu0
      %6487 = vmatprep.mubr.bf16.mxu0 0
      %6488 = vmatmul.mubr.bf16.gmra.mxu0 %v6324
      %v6489 = vpop.f32.mrf.mxu0
      %v6490 = vadd.f32 0.0, %v6489
      %v6491 = vpop.f32.mrf.mxu0
      %v6492 = vpop.f32.mrf.mxu0
      %v6493 = vadd.f32 0.0, %v6492
      %v6494 = vpop.f32.mrf.mxu0
      %6495 = vmatprep.mubr.bf16.mxu0 0
      %6496 = vmatmul.mubr.bf16.gmra.mxu0 %v6327
      %v6497 = vpop.f32.mrf.mxu0
      %v6498 = vadd.f32 0.0, %v6497
      %v6499 = vpop.f32.mrf.mxu0
      %v6500 = vpop.f32.mrf.mxu0
      %v6501 = vadd.f32 0.0, %v6500
      %v6502 = vpop.f32.mrf.mxu0
      %6503 = vmatprep.mubr.bf16.mxu0 0
      %6504 = vmatmul.mubr.bf16.gmra.mxu0 %v6330
      %v6505 = vpop.f32.mrf.mxu0
      %v6506 = vadd.f32 0.0, %v6505
      %v6507 = vpop.f32.mrf.mxu0
      %v6508 = vpop.f32.mrf.mxu0
      %v6509 = vadd.f32 0.0, %v6508
      %v6510 = vpop.f32.mrf.mxu0
      %6511 = vmatprep.mubr.bf16.mxu0 0
      %6512 = vmatmul.mubr.bf16.gmra.mxu0 %v6333
      %v6513 = vpop.f32.mrf.mxu0
      %v6514 = vadd.f32 0.0, %v6513
      %v6515 = vpop.f32.mrf.mxu0
      %v6516 = vpop.f32.mrf.mxu0
      %v6517 = vadd.f32 0.0, %v6516
      %v6518 = vpop.f32.mrf.mxu0
      %6519 = vmatprep.mubr.bf16.mxu0 0
      %6520 = vmatmul.mubr.bf16.gmra.mxu0 %v6336
      %v6521 = vpop.f32.mrf.mxu0
      %v6522 = vadd.f32 0.0, %v6521
      %v6523 = vpop.f32.mrf.mxu0
      %v6524 = vpop.f32.mrf.mxu0
      %v6525 = vadd.f32 0.0, %v6524
      %v6526 = vpop.f32.mrf.mxu0
      %6527 = vmatprep.mubr.bf16.mxu0 0
      %6528 = vmatmul.mubr.bf16.gmra.mxu0 %v6339
      %v6529 = vpop.f32.mrf.mxu0
      %v6530 = vadd.f32 0.0, %v6529
      %v6531 = vpop.f32.mrf.mxu0
      %v6532 = vpop.f32.mrf.mxu0
      %v6533 = vadd.f32 0.0, %v6532
      %v6534 = vpop.f32.mrf.mxu0
      %6535 = vmatprep.mubr.bf16.mxu0 0
      %6536 = vmatmul.mubr.bf16.gmra.mxu0 %v6342
      %v6537 = vpop.f32.mrf.mxu0
      %v6538 = vadd.f32 0.0, %v6537
      %v6539 = vpop.f32.mrf.mxu0
      %v6540 = vpop.f32.mrf.mxu0
      %v6541 = vadd.f32 0.0, %v6540
      %v6542 = vpop.f32.mrf.mxu0
      %6543 = vmatprep.mubr.bf16.mxu0 0
      %6544 = vmatmul.mubr.bf16.gmra.mxu0 %v6345
      %v6545 = vpop.f32.mrf.mxu0
      %v6546 = vadd.f32 0.0, %v6545
      %v6547 = vpop.f32.mrf.mxu0
      %v6548 = vpop.f32.mrf.mxu0
      %v6549 = vadd.f32 0.0, %v6548
      %v6550 = vpop.f32.mrf.mxu0
      %6551 = vmatprep.mubr.bf16.mxu0 0
      %6552 = vmatmul.mubr.bf16.gmra.mxu0 %v6348
      %v6553 = vpop.f32.mrf.mxu0
      %v6554 = vadd.f32 0.0, %v6553
      %v6555 = vpop.f32.mrf.mxu0
      %v6556 = vpop.f32.mrf.mxu0
      %v6557 = vadd.f32 0.0, %v6556
      %v6558 = vpop.f32.mrf.mxu0
      %6559 = vmatprep.mubr.bf16.mxu0 0
      %6560 = vmatmul.mubr.bf16.gmra.mxu0 %v6351
      %v6561 = vpop.f32.mrf.mxu0
      %v6562 = vadd.f32 0.0, %v6561
      %v6563 = vpop.f32.mrf.mxu0
      %v6564 = vpop.f32.mrf.mxu0
      %v6565 = vadd.f32 0.0, %v6564
      %v6566 = vpop.f32.mrf.mxu0
      %6567 = vmatprep.mubr.bf16.mxu0 0
      %6568 = vmatmul.mubr.bf16.gmra.mxu0 %v6354
      %v6569 = vpop.f32.mrf.mxu0
      %v6570 = vadd.f32 0.0, %v6569
      %v6571 = vpop.f32.mrf.mxu0
      %v6572 = vpop.f32.mrf.mxu0
      %v6573 = vadd.f32 0.0, %v6572
      %v6574 = vpop.f32.mrf.mxu0
      %6575 = vmatprep.mubr.bf16.mxu0 0
      %6576 = vmatmul.mubr.bf16.gmra.mxu0 %v6357
      %v6577 = vpop.f32.mrf.mxu0
      %v6578 = vadd.f32 0.0, %v6577
      %v6579 = vpop.f32.mrf.mxu0
      %v6580 = vpop.f32.mrf.mxu0
      %v6581 = vadd.f32 0.0, %v6580
      %v6582 = vpop.f32.mrf.mxu0
      %6583 = vmatprep.mubr.bf16.mxu0 0
      %6584 = vmatmul.mubr.bf16.gmra.mxu0 %v6360
      %v6585 = vpop.f32.mrf.mxu0
      %v6586 = vadd.f32 0.0, %v6585
      %v6587 = vpop.f32.mrf.mxu0
      %v6588 = vpop.f32.mrf.mxu0
      %v6589 = vadd.f32 0.0, %v6588
      %v6590 = vpop.f32.mrf.mxu0
      %6591 = vmatprep.mubr.bf16.mxu0 0
      %6592 = vmatmul.mubr.bf16.gmra.mxu0 %v6363
      %v6593 = vpop.f32.mrf.mxu0
      %v6594 = vadd.f32 0.0, %v6593
      %v6595 = vpop.f32.mrf.mxu0
      %v6596 = vpop.f32.mrf.mxu0
      %v6597 = vadd.f32 0.0, %v6596
      %v6598 = vpop.f32.mrf.mxu0
      %6599 = vmatprep.mubr.bf16.mxu0 0
      %6600 = vmatmul.mubr.bf16.gmra.mxu0 %v6366
      %v6601 = vpop.f32.mrf.mxu0
      %v6602 = vadd.f32 0.0, %v6601
      %v6603 = vpop.f32.mrf.mxu0
      %v6604 = vpop.f32.mrf.mxu0
      %v6605 = vadd.f32 0.0, %v6604
      %v6606 = vpop.f32.mrf.mxu0
      %6607 = vmatprep.mubr.bf16.mxu0 0
      %6608 = vmatmul.mubr.bf16.gmra.mxu0 %v6369
      %v6609 = vpop.f32.mrf.mxu0
      %v6610 = vadd.f32 0.0, %v6609
      %v6611 = vpop.f32.mrf.mxu0
      %v6612 = vpop.f32.mrf.mxu0
      %v6613 = vadd.f32 0.0, %v6612
      %v6614 = vpop.f32.mrf.mxu0
      %6615 = vmatprep.mubr.bf16.mxu0 0
      %6616 = vmatmul.mubr.bf16.gmra.mxu0 %v6372
      %v6617 = vpop.f32.mrf.mxu0
      %v6618 = vadd.f32 0.0, %v6617
      %v6619 = vpop.f32.mrf.mxu0
      %v6620 = vpop.f32.mrf.mxu0
      %v6621 = vadd.f32 0.0, %v6620
      %v6622 = vpop.f32.mrf.mxu0
      %6623 = vmatprep.mubr.bf16.mxu0 0
      %6624 = vmatmul.mubr.bf16.gmra.mxu0 %v6375
      %v6625 = vpop.f32.mrf.mxu0
      %v6626 = vadd.f32 0.0, %v6625
      %v6627 = vpop.f32.mrf.mxu0
      %v6628 = vpop.f32.mrf.mxu0
      %v6629 = vadd.f32 0.0, %v6628
      %v6630 = vpop.f32.mrf.mxu0
      %6631 = vmatprep.mubr.bf16.mxu0 0
      %6632 = vmatmul.mubr.bf16.gmra.mxu0 %v6378
      %v6633 = vpop.f32.mrf.mxu0
      %v6634 = vadd.f32 0.0, %v6633
      %v6635 = vpop.f32.mrf.mxu0
      %v6636 = vpop.f32.mrf.mxu0
      %v6637 = vadd.f32 0.0, %v6636
      %v6638 = vpop.f32.mrf.mxu0
      %6639 = vdwg.mxu0
      %v6640 = vld [vmem:[#allocation3] sm:$0xff]
      %v6641 = vld [vmem:[#allocation3 + $0x8] sm:$0xff]
      %v6642 = vld [vmem:[#allocation3 + $0x10] sm:$0xff]
      %v6643 = vld [vmem:[#allocation3 + $0x18] sm:$0xff]
      %v6644 = vld [vmem:[#allocation3 + $0x20] sm:$0xff]
      %v6645 = vld [vmem:[#allocation3 + $0x28] sm:$0xff]
      %v6646 = vld [vmem:[#allocation3 + $0x30] sm:$0xff]
      %v6647 = vld [vmem:[#allocation3 + $0x38] sm:$0xff]
      %v6648 = vld [vmem:[#allocation3 + $0x40] sm:$0xff]
      %v6649 = vld [vmem:[#allocation3 + $0x48] sm:$0xff]
      %v6650 = vld [vmem:[#allocation3 + $0x50] sm:$0xff]
      %v6651 = vld [vmem:[#allocation3 + $0x58] sm:$0xff]
      %v6652 = vld [vmem:[#allocation3 + $0x60] sm:$0xff]
      %v6653 = vld [vmem:[#allocation3 + $0x68] sm:$0xff]
      %v6654 = vld [vmem:[#allocation3 + $0x70] sm:$0xff]
      %v6655 = vld [vmem:[#allocation3 + $0x78] sm:$0xff]
      %v6656 = vld [vmem:[#allocation3 + $0x80] sm:$0xff]
      %v6657 = vld [vmem:[#allocation3 + $0x88] sm:$0xff]
      %v6658 = vld [vmem:[#allocation3 + $0x90] sm:$0xff]
      %v6659 = vld [vmem:[#allocation3 + $0x98] sm:$0xff]
      %v6660 = vld [vmem:[#allocation3 + $0xa0] sm:$0xff]
      %v6661 = vld [vmem:[#allocation3 + $0xa8] sm:$0xff]
      %v6662 = vld [vmem:[#allocation3 + $0xb0] sm:$0xff]
      %v6663 = vld [vmem:[#allocation3 + $0xb8] sm:$0xff]
      %v6664 = vld [vmem:[#allocation3 + $0xc0] sm:$0xff]
      %v6665 = vld [vmem:[#allocation3 + $0xc8] sm:$0xff]
      %v6666 = vld [vmem:[#allocation3 + $0xd0] sm:$0xff]
      %v6667 = vld [vmem:[#allocation3 + $0xd8] sm:$0xff]
      %v6668 = vld [vmem:[#allocation3 + $0xe0] sm:$0xff]
      %v6669 = vld [vmem:[#allocation3 + $0xe8] sm:$0xff]
      %v6670 = vld [vmem:[#allocation3 + $0xf0] sm:$0xff]
      %v6671 = vld [vmem:[#allocation3 + $0xf8] sm:$0xff]
      %v6672 = vld [vmem:[#allocation3 + $0x100] sm:$0xff]
      %v6673 = vld [vmem:[#allocation3 + $0x108] sm:$0xff]
      %v6674 = vld [vmem:[#allocation3 + $0x110] sm:$0xff]
      %v6675 = vld [vmem:[#allocation3 + $0x118] sm:$0xff]
      %v6676 = vld [vmem:[#allocation3 + $0x120] sm:$0xff]
      %v6677 = vld [vmem:[#allocation3 + $0x128] sm:$0xff]
      %v6678 = vld [vmem:[#allocation3 + $0x130] sm:$0xff]
      %v6679 = vld [vmem:[#allocation3 + $0x138] sm:$0xff]
      %v6680 = vld [vmem:[#allocation3 + $0x140] sm:$0xff]
      %v6681 = vld [vmem:[#allocation3 + $0x148] sm:$0xff]
      %v6682 = vld [vmem:[#allocation3 + $0x150] sm:$0xff]
      %v6683 = vld [vmem:[#allocation3 + $0x158] sm:$0xff]
      %v6684 = vld [vmem:[#allocation3 + $0x160] sm:$0xff]
      %v6685 = vld [vmem:[#allocation3 + $0x168] sm:$0xff]
      %v6686 = vld [vmem:[#allocation3 + $0x170] sm:$0xff]
      %v6687 = vld [vmem:[#allocation3 + $0x178] sm:$0xff]
      %v6688 = vld [vmem:[#allocation3 + $0x180] sm:$0xff]
      %v6689 = vld [vmem:[#allocation3 + $0x188] sm:$0xff]
      %v6690 = vld [vmem:[#allocation3 + $0x190] sm:$0xff]
      %v6691 = vld [vmem:[#allocation3 + $0x198] sm:$0xff]
      %v6692 = vld [vmem:[#allocation3 + $0x1a0] sm:$0xff]
      %v6693 = vld [vmem:[#allocation3 + $0x1a8] sm:$0xff]
      %v6694 = vld [vmem:[#allocation3 + $0x1b0] sm:$0xff]
      %v6695 = vld [vmem:[#allocation3 + $0x1b8] sm:$0xff]
      %v6696 = vadd.f32 %v6640, %v6418
      %v6697 = vadd.f32 %v6641, %v6421
      %v6698 = vadd.f32 %v6642, %v6426
      %v6699 = vadd.f32 %v6643, %v6429
      %v6700 = vadd.f32 %v6644, %v6434
      %v6701 = vadd.f32 %v6645, %v6437
      %v6702 = vadd.f32 %v6646, %v6442
      %v6703 = vadd.f32 %v6647, %v6445
      %v6704 = vadd.f32 %v6648, %v6450
      %v6705 = vadd.f32 %v6649, %v6453
      %v6706 = vadd.f32 %v6650, %v6458
      %v6707 = vadd.f32 %v6651, %v6461
      %v6708 = vadd.f32 %v6652, %v6466
      %v6709 = vadd.f32 %v6653, %v6469
      %v6710 = vadd.f32 %v6654, %v6474
      %v6711 = vadd.f32 %v6655, %v6477
      %v6712 = vadd.f32 %v6656, %v6482
      %v6713 = vadd.f32 %v6657, %v6485
      %v6714 = vadd.f32 %v6658, %v6490
      %v6715 = vadd.f32 %v6659, %v6493
      %v6716 = vadd.f32 %v6660, %v6498
      %v6717 = vadd.f32 %v6661, %v6501
      %v6718 = vadd.f32 %v6662, %v6506
      %v6719 = vadd.f32 %v6663, %v6509
      %v6720 = vadd.f32 %v6664, %v6514
      %v6721 = vadd.f32 %v6665, %v6517
      %v6722 = vadd.f32 %v6666, %v6522
      %v6723 = vadd.f32 %v6667, %v6525
      %v6724 = vadd.f32 %v6668, %v6530
      %v6725 = vadd.f32 %v6669, %v6533
      %v6726 = vadd.f32 %v6670, %v6538
      %v6727 = vadd.f32 %v6671, %v6541
      %v6728 = vadd.f32 %v6672, %v6546
      %v6729 = vadd.f32 %v6673, %v6549
      %v6730 = vadd.f32 %v6674, %v6554
      %v6731 = vadd.f32 %v6675, %v6557
      %v6732 = vadd.f32 %v6676, %v6562
      %v6733 = vadd.f32 %v6677, %v6565
      %v6734 = vadd.f32 %v6678, %v6570
      %v6735 = vadd.f32 %v6679, %v6573
      %v6736 = vadd.f32 %v6680, %v6578
      %v6737 = vadd.f32 %v6681, %v6581
      %v6738 = vadd.f32 %v6682, %v6586
      %v6739 = vadd.f32 %v6683, %v6589
      %v6740 = vadd.f32 %v6684, %v6594
      %v6741 = vadd.f32 %v6685, %v6597
      %v6742 = vadd.f32 %v6686, %v6602
      %v6743 = vadd.f32 %v6687, %v6605
      %v6744 = vadd.f32 %v6688, %v6610
      %v6745 = vadd.f32 %v6689, %v6613
      %v6746 = vadd.f32 %v6690, %v6618
      %v6747 = vadd.f32 %v6691, %v6621
      %v6748 = vadd.f32 %v6692, %v6626
      %v6749 = vadd.f32 %v6693, %v6629
      %v6750 = vadd.f32 %v6694, %v6634
      %v6751 = vadd.f32 %v6695, %v6637
      %6752 = vst.msk [vmem:[#allocation3] sm:$0xff] %vm961, %v6696
      %6753 = vst.msk [vmem:[#allocation3 + $0x8] sm:$0xff] %vm961, %v6697
      %6754 = vst.msk [vmem:[#allocation3 + $0x10] sm:$0xff] %vm961, %v6698
      %6755 = vst.msk [vmem:[#allocation3 + $0x18] sm:$0xff] %vm961, %v6699
      %6756 = vst.msk [vmem:[#allocation3 + $0x20] sm:$0xff] %vm961, %v6700
      %6757 = vst.msk [vmem:[#allocation3 + $0x28] sm:$0xff] %vm961, %v6701
      %6758 = vst.msk [vmem:[#allocation3 + $0x30] sm:$0xff] %vm961, %v6702
      %6759 = vst.msk [vmem:[#allocation3 + $0x38] sm:$0xff] %vm961, %v6703
      %6760 = vst.msk [vmem:[#allocation3 + $0x40] sm:$0xff] %vm961, %v6704
      %6761 = vst.msk [vmem:[#allocation3 + $0x48] sm:$0xff] %vm961, %v6705
      %6762 = vst.msk [vmem:[#allocation3 + $0x50] sm:$0xff] %vm961, %v6706
      %6763 = vst.msk [vmem:[#allocation3 + $0x58] sm:$0xff] %vm961, %v6707
      %6764 = vst.msk [vmem:[#allocation3 + $0x60] sm:$0xff] %vm961, %v6708
      %6765 = vst.msk [vmem:[#allocation3 + $0x68] sm:$0xff] %vm961, %v6709
      %6766 = vst.msk [vmem:[#allocation3 + $0x70] sm:$0xff] %vm961, %v6710
      %6767 = vst.msk [vmem:[#allocation3 + $0x78] sm:$0xff] %vm961, %v6711
      %6768 = vst.msk [vmem:[#allocation3 + $0x80] sm:$0xff] %vm961, %v6712
      %6769 = vst.msk [vmem:[#allocation3 + $0x88] sm:$0xff] %vm961, %v6713
      %6770 = vst.msk [vmem:[#allocation3 + $0x90] sm:$0xff] %vm961, %v6714
      %6771 = vst.msk [vmem:[#allocation3 + $0x98] sm:$0xff] %vm961, %v6715
      %6772 = vst.msk [vmem:[#allocation3 + $0xa0] sm:$0xff] %vm961, %v6716
      %6773 = vst.msk [vmem:[#allocation3 + $0xa8] sm:$0xff] %vm961, %v6717
      %6774 = vst.msk [vmem:[#allocation3 + $0xb0] sm:$0xff] %vm961, %v6718
      %6775 = vst.msk [vmem:[#allocation3 + $0xb8] sm:$0xff] %vm961, %v6719
      %6776 = vst.msk [vmem:[#allocation3 + $0xc0] sm:$0xff] %vm961, %v6720
      %6777 = vst.msk [vmem:[#allocation3 + $0xc8] sm:$0xff] %vm961, %v6721
      %6778 = vst.msk [vmem:[#allocation3 + $0xd0] sm:$0xff] %vm961, %v6722
      %6779 = vst.msk [vmem:[#allocation3 + $0xd8] sm:$0xff] %vm961, %v6723
      %6780 = vst.msk [vmem:[#allocation3 + $0xe0] sm:$0xff] %vm961, %v6724
      %6781 = vst.msk [vmem:[#allocation3 + $0xe8] sm:$0xff] %vm961, %v6725
      %6782 = vst.msk [vmem:[#allocation3 + $0xf0] sm:$0xff] %vm961, %v6726
      %6783 = vst.msk [vmem:[#allocation3 + $0xf8] sm:$0xff] %vm961, %v6727
      %6784 = vst.msk [vmem:[#allocation3 + $0x100] sm:$0xff] %vm961, %v6728
      %6785 = vst.msk [vmem:[#allocation3 + $0x108] sm:$0xff] %vm961, %v6729
      %6786 = vst.msk [vmem:[#allocation3 + $0x110] sm:$0xff] %vm961, %v6730
      %6787 = vst.msk [vmem:[#allocation3 + $0x118] sm:$0xff] %vm961, %v6731
      %6788 = vst.msk [vmem:[#allocation3 + $0x120] sm:$0xff] %vm961, %v6732
      %6789 = vst.msk [vmem:[#allocation3 + $0x128] sm:$0xff] %vm961, %v6733
      %6790 = vst.msk [vmem:[#allocation3 + $0x130] sm:$0xff] %vm961, %v6734
      %6791 = vst.msk [vmem:[#allocation3 + $0x138] sm:$0xff] %vm961, %v6735
      %6792 = vst.msk [vmem:[#allocation3 + $0x140] sm:$0xff] %vm961, %v6736
      %6793 = vst.msk [vmem:[#allocation3 + $0x148] sm:$0xff] %vm961, %v6737
      %6794 = vst.msk [vmem:[#allocation3 + $0x150] sm:$0xff] %vm961, %v6738
      %6795 = vst.msk [vmem:[#allocation3 + $0x158] sm:$0xff] %vm961, %v6739
      %6796 = vst.msk [vmem:[#allocation3 + $0x160] sm:$0xff] %vm961, %v6740
      %6797 = vst.msk [vmem:[#allocation3 + $0x168] sm:$0xff] %vm961, %v6741
      %6798 = vst.msk [vmem:[#allocation3 + $0x170] sm:$0xff] %vm961, %v6742
      %6799 = vst.msk [vmem:[#allocation3 + $0x178] sm:$0xff] %vm961, %v6743
      %6800 = vst.msk [vmem:[#allocation3 + $0x180] sm:$0xff] %vm961, %v6744
      %6801 = vst.msk [vmem:[#allocation3 + $0x188] sm:$0xff] %vm961, %v6745
      %6802 = vst.msk [vmem:[#allocation3 + $0x190] sm:$0xff] %vm961, %v6746
      %6803 = vst.msk [vmem:[#allocation3 + $0x198] sm:$0xff] %vm961, %v6747
      %6804 = vst.msk [vmem:[#allocation3 + $0x1a0] sm:$0xff] %vm961, %v6748
      %6805 = vst.msk [vmem:[#allocation3 + $0x1a8] sm:$0xff] %vm961, %v6749
      %6806 = vst.msk [vmem:[#allocation3 + $0x1b0] sm:$0xff] %vm961, %v6750
      %6807 = vst.msk [vmem:[#allocation3 + $0x1b8] sm:$0xff] %vm961, %v6751
      %v6808 = vld [vmem:[#allocation2 + $0x18] sm:$0xe]
      %v6809 = vld [vmem:[#allocation2 + $0x1c] sm:$0xf]
      %v6810 = vld [vmem:[#allocation2 + $0x20] sm:$0xf]
      %v6811 = vld [vmem:[#allocation2 + $0x24] sm:$0xf]
      %v6812 = vld [vmem:[#allocation2 + $0x28] sm:$0xf]
      %v6813 = vld [vmem:[#allocation2 + $0x2c] sm:$0xf]
      %v6814 = vld [vmem:[#allocation2 + $0x30] sm:$0xf]
      %v6815 = vld [vmem:[#allocation2 + $0x34] sm:$0xf]
      %v6816 = vld [vmem:[#allocation2 + $0x38] sm:$0xf]
      %v6817 = vld [vmem:[#allocation2 + $0x3c] sm:$0xf]
      %v6818 = vld [vmem:[#allocation2 + $0x40] sm:$0xf]
      %v6819 = vld [vmem:[#allocation2 + $0x44] sm:$0xf]
      %v6820 = vld [vmem:[#allocation2 + $0x48] sm:$0xf]
      %v6821 = vld [vmem:[#allocation2 + $0x4c] sm:$0xf]
      %v6822 = vld [vmem:[#allocation2 + $0x50] sm:$0xf]
      %v6823 = vld [vmem:[#allocation2 + $0x54] sm:$0xf]
      %v6824 = vld [vmem:[#allocation2 + $0x58] sm:$0xf]
      %v6825 = vld [vmem:[#allocation2 + $0x5c] sm:$0xf]
      %v6826 = vld [vmem:[#allocation2 + $0x60] sm:$0xf]
      %v6827 = vld [vmem:[#allocation2 + $0x64] sm:$0xf]
      %v6828 = vld [vmem:[#allocation2 + $0x68] sm:$0xf]
      %v6829 = vld [vmem:[#allocation2 + $0x6c] sm:$0xf]
      %v6830 = vld [vmem:[#allocation2 + $0x70] sm:$0xf]
      %v6831 = vld [vmem:[#allocation2 + $0x74] sm:$0xf]
      %v6832 = vld [vmem:[#allocation2 + $0x78] sm:$0xf]
      %v6833 = vld [vmem:[#allocation2 + $0x7c] sm:$0xf]
      %v6834 = vld [vmem:[#allocation2 + $0x80] sm:$0xf]
      %v6835 = vld [vmem:[#allocation2 + $0x84] sm:$0xf]
      %v6836 = vld [vmem:[#allocation2 + $0x88] sm:$0xf]
      %v6837 = vld [vmem:[#allocation2 + $0x8c] sm:$0xf]
      %v6838 = vld [vmem:[#allocation2 + $0x90] sm:$0xf]
      %v6839 = vld [vmem:[#allocation2 + $0x94] sm:$0xf]
      %v6840 = vld [vmem:[#allocation2 + $0x98] sm:$0xf]
      %v6841 = vld [vmem:[#allocation2 + $0x9c] sm:$0xf]
      %v6842 = vld [vmem:[#allocation2 + $0xa0] sm:$0xf]
      %v6843 = vld [vmem:[#allocation2 + $0xa4] sm:$0xf]
      %v6844 = vld [vmem:[#allocation2 + $0xa8] sm:$0xf]
      %v6845 = vld [vmem:[#allocation2 + $0xac] sm:$0xf]
      %v6846 = vld [vmem:[#allocation2 + $0xb0] sm:$0xf]
      %v6847 = vld [vmem:[#allocation2 + $0xb4] sm:$0xf]
      %v6848 = vld [vmem:[#allocation2 + $0xb8] sm:$0xf]
      %v6849 = vld [vmem:[#allocation2 + $0xbc] sm:$0xf]
      %v6850 = vld [vmem:[#allocation2 + $0xc0] sm:$0xf]
      %v6851 = vld [vmem:[#allocation2 + $0xc4] sm:$0xf]
      %v6852 = vld [vmem:[#allocation2 + $0xc8] sm:$0xf]
      %v6853 = vld [vmem:[#allocation2 + $0xcc] sm:$0xf]
      %v6854 = vld [vmem:[#allocation2 + $0xd0] sm:$0xf]
      %v6855 = vld [vmem:[#allocation2 + $0xd4] sm:$0xf]
      %v6856 = vld [vmem:[#allocation2 + $0xd8] sm:$0xf]
      %v6857 = vld [vmem:[#allocation2 + $0xdc] sm:$0xf]
      %v6858 = vld [vmem:[#allocation2 + $0xe0] sm:$0xf]
      %v6859 = vld [vmem:[#allocation2 + $0xe4] sm:$0xf]
      %v6860 = vld [vmem:[#allocation2 + $0xe8] sm:$0xf]
      %v6861 = vld [vmem:[#allocation2 + $0xec] sm:$0xf]
      %v6862 = vld [vmem:[#allocation2 + $0xf0] sm:$0xf]
      %v6863 = vld [vmem:[#allocation2 + $0xf4] sm:$0xf]
      %v6864 = vld [vmem:[#allocation2 + $0xf8] sm:$0x1]
      %s6865 = scalar_lea.vmem %s2, 16
      %v6866 = vld [vmem:[%s6865] sm:$0x3]
      %v6924 = vunpack.c.l.b16 %v6808
      %v6925 = vunpack.c.l.b16 %v6809
      %v6926 = vunpack.c.l.b16 %v6810
      %v6927 = vunpack.c.l.b16 %v6811
      %v6928 = vunpack.c.l.b16 %v6812
      %v6929 = vunpack.c.l.b16 %v6813
      %v6930 = vunpack.c.l.b16 %v6814
      %v6931 = vunpack.c.l.b16 %v6815
      %v6932 = vunpack.c.l.b16 %v6816
      %v6933 = vunpack.c.l.b16 %v6817
      %v6934 = vunpack.c.l.b16 %v6818
      %v6935 = vunpack.c.l.b16 %v6819
      %v6936 = vunpack.c.l.b16 %v6820
      %v6937 = vunpack.c.l.b16 %v6821
      %v6938 = vunpack.c.l.b16 %v6822
      %v6939 = vunpack.c.l.b16 %v6823
      %v6940 = vunpack.c.l.b16 %v6824
      %v6941 = vunpack.c.l.b16 %v6825
      %v6942 = vunpack.c.l.b16 %v6826
      %v6943 = vunpack.c.l.b16 %v6827
      %v6944 = vunpack.c.l.b16 %v6828
      %v6945 = vunpack.c.l.b16 %v6829
      %v6946 = vunpack.c.l.b16 %v6830
      %v6947 = vunpack.c.l.b16 %v6831
      %v6948 = vunpack.c.l.b16 %v6832
      %v6949 = vunpack.c.l.b16 %v6833
      %v6950 = vunpack.c.l.b16 %v6834
      %v6951 = vunpack.c.l.b16 %v6835
      %v6952 = vunpack.c.l.b16 %v6836
      %v6953 = vunpack.c.l.b16 %v6837
      %v6954 = vunpack.c.l.b16 %v6838
      %v6955 = vunpack.c.l.b16 %v6839
      %v6956 = vunpack.c.l.b16 %v6840
      %v6957 = vunpack.c.l.b16 %v6841
      %v6958 = vunpack.c.l.b16 %v6842
      %v6959 = vunpack.c.l.b16 %v6843
      %v6960 = vunpack.c.l.b16 %v6844
      %v6961 = vunpack.c.l.b16 %v6845
      %v6962 = vunpack.c.l.b16 %v6846
      %v6963 = vunpack.c.l.b16 %v6847
      %v6964 = vunpack.c.l.b16 %v6848
      %v6965 = vunpack.c.l.b16 %v6849
      %v6966 = vunpack.c.l.b16 %v6850
      %v6967 = vunpack.c.l.b16 %v6851
      %v6968 = vunpack.c.l.b16 %v6852
      %v6969 = vunpack.c.l.b16 %v6853
      %v6970 = vunpack.c.l.b16 %v6854
      %v6971 = vunpack.c.l.b16 %v6855
      %v6972 = vunpack.c.l.b16 %v6856
      %v6973 = vunpack.c.l.b16 %v6857
      %v6974 = vunpack.c.l.b16 %v6858
      %v6975 = vunpack.c.l.b16 %v6859
      %v6976 = vunpack.c.l.b16 %v6860
      %v6977 = vunpack.c.l.b16 %v6861
      %v6978 = vunpack.c.l.b16 %v6862
      %v6979 = vunpack.c.l.b16 %v6863
      %v6980 = vunpack.c.l.b16 %v6864
      %v6981 = vpack.c.b16 %v6925, %v6924
      %v6982 = vpack.c.b16 %v6927, %v6926
      %v6983 = vpack.c.b16 %v6929, %v6928
      %v6984 = vpack.c.b16 %v6931, %v6930
      %v6985 = vpack.c.b16 %v6933, %v6932
      %v6986 = vpack.c.b16 %v6935, %v6934
      %v6987 = vpack.c.b16 %v6937, %v6936
      %v6988 = vpack.c.b16 %v6939, %v6938
      %v6989 = vpack.c.b16 %v6941, %v6940
      %v6990 = vpack.c.b16 %v6943, %v6942
      %v6991 = vpack.c.b16 %v6945, %v6944
      %v6992 = vpack.c.b16 %v6947, %v6946
      %v6993 = vpack.c.b16 %v6949, %v6948
      %v6994 = vpack.c.b16 %v6951, %v6950
      %v6995 = vpack.c.b16 %v6953, %v6952
      %v6996 = vpack.c.b16 %v6955, %v6954
      %v6997 = vpack.c.b16 %v6957, %v6956
      %v6998 = vpack.c.b16 %v6959, %v6958
      %v6999 = vpack.c.b16 %v6961, %v6960
      %v7000 = vpack.c.b16 %v6963, %v6962
      %v7001 = vpack.c.b16 %v6965, %v6964
      %v7002 = vpack.c.b16 %v6967, %v6966
      %v7003 = vpack.c.b16 %v6969, %v6968
      %v7004 = vpack.c.b16 %v6971, %v6970
      %v7005 = vpack.c.b16 %v6973, %v6972
      %v7006 = vpack.c.b16 %v6975, %v6974
      %v7007 = vpack.c.b16 %v6977, %v6976
      %v7008 = vpack.c.b16 %v6979, %v6978
      %v7009 = vpack.c.b16 %v6980, %v6980
      %v7010 = vrot.slane %v6981, 1
      %v7011 = vrot.slane %v6982, 1
      %v7012 = vsel %vm2163, %v7010, %v7011
      %v7013 = vrot.slane %v6983, 1
      %v7014 = vsel %vm2163, %v7011, %v7013
      %v7015 = vrot.slane %v6984, 1
      %v7016 = vsel %vm2163, %v7013, %v7015
      %v7017 = vrot.slane %v6985, 1
      %v7018 = vsel %vm2163, %v7015, %v7017
      %v7019 = vrot.slane %v6986, 1
      %v7020 = vsel %vm2163, %v7017, %v7019
      %v7021 = vrot.slane %v6987, 1
      %v7022 = vsel %vm2163, %v7019, %v7021
      %v7023 = vrot.slane %v6988, 1
      %v7024 = vsel %vm2163, %v7021, %v7023
      %v7025 = vrot.slane %v6989, 1
      %v7026 = vsel %vm2163, %v7023, %v7025
      %v7027 = vrot.slane %v6990, 1
      %v7028 = vsel %vm2163, %v7025, %v7027
      %v7029 = vrot.slane %v6991, 1
      %v7030 = vsel %vm2163, %v7027, %v7029
      %v7031 = vrot.slane %v6992, 1
      %v7032 = vsel %vm2163, %v7029, %v7031
      %v7033 = vrot.slane %v6993, 1
      %v7034 = vsel %vm2163, %v7031, %v7033
      %v7035 = vrot.slane %v6994, 1
      %v7036 = vsel %vm2163, %v7033, %v7035
      %v7037 = vrot.slane %v6995, 1
      %v7038 = vsel %vm2163, %v7035, %v7037
      %v7039 = vrot.slane %v6996, 1
      %v7040 = vsel %vm2163, %v7037, %v7039
      %v7041 = vrot.slane %v6997, 1
      %v7042 = vsel %vm2163, %v7039, %v7041
      %v7043 = vrot.slane %v6998, 1
      %v7044 = vsel %vm2163, %v7041, %v7043
      %v7045 = vrot.slane %v6999, 1
      %v7046 = vsel %vm2163, %v7043, %v7045
      %v7047 = vrot.slane %v7000, 1
      %v7048 = vsel %vm2163, %v7045, %v7047
      %v7049 = vrot.slane %v7001, 1
      %v7050 = vsel %vm2163, %v7047, %v7049
      %v7051 = vrot.slane %v7002, 1
      %v7052 = vsel %vm2163, %v7049, %v7051
      %v7053 = vrot.slane %v7003, 1
      %v7054 = vsel %vm2163, %v7051, %v7053
      %v7055 = vrot.slane %v7004, 1
      %v7056 = vsel %vm2163, %v7053, %v7055
      %v7057 = vrot.slane %v7005, 1
      %v7058 = vsel %vm2163, %v7055, %v7057
      %v7059 = vrot.slane %v7006, 1
      %v7060 = vsel %vm2163, %v7057, %v7059
      %v7061 = vrot.slane %v7007, 1
      %v7062 = vsel %vm2163, %v7059, %v7061
      %v7063 = vrot.slane %v7008, 1
      %v7064 = vsel %vm2163, %v7061, %v7063
      %v7065 = vrot.slane %v7009, 1
      %v7066 = vsel %vm2163, %v7063, %v7065
      %v7068 = vsel %vm612, %v7012, 0
      %v7071 = vsel %vm612, %v7014, 0
      %v7074 = vsel %vm612, %v7016, 0
      %v7077 = vsel %vm612, %v7018, 0
      %v7080 = vsel %vm612, %v7020, 0
      %v7083 = vsel %vm612, %v7022, 0
      %v7086 = vsel %vm612, %v7024, 0
      %v7089 = vsel %vm612, %v7026, 0
      %v7092 = vsel %vm612, %v7028, 0
      %v7095 = vsel %vm612, %v7030, 0
      %v7098 = vsel %vm612, %v7032, 0
      %v7101 = vsel %vm612, %v7034, 0
      %v7104 = vsel %vm612, %v7036, 0
      %v7107 = vsel %vm612, %v7038, 0
      %v7110 = vsel %vm612, %v7040, 0
      %v7113 = vsel %vm612, %v7042, 0
      %v7116 = vsel %vm612, %v7044, 0
      %v7119 = vsel %vm612, %v7046, 0
      %v7122 = vsel %vm612, %v7048, 0
      %v7125 = vsel %vm612, %v7050, 0
      %v7128 = vsel %vm612, %v7052, 0
      %v7131 = vsel %vm612, %v7054, 0
      %v7134 = vsel %vm612, %v7056, 0
      %v7137 = vsel %vm612, %v7058, 0
      %v7140 = vsel %vm612, %v7060, 0
      %v7143 = vsel %vm612, %v7062, 0
      %v7146 = vsel %vm612, %v7064, 0
      %v7149 = vsel %vm612, %v7066, 0
      %v7152 = vand.u32 %v6866, %v700
      %7154 = vmatprep.subr.bf16.mxu0 0
      %7155 = vmatpush1.bf16.msra.mxu0 0
      %7156 = vmatprep.subr.bf16.mxu0 0
      %7157 = vmatpush1.bf16.msra.mxu0 0
      %7158 = vmatprep.subr.bf16.mxu0 0
      %7159 = vmatpush1.bf16.msra.mxu0 0
      %7160 = vmatprep.subr.bf16.mxu0 0
      %7161 = vmatpush1.bf16.msra.mxu0 0
      %7162 = vmatprep.subr.bf16.mxu0 0
      %7163 = vmatpush1.bf16.msra.mxu0 0
      %7164 = vmatprep.subr.bf16.mxu0 0
      %7165 = vmatpush1.bf16.msra.mxu0 0
      %7166 = vmatprep.subr.bf16.mxu0 0
      %7167 = vmatpush1.bf16.msra.mxu0 0
      %7168 = vmatprep.subr.bf16.mxu0 0
      %7169 = vmatpush1.bf16.msra.mxu0 %v7152
      %7170 = vmatprep.subr.bf16.mxu0 0
      %7171 = vmatpush2.bf16.msra.mxu0 0
      %7172 = vmatprep.subr.bf16.mxu0 0
      %7173 = vmatpush2.bf16.msra.mxu0 0
      %7174 = vmatprep.subr.bf16.mxu0 0
      %7175 = vmatpush2.bf16.msra.mxu0 0
      %7176 = vmatprep.subr.bf16.mxu0 0
      %7177 = vmatpush2.bf16.msra.mxu0 0
      %7178 = vmatprep.subr.bf16.mxu0 0
      %7179 = vmatpush2.bf16.msra.mxu0 0
      %7180 = vmatprep.subr.bf16.mxu0 0
      %7181 = vmatpush2.bf16.msra.mxu0 0
      %7182 = vmatprep.subr.bf16.mxu0 0
      %7183 = vmatpush2.bf16.msra.mxu0 0
      %7184 = vmatprep.subr.bf16.mxu0 0
      %7185 = vmatpush2.bf16.msra.mxu0 0
      %7186 = vmatprep.mubr.bf16.mxu0 0
      %7187 = vmatmul.mubr.bf16.gmra.mxu0 %v7068
      %v7188 = vpop.f32.mrf.mxu0
      %v7189 = vadd.f32 0.0, %v7188
      %v7190 = vpop.f32.mrf.mxu0
      %v7191 = vpop.f32.mrf.mxu0
      %v7192 = vadd.f32 0.0, %v7191
      %v7193 = vpop.f32.mrf.mxu0
      %7194 = vmatprep.mubr.bf16.mxu0 0
      %7195 = vmatmul.mubr.bf16.gmra.mxu0 %v7071
      %v7196 = vpop.f32.mrf.mxu0
      %v7197 = vadd.f32 0.0, %v7196
      %v7198 = vpop.f32.mrf.mxu0
      %v7199 = vpop.f32.mrf.mxu0
      %v7200 = vadd.f32 0.0, %v7199
      %v7201 = vpop.f32.mrf.mxu0
      %7202 = vmatprep.mubr.bf16.mxu0 0
      %7203 = vmatmul.mubr.bf16.gmra.mxu0 %v7074
      %v7204 = vpop.f32.mrf.mxu0
      %v7205 = vadd.f32 0.0, %v7204
      %v7206 = vpop.f32.mrf.mxu0
      %v7207 = vpop.f32.mrf.mxu0
      %v7208 = vadd.f32 0.0, %v7207
      %v7209 = vpop.f32.mrf.mxu0
      %7210 = vmatprep.mubr.bf16.mxu0 0
      %7211 = vmatmul.mubr.bf16.gmra.mxu0 %v7077
      %v7212 = vpop.f32.mrf.mxu0
      %v7213 = vadd.f32 0.0, %v7212
      %v7214 = vpop.f32.mrf.mxu0
      %v7215 = vpop.f32.mrf.mxu0
      %v7216 = vadd.f32 0.0, %v7215
      %v7217 = vpop.f32.mrf.mxu0
      %7218 = vmatprep.mubr.bf16.mxu0 0
      %7219 = vmatmul.mubr.bf16.gmra.mxu0 %v7080
      %v7220 = vpop.f32.mrf.mxu0
      %v7221 = vadd.f32 0.0, %v7220
      %v7222 = vpop.f32.mrf.mxu0
      %v7223 = vpop.f32.mrf.mxu0
      %v7224 = vadd.f32 0.0, %v7223
      %v7225 = vpop.f32.mrf.mxu0
      %7226 = vmatprep.mubr.bf16.mxu0 0
      %7227 = vmatmul.mubr.bf16.gmra.mxu0 %v7083
      %v7228 = vpop.f32.mrf.mxu0
      %v7229 = vadd.f32 0.0, %v7228
      %v7230 = vpop.f32.mrf.mxu0
      %v7231 = vpop.f32.mrf.mxu0
      %v7232 = vadd.f32 0.0, %v7231
      %v7233 = vpop.f32.mrf.mxu0
      %7234 = vmatprep.mubr.bf16.mxu0 0
      %7235 = vmatmul.mubr.bf16.gmra.mxu0 %v7086
      %v7236 = vpop.f32.mrf.mxu0
      %v7237 = vadd.f32 0.0, %v7236
      %v7238 = vpop.f32.mrf.mxu0
      %v7239 = vpop.f32.mrf.mxu0
      %v7240 = vadd.f32 0.0, %v7239
      %v7241 = vpop.f32.mrf.mxu0
      %7242 = vmatprep.mubr.bf16.mxu0 0
      %7243 = vmatmul.mubr.bf16.gmra.mxu0 %v7089
      %v7244 = vpop.f32.mrf.mxu0
      %v7245 = vadd.f32 0.0, %v7244
      %v7246 = vpop.f32.mrf.mxu0
      %v7247 = vpop.f32.mrf.mxu0
      %v7248 = vadd.f32 0.0, %v7247
      %v7249 = vpop.f32.mrf.mxu0
      %7250 = vmatprep.mubr.bf16.mxu0 0
      %7251 = vmatmul.mubr.bf16.gmra.mxu0 %v7092
      %v7252 = vpop.f32.mrf.mxu0
      %v7253 = vadd.f32 0.0, %v7252
      %v7254 = vpop.f32.mrf.mxu0
      %v7255 = vpop.f32.mrf.mxu0
      %v7256 = vadd.f32 0.0, %v7255
      %v7257 = vpop.f32.mrf.mxu0
      %7258 = vmatprep.mubr.bf16.mxu0 0
      %7259 = vmatmul.mubr.bf16.gmra.mxu0 %v7095
      %v7260 = vpop.f32.mrf.mxu0
      %v7261 = vadd.f32 0.0, %v7260
      %v7262 = vpop.f32.mrf.mxu0
      %v7263 = vpop.f32.mrf.mxu0
      %v7264 = vadd.f32 0.0, %v7263
      %v7265 = vpop.f32.mrf.mxu0
      %7266 = vmatprep.mubr.bf16.mxu0 0
      %7267 = vmatmul.mubr.bf16.gmra.mxu0 %v7098
      %v7268 = vpop.f32.mrf.mxu0
      %v7269 = vadd.f32 0.0, %v7268
      %v7270 = vpop.f32.mrf.mxu0
      %v7271 = vpop.f32.mrf.mxu0
      %v7272 = vadd.f32 0.0, %v7271
      %v7273 = vpop.f32.mrf.mxu0
      %7274 = vmatprep.mubr.bf16.mxu0 0
      %7275 = vmatmul.mubr.bf16.gmra.mxu0 %v7101
      %v7276 = vpop.f32.mrf.mxu0
      %v7277 = vadd.f32 0.0, %v7276
      %v7278 = vpop.f32.mrf.mxu0
      %v7279 = vpop.f32.mrf.mxu0
      %v7280 = vadd.f32 0.0, %v7279
      %v7281 = vpop.f32.mrf.mxu0
      %7282 = vmatprep.mubr.bf16.mxu0 0
      %7283 = vmatmul.mubr.bf16.gmra.mxu0 %v7104
      %v7284 = vpop.f32.mrf.mxu0
      %v7285 = vadd.f32 0.0, %v7284
      %v7286 = vpop.f32.mrf.mxu0
      %v7287 = vpop.f32.mrf.mxu0
      %v7288 = vadd.f32 0.0, %v7287
      %v7289 = vpop.f32.mrf.mxu0
      %7290 = vmatprep.mubr.bf16.mxu0 0
      %7291 = vmatmul.mubr.bf16.gmra.mxu0 %v7107
      %v7292 = vpop.f32.mrf.mxu0
      %v7293 = vadd.f32 0.0, %v7292
      %v7294 = vpop.f32.mrf.mxu0
      %v7295 = vpop.f32.mrf.mxu0
      %v7296 = vadd.f32 0.0, %v7295
      %v7297 = vpop.f32.mrf.mxu0
      %7298 = vmatprep.mubr.bf16.mxu0 0
      %7299 = vmatmul.mubr.bf16.gmra.mxu0 %v7110
      %v7300 = vpop.f32.mrf.mxu0
      %v7301 = vadd.f32 0.0, %v7300
      %v7302 = vpop.f32.mrf.mxu0
      %v7303 = vpop.f32.mrf.mxu0
      %v7304 = vadd.f32 0.0, %v7303
      %v7305 = vpop.f32.mrf.mxu0
      %7306 = vmatprep.mubr.bf16.mxu0 0
      %7307 = vmatmul.mubr.bf16.gmra.mxu0 %v7113
      %v7308 = vpop.f32.mrf.mxu0
      %v7309 = vadd.f32 0.0, %v7308
      %v7310 = vpop.f32.mrf.mxu0
      %v7311 = vpop.f32.mrf.mxu0
      %v7312 = vadd.f32 0.0, %v7311
      %v7313 = vpop.f32.mrf.mxu0
      %7314 = vmatprep.mubr.bf16.mxu0 0
      %7315 = vmatmul.mubr.bf16.gmra.mxu0 %v7116
      %v7316 = vpop.f32.mrf.mxu0
      %v7317 = vadd.f32 0.0, %v7316
      %v7318 = vpop.f32.mrf.mxu0
      %v7319 = vpop.f32.mrf.mxu0
      %v7320 = vadd.f32 0.0, %v7319
      %v7321 = vpop.f32.mrf.mxu0
      %7322 = vmatprep.mubr.bf16.mxu0 0
      %7323 = vmatmul.mubr.bf16.gmra.mxu0 %v7119
      %v7324 = vpop.f32.mrf.mxu0
      %v7325 = vadd.f32 0.0, %v7324
      %v7326 = vpop.f32.mrf.mxu0
      %v7327 = vpop.f32.mrf.mxu0
      %v7328 = vadd.f32 0.0, %v7327
      %v7329 = vpop.f32.mrf.mxu0
      %7330 = vmatprep.mubr.bf16.mxu0 0
      %7331 = vmatmul.mubr.bf16.gmra.mxu0 %v7122
      %v7332 = vpop.f32.mrf.mxu0
      %v7333 = vadd.f32 0.0, %v7332
      %v7334 = vpop.f32.mrf.mxu0
      %v7335 = vpop.f32.mrf.mxu0
      %v7336 = vadd.f32 0.0, %v7335
      %v7337 = vpop.f32.mrf.mxu0
      %7338 = vmatprep.mubr.bf16.mxu0 0
      %7339 = vmatmul.mubr.bf16.gmra.mxu0 %v7125
      %v7340 = vpop.f32.mrf.mxu0
      %v7341 = vadd.f32 0.0, %v7340
      %v7342 = vpop.f32.mrf.mxu0
      %v7343 = vpop.f32.mrf.mxu0
      %v7344 = vadd.f32 0.0, %v7343
      %v7345 = vpop.f32.mrf.mxu0
      %7346 = vmatprep.mubr.bf16.mxu0 0
      %7347 = vmatmul.mubr.bf16.gmra.mxu0 %v7128
      %v7348 = vpop.f32.mrf.mxu0
      %v7349 = vadd.f32 0.0, %v7348
      %v7350 = vpop.f32.mrf.mxu0
      %v7351 = vpop.f32.mrf.mxu0
      %v7352 = vadd.f32 0.0, %v7351
      %v7353 = vpop.f32.mrf.mxu0
      %7354 = vmatprep.mubr.bf16.mxu0 0
      %7355 = vmatmul.mubr.bf16.gmra.mxu0 %v7131
      %v7356 = vpop.f32.mrf.mxu0
      %v7357 = vadd.f32 0.0, %v7356
      %v7358 = vpop.f32.mrf.mxu0
      %v7359 = vpop.f32.mrf.mxu0
      %v7360 = vadd.f32 0.0, %v7359
      %v7361 = vpop.f32.mrf.mxu0
      %7362 = vmatprep.mubr.bf16.mxu0 0
      %7363 = vmatmul.mubr.bf16.gmra.mxu0 %v7134
      %v7364 = vpop.f32.mrf.mxu0
      %v7365 = vadd.f32 0.0, %v7364
      %v7366 = vpop.f32.mrf.mxu0
      %v7367 = vpop.f32.mrf.mxu0
      %v7368 = vadd.f32 0.0, %v7367
      %v7369 = vpop.f32.mrf.mxu0
      %7370 = vmatprep.mubr.bf16.mxu0 0
      %7371 = vmatmul.mubr.bf16.gmra.mxu0 %v7137
      %v7372 = vpop.f32.mrf.mxu0
      %v7373 = vadd.f32 0.0, %v7372
      %v7374 = vpop.f32.mrf.mxu0
      %v7375 = vpop.f32.mrf.mxu0
      %v7376 = vadd.f32 0.0, %v7375
      %v7377 = vpop.f32.mrf.mxu0
      %7378 = vmatprep.mubr.bf16.mxu0 0
      %7379 = vmatmul.mubr.bf16.gmra.mxu0 %v7140
      %v7380 = vpop.f32.mrf.mxu0
      %v7381 = vadd.f32 0.0, %v7380
      %v7382 = vpop.f32.mrf.mxu0
      %v7383 = vpop.f32.mrf.mxu0
      %v7384 = vadd.f32 0.0, %v7383
      %v7385 = vpop.f32.mrf.mxu0
      %7386 = vmatprep.mubr.bf16.mxu0 0
      %7387 = vmatmul.mubr.bf16.gmra.mxu0 %v7143
      %v7388 = vpop.f32.mrf.mxu0
      %v7389 = vadd.f32 0.0, %v7388
      %v7390 = vpop.f32.mrf.mxu0
      %v7391 = vpop.f32.mrf.mxu0
      %v7392 = vadd.f32 0.0, %v7391
      %v7393 = vpop.f32.mrf.mxu0
      %7394 = vmatprep.mubr.bf16.mxu0 0
      %7395 = vmatmul.mubr.bf16.gmra.mxu0 %v7146
      %v7396 = vpop.f32.mrf.mxu0
      %v7397 = vadd.f32 0.0, %v7396
      %v7398 = vpop.f32.mrf.mxu0
      %v7399 = vpop.f32.mrf.mxu0
      %v7400 = vadd.f32 0.0, %v7399
      %v7401 = vpop.f32.mrf.mxu0
      %7402 = vmatprep.mubr.bf16.mxu0 0
      %7403 = vmatmul.mubr.bf16.gmra.mxu0 %v7149
      %v7404 = vpop.f32.mrf.mxu0
      %v7405 = vadd.f32 0.0, %v7404
      %v7406 = vpop.f32.mrf.mxu0
      %v7407 = vpop.f32.mrf.mxu0
      %v7408 = vadd.f32 0.0, %v7407
      %v7409 = vpop.f32.mrf.mxu0
      %7410 = vdwg.mxu0
      %v7411 = vld [vmem:[#allocation3] sm:$0xff]
      %v7412 = vld [vmem:[#allocation3 + $0x8] sm:$0xff]
      %v7413 = vld [vmem:[#allocation3 + $0x10] sm:$0xff]
      %v7414 = vld [vmem:[#allocation3 + $0x18] sm:$0xff]
      %v7415 = vld [vmem:[#allocation3 + $0x20] sm:$0xff]
      %v7416 = vld [vmem:[#allocation3 + $0x28] sm:$0xff]
      %v7417 = vld [vmem:[#allocation3 + $0x30] sm:$0xff]
      %v7418 = vld [vmem:[#allocation3 + $0x38] sm:$0xff]
      %v7419 = vld [vmem:[#allocation3 + $0x40] sm:$0xff]
      %v7420 = vld [vmem:[#allocation3 + $0x48] sm:$0xff]
      %v7421 = vld [vmem:[#allocation3 + $0x50] sm:$0xff]
      %v7422 = vld [vmem:[#allocation3 + $0x58] sm:$0xff]
      %v7423 = vld [vmem:[#allocation3 + $0x60] sm:$0xff]
      %v7424 = vld [vmem:[#allocation3 + $0x68] sm:$0xff]
      %v7425 = vld [vmem:[#allocation3 + $0x70] sm:$0xff]
      %v7426 = vld [vmem:[#allocation3 + $0x78] sm:$0xff]
      %v7427 = vld [vmem:[#allocation3 + $0x80] sm:$0xff]
      %v7428 = vld [vmem:[#allocation3 + $0x88] sm:$0xff]
      %v7429 = vld [vmem:[#allocation3 + $0x90] sm:$0xff]
      %v7430 = vld [vmem:[#allocation3 + $0x98] sm:$0xff]
      %v7431 = vld [vmem:[#allocation3 + $0xa0] sm:$0xff]
      %v7432 = vld [vmem:[#allocation3 + $0xa8] sm:$0xff]
      %v7433 = vld [vmem:[#allocation3 + $0xb0] sm:$0xff]
      %v7434 = vld [vmem:[#allocation3 + $0xb8] sm:$0xff]
      %v7435 = vld [vmem:[#allocation3 + $0xc0] sm:$0xff]
      %v7436 = vld [vmem:[#allocation3 + $0xc8] sm:$0xff]
      %v7437 = vld [vmem:[#allocation3 + $0xd0] sm:$0xff]
      %v7438 = vld [vmem:[#allocation3 + $0xd8] sm:$0xff]
      %v7439 = vld [vmem:[#allocation3 + $0xe0] sm:$0xff]
      %v7440 = vld [vmem:[#allocation3 + $0xe8] sm:$0xff]
      %v7441 = vld [vmem:[#allocation3 + $0xf0] sm:$0xff]
      %v7442 = vld [vmem:[#allocation3 + $0xf8] sm:$0xff]
      %v7443 = vld [vmem:[#allocation3 + $0x100] sm:$0xff]
      %v7444 = vld [vmem:[#allocation3 + $0x108] sm:$0xff]
      %v7445 = vld [vmem:[#allocation3 + $0x110] sm:$0xff]
      %v7446 = vld [vmem:[#allocation3 + $0x118] sm:$0xff]
      %v7447 = vld [vmem:[#allocation3 + $0x120] sm:$0xff]
      %v7448 = vld [vmem:[#allocation3 + $0x128] sm:$0xff]
      %v7449 = vld [vmem:[#allocation3 + $0x130] sm:$0xff]
      %v7450 = vld [vmem:[#allocation3 + $0x138] sm:$0xff]
      %v7451 = vld [vmem:[#allocation3 + $0x140] sm:$0xff]
      %v7452 = vld [vmem:[#allocation3 + $0x148] sm:$0xff]
      %v7453 = vld [vmem:[#allocation3 + $0x150] sm:$0xff]
      %v7454 = vld [vmem:[#allocation3 + $0x158] sm:$0xff]
      %v7455 = vld [vmem:[#allocation3 + $0x160] sm:$0xff]
      %v7456 = vld [vmem:[#allocation3 + $0x168] sm:$0xff]
      %v7457 = vld [vmem:[#allocation3 + $0x170] sm:$0xff]
      %v7458 = vld [vmem:[#allocation3 + $0x178] sm:$0xff]
      %v7459 = vld [vmem:[#allocation3 + $0x180] sm:$0xff]
      %v7460 = vld [vmem:[#allocation3 + $0x188] sm:$0xff]
      %v7461 = vld [vmem:[#allocation3 + $0x190] sm:$0xff]
      %v7462 = vld [vmem:[#allocation3 + $0x198] sm:$0xff]
      %v7463 = vld [vmem:[#allocation3 + $0x1a0] sm:$0xff]
      %v7464 = vld [vmem:[#allocation3 + $0x1a8] sm:$0xff]
      %v7465 = vld [vmem:[#allocation3 + $0x1b0] sm:$0xff]
      %v7466 = vld [vmem:[#allocation3 + $0x1b8] sm:$0xff]
      %v7467 = vadd.f32 %v7411, %v7189
      %v7468 = vadd.f32 %v7412, %v7192
      %v7469 = vadd.f32 %v7413, %v7197
      %v7470 = vadd.f32 %v7414, %v7200
      %v7471 = vadd.f32 %v7415, %v7205
      %v7472 = vadd.f32 %v7416, %v7208
      %v7473 = vadd.f32 %v7417, %v7213
      %v7474 = vadd.f32 %v7418, %v7216
      %v7475 = vadd.f32 %v7419, %v7221
      %v7476 = vadd.f32 %v7420, %v7224
      %v7477 = vadd.f32 %v7421, %v7229
      %v7478 = vadd.f32 %v7422, %v7232
      %v7479 = vadd.f32 %v7423, %v7237
      %v7480 = vadd.f32 %v7424, %v7240
      %v7481 = vadd.f32 %v7425, %v7245
      %v7482 = vadd.f32 %v7426, %v7248
      %v7483 = vadd.f32 %v7427, %v7253
      %v7484 = vadd.f32 %v7428, %v7256
      %v7485 = vadd.f32 %v7429, %v7261
      %v7486 = vadd.f32 %v7430, %v7264
      %v7487 = vadd.f32 %v7431, %v7269
      %v7488 = vadd.f32 %v7432, %v7272
      %v7489 = vadd.f32 %v7433, %v7277
      %v7490 = vadd.f32 %v7434, %v7280
      %v7491 = vadd.f32 %v7435, %v7285
      %v7492 = vadd.f32 %v7436, %v7288
      %v7493 = vadd.f32 %v7437, %v7293
      %v7494 = vadd.f32 %v7438, %v7296
      %v7495 = vadd.f32 %v7439, %v7301
      %v7496 = vadd.f32 %v7440, %v7304
      %v7497 = vadd.f32 %v7441, %v7309
      %v7498 = vadd.f32 %v7442, %v7312
      %v7499 = vadd.f32 %v7443, %v7317
      %v7500 = vadd.f32 %v7444, %v7320
      %v7501 = vadd.f32 %v7445, %v7325
      %v7502 = vadd.f32 %v7446, %v7328
      %v7503 = vadd.f32 %v7447, %v7333
      %v7504 = vadd.f32 %v7448, %v7336
      %v7505 = vadd.f32 %v7449, %v7341
      %v7506 = vadd.f32 %v7450, %v7344
      %v7507 = vadd.f32 %v7451, %v7349
      %v7508 = vadd.f32 %v7452, %v7352
      %v7509 = vadd.f32 %v7453, %v7357
      %v7510 = vadd.f32 %v7454, %v7360
      %v7511 = vadd.f32 %v7455, %v7365
      %v7512 = vadd.f32 %v7456, %v7368
      %v7513 = vadd.f32 %v7457, %v7373
      %v7514 = vadd.f32 %v7458, %v7376
      %v7515 = vadd.f32 %v7459, %v7381
      %v7516 = vadd.f32 %v7460, %v7384
      %v7517 = vadd.f32 %v7461, %v7389
      %v7518 = vadd.f32 %v7462, %v7392
      %v7519 = vadd.f32 %v7463, %v7397
      %v7520 = vadd.f32 %v7464, %v7400
      %v7521 = vadd.f32 %v7465, %v7405
      %v7522 = vadd.f32 %v7466, %v7408
      %7523 = vst.msk [vmem:[#allocation3] sm:$0xff] %vm961, %v7467
      %7524 = vst.msk [vmem:[#allocation3 + $0x8] sm:$0xff] %vm961, %v7468
      %7525 = vst.msk [vmem:[#allocation3 + $0x10] sm:$0xff] %vm961, %v7469
      %7526 = vst.msk [vmem:[#allocation3 + $0x18] sm:$0xff] %vm961, %v7470
      %7527 = vst.msk [vmem:[#allocation3 + $0x20] sm:$0xff] %vm961, %v7471
      %7528 = vst.msk [vmem:[#allocation3 + $0x28] sm:$0xff] %vm961, %v7472
      %7529 = vst.msk [vmem:[#allocation3 + $0x30] sm:$0xff] %vm961, %v7473
      %7530 = vst.msk [vmem:[#allocation3 + $0x38] sm:$0xff] %vm961, %v7474
      %7531 = vst.msk [vmem:[#allocation3 + $0x40] sm:$0xff] %vm961, %v7475
      %7532 = vst.msk [vmem:[#allocation3 + $0x48] sm:$0xff] %vm961, %v7476
      %7533 = vst.msk [vmem:[#allocation3 + $0x50] sm:$0xff] %vm961, %v7477
      %7534 = vst.msk [vmem:[#allocation3 + $0x58] sm:$0xff] %vm961, %v7478
      %7535 = vst.msk [vmem:[#allocation3 + $0x60] sm:$0xff] %vm961, %v7479
      %7536 = vst.msk [vmem:[#allocation3 + $0x68] sm:$0xff] %vm961, %v7480
      %7537 = vst.msk [vmem:[#allocation3 + $0x70] sm:$0xff] %vm961, %v7481
      %7538 = vst.msk [vmem:[#allocation3 + $0x78] sm:$0xff] %vm961, %v7482
      %7539 = vst.msk [vmem:[#allocation3 + $0x80] sm:$0xff] %vm961, %v7483
      %7540 = vst.msk [vmem:[#allocation3 + $0x88] sm:$0xff] %vm961, %v7484
      %7541 = vst.msk [vmem:[#allocation3 + $0x90] sm:$0xff] %vm961, %v7485
      %7542 = vst.msk [vmem:[#allocation3 + $0x98] sm:$0xff] %vm961, %v7486
      %7543 = vst.msk [vmem:[#allocation3 + $0xa0] sm:$0xff] %vm961, %v7487
      %7544 = vst.msk [vmem:[#allocation3 + $0xa8] sm:$0xff] %vm961, %v7488
      %7545 = vst.msk [vmem:[#allocation3 + $0xb0] sm:$0xff] %vm961, %v7489
      %7546 = vst.msk [vmem:[#allocation3 + $0xb8] sm:$0xff] %vm961, %v7490
      %7547 = vst.msk [vmem:[#allocation3 + $0xc0] sm:$0xff] %vm961, %v7491
      %7548 = vst.msk [vmem:[#allocation3 + $0xc8] sm:$0xff] %vm961, %v7492
      %7549 = vst.msk [vmem:[#allocation3 + $0xd0] sm:$0xff] %vm961, %v7493
      %7550 = vst.msk [vmem:[#allocation3 + $0xd8] sm:$0xff] %vm961, %v7494
      %7551 = vst.msk [vmem:[#allocation3 + $0xe0] sm:$0xff] %vm961, %v7495
      %7552 = vst.msk [vmem:[#allocation3 + $0xe8] sm:$0xff] %vm961, %v7496
      %7553 = vst.msk [vmem:[#allocation3 + $0xf0] sm:$0xff] %vm961, %v7497
      %7554 = vst.msk [vmem:[#allocation3 + $0xf8] sm:$0xff] %vm961, %v7498
      %7555 = vst.msk [vmem:[#allocation3 + $0x100] sm:$0xff] %vm961, %v7499
      %7556 = vst.msk [vmem:[#allocation3 + $0x108] sm:$0xff] %vm961, %v7500
      %7557 = vst.msk [vmem:[#allocation3 + $0x110] sm:$0xff] %vm961, %v7501
      %7558 = vst.msk [vmem:[#allocation3 + $0x118] sm:$0xff] %vm961, %v7502
      %7559 = vst.msk [vmem:[#allocation3 + $0x120] sm:$0xff] %vm961, %v7503
      %7560 = vst.msk [vmem:[#allocation3 + $0x128] sm:$0xff] %vm961, %v7504
      %7561 = vst.msk [vmem:[#allocation3 + $0x130] sm:$0xff] %vm961, %v7505
      %7562 = vst.msk [vmem:[#allocation3 + $0x138] sm:$0xff] %vm961, %v7506
      %7563 = vst.msk [vmem:[#allocation3 + $0x140] sm:$0xff] %vm961, %v7507
      %7564 = vst.msk [vmem:[#allocation3 + $0x148] sm:$0xff] %vm961, %v7508
      %7565 = vst.msk [vmem:[#allocation3 + $0x150] sm:$0xff] %vm961, %v7509
      %7566 = vst.msk [vmem:[#allocation3 + $0x158] sm:$0xff] %vm961, %v7510
      %7567 = vst.msk [vmem:[#allocation3 + $0x160] sm:$0xff] %vm961, %v7511
      %7568 = vst.msk [vmem:[#allocation3 + $0x168] sm:$0xff] %vm961, %v7512
      %7569 = vst.msk [vmem:[#allocation3 + $0x170] sm:$0xff] %vm961, %v7513
      %7570 = vst.msk [vmem:[#allocation3 + $0x178] sm:$0xff] %vm961, %v7514
      %7571 = vst.msk [vmem:[#allocation3 + $0x180] sm:$0xff] %vm961, %v7515
      %7572 = vst.msk [vmem:[#allocation3 + $0x188] sm:$0xff] %vm961, %v7516
      %7573 = vst.msk [vmem:[#allocation3 + $0x190] sm:$0xff] %vm961, %v7517
      %7574 = vst.msk [vmem:[#allocation3 + $0x198] sm:$0xff] %vm961, %v7518
      %7575 = vst.msk [vmem:[#allocation3 + $0x1a0] sm:$0xff] %vm961, %v7519
      %7576 = vst.msk [vmem:[#allocation3 + $0x1a8] sm:$0xff] %vm961, %v7520
      %7577 = vst.msk [vmem:[#allocation3 + $0x1b0] sm:$0xff] %vm961, %v7521
      %7578 = vst.msk [vmem:[#allocation3 + $0x1b8] sm:$0xff] %vm961, %v7522
      %v7579 = vld [vmem:[#allocation3] sm:$0xff]
      %v7580 = vld [vmem:[#allocation3 + $0x8] sm:$0xff]
      %v7581 = vld [vmem:[#allocation3 + $0x10] sm:$0xff]
      %v7582 = vld [vmem:[#allocation3 + $0x18] sm:$0xff]
      %v7583 = vld [vmem:[#allocation3 + $0x20] sm:$0xff]
      %v7584 = vld [vmem:[#allocation3 + $0x28] sm:$0xff]
      %v7585 = vld [vmem:[#allocation3 + $0x30] sm:$0xff]
      %v7586 = vld [vmem:[#allocation3 + $0x38] sm:$0xff]
      %v7587 = vld [vmem:[#allocation3 + $0x40] sm:$0xff]
      %v7588 = vld [vmem:[#allocation3 + $0x48] sm:$0xff]
      %v7589 = vld [vmem:[#allocation3 + $0x50] sm:$0xff]
      %v7590 = vld [vmem:[#allocation3 + $0x58] sm:$0xff]
      %v7591 = vld [vmem:[#allocation3 + $0x60] sm:$0xff]
      %v7592 = vld [vmem:[#allocation3 + $0x68] sm:$0xff]
      %v7593 = vld [vmem:[#allocation3 + $0x70] sm:$0xff]
      %v7594 = vld [vmem:[#allocation3 + $0x78] sm:$0xff]
      %v7595 = vld [vmem:[#allocation3 + $0x80] sm:$0xff]
      %v7596 = vld [vmem:[#allocation3 + $0x88] sm:$0xff]
      %v7597 = vld [vmem:[#allocation3 + $0x90] sm:$0xff]
      %v7598 = vld [vmem:[#allocation3 + $0x98] sm:$0xff]
      %v7599 = vld [vmem:[#allocation3 + $0xa0] sm:$0xff]
      %v7600 = vld [vmem:[#allocation3 + $0xa8] sm:$0xff]
      %v7601 = vld [vmem:[#allocation3 + $0xb0] sm:$0xff]
      %v7602 = vld [vmem:[#allocation3 + $0xb8] sm:$0xff]
      %v7603 = vld [vmem:[#allocation3 + $0xc0] sm:$0xff]
      %v7604 = vld [vmem:[#allocation3 + $0xc8] sm:$0xff]
      %v7605 = vld [vmem:[#allocation3 + $0xd0] sm:$0xff]
      %v7606 = vld [vmem:[#allocation3 + $0xd8] sm:$0xff]
      %v7607 = vld [vmem:[#allocation3 + $0xe0] sm:$0xff]
      %v7608 = vld [vmem:[#allocation3 + $0xe8] sm:$0xff]
      %v7609 = vld [vmem:[#allocation3 + $0xf0] sm:$0xff]
      %v7610 = vld [vmem:[#allocation3 + $0xf8] sm:$0xff]
      %v7611 = vld [vmem:[#allocation3 + $0x100] sm:$0xff]
      %v7612 = vld [vmem:[#allocation3 + $0x108] sm:$0xff]
      %v7613 = vld [vmem:[#allocation3 + $0x110] sm:$0xff]
      %v7614 = vld [vmem:[#allocation3 + $0x118] sm:$0xff]
      %v7615 = vld [vmem:[#allocation3 + $0x120] sm:$0xff]
      %v7616 = vld [vmem:[#allocation3 + $0x128] sm:$0xff]
      %v7617 = vld [vmem:[#allocation3 + $0x130] sm:$0xff]
      %v7618 = vld [vmem:[#allocation3 + $0x138] sm:$0xff]
      %v7619 = vld [vmem:[#allocation3 + $0x140] sm:$0xff]
      %v7620 = vld [vmem:[#allocation3 + $0x148] sm:$0xff]
      %v7621 = vld [vmem:[#allocation3 + $0x150] sm:$0xff]
      %v7622 = vld [vmem:[#allocation3 + $0x158] sm:$0xff]
      %v7623 = vld [vmem:[#allocation3 + $0x160] sm:$0xff]
      %v7624 = vld [vmem:[#allocation3 + $0x168] sm:$0xff]
      %v7625 = vld [vmem:[#allocation3 + $0x170] sm:$0xff]
      %v7626 = vld [vmem:[#allocation3 + $0x178] sm:$0xff]
      %v7627 = vld [vmem:[#allocation3 + $0x180] sm:$0xff]
      %v7628 = vld [vmem:[#allocation3 + $0x188] sm:$0xff]
      %v7629 = vld [vmem:[#allocation3 + $0x190] sm:$0xff]
      %v7630 = vld [vmem:[#allocation3 + $0x198] sm:$0xff]
      %v7631 = vld [vmem:[#allocation3 + $0x1a0] sm:$0xff]
      %v7632 = vld [vmem:[#allocation3 + $0x1a8] sm:$0xff]
      %v7633 = vld [vmem:[#allocation3 + $0x1b0] sm:$0xff]
      %v7634 = vld [vmem:[#allocation3 + $0x1b8] sm:$0xff]
      %v7635 = vld [vmem:[%s3] sm:$0x1]
      %v7637 = vlaneseq
      %v7638 = vshrl.u32 %v7637, 7
      %v7639 = vsub.s32 0, %v7638
      %v7640 = vrot.slane %v7635, %v7639
      %v7642 = vadd.f32 %v7579, %v7640
      %v7643 = vadd.f32 %v7580, %v7640
      %v7644 = vadd.f32 %v7581, %v7640
      %v7645 = vadd.f32 %v7582, %v7640
      %v7646 = vadd.f32 %v7583, %v7640
      %v7647 = vadd.f32 %v7584, %v7640
      %v7648 = vadd.f32 %v7585, %v7640
      %v7649 = vadd.f32 %v7586, %v7640
      %v7650 = vadd.f32 %v7587, %v7640
      %v7651 = vadd.f32 %v7588, %v7640
      %v7652 = vadd.f32 %v7589, %v7640
      %v7653 = vadd.f32 %v7590, %v7640
      %v7654 = vadd.f32 %v7591, %v7640
      %v7655 = vadd.f32 %v7592, %v7640
      %v7656 = vadd.f32 %v7593, %v7640
      %v7657 = vadd.f32 %v7594, %v7640
      %v7658 = vadd.f32 %v7595, %v7640
      %v7659 = vadd.f32 %v7596, %v7640
      %v7660 = vadd.f32 %v7597, %v7640
      %v7661 = vadd.f32 %v7598, %v7640
      %v7662 = vadd.f32 %v7599, %v7640
      %v7663 = vadd.f32 %v7600, %v7640
      %v7664 = vadd.f32 %v7601, %v7640
      %v7665 = vadd.f32 %v7602, %v7640
      %v7666 = vadd.f32 %v7603, %v7640
      %v7667 = vadd.f32 %v7604, %v7640
      %v7668 = vadd.f32 %v7605, %v7640
      %v7669 = vadd.f32 %v7606, %v7640
      %v7670 = vadd.f32 %v7607, %v7640
      %v7671 = vadd.f32 %v7608, %v7640
      %v7672 = vadd.f32 %v7609, %v7640
      %v7673 = vadd.f32 %v7610, %v7640
      %v7674 = vadd.f32 %v7611, %v7640
      %v7675 = vadd.f32 %v7612, %v7640
      %v7676 = vadd.f32 %v7613, %v7640
      %v7677 = vadd.f32 %v7614, %v7640
      %v7678 = vadd.f32 %v7615, %v7640
      %v7679 = vadd.f32 %v7616, %v7640
      %v7680 = vadd.f32 %v7617, %v7640
      %v7681 = vadd.f32 %v7618, %v7640
      %v7682 = vadd.f32 %v7619, %v7640
      %v7683 = vadd.f32 %v7620, %v7640
      %v7684 = vadd.f32 %v7621, %v7640
      %v7685 = vadd.f32 %v7622, %v7640
      %v7686 = vadd.f32 %v7623, %v7640
      %v7687 = vadd.f32 %v7624, %v7640
      %v7688 = vadd.f32 %v7625, %v7640
      %v7689 = vadd.f32 %v7626, %v7640
      %v7690 = vadd.f32 %v7627, %v7640
      %v7691 = vadd.f32 %v7628, %v7640
      %v7692 = vadd.f32 %v7629, %v7640
      %v7693 = vadd.f32 %v7630, %v7640
      %v7694 = vadd.f32 %v7631, %v7640
      %v7695 = vadd.f32 %v7632, %v7640
      %v7696 = vadd.f32 %v7633, %v7640
      %v7697 = vadd.f32 %v7634, %v7640
      %v7698 = vmax.f32 %v7642, 0.0
      %v7699 = vmax.f32 %v7643, 0.0
      %v7700 = vmax.f32 %v7644, 0.0
      %v7701 = vmax.f32 %v7645, 0.0
      %v7702 = vmax.f32 %v7646, 0.0
      %v7703 = vmax.f32 %v7647, 0.0
      %v7704 = vmax.f32 %v7648, 0.0
      %v7705 = vmax.f32 %v7649, 0.0
      %v7706 = vmax.f32 %v7650, 0.0
      %v7707 = vmax.f32 %v7651, 0.0
      %v7708 = vmax.f32 %v7652, 0.0
      %v7709 = vmax.f32 %v7653, 0.0
      %v7710 = vmax.f32 %v7654, 0.0
      %v7711 = vmax.f32 %v7655, 0.0
      %v7712 = vmax.f32 %v7656, 0.0
      %v7713 = vmax.f32 %v7657, 0.0
      %v7714 = vmax.f32 %v7658, 0.0
      %v7715 = vmax.f32 %v7659, 0.0
      %v7716 = vmax.f32 %v7660, 0.0
      %v7717 = vmax.f32 %v7661, 0.0
      %v7718 = vmax.f32 %v7662, 0.0
      %v7719 = vmax.f32 %v7663, 0.0
      %v7720 = vmax.f32 %v7664, 0.0
      %v7721 = vmax.f32 %v7665, 0.0
      %v7722 = vmax.f32 %v7666, 0.0
      %v7723 = vmax.f32 %v7667, 0.0
      %v7724 = vmax.f32 %v7668, 0.0
      %v7725 = vmax.f32 %v7669, 0.0
      %v7726 = vmax.f32 %v7670, 0.0
      %v7727 = vmax.f32 %v7671, 0.0
      %v7728 = vmax.f32 %v7672, 0.0
      %v7729 = vmax.f32 %v7673, 0.0
      %v7730 = vmax.f32 %v7674, 0.0
      %v7731 = vmax.f32 %v7675, 0.0
      %v7732 = vmax.f32 %v7676, 0.0
      %v7733 = vmax.f32 %v7677, 0.0
      %v7734 = vmax.f32 %v7678, 0.0
      %v7735 = vmax.f32 %v7679, 0.0
      %v7736 = vmax.f32 %v7680, 0.0
      %v7737 = vmax.f32 %v7681, 0.0
      %v7738 = vmax.f32 %v7682, 0.0
      %v7739 = vmax.f32 %v7683, 0.0
      %v7740 = vmax.f32 %v7684, 0.0
      %v7741 = vmax.f32 %v7685, 0.0
      %v7742 = vmax.f32 %v7686, 0.0
      %v7743 = vmax.f32 %v7687, 0.0
      %v7744 = vmax.f32 %v7688, 0.0
      %v7745 = vmax.f32 %v7689, 0.0
      %v7746 = vmax.f32 %v7690, 0.0
      %v7747 = vmax.f32 %v7691, 0.0
      %v7748 = vmax.f32 %v7692, 0.0
      %v7749 = vmax.f32 %v7693, 0.0
      %v7750 = vmax.f32 %v7694, 0.0
      %v7751 = vmax.f32 %v7695, 0.0
      %v7752 = vmax.f32 %v7696, 0.0
      %v7753 = vmax.f32 %v7697, 0.0
      %v7754 = vpack.c.bf16 %v7699, %v7698
      %v7755 = vpack.c.bf16 %v7701, %v7700
      %v7756 = vpack.c.bf16 %v7703, %v7702
      %v7757 = vpack.c.bf16 %v7705, %v7704
      %v7758 = vpack.c.bf16 %v7707, %v7706
      %v7759 = vpack.c.bf16 %v7709, %v7708
      %v7760 = vpack.c.bf16 %v7711, %v7710
      %v7761 = vpack.c.bf16 %v7713, %v7712
      %v7762 = vpack.c.bf16 %v7715, %v7714
      %v7763 = vpack.c.bf16 %v7717, %v7716
      %v7764 = vpack.c.bf16 %v7719, %v7718
      %v7765 = vpack.c.bf16 %v7721, %v7720
      %v7766 = vpack.c.bf16 %v7723, %v7722
      %v7767 = vpack.c.bf16 %v7725, %v7724
      %v7768 = vpack.c.bf16 %v7727, %v7726
      %v7769 = vpack.c.bf16 %v7729, %v7728
      %v7770 = vpack.c.bf16 %v7731, %v7730
      %v7771 = vpack.c.bf16 %v7733, %v7732
      %v7772 = vpack.c.bf16 %v7735, %v7734
      %v7773 = vpack.c.bf16 %v7737, %v7736
      %v7774 = vpack.c.bf16 %v7739, %v7738
      %v7775 = vpack.c.bf16 %v7741, %v7740
      %v7776 = vpack.c.bf16 %v7743, %v7742
      %v7777 = vpack.c.bf16 %v7745, %v7744
      %v7778 = vpack.c.bf16 %v7747, %v7746
      %v7779 = vpack.c.bf16 %v7749, %v7748
      %v7780 = vpack.c.bf16 %v7751, %v7750
      %v7781 = vpack.c.bf16 %v7753, %v7752
      %v7810 = vunpack.c.l.b16 %v7754
      %v7811 = vunpack.c.h.b16 %v7754
      %v7812 = vunpack.c.l.b16 %v7755
      %v7813 = vunpack.c.h.b16 %v7755
      %v7814 = vunpack.c.l.b16 %v7756
      %v7815 = vunpack.c.h.b16 %v7756
      %v7816 = vunpack.c.l.b16 %v7757
      %v7817 = vunpack.c.h.b16 %v7757
      %v7818 = vunpack.c.l.b16 %v7758
      %v7819 = vunpack.c.h.b16 %v7758
      %v7820 = vunpack.c.l.b16 %v7759
      %v7821 = vunpack.c.h.b16 %v7759
      %v7822 = vunpack.c.l.b16 %v7760
      %v7823 = vunpack.c.h.b16 %v7760
      %v7824 = vunpack.c.l.b16 %v7761
      %v7825 = vunpack.c.h.b16 %v7761
      %v7826 = vunpack.c.l.b16 %v7762
      %v7827 = vunpack.c.h.b16 %v7762
      %v7828 = vunpack.c.l.b16 %v7763
      %v7829 = vunpack.c.h.b16 %v7763
      %v7830 = vunpack.c.l.b16 %v7764
      %v7831 = vunpack.c.h.b16 %v7764
      %v7832 = vunpack.c.l.b16 %v7765
      %v7833 = vunpack.c.h.b16 %v7765
      %v7834 = vunpack.c.l.b16 %v7766
      %v7835 = vunpack.c.h.b16 %v7766
      %v7836 = vunpack.c.l.b16 %v7767
      %v7837 = vunpack.c.h.b16 %v7767
      %v7838 = vunpack.c.l.b16 %v7768
      %v7839 = vunpack.c.h.b16 %v7768
      %v7840 = vunpack.c.l.b16 %v7769
      %v7841 = vunpack.c.h.b16 %v7769
      %v7842 = vunpack.c.l.b16 %v7770
      %v7843 = vunpack.c.h.b16 %v7770
      %v7844 = vunpack.c.l.b16 %v7771
      %v7845 = vunpack.c.h.b16 %v7771
      %v7846 = vunpack.c.l.b16 %v7772
      %v7847 = vunpack.c.h.b16 %v7772
      %v7848 = vunpack.c.l.b16 %v7773
      %v7849 = vunpack.c.h.b16 %v7773
      %v7850 = vunpack.c.l.b16 %v7774
      %v7851 = vunpack.c.h.b16 %v7774
      %v7852 = vunpack.c.l.b16 %v7775
      %v7853 = vunpack.c.h.b16 %v7775
      %v7854 = vunpack.c.l.b16 %v7776
      %v7855 = vunpack.c.h.b16 %v7776
      %v7856 = vunpack.c.l.b16 %v7777
      %v7857 = vunpack.c.h.b16 %v7777
      %v7858 = vunpack.c.l.b16 %v7778
      %v7859 = vunpack.c.h.b16 %v7778
      %v7860 = vunpack.c.l.b16 %v7779
      %v7861 = vunpack.c.h.b16 %v7779
      %v7862 = vunpack.c.l.b16 %v7780
      %v7863 = vunpack.c.h.b16 %v7780
      %v7864 = vunpack.c.l.b16 %v7781
      %v7865 = vunpack.c.h.b16 %v7781
      %v7866 = vpack.c.b16 %v7810, %v7810
      %v7867 = vpack.c.b16 %v7811, %v7811
      %v7868 = vpack.c.b16 %v7812, %v7812
      %v7869 = vpack.c.b16 %v7813, %v7813
      %v7870 = vpack.c.b16 %v7814, %v7814
      %v7871 = vpack.c.b16 %v7815, %v7815
      %v7872 = vpack.c.b16 %v7816, %v7816
      %v7873 = vpack.c.b16 %v7817, %v7817
      %v7874 = vpack.c.b16 %v7818, %v7818
      %v7875 = vpack.c.b16 %v7819, %v7819
      %v7876 = vpack.c.b16 %v7820, %v7820
      %v7877 = vpack.c.b16 %v7821, %v7821
      %v7878 = vpack.c.b16 %v7822, %v7822
      %v7879 = vpack.c.b16 %v7823, %v7823
      %v7880 = vpack.c.b16 %v7824, %v7824
      %v7881 = vpack.c.b16 %v7825, %v7825
      %v7882 = vpack.c.b16 %v7826, %v7826
      %v7883 = vpack.c.b16 %v7827, %v7827
      %v7884 = vpack.c.b16 %v7828, %v7828
      %v7885 = vpack.c.b16 %v7829, %v7829
      %v7886 = vpack.c.b16 %v7830, %v7830
      %v7887 = vpack.c.b16 %v7831, %v7831
      %v7888 = vpack.c.b16 %v7832, %v7832
      %v7889 = vpack.c.b16 %v7833, %v7833
      %v7890 = vpack.c.b16 %v7834, %v7834
      %v7891 = vpack.c.b16 %v7835, %v7835
      %v7892 = vpack.c.b16 %v7836, %v7836
      %v7893 = vpack.c.b16 %v7837, %v7837
      %v7894 = vpack.c.b16 %v7838, %v7838
      %v7895 = vpack.c.b16 %v7839, %v7839
      %v7896 = vpack.c.b16 %v7840, %v7840
      %v7897 = vpack.c.b16 %v7841, %v7841
      %v7898 = vpack.c.b16 %v7842, %v7842
      %v7899 = vpack.c.b16 %v7843, %v7843
      %v7900 = vpack.c.b16 %v7844, %v7844
      %v7901 = vpack.c.b16 %v7845, %v7845
      %v7902 = vpack.c.b16 %v7846, %v7846
      %v7903 = vpack.c.b16 %v7847, %v7847
      %v7904 = vpack.c.b16 %v7848, %v7848
      %v7905 = vpack.c.b16 %v7849, %v7849
      %v7906 = vpack.c.b16 %v7850, %v7850
      %v7907 = vpack.c.b16 %v7851, %v7851
      %v7908 = vpack.c.b16 %v7852, %v7852
      %v7909 = vpack.c.b16 %v7853, %v7853
      %v7910 = vpack.c.b16 %v7854, %v7854
      %v7911 = vpack.c.b16 %v7855, %v7855
      %v7912 = vpack.c.b16 %v7856, %v7856
      %v7913 = vpack.c.b16 %v7857, %v7857
      %v7914 = vpack.c.b16 %v7858, %v7858
      %v7915 = vpack.c.b16 %v7859, %v7859
      %v7916 = vpack.c.b16 %v7860, %v7860
      %v7917 = vpack.c.b16 %v7861, %v7861
      %v7918 = vpack.c.b16 %v7862, %v7862
      %v7919 = vpack.c.b16 %v7863, %v7863
      %v7920 = vpack.c.b16 %v7864, %v7864
      %v7921 = vpack.c.b16 %v7865, %v7865
      %vm7978 = vcmask 519168
      %7979 = vst.msk [vmem:[%s285] sm:$0xf] %vm7978, %v7866
      %7980 = vst.msk [vmem:[%s285 + $0x4] sm:$0xf] %vm7978, %v7867
      %7981 = vst.msk [vmem:[%s285 + $0x8] sm:$0xf] %vm7978, %v7868
      %7982 = vst.msk [vmem:[%s285 + $0xc] sm:$0xf] %vm7978, %v7869
      %7983 = vst.msk [vmem:[%s285 + $0x10] sm:$0xf] %vm7978, %v7870
      %7984 = vst.msk [vmem:[%s285 + $0x14] sm:$0xf] %vm7978, %v7871
      %7985 = vst.msk [vmem:[%s285 + $0x18] sm:$0xf] %vm7978, %v7872
      %7986 = vst.msk [vmem:[%s285 + $0x1c] sm:$0xf] %vm7978, %v7873
      %7987 = vst.msk [vmem:[%s285 + $0x20] sm:$0xf] %vm7978, %v7874
      %7988 = vst.msk [vmem:[%s285 + $0x24] sm:$0xf] %vm7978, %v7875
      %7989 = vst.msk [vmem:[%s285 + $0x28] sm:$0xf] %vm7978, %v7876
      %7990 = vst.msk [vmem:[%s285 + $0x2c] sm:$0xf] %vm7978, %v7877
      %7991 = vst.msk [vmem:[%s285 + $0x30] sm:$0xf] %vm7978, %v7878
      %7992 = vst.msk [vmem:[%s285 + $0x34] sm:$0xf] %vm7978, %v7879
      %7993 = vst.msk [vmem:[%s285 + $0x38] sm:$0xf] %vm7978, %v7880
      %7994 = vst.msk [vmem:[%s285 + $0x3c] sm:$0xf] %vm7978, %v7881
      %7995 = vst.msk [vmem:[%s285 + $0x40] sm:$0xf] %vm7978, %v7882
      %7996 = vst.msk [vmem:[%s285 + $0x44] sm:$0xf] %vm7978, %v7883
      %7997 = vst.msk [vmem:[%s285 + $0x48] sm:$0xf] %vm7978, %v7884
      %7998 = vst.msk [vmem:[%s285 + $0x4c] sm:$0xf] %vm7978, %v7885
      %7999 = vst.msk [vmem:[%s285 + $0x50] sm:$0xf] %vm7978, %v7886
      %8000 = vst.msk [vmem:[%s285 + $0x54] sm:$0xf] %vm7978, %v7887
      %8001 = vst.msk [vmem:[%s285 + $0x58] sm:$0xf] %vm7978, %v7888
      %8002 = vst.msk [vmem:[%s285 + $0x5c] sm:$0xf] %vm7978, %v7889
      %8003 = vst.msk [vmem:[%s285 + $0x60] sm:$0xf] %vm7978, %v7890
      %8004 = vst.msk [vmem:[%s285 + $0x64] sm:$0xf] %vm7978, %v7891
      %8005 = vst.msk [vmem:[%s285 + $0x68] sm:$0xf] %vm7978, %v7892
      %8006 = vst.msk [vmem:[%s285 + $0x6c] sm:$0xf] %vm7978, %v7893
      %8007 = vst.msk [vmem:[%s285 + $0x70] sm:$0xf] %vm7978, %v7894
      %8008 = vst.msk [vmem:[%s285 + $0x74] sm:$0xf] %vm7978, %v7895
      %8009 = vst.msk [vmem:[%s285 + $0x78] sm:$0xf] %vm7978, %v7896
      %8010 = vst.msk [vmem:[%s285 + $0x7c] sm:$0xf] %vm7978, %v7897
      %8011 = vst.msk [vmem:[%s285 + $0x80] sm:$0xf] %vm7978, %v7898
      %8012 = vst.msk [vmem:[%s285 + $0x84] sm:$0xf] %vm7978, %v7899
      %8013 = vst.msk [vmem:[%s285 + $0x88] sm:$0xf] %vm7978, %v7900
      %8014 = vst.msk [vmem:[%s285 + $0x8c] sm:$0xf] %vm7978, %v7901
      %8015 = vst.msk [vmem:[%s285 + $0x90] sm:$0xf] %vm7978, %v7902
      %8016 = vst.msk [vmem:[%s285 + $0x94] sm:$0xf] %vm7978, %v7903
      %8017 = vst.msk [vmem:[%s285 + $0x98] sm:$0xf] %vm7978, %v7904
      %8018 = vst.msk [vmem:[%s285 + $0x9c] sm:$0xf] %vm7978, %v7905
      %8019 = vst.msk [vmem:[%s285 + $0xa0] sm:$0xf] %vm7978, %v7906
      %8020 = vst.msk [vmem:[%s285 + $0xa4] sm:$0xf] %vm7978, %v7907
      %8021 = vst.msk [vmem:[%s285 + $0xa8] sm:$0xf] %vm7978, %v7908
      %8022 = vst.msk [vmem:[%s285 + $0xac] sm:$0xf] %vm7978, %v7909
      %8023 = vst.msk [vmem:[%s285 + $0xb0] sm:$0xf] %vm7978, %v7910
      %8024 = vst.msk [vmem:[%s285 + $0xb4] sm:$0xf] %vm7978, %v7911
      %8025 = vst.msk [vmem:[%s285 + $0xb8] sm:$0xf] %vm7978, %v7912
      %8026 = vst.msk [vmem:[%s285 + $0xbc] sm:$0xf] %vm7978, %v7913
      %8027 = vst.msk [vmem:[%s285 + $0xc0] sm:$0xf] %vm7978, %v7914
      %8028 = vst.msk [vmem:[%s285 + $0xc4] sm:$0xf] %vm7978, %v7915
      %8029 = vst.msk [vmem:[%s285 + $0xc8] sm:$0xf] %vm7978, %v7916
      %8030 = vst.msk [vmem:[%s285 + $0xcc] sm:$0xf] %vm7978, %v7917
      %8031 = vst.msk [vmem:[%s285 + $0xd0] sm:$0xf] %vm7978, %v7918
      %8032 = vst.msk [vmem:[%s285 + $0xd4] sm:$0xf] %vm7978, %v7919
      %8033 = vst.msk [vmem:[%s285 + $0xd8] sm:$0xf] %vm7978, %v7920
      %8034 = vst.msk [vmem:[%s285 + $0xdc] sm:$0xf] %vm7978, %v7921
      %s8035 = smul.u32 56, %s20
      %p8036 = scmp.lt.s32.totalorder %s19, 1
      %s8037 = scalar_select %p8036, %s19, 1
      %p8038 = scmp.lt.s32.totalorder %s8035, 55
      %s8039 = scalar_select %p8038, %s8035, 55
      %s8040 = smul.addr %s8037, 56
      %s8041 = sadd.s32 %s8039, %s8040
      %s8042 = smul.addr %s8041, 4
      %s8043 = scalar_lea.vmem %s4, %s8042
      // Predicated region
      $region37: #{conv3x3_pallas.1} parent=35 // pred_check
        %p8044 = pneg %p149
      $region38: #{conv3x3_pallas.1} parent=35 // pred_check_branch
        %8046 = sbr.rel (%p8044) target = $region40
      $region39: #{conv3x3_pallas.1} parent=35 // pred_region
        %s8047 = smul.u32 56, %s20
      $region40: #{conv3x3_pallas.1} parent=35 // pred_fallthru
        _
    $region36: #{conv3x3_pallas.1} parent=5 // pred_fallthru
      _
    %p8048 = scmp.le.s32.totalorder 2, %s10
    // Predicated region
    $region41: #{conv3x3_pallas.1} parent=5 // pred_check
      %p8049 = pneg %p8048
    $region42: #{conv3x3_pallas.1} parent=5 // pred_check_branch
      %8051 = sbr.rel (%p8049) target = $region44
    $region43: #{conv3x3_pallas.1} parent=5 // pred_region
      %s8052 = ssub.s32 %s10, 2
      // Predicated region
      $region45: #{conv3x3_pallas.1} parent=43 // pred_check
        %p8053 = pneg %p155
      $region46: #{conv3x3_pallas.1} parent=43 // pred_check_branch
        %8055 = sbr.rel (%p8053) target = $region48
      $region47: #{conv3x3_pallas.1} parent=43 // pred_region
        %s8056 = smul.u32 56, %s22
        %p8057 = scmp.lt.s32.totalorder %s21, 1
        %s8058 = scalar_select %p8057, %s21, 1
        %p8059 = scmp.lt.s32.totalorder %s8056, 55
        %s8060 = scalar_select %p8059, %s8056, 55
        %s8061 = smul.addr %s8058, 56
        %s8062 = sadd.s32 %s8060, %s8061
        %s8063 = smul.addr %s8062, 4
        %s8064 = scalar_lea.vmem %s4, %s8063
      $region48: #{conv3x3_pallas.1} parent=43 // pred_fallthru
        _
    $region44: #{conv3x3_pallas.1} parent=5 // pred_fallthru
      _
  $region6: #{conv3x3_pallas.1} parent=0 // loop_footer
    %s14 = sadd.s32 1, %s10
  $region7: #{conv3x3_pallas.1} parent=0 // loop_footer_branch
    %9 = sbr.rel target = $region3
  $region8: #{conv3x3_pallas.1} parent=0 // loop_exit
    _

</llo_original>
